<compile_context>
chip_gen: v7x
topology: tpu7x:2x2x1
jax: 0.10.0
libtpu: 0.0.40
codegen_flags: <defaults>
</compile_context>

<pallas_src>
import functools

import jax
import jax.numpy as jnp
from jax.experimental import pallas as pl
from jax.experimental.pallas import tpu as pltpu


def _round_up(x, m):
    return (x + m - 1) // m * m


# --------------------------------------------------------------------------
# One-time parameter re-layout (hoisted out of the per-step forward).
# --------------------------------------------------------------------------
def prepare_params(params):
    hidden = params["w1"].shape[0]
    p2 = params["wf"].shape[1] // 8                       # (r-3)**2
    wf_taps = (params["wf"].T                             # (8*p2, hidden)
               .reshape(8, p2, hidden)
               .transpose(1, 0, 2))                       # (p2, 8, hidden)
    return {
        "wc1_taps": params["wc1"].transpose(2, 3, 1, 0).reshape(16, 2, 4),
        "bc1": params["bc1"][None, :],                    # (1, 4)
        "wc2_taps": params["wc2"].transpose(2, 3, 1, 0).reshape(9, 4, 8),
        "bc2": params["bc2"][None, :],                    # (1, 8)
        "wf_taps": wf_taps,                               # (p2, 8, hidden)
        "bf": params["bf"][None, :],                      # (1, hidden)
        "w1t": params["w1"].T,                            # (in, hidden)
        "b1": params["b1"][None, :],                      # (1, hidden)
        "w2a": params["w2"][:, :hidden].T,                # (hidden, out)
        "w2b": params["w2"][:, hidden:].T,                # (hidden, out)
        "b2": params["b2"][None, :],                      # (1, out)
    }


# --------------------------------------------------------------------------
# Fused kernel.
#   x_ref:  (B*H*W, Cin)  input image, spatial flattened onto sublanes.
#   Row p = b*H*W + h*W + w.  A conv tap (i, j) is then just the window
#   x_ref[p + i*W + j]; rows whose (h, w) would run off the image produce
#   garbage, but those rows are never consumed downstream (pool/ conv2 only
#   read the interior rows).
# --------------------------------------------------------------------------
def _fused_kernel(x_ref, st1_ref, wc1_ref, bc1_ref, wc2_ref, bc2_ref,
                  wf_ref, bf_ref, w1t_ref, b1_ref, w2a_ref, w2b_ref, b2_ref,
                  out_ref, s1_scr, s2_scr, h2_scr,
                  *, B, H, W, r, acc_rows, s1_rows):
    f32 = jnp.float32
    kh1 = kw1 = 4                  # conv1 kernel
    k2 = 3                         # conv2 kernel
    o2 = r - 3                     # conv2 output spatial extent
    co1 = 4                        # conv1 out channels
    hidden = b1_ref.shape[-1]

    # ---- conv1 (valid 4x4): 16 tap matmuls on sublane-shifted windows ------
    acc = jnp.zeros((acc_rows, co1), f32)
    for i in range(kh1):
        for j in range(kw1):
            win = x_ref[pl.ds(i * W + j, acc_rows), :]          # (acc_rows, Cin)
            acc = acc + jnp.dot(win, wc1_ref[i * kw1 + j],
                                preferred_element_type=f32)
    acc = acc + bc1_ref[...]                                     # pre-relu conv1
    s1_scr[pl.ds(0, acc_rows), :] = acc
    s1_scr[pl.ds(acc_rows, s1_rows - acc_rows), :] = jnp.zeros(
        (s1_rows - acc_rows, co1), f32)

    # ---- relu + 2x2/2 max-pool: elementwise max of 4 shifted windows --------
    m = s1_scr[pl.ds(0, acc_rows), :]
    m = jnp.maximum(m, s1_scr[pl.ds(1, acc_rows), :])
    m = jnp.maximum(m, s1_scr[pl.ds(W, acc_rows), :])
    m = jnp.maximum(m, s1_scr[pl.ds(W + 1, acc_rows), :])
    s2_scr[...] = jnp.maximum(m, 0.0)          # max(relu(.)) == relu(max(.))

    # ---- conv2 (3x3) + relu + fc1, per batch / conv2 output position --------
    bc2v = bc2_ref[...]                        # (1, 8)
    bfv = bf_ref[...]                          # (1, hidden)
    for b in range(B):
        h2_acc = jnp.zeros((1, hidden), f32)
        for oh in range(o2):
            for ow in range(o2):
                a2 = bc2v
                for i2 in range(k2):
                    for j2 in range(k2):
                        row = b * H * W + 2 * (oh + i2) * W + 2 * (ow + j2)
                        prow = s2_scr[pl.ds(row, 1), :]           # (1, 4)
                        a2 = a2 + jnp.dot(prow, wc2_ref[i2 * k2 + j2],
                                          preferred_element_type=f32)
                o2v = jnp.maximum(a2, 0.0)                        # relu(conv2)
                h2_acc = h2_acc + jnp.dot(o2v, wf_ref[oh * o2 + ow],
                                          preferred_element_type=f32)
        h2_scr[pl.ds(b, 1), :] = h2_acc + bfv                     # fc1 (no relu)

    # ---- head: linear1+relu, concat (split weights), linear2 ----------------
    x1 = jnp.dot(st1_ref[...], w1t_ref[...], preferred_element_type=f32)
    x1 = jnp.maximum(x1 + b1_ref[...], 0.0)
    h2 = h2_scr[...]
    out = (jnp.dot(x1, w2a_ref[...], preferred_element_type=f32)
           + jnp.dot(h2, w2b_ref[...], preferred_element_type=f32)
           + b2_ref[...])
    out_ref[...] = out.astype(out_ref.dtype)


# --------------------------------------------------------------------------
# Forward wrapper (single pallas_call, whole arrays resident in VMEM).
# --------------------------------------------------------------------------
@jax.jit
def conv_qnet_forward(prepped, state1, state2):
    B, C, H, W = state2.shape
    r = (H - 2) // 2
    assert r >= 4
    hidden = prepped["w1t"].shape[1]
    out_dim = prepped["w2a"].shape[1]
    co1 = 4

    # Tiny one-off relayout of the 400-element input into the kernel layout.
    x_flat = state2.transpose(0, 2, 3, 1).reshape(B * H * W, C)

    # Rows of conv1 output actually consumed downstream (+ pooling window).
    max_m_row = (B - 1) * H * W + 2 * (r - 2) * (W + 1)
    acc_rows = _round_up(max_m_row + W + 2, 8)
    s1_rows = _round_up(acc_rows + W + 1, 8)
    assert acc_rows + 3 * W + 3 <= B * H * W      # window reads stay in bounds

    kernel = functools.partial(_fused_kernel, B=B, H=H, W=W, r=r,
                               acc_rows=acc_rows, s1_rows=s1_rows)
    vmem = lambda: pl.BlockSpec(memory_space=pltpu.MemorySpace.VMEM)

    return pl.pallas_call(
        kernel,
        in_specs=[vmem() for _ in range(13)],
        out_specs=vmem(),
        out_shape=jax.ShapeDtypeStruct((B, out_dim), jnp.float32),
        scratch_shapes=[
            pltpu.VMEM((s1_rows, co1), jnp.float32),   # conv1 pre-relu
            pltpu.VMEM((acc_rows, co1), jnp.float32),  # pooled + relu
            pltpu.VMEM((B, hidden), jnp.float32),      # fc1 output rows
        ],
    )(x_flat, state1,
      prepped["wc1_taps"], prepped["bc1"],
      prepped["wc2_taps"], prepped["bc2"],
      prepped["wf_taps"], prepped["bf"],
      prepped["w1t"], prepped["b1"],
      prepped["w2a"], prepped["w2b"], prepped["b2"])


# --------------------------------------------------------------------------
# Pure-JAX reference for validation.
# --------------------------------------------------------------------------
def reference(params, s1, s2):
    x1 = jax.nn.relu(s1 @ params["w1"].T + params["b1"])
    dn = ("NCHW", "OIHW", "NCHW")
    y = jax.lax.conv_general_dilated(s2, params["wc1"], (1, 1), "VALID",
                                     dimension_numbers=dn)
    y = jax.nn.relu(y + params["bc1"][None, :, None, None])
    y = jax.lax.reduce_window(y, -jnp.inf, jax.lax.max,
                              (1, 1, 2, 2), (1, 1, 2, 2), "VALID")
    y = jax.lax.conv_general_dilated(y, params["wc2"], (1, 1), "VALID",
                                     dimension_numbers=dn)
    y = jax.nn.relu(y + params["bc2"][None, :, None, None])
    y = y.reshape(y.shape[0], -1)
    h2 = y @ params["wf"].T + params["bf"]
    x = jnp.concatenate([x1, h2], axis=1)
    return x @ params["w2"].T + params["b2"]


# --------------------------------------------------------------------------
if __name__ == "__main__":
    r = 4
    input_size, hidden_size, output_size = 16, 32, 4
    B = 2
    Hs = Ws = 2 * r + 2          # 10: conv1 -> 7, pool -> 3, conv2 -> 1

    key = jax.random.PRNGKey(0)
    ks = jax.random.split(key, 12)
    f32 = jnp.float32
    params = {
        "w1":  0.1 * jax.random.normal(ks[0], (hidden_size, input_size), f32),
        "b1":  0.1 * jax.random.normal(ks[1], (hidden_size,), f32),
        "wc1": 0.1 * jax.random.normal(ks[2], (4, 2, 4, 4), f32),
        "bc1": 0.1 * jax.random.normal(ks[3], (4,), f32),
        "wc2": 0.1 * jax.random.normal(ks[4], (8, 4, 3, 3), f32),
        "bc2": 0.1 * jax.random.normal(ks[5], (8,), f32),
        "wf":  0.1 * jax.random.normal(ks[6], (hidden_size, 8 * (r - 3) ** 2), f32),
        "bf":  0.1 * jax.random.normal(ks[7], (hidden_size,), f32),
        "w2":  0.1 * jax.random.normal(ks[8], (output_size, 2 * hidden_size), f32),
        "b2":  0.1 * jax.random.normal(ks[9], (output_size,), f32),
    }
    state1 = jax.random.normal(ks[10], (B, input_size), f32)
    state2 = jax.random.normal(ks[11], (B, 2, Hs, Ws), f32)

    prepped = prepare_params(params)          # one-time weight re-layout

    out = conv_qnet_forward(prepped, state1, state2)
    out = jax.block_until_ready(out)

    ref = reference(params, state1, state2)
    assert out.shape == (B, output_size), out.shape
    assert bool(jnp.allclose(out, ref, atol=1e-4, rtol=1e-4)), (out, ref)
    print("KERNEL_OK")
</pallas_src>

<mosaic_0001>
module attributes {stable_mosaic.version = 11 : i64} {
  func.func @_fused_kernel(%arg0: memref<200x2xf32, #tpu.memory_space<vmem>>, %arg1: memref<2x16xf32, #tpu.memory_space<vmem>>, %arg2: memref<16x2x4xf32, #tpu.memory_space<vmem>>, %arg3: memref<1x4xf32, #tpu.memory_space<vmem>>, %arg4: memref<9x4x8xf32, #tpu.memory_space<vmem>>, %arg5: memref<1x8xf32, #tpu.memory_space<vmem>>, %arg6: memref<1x8x32xf32, #tpu.memory_space<vmem>>, %arg7: memref<1x32xf32, #tpu.memory_space<vmem>>, %arg8: memref<16x32xf32, #tpu.memory_space<vmem>>, %arg9: memref<1x32xf32, #tpu.memory_space<vmem>>, %arg10: memref<32x4xf32, #tpu.memory_space<vmem>>, %arg11: memref<32x4xf32, #tpu.memory_space<vmem>>, %arg12: memref<1x4xf32, #tpu.memory_space<vmem>>, %arg13: memref<2x4xf32, #tpu.memory_space<vmem>>, %arg14: memref<176x4xf32, #tpu.memory_space<vmem>>, %arg15: memref<160x4xf32, #tpu.memory_space<vmem>>, %arg16: memref<2x32xf32, #tpu.memory_space<vmem>>) attributes {dimension_semantics = [], scalar_prefetch = 0 : i64, scratch_operands = 3 : i64, tpu.core_type = #tpu.core_type<tc>} {
    %cst = arith.constant 0.000000e+00 : f32
    %0 = vector.broadcast %cst : f32 to vector<160x4xf32>
    %c0 = arith.constant 0 : index
    %c0_0 = arith.constant 0 : index
    %1 = vector.load %arg0[%c0, %c0_0] : memref<200x2xf32, #tpu.memory_space<vmem>>, vector<160x2xf32>
    %c0_1 = arith.constant 0 : index
    %c0_2 = arith.constant 0 : index
    %c0_3 = arith.constant 0 : index
    %2 = vector.load %arg2[%c0_1, %c0_2, %c0_3] : memref<16x2x4xf32, #tpu.memory_space<vmem>>, vector<1x2x4xf32>
    %3 = vector.shape_cast %2 : vector<1x2x4xf32> to vector<2x4xf32>
    %cst_4 = arith.constant dense<0.000000e+00> : vector<160x4xf32>
    %4 = tpu.matmul %1, %3, %cst_4 {dimension_numbers = #tpu.dot_dimension_numbers<[1], [0], [0], [1], [0, 0, 1, 1], [], []>} : vector<160x2xf32>, vector<2x4xf32>, vector<160x4xf32> -> vector<160x4xf32>
    %5 = arith.addf %0, %4 : vector<160x4xf32>
    %c1 = arith.constant 1 : index
    %c0_5 = arith.constant 0 : index
    %6 = vector.load %arg0[%c1, %c0_5] : memref<200x2xf32, #tpu.memory_space<vmem>>, vector<160x2xf32>
    %c1_6 = arith.constant 1 : index
    %c0_7 = arith.constant 0 : index
    %c0_8 = arith.constant 0 : index
    %7 = vector.load %arg2[%c1_6, %c0_7, %c0_8] : memref<16x2x4xf32, #tpu.memory_space<vmem>>, vector<1x2x4xf32>
    %8 = vector.shape_cast %7 : vector<1x2x4xf32> to vector<2x4xf32>
    %cst_9 = arith.constant dense<0.000000e+00> : vector<160x4xf32>
    %9 = tpu.matmul %6, %8, %cst_9 {dimension_numbers = #tpu.dot_dimension_numbers<[1], [0], [0], [1], [0, 0, 1, 1], [], []>} : vector<160x2xf32>, vector<2x4xf32>, vector<160x4xf32> -> vector<160x4xf32>
    %10 = arith.addf %5, %9 : vector<160x4xf32>
    %c2 = arith.constant 2 : index
    %c0_10 = arith.constant 0 : index
    %11 = vector.load %arg0[%c2, %c0_10] : memref<200x2xf32, #tpu.memory_space<vmem>>, vector<160x2xf32>
    %c2_11 = arith.constant 2 : index
    %c0_12 = arith.constant 0 : index
    %c0_13 = arith.constant 0 : index
    %12 = vector.load %arg2[%c2_11, %c0_12, %c0_13] : memref<16x2x4xf32, #tpu.memory_space<vmem>>, vector<1x2x4xf32>
    %13 = vector.shape_cast %12 : vector<1x2x4xf32> to vector<2x4xf32>
    %cst_14 = arith.constant dense<0.000000e+00> : vector<160x4xf32>
    %14 = tpu.matmul %11, %13, %cst_14 {dimension_numbers = #tpu.dot_dimension_numbers<[1], [0], [0], [1], [0, 0, 1, 1], [], []>} : vector<160x2xf32>, vector<2x4xf32>, vector<160x4xf32> -> vector<160x4xf32>
    %15 = arith.addf %10, %14 : vector<160x4xf32>
    %c3 = arith.constant 3 : index
    %c0_15 = arith.constant 0 : index
    %16 = vector.load %arg0[%c3, %c0_15] : memref<200x2xf32, #tpu.memory_space<vmem>>, vector<160x2xf32>
    %c3_16 = arith.constant 3 : index
    %c0_17 = arith.constant 0 : index
    %c0_18 = arith.constant 0 : index
    %17 = vector.load %arg2[%c3_16, %c0_17, %c0_18] : memref<16x2x4xf32, #tpu.memory_space<vmem>>, vector<1x2x4xf32>
    %18 = vector.shape_cast %17 : vector<1x2x4xf32> to vector<2x4xf32>
    %cst_19 = arith.constant dense<0.000000e+00> : vector<160x4xf32>
    %19 = tpu.matmul %16, %18, %cst_19 {dimension_numbers = #tpu.dot_dimension_numbers<[1], [0], [0], [1], [0, 0, 1, 1], [], []>} : vector<160x2xf32>, vector<2x4xf32>, vector<160x4xf32> -> vector<160x4xf32>
    %20 = arith.addf %15, %19 : vector<160x4xf32>
    %c10 = arith.constant 10 : index
    %c0_20 = arith.constant 0 : index
    %21 = vector.load %arg0[%c10, %c0_20] : memref<200x2xf32, #tpu.memory_space<vmem>>, vector<160x2xf32>
    %c4 = arith.constant 4 : index
    %c0_21 = arith.constant 0 : index
    %c0_22 = arith.constant 0 : index
    %22 = vector.load %arg2[%c4, %c0_21, %c0_22] : memref<16x2x4xf32, #tpu.memory_space<vmem>>, vector<1x2x4xf32>
    %23 = vector.shape_cast %22 : vector<1x2x4xf32> to vector<2x4xf32>
    %cst_23 = arith.constant dense<0.000000e+00> : vector<160x4xf32>
    %24 = tpu.matmul %21, %23, %cst_23 {dimension_numbers = #tpu.dot_dimension_numbers<[1], [0], [0], [1], [0, 0, 1, 1], [], []>} : vector<160x2xf32>, vector<2x4xf32>, vector<160x4xf32> -> vector<160x4xf32>
    %25 = arith.addf %20, %24 : vector<160x4xf32>
    %c11 = arith.constant 11 : index
    %c0_24 = arith.constant 0 : index
    %26 = vector.load %arg0[%c11, %c0_24] : memref<200x2xf32, #tpu.memory_space<vmem>>, vector<160x2xf32>
    %c5 = arith.constant 5 : index
    %c0_25 = arith.constant 0 : index
    %c0_26 = arith.constant 0 : index
    %27 = vector.load %arg2[%c5, %c0_25, %c0_26] : memref<16x2x4xf32, #tpu.memory_space<vmem>>, vector<1x2x4xf32>
    %28 = vector.shape_cast %27 : vector<1x2x4xf32> to vector<2x4xf32>
    %cst_27 = arith.constant dense<0.000000e+00> : vector<160x4xf32>
    %29 = tpu.matmul %26, %28, %cst_27 {dimension_numbers = #tpu.dot_dimension_numbers<[1], [0], [0], [1], [0, 0, 1, 1], [], []>} : vector<160x2xf32>, vector<2x4xf32>, vector<160x4xf32> -> vector<160x4xf32>
    %30 = arith.addf %25, %29 : vector<160x4xf32>
    %c12 = arith.constant 12 : index
    %c0_28 = arith.constant 0 : index
    %31 = vector.load %arg0[%c12, %c0_28] : memref<200x2xf32, #tpu.memory_space<vmem>>, vector<160x2xf32>
    %c6 = arith.constant 6 : index
    %c0_29 = arith.constant 0 : index
    %c0_30 = arith.constant 0 : index
    %32 = vector.load %arg2[%c6, %c0_29, %c0_30] : memref<16x2x4xf32, #tpu.memory_space<vmem>>, vector<1x2x4xf32>
    %33 = vector.shape_cast %32 : vector<1x2x4xf32> to vector<2x4xf32>
    %cst_31 = arith.constant dense<0.000000e+00> : vector<160x4xf32>
    %34 = tpu.matmul %31, %33, %cst_31 {dimension_numbers = #tpu.dot_dimension_numbers<[1], [0], [0], [1], [0, 0, 1, 1], [], []>} : vector<160x2xf32>, vector<2x4xf32>, vector<160x4xf32> -> vector<160x4xf32>
    %35 = arith.addf %30, %34 : vector<160x4xf32>
    %c13 = arith.constant 13 : index
    %c0_32 = arith.constant 0 : index
    %36 = vector.load %arg0[%c13, %c0_32] : memref<200x2xf32, #tpu.memory_space<vmem>>, vector<160x2xf32>
    %c7 = arith.constant 7 : index
    %c0_33 = arith.constant 0 : index
    %c0_34 = arith.constant 0 : index
    %37 = vector.load %arg2[%c7, %c0_33, %c0_34] : memref<16x2x4xf32, #tpu.memory_space<vmem>>, vector<1x2x4xf32>
    %38 = vector.shape_cast %37 : vector<1x2x4xf32> to vector<2x4xf32>
    %cst_35 = arith.constant dense<0.000000e+00> : vector<160x4xf32>
    %39 = tpu.matmul %36, %38, %cst_35 {dimension_numbers = #tpu.dot_dimension_numbers<[1], [0], [0], [1], [0, 0, 1, 1], [], []>} : vector<160x2xf32>, vector<2x4xf32>, vector<160x4xf32> -> vector<160x4xf32>
    %40 = arith.addf %35, %39 : vector<160x4xf32>
    %c20 = arith.constant 20 : index
    %c0_36 = arith.constant 0 : index
    %41 = vector.load %arg0[%c20, %c0_36] : memref<200x2xf32, #tpu.memory_space<vmem>>, vector<160x2xf32>
    %c8 = arith.constant 8 : index
    %c0_37 = arith.constant 0 : index
    %c0_38 = arith.constant 0 : index
    %42 = vector.load %arg2[%c8, %c0_37, %c0_38] : memref<16x2x4xf32, #tpu.memory_space<vmem>>, vector<1x2x4xf32>
    %43 = vector.shape_cast %42 : vector<1x2x4xf32> to vector<2x4xf32>
    %cst_39 = arith.constant dense<0.000000e+00> : vector<160x4xf32>
    %44 = tpu.matmul %41, %43, %cst_39 {dimension_numbers = #tpu.dot_dimension_numbers<[1], [0], [0], [1], [0, 0, 1, 1], [], []>} : vector<160x2xf32>, vector<2x4xf32>, vector<160x4xf32> -> vector<160x4xf32>
    %45 = arith.addf %40, %44 : vector<160x4xf32>
    %c21 = arith.constant 21 : index
    %c0_40 = arith.constant 0 : index
    %46 = vector.load %arg0[%c21, %c0_40] : memref<200x2xf32, #tpu.memory_space<vmem>>, vector<160x2xf32>
    %c9 = arith.constant 9 : index
    %c0_41 = arith.constant 0 : index
    %c0_42 = arith.constant 0 : index
    %47 = vector.load %arg2[%c9, %c0_41, %c0_42] : memref<16x2x4xf32, #tpu.memory_space<vmem>>, vector<1x2x4xf32>
    %48 = vector.shape_cast %47 : vector<1x2x4xf32> to vector<2x4xf32>
    %cst_43 = arith.constant dense<0.000000e+00> : vector<160x4xf32>
    %49 = tpu.matmul %46, %48, %cst_43 {dimension_numbers = #tpu.dot_dimension_numbers<[1], [0], [0], [1], [0, 0, 1, 1], [], []>} : vector<160x2xf32>, vector<2x4xf32>, vector<160x4xf32> -> vector<160x4xf32>
    %50 = arith.addf %45, %49 : vector<160x4xf32>
    %c22 = arith.constant 22 : index
    %c0_44 = arith.constant 0 : index
    %51 = vector.load %arg0[%c22, %c0_44] : memref<200x2xf32, #tpu.memory_space<vmem>>, vector<160x2xf32>
    %c10_45 = arith.constant 10 : index
    %c0_46 = arith.constant 0 : index
    %c0_47 = arith.constant 0 : index
    %52 = vector.load %arg2[%c10_45, %c0_46, %c0_47] : memref<16x2x4xf32, #tpu.memory_space<vmem>>, vector<1x2x4xf32>
    %53 = vector.shape_cast %52 : vector<1x2x4xf32> to vector<2x4xf32>
    %cst_48 = arith.constant dense<0.000000e+00> : vector<160x4xf32>
    %54 = tpu.matmul %51, %53, %cst_48 {dimension_numbers = #tpu.dot_dimension_numbers<[1], [0], [0], [1], [0, 0, 1, 1], [], []>} : vector<160x2xf32>, vector<2x4xf32>, vector<160x4xf32> -> vector<160x4xf32>
    %55 = arith.addf %50, %54 : vector<160x4xf32>
    %c23 = arith.constant 23 : index
    %c0_49 = arith.constant 0 : index
    %56 = vector.load %arg0[%c23, %c0_49] : memref<200x2xf32, #tpu.memory_space<vmem>>, vector<160x2xf32>
    %c11_50 = arith.constant 11 : index
    %c0_51 = arith.constant 0 : index
    %c0_52 = arith.constant 0 : index
    %57 = vector.load %arg2[%c11_50, %c0_51, %c0_52] : memref<16x2x4xf32, #tpu.memory_space<vmem>>, vector<1x2x4xf32>
    %58 = vector.shape_cast %57 : vector<1x2x4xf32> to vector<2x4xf32>
    %cst_53 = arith.constant dense<0.000000e+00> : vector<160x4xf32>
    %59 = tpu.matmul %56, %58, %cst_53 {dimension_numbers = #tpu.dot_dimension_numbers<[1], [0], [0], [1], [0, 0, 1, 1], [], []>} : vector<160x2xf32>, vector<2x4xf32>, vector<160x4xf32> -> vector<160x4xf32>
    %60 = arith.addf %55, %59 : vector<160x4xf32>
    %c30 = arith.constant 30 : index
    %c0_54 = arith.constant 0 : index
    %61 = vector.load %arg0[%c30, %c0_54] : memref<200x2xf32, #tpu.memory_space<vmem>>, vector<160x2xf32>
    %c12_55 = arith.constant 12 : index
    %c0_56 = arith.constant 0 : index
    %c0_57 = arith.constant 0 : index
    %62 = vector.load %arg2[%c12_55, %c0_56, %c0_57] : memref<16x2x4xf32, #tpu.memory_space<vmem>>, vector<1x2x4xf32>
    %63 = vector.shape_cast %62 : vector<1x2x4xf32> to vector<2x4xf32>
    %cst_58 = arith.constant dense<0.000000e+00> : vector<160x4xf32>
    %64 = tpu.matmul %61, %63, %cst_58 {dimension_numbers = #tpu.dot_dimension_numbers<[1], [0], [0], [1], [0, 0, 1, 1], [], []>} : vector<160x2xf32>, vector<2x4xf32>, vector<160x4xf32> -> vector<160x4xf32>
    %65 = arith.addf %60, %64 : vector<160x4xf32>
    %c31 = arith.constant 31 : index
    %c0_59 = arith.constant 0 : index
    %66 = vector.load %arg0[%c31, %c0_59] : memref<200x2xf32, #tpu.memory_space<vmem>>, vector<160x2xf32>
    %c13_60 = arith.constant 13 : index
    %c0_61 = arith.constant 0 : index
    %c0_62 = arith.constant 0 : index
    %67 = vector.load %arg2[%c13_60, %c0_61, %c0_62] : memref<16x2x4xf32, #tpu.memory_space<vmem>>, vector<1x2x4xf32>
    %68 = vector.shape_cast %67 : vector<1x2x4xf32> to vector<2x4xf32>
    %cst_63 = arith.constant dense<0.000000e+00> : vector<160x4xf32>
    %69 = tpu.matmul %66, %68, %cst_63 {dimension_numbers = #tpu.dot_dimension_numbers<[1], [0], [0], [1], [0, 0, 1, 1], [], []>} : vector<160x2xf32>, vector<2x4xf32>, vector<160x4xf32> -> vector<160x4xf32>
    %70 = arith.addf %65, %69 : vector<160x4xf32>
    %c32 = arith.constant 32 : index
    %c0_64 = arith.constant 0 : index
    %71 = vector.load %arg0[%c32, %c0_64] : memref<200x2xf32, #tpu.memory_space<vmem>>, vector<160x2xf32>
    %c14 = arith.constant 14 : index
    %c0_65 = arith.constant 0 : index
    %c0_66 = arith.constant 0 : index
    %72 = vector.load %arg2[%c14, %c0_65, %c0_66] : memref<16x2x4xf32, #tpu.memory_space<vmem>>, vector<1x2x4xf32>
    %73 = vector.shape_cast %72 : vector<1x2x4xf32> to vector<2x4xf32>
    %cst_67 = arith.constant dense<0.000000e+00> : vector<160x4xf32>
    %74 = tpu.matmul %71, %73, %cst_67 {dimension_numbers = #tpu.dot_dimension_numbers<[1], [0], [0], [1], [0, 0, 1, 1], [], []>} : vector<160x2xf32>, vector<2x4xf32>, vector<160x4xf32> -> vector<160x4xf32>
    %75 = arith.addf %70, %74 : vector<160x4xf32>
    %c33 = arith.constant 33 : index
    %c0_68 = arith.constant 0 : index
    %76 = vector.load %arg0[%c33, %c0_68] : memref<200x2xf32, #tpu.memory_space<vmem>>, vector<160x2xf32>
    %c15 = arith.constant 15 : index
    %c0_69 = arith.constant 0 : index
    %c0_70 = arith.constant 0 : index
    %77 = vector.load %arg2[%c15, %c0_69, %c0_70] : memref<16x2x4xf32, #tpu.memory_space<vmem>>, vector<1x2x4xf32>
    %78 = vector.shape_cast %77 : vector<1x2x4xf32> to vector<2x4xf32>
    %cst_71 = arith.constant dense<0.000000e+00> : vector<160x4xf32>
    %79 = tpu.matmul %76, %78, %cst_71 {dimension_numbers = #tpu.dot_dimension_numbers<[1], [0], [0], [1], [0, 0, 1, 1], [], []>} : vector<160x2xf32>, vector<2x4xf32>, vector<160x4xf32> -> vector<160x4xf32>
    %80 = arith.addf %75, %79 : vector<160x4xf32>
    %c0_72 = arith.constant 0 : index
    %c0_73 = arith.constant 0 : index
    %81 = vector.load %arg3[%c0_72, %c0_73] : memref<1x4xf32, #tpu.memory_space<vmem>>, vector<1x4xf32>
    %82 = vector.broadcast %81 : vector<1x4xf32> to vector<160x4xf32>
    %83 = arith.addf %80, %82 : vector<160x4xf32>
    %c0_74 = arith.constant 0 : index
    %c0_75 = arith.constant 0 : index
    %84 = vector.load %arg14[%c0_74, %c0_75] : memref<176x4xf32, #tpu.memory_space<vmem>>, vector<160x4xf32>
    tpu.vector_store %arg14[%c0_74, %c0_75], %83 {strides = array<i32>} : memref<176x4xf32, #tpu.memory_space<vmem>>, vector<160x4xf32>,
    %cst_76 = arith.constant 0.000000e+00 : f32
    %85 = vector.broadcast %cst_76 : f32 to vector<16x4xf32>
    %c160 = arith.constant 160 : index
    %c0_77 = arith.constant 0 : index
    %86 = vector.load %arg14[%c160, %c0_77] : memref<176x4xf32, #tpu.memory_space<vmem>>, vector<16x4xf32>
    tpu.vector_store %arg14[%c160, %c0_77], %85 {strides = array<i32>} : memref<176x4xf32, #tpu.memory_space<vmem>>, vector<16x4xf32>,
    %c0_78 = arith.constant 0 : index
    %c0_79 = arith.constant 0 : index
    %87 = vector.load %arg14[%c0_78, %c0_79] : memref<176x4xf32, #tpu.memory_space<vmem>>, vector<160x4xf32>
    %c1_80 = arith.constant 1 : index
    %c0_81 = arith.constant 0 : index
    %88 = vector.load %arg14[%c1_80, %c0_81] : memref<176x4xf32, #tpu.memory_space<vmem>>, vector<160x4xf32>
    %89 = arith.maximumf %87, %88 : vector<160x4xf32>
    %c10_82 = arith.constant 10 : index
    %c0_83 = arith.constant 0 : index
    %90 = vector.load %arg14[%c10_82, %c0_83] : memref<176x4xf32, #tpu.memory_space<vmem>>, vector<160x4xf32>
    %91 = arith.maximumf %89, %90 : vector<160x4xf32>
    %c11_84 = arith.constant 11 : index
    %c0_85 = arith.constant 0 : index
    %92 = vector.load %arg14[%c11_84, %c0_85] : memref<176x4xf32, #tpu.memory_space<vmem>>, vector<160x4xf32>
    %93 = arith.maximumf %91, %92 : vector<160x4xf32>
    %cst_86 = arith.constant 0.000000e+00 : f32
    %94 = vector.broadcast %cst_86 : f32 to vector<160x4xf32>
    %95 = arith.maximumf %93, %94 : vector<160x4xf32>
    %c0_87 = arith.constant 0 : index
    %c0_88 = arith.constant 0 : index
    %96 = vector.load %arg15[%c0_87, %c0_88] : memref<160x4xf32, #tpu.memory_space<vmem>>, vector<160x4xf32>
    tpu.vector_store %arg15[%c0_87, %c0_88], %95 {strides = array<i32>} : memref<160x4xf32, #tpu.memory_space<vmem>>, vector<160x4xf32>,
    %c0_89 = arith.constant 0 : index
    %c0_90 = arith.constant 0 : index
    %97 = vector.load %arg5[%c0_89, %c0_90] : memref<1x8xf32, #tpu.memory_space<vmem>>, vector<1x8xf32>
    %c0_91 = arith.constant 0 : index
    %c0_92 = arith.constant 0 : index
    %98 = vector.load %arg7[%c0_91, %c0_92] : memref<1x32xf32, #tpu.memory_space<vmem>>, vector<1x32xf32>
    %cst_93 = arith.constant 0.000000e+00 : f32
    %99 = vector.broadcast %cst_93 : f32 to vector<1x32xf32>
    %c0_94 = arith.constant 0 : index
    %c0_95 = arith.constant 0 : index
    %100 = vector.load %arg15[%c0_94, %c0_95] : memref<160x4xf32, #tpu.memory_space<vmem>>, vector<1x4xf32>
    %c0_96 = arith.constant 0 : index
    %c0_97 = arith.constant 0 : index
    %c0_98 = arith.constant 0 : index
    %101 = vector.load %arg4[%c0_96, %c0_97, %c0_98] : memref<9x4x8xf32, #tpu.memory_space<vmem>>, vector<1x4x8xf32>
    %102 = vector.shape_cast %101 : vector<1x4x8xf32> to vector<4x8xf32>
    %cst_99 = arith.constant dense<0.000000e+00> : vector<1x8xf32>
    %103 = tpu.matmul %100, %102, %cst_99 {dimension_numbers = #tpu.dot_dimension_numbers<[1], [0], [0], [1], [0, 0, 1, 1], [], []>} : vector<1x4xf32>, vector<4x8xf32>, vector<1x8xf32> -> vector<1x8xf32>
    %104 = arith.addf %97, %103 : vector<1x8xf32>
    %c2_100 = arith.constant 2 : index
    %c0_101 = arith.constant 0 : index
    %105 = vector.load %arg15[%c2_100, %c0_101] : memref<160x4xf32, #tpu.memory_space<vmem>>, vector<1x4xf32>
    %c1_102 = arith.constant 1 : index
    %c0_103 = arith.constant 0 : index
    %c0_104 = arith.constant 0 : index
    %106 = vector.load %arg4[%c1_102, %c0_103, %c0_104] : memref<9x4x8xf32, #tpu.memory_space<vmem>>, vector<1x4x8xf32>
    %107 = vector.shape_cast %106 : vector<1x4x8xf32> to vector<4x8xf32>
    %cst_105 = arith.constant dense<0.000000e+00> : vector<1x8xf32>
    %108 = tpu.matmul %105, %107, %cst_105 {dimension_numbers = #tpu.dot_dimension_numbers<[1], [0], [0], [1], [0, 0, 1, 1], [], []>} : vector<1x4xf32>, vector<4x8xf32>, vector<1x8xf32> -> vector<1x8xf32>
    %109 = arith.addf %104, %108 : vector<1x8xf32>
    %c4_106 = arith.constant 4 : index
    %c0_107 = arith.constant 0 : index
    %110 = vector.load %arg15[%c4_106, %c0_107] : memref<160x4xf32, #tpu.memory_space<vmem>>, vector<1x4xf32>
    %c2_108 = arith.constant 2 : index
    %c0_109 = arith.constant 0 : index
    %c0_110 = arith.constant 0 : index
    %111 = vector.load %arg4[%c2_108, %c0_109, %c0_110] : memref<9x4x8xf32, #tpu.memory_space<vmem>>, vector<1x4x8xf32>
    %112 = vector.shape_cast %111 : vector<1x4x8xf32> to vector<4x8xf32>
    %cst_111 = arith.constant dense<0.000000e+00> : vector<1x8xf32>
    %113 = tpu.matmul %110, %112, %cst_111 {dimension_numbers = #tpu.dot_dimension_numbers<[1], [0], [0], [1], [0, 0, 1, 1], [], []>} : vector<1x4xf32>, vector<4x8xf32>, vector<1x8xf32> -> vector<1x8xf32>
    %114 = arith.addf %109, %113 : vector<1x8xf32>
    %c20_112 = arith.constant 20 : index
    %c0_113 = arith.constant 0 : index
    %115 = vector.load %arg15[%c20_112, %c0_113] : memref<160x4xf32, #tpu.memory_space<vmem>>, vector<1x4xf32>
    %c3_114 = arith.constant 3 : index
    %c0_115 = arith.constant 0 : index
    %c0_116 = arith.constant 0 : index
    %116 = vector.load %arg4[%c3_114, %c0_115, %c0_116] : memref<9x4x8xf32, #tpu.memory_space<vmem>>, vector<1x4x8xf32>
    %117 = vector.shape_cast %116 : vector<1x4x8xf32> to vector<4x8xf32>
    %cst_117 = arith.constant dense<0.000000e+00> : vector<1x8xf32>
    %118 = tpu.matmul %115, %117, %cst_117 {dimension_numbers = #tpu.dot_dimension_numbers<[1], [0], [0], [1], [0, 0, 1, 1], [], []>} : vector<1x4xf32>, vector<4x8xf32>, vector<1x8xf32> -> vector<1x8xf32>
    %119 = arith.addf %114, %118 : vector<1x8xf32>
    %c22_118 = arith.constant 22 : index
    %c0_119 = arith.constant 0 : index
    %120 = vector.load %arg15[%c22_118, %c0_119] : memref<160x4xf32, #tpu.memory_space<vmem>>, vector<1x4xf32>
    %c4_120 = arith.constant 4 : index
    %c0_121 = arith.constant 0 : index
    %c0_122 = arith.constant 0 : index
    %121 = vector.load %arg4[%c4_120, %c0_121, %c0_122] : memref<9x4x8xf32, #tpu.memory_space<vmem>>, vector<1x4x8xf32>
    %122 = vector.shape_cast %121 : vector<1x4x8xf32> to vector<4x8xf32>
    %cst_123 = arith.constant dense<0.000000e+00> : vector<1x8xf32>
    %123 = tpu.matmul %120, %122, %cst_123 {dimension_numbers = #tpu.dot_dimension_numbers<[1], [0], [0], [1], [0, 0, 1, 1], [], []>} : vector<1x4xf32>, vector<4x8xf32>, vector<1x8xf32> -> vector<1x8xf32>
    %124 = arith.addf %119, %123 : vector<1x8xf32>
    %c24 = arith.constant 24 : index
    %c0_124 = arith.constant 0 : index
    %125 = vector.load %arg15[%c24, %c0_124] : memref<160x4xf32, #tpu.memory_space<vmem>>, vector<1x4xf32>
    %c5_125 = arith.constant 5 : index
    %c0_126 = arith.constant 0 : index
    %c0_127 = arith.constant 0 : index
    %126 = vector.load %arg4[%c5_125, %c0_126, %c0_127] : memref<9x4x8xf32, #tpu.memory_space<vmem>>, vector<1x4x8xf32>
    %127 = vector.shape_cast %126 : vector<1x4x8xf32> to vector<4x8xf32>
    %cst_128 = arith.constant dense<0.000000e+00> : vector<1x8xf32>
    %128 = tpu.matmul %125, %127, %cst_128 {dimension_numbers = #tpu.dot_dimension_numbers<[1], [0], [0], [1], [0, 0, 1, 1], [], []>} : vector<1x4xf32>, vector<4x8xf32>, vector<1x8xf32> -> vector<1x8xf32>
    %129 = arith.addf %124, %128 : vector<1x8xf32>
    %c40 = arith.constant 40 : index
    %c0_129 = arith.constant 0 : index
    %130 = vector.load %arg15[%c40, %c0_129] : memref<160x4xf32, #tpu.memory_space<vmem>>, vector<1x4xf32>
    %c6_130 = arith.constant 6 : index
    %c0_131 = arith.constant 0 : index
    %c0_132 = arith.constant 0 : index
    %131 = vector.load %arg4[%c6_130, %c0_131, %c0_132] : memref<9x4x8xf32, #tpu.memory_space<vmem>>, vector<1x4x8xf32>
    %132 = vector.shape_cast %131 : vector<1x4x8xf32> to vector<4x8xf32>
    %cst_133 = arith.constant dense<0.000000e+00> : vector<1x8xf32>
    %133 = tpu.matmul %130, %132, %cst_133 {dimension_numbers = #tpu.dot_dimension_numbers<[1], [0], [0], [1], [0, 0, 1, 1], [], []>} : vector<1x4xf32>, vector<4x8xf32>, vector<1x8xf32> -> vector<1x8xf32>
    %134 = arith.addf %129, %133 : vector<1x8xf32>
    %c42 = arith.constant 42 : index
    %c0_134 = arith.constant 0 : index
    %135 = vector.load %arg15[%c42, %c0_134] : memref<160x4xf32, #tpu.memory_space<vmem>>, vector<1x4xf32>
    %c7_135 = arith.constant 7 : index
    %c0_136 = arith.constant 0 : index
    %c0_137 = arith.constant 0 : index
    %136 = vector.load %arg4[%c7_135, %c0_136, %c0_137] : memref<9x4x8xf32, #tpu.memory_space<vmem>>, vector<1x4x8xf32>
    %137 = vector.shape_cast %136 : vector<1x4x8xf32> to vector<4x8xf32>
    %cst_138 = arith.constant dense<0.000000e+00> : vector<1x8xf32>
    %138 = tpu.matmul %135, %137, %cst_138 {dimension_numbers = #tpu.dot_dimension_numbers<[1], [0], [0], [1], [0, 0, 1, 1], [], []>} : vector<1x4xf32>, vector<4x8xf32>, vector<1x8xf32> -> vector<1x8xf32>
    %139 = arith.addf %134, %138 : vector<1x8xf32>
    %c44 = arith.constant 44 : index
    %c0_139 = arith.constant 0 : index
    %140 = vector.load %arg15[%c44, %c0_139] : memref<160x4xf32, #tpu.memory_space<vmem>>, vector<1x4xf32>
    %c8_140 = arith.constant 8 : index
    %c0_141 = arith.constant 0 : index
    %c0_142 = arith.constant 0 : index
    %141 = vector.load %arg4[%c8_140, %c0_141, %c0_142] : memref<9x4x8xf32, #tpu.memory_space<vmem>>, vector<1x4x8xf32>
    %142 = vector.shape_cast %141 : vector<1x4x8xf32> to vector<4x8xf32>
    %cst_143 = arith.constant dense<0.000000e+00> : vector<1x8xf32>
    %143 = tpu.matmul %140, %142, %cst_143 {dimension_numbers = #tpu.dot_dimension_numbers<[1], [0], [0], [1], [0, 0, 1, 1], [], []>} : vector<1x4xf32>, vector<4x8xf32>, vector<1x8xf32> -> vector<1x8xf32>
    %144 = arith.addf %139, %143 : vector<1x8xf32>
    %cst_144 = arith.constant 0.000000e+00 : f32
    %145 = vector.broadcast %cst_144 : f32 to vector<1x8xf32>
    %146 = arith.maximumf %144, %145 : vector<1x8xf32>
    %c0_145 = arith.constant 0 : index
    %c0_146 = arith.constant 0 : index
    %c0_147 = arith.constant 0 : index
    %147 = vector.load %arg6[%c0_145, %c0_146, %c0_147] : memref<1x8x32xf32, #tpu.memory_space<vmem>>, vector<1x8x32xf32>
    %148 = vector.shape_cast %147 : vector<1x8x32xf32> to vector<8x32xf32>
    %cst_148 = arith.constant dense<0.000000e+00> : vector<1x32xf32>
    %149 = tpu.matmul %146, %148, %cst_148 {dimension_numbers = #tpu.dot_dimension_numbers<[1], [0], [0], [1], [0, 0, 1, 1], [], []>} : vector<1x8xf32>, vector<8x32xf32>, vector<1x32xf32> -> vector<1x32xf32>
    %150 = arith.addf %99, %149 : vector<1x32xf32>
    %151 = arith.addf %150, %98 : vector<1x32xf32>
    %c0_149 = arith.constant 0 : index
    %c0_150 = arith.constant 0 : index
    %152 = vector.load %arg16[%c0_149, %c0_150] : memref<2x32xf32, #tpu.memory_space<vmem>>, vector<1x32xf32>
    tpu.vector_store %arg16[%c0_149, %c0_150], %151 {strides = array<i32>} : memref<2x32xf32, #tpu.memory_space<vmem>>, vector<1x32xf32>,
    %cst_151 = arith.constant 0.000000e+00 : f32
    %153 = vector.broadcast %cst_151 : f32 to vector<1x32xf32>
    %c100 = arith.constant 100 : index
    %c0_152 = arith.constant 0 : index
    %154 = vector.load %arg15[%c100, %c0_152] : memref<160x4xf32, #tpu.memory_space<vmem>>, vector<1x4xf32>
    %c0_153 = arith.constant 0 : index
    %c0_154 = arith.constant 0 : index
    %c0_155 = arith.constant 0 : index
    %155 = vector.load %arg4[%c0_153, %c0_154, %c0_155] : memref<9x4x8xf32, #tpu.memory_space<vmem>>, vector<1x4x8xf32>
    %156 = vector.shape_cast %155 : vector<1x4x8xf32> to vector<4x8xf32>
    %cst_156 = arith.constant dense<0.000000e+00> : vector<1x8xf32>
    %157 = tpu.matmul %154, %156, %cst_156 {dimension_numbers = #tpu.dot_dimension_numbers<[1], [0], [0], [1], [0, 0, 1, 1], [], []>} : vector<1x4xf32>, vector<4x8xf32>, vector<1x8xf32> -> vector<1x8xf32>
    %158 = arith.addf %97, %157 : vector<1x8xf32>
    %c102 = arith.constant 102 : index
    %c0_157 = arith.constant 0 : index
    %159 = vector.load %arg15[%c102, %c0_157] : memref<160x4xf32, #tpu.memory_space<vmem>>, vector<1x4xf32>
    %c1_158 = arith.constant 1 : index
    %c0_159 = arith.constant 0 : index
    %c0_160 = arith.constant 0 : index
    %160 = vector.load %arg4[%c1_158, %c0_159, %c0_160] : memref<9x4x8xf32, #tpu.memory_space<vmem>>, vector<1x4x8xf32>
    %161 = vector.shape_cast %160 : vector<1x4x8xf32> to vector<4x8xf32>
    %cst_161 = arith.constant dense<0.000000e+00> : vector<1x8xf32>
    %162 = tpu.matmul %159, %161, %cst_161 {dimension_numbers = #tpu.dot_dimension_numbers<[1], [0], [0], [1], [0, 0, 1, 1], [], []>} : vector<1x4xf32>, vector<4x8xf32>, vector<1x8xf32> -> vector<1x8xf32>
    %163 = arith.addf %158, %162 : vector<1x8xf32>
    %c104 = arith.constant 104 : index
    %c0_162 = arith.constant 0 : index
    %164 = vector.load %arg15[%c104, %c0_162] : memref<160x4xf32, #tpu.memory_space<vmem>>, vector<1x4xf32>
    %c2_163 = arith.constant 2 : index
    %c0_164 = arith.constant 0 : index
    %c0_165 = arith.constant 0 : index
    %165 = vector.load %arg4[%c2_163, %c0_164, %c0_165] : memref<9x4x8xf32, #tpu.memory_space<vmem>>, vector<1x4x8xf32>
    %166 = vector.shape_cast %165 : vector<1x4x8xf32> to vector<4x8xf32>
    %cst_166 = arith.constant dense<0.000000e+00> : vector<1x8xf32>
    %167 = tpu.matmul %164, %166, %cst_166 {dimension_numbers = #tpu.dot_dimension_numbers<[1], [0], [0], [1], [0, 0, 1, 1], [], []>} : vector<1x4xf32>, vector<4x8xf32>, vector<1x8xf32> -> vector<1x8xf32>
    %168 = arith.addf %163, %167 : vector<1x8xf32>
    %c120 = arith.constant 120 : index
    %c0_167 = arith.constant 0 : index
    %169 = vector.load %arg15[%c120, %c0_167] : memref<160x4xf32, #tpu.memory_space<vmem>>, vector<1x4xf32>
    %c3_168 = arith.constant 3 : index
    %c0_169 = arith.constant 0 : index
    %c0_170 = arith.constant 0 : index
    %170 = vector.load %arg4[%c3_168, %c0_169, %c0_170] : memref<9x4x8xf32, #tpu.memory_space<vmem>>, vector<1x4x8xf32>
    %171 = vector.shape_cast %170 : vector<1x4x8xf32> to vector<4x8xf32>
    %cst_171 = arith.constant dense<0.000000e+00> : vector<1x8xf32>
    %172 = tpu.matmul %169, %171, %cst_171 {dimension_numbers = #tpu.dot_dimension_numbers<[1], [0], [0], [1], [0, 0, 1, 1], [], []>} : vector<1x4xf32>, vector<4x8xf32>, vector<1x8xf32> -> vector<1x8xf32>
    %173 = arith.addf %168, %172 : vector<1x8xf32>
    %c122 = arith.constant 122 : index
    %c0_172 = arith.constant 0 : index
    %174 = vector.load %arg15[%c122, %c0_172] : memref<160x4xf32, #tpu.memory_space<vmem>>, vector<1x4xf32>
    %c4_173 = arith.constant 4 : index
    %c0_174 = arith.constant 0 : index
    %c0_175 = arith.constant 0 : index
    %175 = vector.load %arg4[%c4_173, %c0_174, %c0_175] : memref<9x4x8xf32, #tpu.memory_space<vmem>>, vector<1x4x8xf32>
    %176 = vector.shape_cast %175 : vector<1x4x8xf32> to vector<4x8xf32>
    %cst_176 = arith.constant dense<0.000000e+00> : vector<1x8xf32>
    %177 = tpu.matmul %174, %176, %cst_176 {dimension_numbers = #tpu.dot_dimension_numbers<[1], [0], [0], [1], [0, 0, 1, 1], [], []>} : vector<1x4xf32>, vector<4x8xf32>, vector<1x8xf32> -> vector<1x8xf32>
    %178 = arith.addf %173, %177 : vector<1x8xf32>
    %c124 = arith.constant 124 : index
    %c0_177 = arith.constant 0 : index
    %179 = vector.load %arg15[%c124, %c0_177] : memref<160x4xf32, #tpu.memory_space<vmem>>, vector<1x4xf32>
    %c5_178 = arith.constant 5 : index
    %c0_179 = arith.constant 0 : index
    %c0_180 = arith.constant 0 : index
    %180 = vector.load %arg4[%c5_178, %c0_179, %c0_180] : memref<9x4x8xf32, #tpu.memory_space<vmem>>, vector<1x4x8xf32>
    %181 = vector.shape_cast %180 : vector<1x4x8xf32> to vector<4x8xf32>
    %cst_181 = arith.constant dense<0.000000e+00> : vector<1x8xf32>
    %182 = tpu.matmul %179, %181, %cst_181 {dimension_numbers = #tpu.dot_dimension_numbers<[1], [0], [0], [1], [0, 0, 1, 1], [], []>} : vector<1x4xf32>, vector<4x8xf32>, vector<1x8xf32> -> vector<1x8xf32>
    %183 = arith.addf %178, %182 : vector<1x8xf32>
    %c140 = arith.constant 140 : index
    %c0_182 = arith.constant 0 : index
    %184 = vector.load %arg15[%c140, %c0_182] : memref<160x4xf32, #tpu.memory_space<vmem>>, vector<1x4xf32>
    %c6_183 = arith.constant 6 : index
    %c0_184 = arith.constant 0 : index
    %c0_185 = arith.constant 0 : index
    %185 = vector.load %arg4[%c6_183, %c0_184, %c0_185] : memref<9x4x8xf32, #tpu.memory_space<vmem>>, vector<1x4x8xf32>
    %186 = vector.shape_cast %185 : vector<1x4x8xf32> to vector<4x8xf32>
    %cst_186 = arith.constant dense<0.000000e+00> : vector<1x8xf32>
    %187 = tpu.matmul %184, %186, %cst_186 {dimension_numbers = #tpu.dot_dimension_numbers<[1], [0], [0], [1], [0, 0, 1, 1], [], []>} : vector<1x4xf32>, vector<4x8xf32>, vector<1x8xf32> -> vector<1x8xf32>
    %188 = arith.addf %183, %187 : vector<1x8xf32>
    %c142 = arith.constant 142 : index
    %c0_187 = arith.constant 0 : index
    %189 = vector.load %arg15[%c142, %c0_187] : memref<160x4xf32, #tpu.memory_space<vmem>>, vector<1x4xf32>
    %c7_188 = arith.constant 7 : index
    %c0_189 = arith.constant 0 : index
    %c0_190 = arith.constant 0 : index
    %190 = vector.load %arg4[%c7_188, %c0_189, %c0_190] : memref<9x4x8xf32, #tpu.memory_space<vmem>>, vector<1x4x8xf32>
    %191 = vector.shape_cast %190 : vector<1x4x8xf32> to vector<4x8xf32>
    %cst_191 = arith.constant dense<0.000000e+00> : vector<1x8xf32>
    %192 = tpu.matmul %189, %191, %cst_191 {dimension_numbers = #tpu.dot_dimension_numbers<[1], [0], [0], [1], [0, 0, 1, 1], [], []>} : vector<1x4xf32>, vector<4x8xf32>, vector<1x8xf32> -> vector<1x8xf32>
    %193 = arith.addf %188, %192 : vector<1x8xf32>
    %c144 = arith.constant 144 : index
    %c0_192 = arith.constant 0 : index
    %194 = vector.load %arg15[%c144, %c0_192] : memref<160x4xf32, #tpu.memory_space<vmem>>, vector<1x4xf32>
    %c8_193 = arith.constant 8 : index
    %c0_194 = arith.constant 0 : index
    %c0_195 = arith.constant 0 : index
    %195 = vector.load %arg4[%c8_193, %c0_194, %c0_195] : memref<9x4x8xf32, #tpu.memory_space<vmem>>, vector<1x4x8xf32>
    %196 = vector.shape_cast %195 : vector<1x4x8xf32> to vector<4x8xf32>
    %cst_196 = arith.constant dense<0.000000e+00> : vector<1x8xf32>
    %197 = tpu.matmul %194, %196, %cst_196 {dimension_numbers = #tpu.dot_dimension_numbers<[1], [0], [0], [1], [0, 0, 1, 1], [], []>} : vector<1x4xf32>, vector<4x8xf32>, vector<1x8xf32> -> vector<1x8xf32>
    %198 = arith.addf %193, %197 : vector<1x8xf32>
    %cst_197 = arith.constant 0.000000e+00 : f32
    %199 = vector.broadcast %cst_197 : f32 to vector<1x8xf32>
    %200 = arith.maximumf %198, %199 : vector<1x8xf32>
    %c0_198 = arith.constant 0 : index
    %c0_199 = arith.constant 0 : index
    %c0_200 = arith.constant 0 : index
    %201 = vector.load %arg6[%c0_198, %c0_199, %c0_200] : memref<1x8x32xf32, #tpu.memory_space<vmem>>, vector<1x8x32xf32>
    %202 = vector.shape_cast %201 : vector<1x8x32xf32> to vector<8x32xf32>
    %cst_201 = arith.constant dense<0.000000e+00> : vector<1x32xf32>
    %203 = tpu.matmul %200, %202, %cst_201 {dimension_numbers = #tpu.dot_dimension_numbers<[1], [0], [0], [1], [0, 0, 1, 1], [], []>} : vector<1x8xf32>, vector<8x32xf32>, vector<1x32xf32> -> vector<1x32xf32>
    %204 = arith.addf %153, %203 : vector<1x32xf32>
    %205 = arith.addf %204, %98 : vector<1x32xf32>
    %c1_202 = arith.constant 1 : index
    %c0_203 = arith.constant 0 : index
    %206 = vector.load %arg16[%c1_202, %c0_203] : memref<2x32xf32, #tpu.memory_space<vmem>>, vector<1x32xf32>
    tpu.vector_store %arg16[%c1_202, %c0_203], %205 {strides = array<i32>} : memref<2x32xf32, #tpu.memory_space<vmem>>, vector<1x32xf32>,
    %c0_204 = arith.constant 0 : index
    %c0_205 = arith.constant 0 : index
    %207 = vector.load %arg1[%c0_204, %c0_205] : memref<2x16xf32, #tpu.memory_space<vmem>>, vector<2x16xf32>
    %c0_206 = arith.constant 0 : index
    %c0_207 = arith.constant 0 : index
    %208 = vector.load %arg8[%c0_206, %c0_207] : memref<16x32xf32, #tpu.memory_space<vmem>>, vector<16x32xf32>
    %cst_208 = arith.constant dense<0.000000e+00> : vector<2x32xf32>
    %209 = tpu.matmul %207, %208, %cst_208 {dimension_numbers = #tpu.dot_dimension_numbers<[1], [0], [0], [1], [0, 0, 1, 1], [], []>} : vector<2x16xf32>, vector<16x32xf32>, vector<2x32xf32> -> vector<2x32xf32>
    %c0_209 = arith.constant 0 : index
    %c0_210 = arith.constant 0 : index
    %210 = vector.load %arg9[%c0_209, %c0_210] : memref<1x32xf32, #tpu.memory_space<vmem>>, vector<1x32xf32>
    %211 = vector.broadcast %210 : vector<1x32xf32> to vector<2x32xf32>
    %212 = arith.addf %209, %211 : vector<2x32xf32>
    %cst_211 = arith.constant 0.000000e+00 : f32
    %213 = vector.broadcast %cst_211 : f32 to vector<2x32xf32>
    %214 = arith.maximumf %212, %213 : vector<2x32xf32>
    %c0_212 = arith.constant 0 : index
    %c0_213 = arith.constant 0 : index
    %215 = vector.load %arg16[%c0_212, %c0_213] : memref<2x32xf32, #tpu.memory_space<vmem>>, vector<2x32xf32>
    %c0_214 = arith.constant 0 : index
    %c0_215 = arith.constant 0 : index
    %216 = vector.load %arg10[%c0_214, %c0_215] : memref<32x4xf32, #tpu.memory_space<vmem>>, vector<32x4xf32>
    %cst_216 = arith.constant dense<0.000000e+00> : vector<2x4xf32>
    %217 = tpu.matmul %214, %216, %cst_216 {dimension_numbers = #tpu.dot_dimension_numbers<[1], [0], [0], [1], [0, 0, 1, 1], [], []>} : vector<2x32xf32>, vector<32x4xf32>, vector<2x4xf32> -> vector<2x4xf32>
    %c0_217 = arith.constant 0 : index
    %c0_218 = arith.constant 0 : index
    %218 = vector.load %arg11[%c0_217, %c0_218] : memref<32x4xf32, #tpu.memory_space<vmem>>, vector<32x4xf32>
    %cst_219 = arith.constant dense<0.000000e+00> : vector<2x4xf32>
    %219 = tpu.matmul %215, %218, %cst_219 {dimension_numbers = #tpu.dot_dimension_numbers<[1], [0], [0], [1], [0, 0, 1, 1], [], []>} : vector<2x32xf32>, vector<32x4xf32>, vector<2x4xf32> -> vector<2x4xf32>
    %220 = arith.addf %217, %219 : vector<2x4xf32>
    %c0_220 = arith.constant 0 : index
    %c0_221 = arith.constant 0 : index
    %221 = vector.load %arg12[%c0_220, %c0_221] : memref<1x4xf32, #tpu.memory_space<vmem>>, vector<1x4xf32>
    %222 = vector.broadcast %221 : vector<1x4xf32> to vector<2x4xf32>
    %223 = arith.addf %220, %222 : vector<2x4xf32>
    %c0_222 = arith.constant 0 : index
    %c0_223 = arith.constant 0 : index
    %224 = vector.load %arg13[%c0_222, %c0_223] : memref<2x4xf32, #tpu.memory_space<vmem>>, vector<2x4xf32>
    tpu.vector_store %arg13[%c0_222, %c0_223], %223 {strides = array<i32>} : memref<2x4xf32, #tpu.memory_space<vmem>>, vector<2x4xf32>,
    return
  }
}

</mosaic_0001>

<llo_original>
// kernel: conv_qnet_forward.1
$region0: #{conv_qnet_forward.1}
  #allocation0 [shape = 'u32[]', space=smem, size = 0x4, offset = 0x4, fixed_abs, tag = 'smem constant byte address 0x4 - core index']
  #allocation1 [shape = 'u32[144,128]{1,0:T(1,128)}', space=vmem, size = 0x12000, scoped, tag = 'internal scratch']
  #allocation2 [shape = 'f32[176,4]{1,0:T(8,128)}', space=vmem, size = 0x16000, scoped, tag = 'scratch operand']
  #allocation3 [shape = 'f32[160,4]{1,0:T(8,128)}', space=vmem, size = 0x14000, scoped, tag = 'scratch operand']
  #allocation4 [shape = 'f32[2,32]{1,0:T(2,128)}', space=vmem, size = 0x400, scoped, tag = 'scratch operand']
  %s0 = inlined_call_operand.vmem [shape: f32[200,2], index: 0, kind: input, shape index: {}]
  %s1 = inlined_call_operand.vmem [shape: f32[2,16], index: 1, kind: input, shape index: {}]
  %s2 = inlined_call_operand.vmem [shape: f32[16,2,4], index: 2, kind: input, shape index: {}]
  %s3 = inlined_call_operand.vmem [shape: f32[1,4], index: 3, kind: input, shape index: {}]
  %s4 = inlined_call_operand.vmem [shape: f32[9,4,8], index: 4, kind: input, shape index: {}]
  %s5 = inlined_call_operand.vmem [shape: f32[1,8], index: 5, kind: input, shape index: {}]
  %s6 = inlined_call_operand.vmem [shape: f32[1,8,32], index: 6, kind: input, shape index: {}]
  %s7 = inlined_call_operand.vmem [shape: f32[1,32], index: 7, kind: input, shape index: {}]
  %s8 = inlined_call_operand.vmem [shape: f32[16,32], index: 8, kind: input, shape index: {}]
  %s9 = inlined_call_operand.vmem [shape: f32[1,32], index: 9, kind: input, shape index: {}]
  %s10 = inlined_call_operand.vmem [shape: f32[32,4], index: 10, kind: input, shape index: {}]
  %s11 = inlined_call_operand.vmem [shape: f32[32,4], index: 11, kind: input, shape index: {}]
  %s12 = inlined_call_operand.vmem [shape: f32[1,4], index: 12, kind: input, shape index: {}]
  %s13 = inlined_call_operand.hbm [shape: f32[2,4], index: 13, kind: output, shape index: {}]
  %s14 = sld [smem:[#allocation0]]
  $region62: #{conv_qnet_forward.1} parent=0
    _
  %s16 = ssub.s32 1, %s14
  %s17 = scalar_select 0, %s16, %s14
  $region1: #{conv_qnet_forward.1} parent=0
    #allocation5 [shape = 'u8[1024]{0}', space=vmem, size = 0x400, scoped, tag = 'output window, operand 0, single buffered']
    #allocation6 [shape = 's32[1]{0}', space=sflag, size = 0x4, scoped, tag = 'scoped memory for conv_qnet_forward.1']
    %18 = vsyncpa [#allocation6], 0
    // Predicated region
    $region2: #{conv_qnet_forward.1} parent=1 // pred_check
      _
    $region3: #{conv_qnet_forward.1} parent=1 // pred_check_branch
      %20 = sbr.rel (0) target = $region5
    $region4: #{conv_qnet_forward.1} parent=1 // pred_region
      _
    $region5: #{conv_qnet_forward.1} parent=1 // pred_fallthru
      _
    // Predicated region
    $region6: #{conv_qnet_forward.1} parent=1 // pred_check
      _
    $region7: #{conv_qnet_forward.1} parent=1 // pred_check_branch
      %22 = sbr.rel (0) target = $region9
    $region8: #{conv_qnet_forward.1} parent=1 // pred_region
      _
    $region9: #{conv_qnet_forward.1} parent=1 // pred_fallthru
      _
    // Predicated region
    $region10: #{conv_qnet_forward.1} parent=1 // pred_check
      _
    $region11: #{conv_qnet_forward.1} parent=1 // pred_check_branch
      %24 = sbr.rel (0) target = $region13
    $region12: #{conv_qnet_forward.1} parent=1 // pred_region
      _
    $region13: #{conv_qnet_forward.1} parent=1 // pred_fallthru
      _
    // Predicated region
    $region14: #{conv_qnet_forward.1} parent=1 // pred_check
      _
    $region15: #{conv_qnet_forward.1} parent=1 // pred_check_branch
      %26 = sbr.rel (0) target = $region17
    $region16: #{conv_qnet_forward.1} parent=1 // pred_region
      _
    $region17: #{conv_qnet_forward.1} parent=1 // pred_fallthru
      _
    // Predicated region
    $region18: #{conv_qnet_forward.1} parent=1 // pred_check
      _
    $region19: #{conv_qnet_forward.1} parent=1 // pred_check_branch
      %28 = sbr.rel (0) target = $region21
    $region20: #{conv_qnet_forward.1} parent=1 // pred_region
      _
    $region21: #{conv_qnet_forward.1} parent=1 // pred_fallthru
      _
    // Predicated region
    $region22: #{conv_qnet_forward.1} parent=1 // pred_check
      _
    $region23: #{conv_qnet_forward.1} parent=1 // pred_check_branch
      %30 = sbr.rel (0) target = $region25
    $region24: #{conv_qnet_forward.1} parent=1 // pred_region
      _
    $region25: #{conv_qnet_forward.1} parent=1 // pred_fallthru
      _
    // Predicated region
    $region26: #{conv_qnet_forward.1} parent=1 // pred_check
      _
    $region27: #{conv_qnet_forward.1} parent=1 // pred_check_branch
      %32 = sbr.rel (0) target = $region29
    $region28: #{conv_qnet_forward.1} parent=1 // pred_region
      _
    $region29: #{conv_qnet_forward.1} parent=1 // pred_fallthru
      _
    // Predicated region
    $region30: #{conv_qnet_forward.1} parent=1 // pred_check
      _
    $region31: #{conv_qnet_forward.1} parent=1 // pred_check_branch
      %34 = sbr.rel (0) target = $region33
    $region32: #{conv_qnet_forward.1} parent=1 // pred_region
      _
    $region33: #{conv_qnet_forward.1} parent=1 // pred_fallthru
      _
    // Predicated region
    $region34: #{conv_qnet_forward.1} parent=1 // pred_check
      _
    $region35: #{conv_qnet_forward.1} parent=1 // pred_check_branch
      %36 = sbr.rel (0) target = $region37
    $region36: #{conv_qnet_forward.1} parent=1 // pred_region
      _
    $region37: #{conv_qnet_forward.1} parent=1 // pred_fallthru
      _
    // Predicated region
    $region38: #{conv_qnet_forward.1} parent=1 // pred_check
      _
    $region39: #{conv_qnet_forward.1} parent=1 // pred_check_branch
      %38 = sbr.rel (0) target = $region41
    $region40: #{conv_qnet_forward.1} parent=1 // pred_region
      _
    $region41: #{conv_qnet_forward.1} parent=1 // pred_fallthru
      _
    // Predicated region
    $region42: #{conv_qnet_forward.1} parent=1 // pred_check
      _
    $region43: #{conv_qnet_forward.1} parent=1 // pred_check_branch
      %40 = sbr.rel (0) target = $region45
    $region44: #{conv_qnet_forward.1} parent=1 // pred_region
      _
    $region45: #{conv_qnet_forward.1} parent=1 // pred_fallthru
      _
    // Predicated region
    $region46: #{conv_qnet_forward.1} parent=1 // pred_check
      _
    $region47: #{conv_qnet_forward.1} parent=1 // pred_check_branch
      %42 = sbr.rel (0) target = $region49
    $region48: #{conv_qnet_forward.1} parent=1 // pred_region
      _
    $region49: #{conv_qnet_forward.1} parent=1 // pred_fallthru
      _
    // Predicated region
    $region50: #{conv_qnet_forward.1} parent=1 // pred_check
      _
    $region51: #{conv_qnet_forward.1} parent=1 // pred_check_branch
      %44 = sbr.rel (0) target = $region53
    $region52: #{conv_qnet_forward.1} parent=1 // pred_region
      _
    $region53: #{conv_qnet_forward.1} parent=1 // pred_fallthru
      _
    %v45 = vld [vmem:[%s0] sm:$0xff]
    %v46 = vld [vmem:[%s0 + $0x8] sm:$0xff]
    %v47 = vld [vmem:[%s0 + $0x10] sm:$0xff]
    %v48 = vld [vmem:[%s0 + $0x18] sm:$0xff]
    %v49 = vld [vmem:[%s0 + $0x20] sm:$0xff]
    %v50 = vld [vmem:[%s0 + $0x28] sm:$0xff]
    %v51 = vld [vmem:[%s0 + $0x30] sm:$0xff]
    %v52 = vld [vmem:[%s0 + $0x38] sm:$0xff]
    %v53 = vld [vmem:[%s0 + $0x40] sm:$0xff]
    %v54 = vld [vmem:[%s0 + $0x48] sm:$0xff]
    %v55 = vld [vmem:[%s0 + $0x50] sm:$0xff]
    %v56 = vld [vmem:[%s0 + $0x58] sm:$0xff]
    %v57 = vld [vmem:[%s0 + $0x60] sm:$0xff]
    %v58 = vld [vmem:[%s0 + $0x68] sm:$0xff]
    %v59 = vld [vmem:[%s0 + $0x70] sm:$0xff]
    %v60 = vld [vmem:[%s0 + $0x78] sm:$0xff]
    %v61 = vld [vmem:[%s0 + $0x80] sm:$0xff]
    %v62 = vld [vmem:[%s0 + $0x88] sm:$0xff]
    %v63 = vld [vmem:[%s0 + $0x90] sm:$0xff]
    %v64 = vld [vmem:[%s0 + $0x98] sm:$0xff]
    %v65 = vld [vmem:[%s2] sm:$0x3]
    %v66 = vld [vmem:[%s0 + $0x1] sm:$0xff]
    %v67 = vld [vmem:[%s0 + $0x9] sm:$0xff]
    %v68 = vld [vmem:[%s0 + $0x11] sm:$0xff]
    %v69 = vld [vmem:[%s0 + $0x19] sm:$0xff]
    %v70 = vld [vmem:[%s0 + $0x21] sm:$0xff]
    %v71 = vld [vmem:[%s0 + $0x29] sm:$0xff]
    %v72 = vld [vmem:[%s0 + $0x31] sm:$0xff]
    %v73 = vld [vmem:[%s0 + $0x39] sm:$0xff]
    %v74 = vld [vmem:[%s0 + $0x41] sm:$0xff]
    %v75 = vld [vmem:[%s0 + $0x49] sm:$0xff]
    %v76 = vld [vmem:[%s0 + $0x51] sm:$0xff]
    %v77 = vld [vmem:[%s0 + $0x59] sm:$0xff]
    %v78 = vld [vmem:[%s0 + $0x61] sm:$0xff]
    %v79 = vld [vmem:[%s0 + $0x69] sm:$0xff]
    %v80 = vld [vmem:[%s0 + $0x71] sm:$0xff]
    %v81 = vld [vmem:[%s0 + $0x79] sm:$0xff]
    %v82 = vld [vmem:[%s0 + $0x81] sm:$0xff]
    %v83 = vld [vmem:[%s0 + $0x89] sm:$0xff]
    %v84 = vld [vmem:[%s0 + $0x91] sm:$0xff]
    %v85 = vld [vmem:[%s0 + $0x99] sm:$0xff]
    %s86 = scalar_lea.vmem %s2, 2
    %v87 = vld [vmem:[%s86] sm:$0x3]
    %vm88 = vcmask 15360
    %v90 = vsel %vm88, %v66, 0
    %v93 = vsel %vm88, %v67, 0
    %v96 = vsel %vm88, %v68, 0
    %v99 = vsel %vm88, %v69, 0
    %v102 = vsel %vm88, %v70, 0
    %v105 = vsel %vm88, %v71, 0
    %v108 = vsel %vm88, %v72, 0
    %v111 = vsel %vm88, %v73, 0
    %v114 = vsel %vm88, %v74, 0
    %v117 = vsel %vm88, %v75, 0
    %v120 = vsel %vm88, %v76, 0
    %v123 = vsel %vm88, %v77, 0
    %v126 = vsel %vm88, %v78, 0
    %v129 = vsel %vm88, %v79, 0
    %v132 = vsel %vm88, %v80, 0
    %v135 = vsel %vm88, %v81, 0
    %v138 = vsel %vm88, %v82, 0
    %v141 = vsel %vm88, %v83, 0
    %v144 = vsel %vm88, %v84, 0
    %v147 = vsel %vm88, %v85, 0
    %vm149 = vcmask 1041408
    %v151 = vsel %vm149, %v87, 0
    %153 = vmatprep.subr.mxu0 0.0
    %154 = vmatpush1.msra.mxu0 %v151
    %155 = vmatprep.subr.mxu0 0.0
    %156 = vmatpush1.msra.mxu0 0.0
    %157 = vmatprep.subr.mxu0 0.0
    %158 = vmatpush1.msra.mxu0 0.0
    %159 = vmatprep.subr.mxu0 0.0
    %160 = vmatpush1.msra.mxu0 0.0
    %161 = vmatprep.subr.mxu0 0.0
    %162 = vmatpush1.msra.mxu0 0.0
    %163 = vmatprep.subr.mxu0 0.0
    %164 = vmatpush1.msra.mxu0 0.0
    %165 = vmatprep.subr.mxu0 0.0
    %166 = vmatpush1.msra.mxu0 0.0
    %167 = vmatprep.subr.mxu0 0.0
    %168 = vmatpush1.msra.mxu0 0.0
    %169 = vmatprep.subr.mxu0 0.0
    %170 = vmatpush1.msra.mxu0 0.0
    %171 = vmatprep.subr.mxu0 0.0
    %172 = vmatpush1.msra.mxu0 0.0
    %173 = vmatprep.subr.mxu0 0.0
    %174 = vmatpush1.msra.mxu0 0.0
    %175 = vmatprep.subr.mxu0 0.0
    %176 = vmatpush1.msra.mxu0 0.0
    %177 = vmatprep.subr.mxu0 0.0
    %178 = vmatpush1.msra.mxu0 0.0
    %179 = vmatprep.subr.mxu0 0.0
    %180 = vmatpush1.msra.mxu0 0.0
    %181 = vmatprep.subr.mxu0 0.0
    %182 = vmatpush1.msra.mxu0 0.0
    %183 = vmatprep.subr.mxu0 0.0
    %184 = vmatpush1.msra.mxu0 0.0
    %185 = vmatprep.subr.mxu0 0.0
    %186 = vmatpush1.msra.mxu0 0.0
    %187 = vmatprep.subr.mxu0 0.0
    %188 = vmatpush1.msra.mxu0 0.0
    %189 = vmatprep.subr.mxu0 0.0
    %190 = vmatpush1.msra.mxu0 0.0
    %191 = vmatprep.subr.mxu0 0.0
    %192 = vmatpush1.msra.mxu0 0.0
    %193 = vmatprep.subr.mxu0 0.0
    %194 = vmatpush1.msra.mxu0 0.0
    %195 = vmatprep.subr.mxu0 0.0
    %196 = vmatpush1.msra.mxu0 0.0
    %197 = vmatprep.subr.mxu0 0.0
    %198 = vmatpush1.msra.mxu0 0.0
    %199 = vmatprep.subr.mxu0 0.0
    %200 = vmatpush1.msra.mxu0 0.0
    %201 = vmatprep.subr.mxu0 0.0
    %202 = vmatpush1.msra.mxu0 0.0
    %203 = vmatprep.subr.mxu0 0.0
    %204 = vmatpush1.msra.mxu0 0.0
    %205 = vmatprep.subr.mxu0 0.0
    %206 = vmatpush1.msra.mxu0 0.0
    %207 = vmatprep.subr.mxu0 0.0
    %208 = vmatpush1.msra.mxu0 0.0
    %209 = vmatprep.subr.mxu0 0.0
    %210 = vmatpush1.msra.mxu0 0.0
    %211 = vmatprep.subr.mxu0 0.0
    %212 = vmatpush1.msra.mxu0 0.0
    %213 = vmatprep.subr.mxu0 0.0
    %214 = vmatpush1.msra.mxu0 0.0
    %215 = vmatprep.subr.mxu0 0.0
    %216 = vmatpush1.msra.mxu0 0.0
    %217 = vmatprep.mubr.f32.mxu0 0.0
    %218 = vmatmul.mubr.f32.gmra.mrb[0].mxu0 %v90
    %v219 = vpop.f32.mrb[0].mxu0
    %v220 = vadd.f32 0.0, %v219
    %v221 = vpop.f32.mrb[0].mxu0
    %222 = vmatprep.mubr.f32.mxu0 0.0
    %223 = vmatmul.mubr.f32.gmra.mrb[0].mxu0 %v93
    %v224 = vpop.f32.mrb[0].mxu0
    %v225 = vadd.f32 0.0, %v224
    %v226 = vpop.f32.mrb[0].mxu0
    %227 = vmatprep.mubr.f32.mxu0 0.0
    %228 = vmatmul.mubr.f32.gmra.mrb[0].mxu0 %v96
    %v229 = vpop.f32.mrb[0].mxu0
    %v230 = vadd.f32 0.0, %v229
    %v231 = vpop.f32.mrb[0].mxu0
    %232 = vmatprep.mubr.f32.mxu0 0.0
    %233 = vmatmul.mubr.f32.gmra.mrb[0].mxu0 %v99
    %v234 = vpop.f32.mrb[0].mxu0
    %v235 = vadd.f32 0.0, %v234
    %v236 = vpop.f32.mrb[0].mxu0
    %237 = vmatprep.mubr.f32.mxu0 0.0
    %238 = vmatmul.mubr.f32.gmra.mrb[0].mxu0 %v102
    %v239 = vpop.f32.mrb[0].mxu0
    %v240 = vadd.f32 0.0, %v239
    %v241 = vpop.f32.mrb[0].mxu0
    %242 = vmatprep.mubr.f32.mxu0 0.0
    %243 = vmatmul.mubr.f32.gmra.mrb[0].mxu0 %v105
    %v244 = vpop.f32.mrb[0].mxu0
    %v245 = vadd.f32 0.0, %v244
    %v246 = vpop.f32.mrb[0].mxu0
    %247 = vmatprep.mubr.f32.mxu0 0.0
    %248 = vmatmul.mubr.f32.gmra.mrb[0].mxu0 %v108
    %v249 = vpop.f32.mrb[0].mxu0
    %v250 = vadd.f32 0.0, %v249
    %v251 = vpop.f32.mrb[0].mxu0
    %252 = vmatprep.mubr.f32.mxu0 0.0
    %253 = vmatmul.mubr.f32.gmra.mrb[0].mxu0 %v111
    %v254 = vpop.f32.mrb[0].mxu0
    %v255 = vadd.f32 0.0, %v254
    %v256 = vpop.f32.mrb[0].mxu0
    %257 = vmatprep.mubr.f32.mxu0 0.0
    %258 = vmatmul.mubr.f32.gmra.mrb[0].mxu0 %v114
    %v259 = vpop.f32.mrb[0].mxu0
    %v260 = vadd.f32 0.0, %v259
    %v261 = vpop.f32.mrb[0].mxu0
    %262 = vmatprep.mubr.f32.mxu0 0.0
    %263 = vmatmul.mubr.f32.gmra.mrb[0].mxu0 %v117
    %v264 = vpop.f32.mrb[0].mxu0
    %v265 = vadd.f32 0.0, %v264
    %v266 = vpop.f32.mrb[0].mxu0
    %267 = vmatprep.mubr.f32.mxu0 0.0
    %268 = vmatmul.mubr.f32.gmra.mrb[0].mxu0 %v120
    %v269 = vpop.f32.mrb[0].mxu0
    %v270 = vadd.f32 0.0, %v269
    %v271 = vpop.f32.mrb[0].mxu0
    %272 = vmatprep.mubr.f32.mxu0 0.0
    %273 = vmatmul.mubr.f32.gmra.mrb[0].mxu0 %v123
    %v274 = vpop.f32.mrb[0].mxu0
    %v275 = vadd.f32 0.0, %v274
    %v276 = vpop.f32.mrb[0].mxu0
    %277 = vmatprep.mubr.f32.mxu0 0.0
    %278 = vmatmul.mubr.f32.gmra.mrb[0].mxu0 %v126
    %v279 = vpop.f32.mrb[0].mxu0
    %v280 = vadd.f32 0.0, %v279
    %v281 = vpop.f32.mrb[0].mxu0
    %282 = vmatprep.mubr.f32.mxu0 0.0
    %283 = vmatmul.mubr.f32.gmra.mrb[0].mxu0 %v129
    %v284 = vpop.f32.mrb[0].mxu0
    %v285 = vadd.f32 0.0, %v284
    %v286 = vpop.f32.mrb[0].mxu0
    %287 = vmatprep.mubr.f32.mxu0 0.0
    %288 = vmatmul.mubr.f32.gmra.mrb[0].mxu0 %v132
    %v289 = vpop.f32.mrb[0].mxu0
    %v290 = vadd.f32 0.0, %v289
    %v291 = vpop.f32.mrb[0].mxu0
    %292 = vmatprep.mubr.f32.mxu0 0.0
    %293 = vmatmul.mubr.f32.gmra.mrb[0].mxu0 %v135
    %v294 = vpop.f32.mrb[0].mxu0
    %v295 = vadd.f32 0.0, %v294
    %v296 = vpop.f32.mrb[0].mxu0
    %297 = vmatprep.mubr.f32.mxu0 0.0
    %298 = vmatmul.mubr.f32.gmra.mrb[0].mxu0 %v138
    %v299 = vpop.f32.mrb[0].mxu0
    %v300 = vadd.f32 0.0, %v299
    %v301 = vpop.f32.mrb[0].mxu0
    %302 = vmatprep.mubr.f32.mxu0 0.0
    %303 = vmatmul.mubr.f32.gmra.mrb[0].mxu0 %v141
    %v304 = vpop.f32.mrb[0].mxu0
    %v305 = vadd.f32 0.0, %v304
    %v306 = vpop.f32.mrb[0].mxu0
    %307 = vmatprep.mubr.f32.mxu0 0.0
    %308 = vmatmul.mubr.f32.gmra.mrb[0].mxu0 %v144
    %v309 = vpop.f32.mrb[0].mxu0
    %v310 = vadd.f32 0.0, %v309
    %v311 = vpop.f32.mrb[0].mxu0
    %312 = vmatprep.mubr.f32.mxu0 0.0
    %313 = vmatmul.mubr.f32.gmra.mrb[0].mxu0 %v147
    %v314 = vpop.f32.mrb[0].mxu0
    %v315 = vadd.f32 0.0, %v314
    %v316 = vpop.f32.mrb[0].mxu0
    %317 = vdwg.mxu0
    %v319 = vsel %vm88, %v45, 0
    %v322 = vsel %vm88, %v46, 0
    %v325 = vsel %vm88, %v47, 0
    %v328 = vsel %vm88, %v48, 0
    %v331 = vsel %vm88, %v49, 0
    %v334 = vsel %vm88, %v50, 0
    %v337 = vsel %vm88, %v51, 0
    %v340 = vsel %vm88, %v52, 0
    %v343 = vsel %vm88, %v53, 0
    %v346 = vsel %vm88, %v54, 0
    %v349 = vsel %vm88, %v55, 0
    %v352 = vsel %vm88, %v56, 0
    %v355 = vsel %vm88, %v57, 0
    %v358 = vsel %vm88, %v58, 0
    %v361 = vsel %vm88, %v59, 0
    %v364 = vsel %vm88, %v60, 0
    %v367 = vsel %vm88, %v61, 0
    %v370 = vsel %vm88, %v62, 0
    %v373 = vsel %vm88, %v63, 0
    %v376 = vsel %vm88, %v64, 0
    %v379 = vsel %vm149, %v65, 0
    %381 = vmatprep.subr.mxu0 0.0
    %382 = vmatpush1.msra.mxu0 %v379
    %383 = vmatprep.subr.mxu0 0.0
    %384 = vmatpush1.msra.mxu0 0.0
    %385 = vmatprep.subr.mxu0 0.0
    %386 = vmatpush1.msra.mxu0 0.0
    %387 = vmatprep.subr.mxu0 0.0
    %388 = vmatpush1.msra.mxu0 0.0
    %389 = vmatprep.subr.mxu0 0.0
    %390 = vmatpush1.msra.mxu0 0.0
    %391 = vmatprep.subr.mxu0 0.0
    %392 = vmatpush1.msra.mxu0 0.0
    %393 = vmatprep.subr.mxu0 0.0
    %394 = vmatpush1.msra.mxu0 0.0
    %395 = vmatprep.subr.mxu0 0.0
    %396 = vmatpush1.msra.mxu0 0.0
    %397 = vmatprep.subr.mxu0 0.0
    %398 = vmatpush1.msra.mxu0 0.0
    %399 = vmatprep.subr.mxu0 0.0
    %400 = vmatpush1.msra.mxu0 0.0
    %401 = vmatprep.subr.mxu0 0.0
    %402 = vmatpush1.msra.mxu0 0.0
    %403 = vmatprep.subr.mxu0 0.0
    %404 = vmatpush1.msra.mxu0 0.0
    %405 = vmatprep.subr.mxu0 0.0
    %406 = vmatpush1.msra.mxu0 0.0
    %407 = vmatprep.subr.mxu0 0.0
    %408 = vmatpush1.msra.mxu0 0.0
    %409 = vmatprep.subr.mxu0 0.0
    %410 = vmatpush1.msra.mxu0 0.0
    %411 = vmatprep.subr.mxu0 0.0
    %412 = vmatpush1.msra.mxu0 0.0
    %413 = vmatprep.subr.mxu0 0.0
    %414 = vmatpush1.msra.mxu0 0.0
    %415 = vmatprep.subr.mxu0 0.0
    %416 = vmatpush1.msra.mxu0 0.0
    %417 = vmatprep.subr.mxu0 0.0
    %418 = vmatpush1.msra.mxu0 0.0
    %419 = vmatprep.subr.mxu0 0.0
    %420 = vmatpush1.msra.mxu0 0.0
    %421 = vmatprep.subr.mxu0 0.0
    %422 = vmatpush1.msra.mxu0 0.0
    %423 = vmatprep.subr.mxu0 0.0
    %424 = vmatpush1.msra.mxu0 0.0
    %425 = vmatprep.subr.mxu0 0.0
    %426 = vmatpush1.msra.mxu0 0.0
    %427 = vmatprep.subr.mxu0 0.0
    %428 = vmatpush1.msra.mxu0 0.0
    %429 = vmatprep.subr.mxu0 0.0
    %430 = vmatpush1.msra.mxu0 0.0
    %431 = vmatprep.subr.mxu0 0.0
    %432 = vmatpush1.msra.mxu0 0.0
    %433 = vmatprep.subr.mxu0 0.0
    %434 = vmatpush1.msra.mxu0 0.0
    %435 = vmatprep.subr.mxu0 0.0
    %436 = vmatpush1.msra.mxu0 0.0
    %437 = vmatprep.subr.mxu0 0.0
    %438 = vmatpush1.msra.mxu0 0.0
    %439 = vmatprep.subr.mxu0 0.0
    %440 = vmatpush1.msra.mxu0 0.0
    %441 = vmatprep.subr.mxu0 0.0
    %442 = vmatpush1.msra.mxu0 0.0
    %443 = vmatprep.subr.mxu0 0.0
    %444 = vmatpush1.msra.mxu0 0.0
    %445 = vmatprep.mubr.f32.mxu0 0.0
    %446 = vmatmul.mubr.f32.gmra.mrb[0].mxu0 %v319
    %v447 = vpop.f32.mrb[0].mxu0
    %v448 = vadd.f32 %v220, %v447
    %v449 = vpop.f32.mrb[0].mxu0
    %450 = vmatprep.mubr.f32.mxu0 0.0
    %451 = vmatmul.mubr.f32.gmra.mrb[0].mxu0 %v322
    %v452 = vpop.f32.mrb[0].mxu0
    %v453 = vadd.f32 %v225, %v452
    %v454 = vpop.f32.mrb[0].mxu0
    %455 = vmatprep.mubr.f32.mxu0 0.0
    %456 = vmatmul.mubr.f32.gmra.mrb[0].mxu0 %v325
    %v457 = vpop.f32.mrb[0].mxu0
    %v458 = vadd.f32 %v230, %v457
    %v459 = vpop.f32.mrb[0].mxu0
    %460 = vmatprep.mubr.f32.mxu0 0.0
    %461 = vmatmul.mubr.f32.gmra.mrb[0].mxu0 %v328
    %v462 = vpop.f32.mrb[0].mxu0
    %v463 = vadd.f32 %v235, %v462
    %v464 = vpop.f32.mrb[0].mxu0
    %465 = vmatprep.mubr.f32.mxu0 0.0
    %466 = vmatmul.mubr.f32.gmra.mrb[0].mxu0 %v331
    %v467 = vpop.f32.mrb[0].mxu0
    %v468 = vadd.f32 %v240, %v467
    %v469 = vpop.f32.mrb[0].mxu0
    %470 = vmatprep.mubr.f32.mxu0 0.0
    %471 = vmatmul.mubr.f32.gmra.mrb[0].mxu0 %v334
    %v472 = vpop.f32.mrb[0].mxu0
    %v473 = vadd.f32 %v245, %v472
    %v474 = vpop.f32.mrb[0].mxu0
    %475 = vmatprep.mubr.f32.mxu0 0.0
    %476 = vmatmul.mubr.f32.gmra.mrb[0].mxu0 %v337
    %v477 = vpop.f32.mrb[0].mxu0
    %v478 = vadd.f32 %v250, %v477
    %v479 = vpop.f32.mrb[0].mxu0
    %480 = vmatprep.mubr.f32.mxu0 0.0
    %481 = vmatmul.mubr.f32.gmra.mrb[0].mxu0 %v340
    %v482 = vpop.f32.mrb[0].mxu0
    %v483 = vadd.f32 %v255, %v482
    %v484 = vpop.f32.mrb[0].mxu0
    %485 = vmatprep.mubr.f32.mxu0 0.0
    %486 = vmatmul.mubr.f32.gmra.mrb[0].mxu0 %v343
    %v487 = vpop.f32.mrb[0].mxu0
    %v488 = vadd.f32 %v260, %v487
    %v489 = vpop.f32.mrb[0].mxu0
    %490 = vmatprep.mubr.f32.mxu0 0.0
    %491 = vmatmul.mubr.f32.gmra.mrb[0].mxu0 %v346
    %v492 = vpop.f32.mrb[0].mxu0
    %v493 = vadd.f32 %v265, %v492
    %v494 = vpop.f32.mrb[0].mxu0
    %495 = vmatprep.mubr.f32.mxu0 0.0
    %496 = vmatmul.mubr.f32.gmra.mrb[0].mxu0 %v349
    %v497 = vpop.f32.mrb[0].mxu0
    %v498 = vadd.f32 %v270, %v497
    %v499 = vpop.f32.mrb[0].mxu0
    %500 = vmatprep.mubr.f32.mxu0 0.0
    %501 = vmatmul.mubr.f32.gmra.mrb[0].mxu0 %v352
    %v502 = vpop.f32.mrb[0].mxu0
    %v503 = vadd.f32 %v275, %v502
    %v504 = vpop.f32.mrb[0].mxu0
    %505 = vmatprep.mubr.f32.mxu0 0.0
    %506 = vmatmul.mubr.f32.gmra.mrb[0].mxu0 %v355
    %v507 = vpop.f32.mrb[0].mxu0
    %v508 = vadd.f32 %v280, %v507
    %v509 = vpop.f32.mrb[0].mxu0
    %510 = vmatprep.mubr.f32.mxu0 0.0
    %511 = vmatmul.mubr.f32.gmra.mrb[0].mxu0 %v358
    %v512 = vpop.f32.mrb[0].mxu0
    %v513 = vadd.f32 %v285, %v512
    %v514 = vpop.f32.mrb[0].mxu0
    %515 = vmatprep.mubr.f32.mxu0 0.0
    %516 = vmatmul.mubr.f32.gmra.mrb[0].mxu0 %v361
    %v517 = vpop.f32.mrb[0].mxu0
    %v518 = vadd.f32 %v290, %v517
    %v519 = vpop.f32.mrb[0].mxu0
    %520 = vmatprep.mubr.f32.mxu0 0.0
    %521 = vmatmul.mubr.f32.gmra.mrb[0].mxu0 %v364
    %v522 = vpop.f32.mrb[0].mxu0
    %v523 = vadd.f32 %v295, %v522
    %v524 = vpop.f32.mrb[0].mxu0
    %525 = vmatprep.mubr.f32.mxu0 0.0
    %526 = vmatmul.mubr.f32.gmra.mrb[0].mxu0 %v367
    %v527 = vpop.f32.mrb[0].mxu0
    %v528 = vadd.f32 %v300, %v527
    %v529 = vpop.f32.mrb[0].mxu0
    %530 = vmatprep.mubr.f32.mxu0 0.0
    %531 = vmatmul.mubr.f32.gmra.mrb[0].mxu0 %v370
    %v532 = vpop.f32.mrb[0].mxu0
    %v533 = vadd.f32 %v305, %v532
    %v534 = vpop.f32.mrb[0].mxu0
    %535 = vmatprep.mubr.f32.mxu0 0.0
    %536 = vmatmul.mubr.f32.gmra.mrb[0].mxu0 %v373
    %v537 = vpop.f32.mrb[0].mxu0
    %v538 = vadd.f32 %v310, %v537
    %v539 = vpop.f32.mrb[0].mxu0
    %540 = vmatprep.mubr.f32.mxu0 0.0
    %541 = vmatmul.mubr.f32.gmra.mrb[0].mxu0 %v376
    %v542 = vpop.f32.mrb[0].mxu0
    %v543 = vadd.f32 %v315, %v542
    %v544 = vpop.f32.mrb[0].mxu0
    %545 = vdwg.mxu0
    %v546 = vld [vmem:[%s0 + $0x2] sm:$0xff]
    %v547 = vld [vmem:[%s0 + $0xa] sm:$0xff]
    %v548 = vld [vmem:[%s0 + $0x12] sm:$0xff]
    %v549 = vld [vmem:[%s0 + $0x1a] sm:$0xff]
    %v550 = vld [vmem:[%s0 + $0x22] sm:$0xff]
    %v551 = vld [vmem:[%s0 + $0x2a] sm:$0xff]
    %v552 = vld [vmem:[%s0 + $0x32] sm:$0xff]
    %v553 = vld [vmem:[%s0 + $0x3a] sm:$0xff]
    %v554 = vld [vmem:[%s0 + $0x42] sm:$0xff]
    %v555 = vld [vmem:[%s0 + $0x4a] sm:$0xff]
    %v556 = vld [vmem:[%s0 + $0x52] sm:$0xff]
    %v557 = vld [vmem:[%s0 + $0x5a] sm:$0xff]
    %v558 = vld [vmem:[%s0 + $0x62] sm:$0xff]
    %v559 = vld [vmem:[%s0 + $0x6a] sm:$0xff]
    %v560 = vld [vmem:[%s0 + $0x72] sm:$0xff]
    %v561 = vld [vmem:[%s0 + $0x7a] sm:$0xff]
    %v562 = vld [vmem:[%s0 + $0x82] sm:$0xff]
    %v563 = vld [vmem:[%s0 + $0x8a] sm:$0xff]
    %v564 = vld [vmem:[%s0 + $0x92] sm:$0xff]
    %v565 = vld [vmem:[%s0 + $0x9a] sm:$0xff]
    %s566 = scalar_lea.vmem %s2, 4
    %v567 = vld [vmem:[%s566] sm:$0x3]
    %v569 = vsel %vm88, %v546, 0
    %v572 = vsel %vm88, %v547, 0
    %v575 = vsel %vm88, %v548, 0
    %v578 = vsel %vm88, %v549, 0
    %v581 = vsel %vm88, %v550, 0
    %v584 = vsel %vm88, %v551, 0
    %v587 = vsel %vm88, %v552, 0
    %v590 = vsel %vm88, %v553, 0
    %v593 = vsel %vm88, %v554, 0
    %v596 = vsel %vm88, %v555, 0
    %v599 = vsel %vm88, %v556, 0
    %v602 = vsel %vm88, %v557, 0
    %v605 = vsel %vm88, %v558, 0
    %v608 = vsel %vm88, %v559, 0
    %v611 = vsel %vm88, %v560, 0
    %v614 = vsel %vm88, %v561, 0
    %v617 = vsel %vm88, %v562, 0
    %v620 = vsel %vm88, %v563, 0
    %v623 = vsel %vm88, %v564, 0
    %v626 = vsel %vm88, %v565, 0
    %v629 = vsel %vm149, %v567, 0
    %631 = vmatprep.subr.mxu0 0.0
    %632 = vmatpush1.msra.mxu0 %v629
    %633 = vmatprep.subr.mxu0 0.0
    %634 = vmatpush1.msra.mxu0 0.0
    %635 = vmatprep.subr.mxu0 0.0
    %636 = vmatpush1.msra.mxu0 0.0
    %637 = vmatprep.subr.mxu0 0.0
    %638 = vmatpush1.msra.mxu0 0.0
    %639 = vmatprep.subr.mxu0 0.0
    %640 = vmatpush1.msra.mxu0 0.0
    %641 = vmatprep.subr.mxu0 0.0
    %642 = vmatpush1.msra.mxu0 0.0
    %643 = vmatprep.subr.mxu0 0.0
    %644 = vmatpush1.msra.mxu0 0.0
    %645 = vmatprep.subr.mxu0 0.0
    %646 = vmatpush1.msra.mxu0 0.0
    %647 = vmatprep.subr.mxu0 0.0
    %648 = vmatpush1.msra.mxu0 0.0
    %649 = vmatprep.subr.mxu0 0.0
    %650 = vmatpush1.msra.mxu0 0.0
    %651 = vmatprep.subr.mxu0 0.0
    %652 = vmatpush1.msra.mxu0 0.0
    %653 = vmatprep.subr.mxu0 0.0
    %654 = vmatpush1.msra.mxu0 0.0
    %655 = vmatprep.subr.mxu0 0.0
    %656 = vmatpush1.msra.mxu0 0.0
    %657 = vmatprep.subr.mxu0 0.0
    %658 = vmatpush1.msra.mxu0 0.0
    %659 = vmatprep.subr.mxu0 0.0
    %660 = vmatpush1.msra.mxu0 0.0
    %661 = vmatprep.subr.mxu0 0.0
    %662 = vmatpush1.msra.mxu0 0.0
    %663 = vmatprep.subr.mxu0 0.0
    %664 = vmatpush1.msra.mxu0 0.0
    %665 = vmatprep.subr.mxu0 0.0
    %666 = vmatpush1.msra.mxu0 0.0
    %667 = vmatprep.subr.mxu0 0.0
    %668 = vmatpush1.msra.mxu0 0.0
    %669 = vmatprep.subr.mxu0 0.0
    %670 = vmatpush1.msra.mxu0 0.0
    %671 = vmatprep.subr.mxu0 0.0
    %672 = vmatpush1.msra.mxu0 0.0
    %673 = vmatprep.subr.mxu0 0.0
    %674 = vmatpush1.msra.mxu0 0.0
    %675 = vmatprep.subr.mxu0 0.0
    %676 = vmatpush1.msra.mxu0 0.0
    %677 = vmatprep.subr.mxu0 0.0
    %678 = vmatpush1.msra.mxu0 0.0
    %679 = vmatprep.subr.mxu0 0.0
    %680 = vmatpush1.msra.mxu0 0.0
    %681 = vmatprep.subr.mxu0 0.0
    %682 = vmatpush1.msra.mxu0 0.0
    %683 = vmatprep.subr.mxu0 0.0
    %684 = vmatpush1.msra.mxu0 0.0
    %685 = vmatprep.subr.mxu0 0.0
    %686 = vmatpush1.msra.mxu0 0.0
    %687 = vmatprep.subr.mxu0 0.0
    %688 = vmatpush1.msra.mxu0 0.0
    %689 = vmatprep.subr.mxu0 0.0
    %690 = vmatpush1.msra.mxu0 0.0
    %691 = vmatprep.subr.mxu0 0.0
    %692 = vmatpush1.msra.mxu0 0.0
    %693 = vmatprep.subr.mxu0 0.0
    %694 = vmatpush1.msra.mxu0 0.0
    %695 = vmatprep.mubr.f32.mxu0 0.0
    %696 = vmatmul.mubr.f32.gmra.mrb[0].mxu0 %v569
    %v697 = vpop.f32.mrb[0].mxu0
    %v698 = vadd.f32 0.0, %v697
    %v699 = vpop.f32.mrb[0].mxu0
    %700 = vmatprep.mubr.f32.mxu0 0.0
    %701 = vmatmul.mubr.f32.gmra.mrb[0].mxu0 %v572
    %v702 = vpop.f32.mrb[0].mxu0
    %v703 = vadd.f32 0.0, %v702
    %v704 = vpop.f32.mrb[0].mxu0
    %705 = vmatprep.mubr.f32.mxu0 0.0
    %706 = vmatmul.mubr.f32.gmra.mrb[0].mxu0 %v575
    %v707 = vpop.f32.mrb[0].mxu0
    %v708 = vadd.f32 0.0, %v707
    %v709 = vpop.f32.mrb[0].mxu0
    %710 = vmatprep.mubr.f32.mxu0 0.0
    %711 = vmatmul.mubr.f32.gmra.mrb[0].mxu0 %v578
    %v712 = vpop.f32.mrb[0].mxu0
    %v713 = vadd.f32 0.0, %v712
    %v714 = vpop.f32.mrb[0].mxu0
    %715 = vmatprep.mubr.f32.mxu0 0.0
    %716 = vmatmul.mubr.f32.gmra.mrb[0].mxu0 %v581
    %v717 = vpop.f32.mrb[0].mxu0
    %v718 = vadd.f32 0.0, %v717
    %v719 = vpop.f32.mrb[0].mxu0
    %720 = vmatprep.mubr.f32.mxu0 0.0
    %721 = vmatmul.mubr.f32.gmra.mrb[0].mxu0 %v584
    %v722 = vpop.f32.mrb[0].mxu0
    %v723 = vadd.f32 0.0, %v722
    %v724 = vpop.f32.mrb[0].mxu0
    %725 = vmatprep.mubr.f32.mxu0 0.0
    %726 = vmatmul.mubr.f32.gmra.mrb[0].mxu0 %v587
    %v727 = vpop.f32.mrb[0].mxu0
    %v728 = vadd.f32 0.0, %v727
    %v729 = vpop.f32.mrb[0].mxu0
    %730 = vmatprep.mubr.f32.mxu0 0.0
    %731 = vmatmul.mubr.f32.gmra.mrb[0].mxu0 %v590
    %v732 = vpop.f32.mrb[0].mxu0
    %v733 = vadd.f32 0.0, %v732
    %v734 = vpop.f32.mrb[0].mxu0
    %735 = vmatprep.mubr.f32.mxu0 0.0
    %736 = vmatmul.mubr.f32.gmra.mrb[0].mxu0 %v593
    %v737 = vpop.f32.mrb[0].mxu0
    %v738 = vadd.f32 0.0, %v737
    %v739 = vpop.f32.mrb[0].mxu0
    %740 = vmatprep.mubr.f32.mxu0 0.0
    %741 = vmatmul.mubr.f32.gmra.mrb[0].mxu0 %v596
    %v742 = vpop.f32.mrb[0].mxu0
    %v743 = vadd.f32 0.0, %v742
    %v744 = vpop.f32.mrb[0].mxu0
    %745 = vmatprep.mubr.f32.mxu0 0.0
    %746 = vmatmul.mubr.f32.gmra.mrb[0].mxu0 %v599
    %v747 = vpop.f32.mrb[0].mxu0
    %v748 = vadd.f32 0.0, %v747
    %v749 = vpop.f32.mrb[0].mxu0
    %750 = vmatprep.mubr.f32.mxu0 0.0
    %751 = vmatmul.mubr.f32.gmra.mrb[0].mxu0 %v602
    %v752 = vpop.f32.mrb[0].mxu0
    %v753 = vadd.f32 0.0, %v752
    %v754 = vpop.f32.mrb[0].mxu0
    %755 = vmatprep.mubr.f32.mxu0 0.0
    %756 = vmatmul.mubr.f32.gmra.mrb[0].mxu0 %v605
    %v757 = vpop.f32.mrb[0].mxu0
    %v758 = vadd.f32 0.0, %v757
    %v759 = vpop.f32.mrb[0].mxu0
    %760 = vmatprep.mubr.f32.mxu0 0.0
    %761 = vmatmul.mubr.f32.gmra.mrb[0].mxu0 %v608
    %v762 = vpop.f32.mrb[0].mxu0
    %v763 = vadd.f32 0.0, %v762
    %v764 = vpop.f32.mrb[0].mxu0
    %765 = vmatprep.mubr.f32.mxu0 0.0
    %766 = vmatmul.mubr.f32.gmra.mrb[0].mxu0 %v611
    %v767 = vpop.f32.mrb[0].mxu0
    %v768 = vadd.f32 0.0, %v767
    %v769 = vpop.f32.mrb[0].mxu0
    %770 = vmatprep.mubr.f32.mxu0 0.0
    %771 = vmatmul.mubr.f32.gmra.mrb[0].mxu0 %v614
    %v772 = vpop.f32.mrb[0].mxu0
    %v773 = vadd.f32 0.0, %v772
    %v774 = vpop.f32.mrb[0].mxu0
    %775 = vmatprep.mubr.f32.mxu0 0.0
    %776 = vmatmul.mubr.f32.gmra.mrb[0].mxu0 %v617
    %v777 = vpop.f32.mrb[0].mxu0
    %v778 = vadd.f32 0.0, %v777
    %v779 = vpop.f32.mrb[0].mxu0
    %780 = vmatprep.mubr.f32.mxu0 0.0
    %781 = vmatmul.mubr.f32.gmra.mrb[0].mxu0 %v620
    %v782 = vpop.f32.mrb[0].mxu0
    %v783 = vadd.f32 0.0, %v782
    %v784 = vpop.f32.mrb[0].mxu0
    %785 = vmatprep.mubr.f32.mxu0 0.0
    %786 = vmatmul.mubr.f32.gmra.mrb[0].mxu0 %v623
    %v787 = vpop.f32.mrb[0].mxu0
    %v788 = vadd.f32 0.0, %v787
    %v789 = vpop.f32.mrb[0].mxu0
    %790 = vmatprep.mubr.f32.mxu0 0.0
    %791 = vmatmul.mubr.f32.gmra.mrb[0].mxu0 %v626
    %v792 = vpop.f32.mrb[0].mxu0
    %v793 = vadd.f32 0.0, %v792
    %v794 = vpop.f32.mrb[0].mxu0
    %795 = vdwg.mxu0
    %v796 = vadd.f32 %v448, %v698
    %v797 = vadd.f32 %v453, %v703
    %v798 = vadd.f32 %v458, %v708
    %v799 = vadd.f32 %v463, %v713
    %v800 = vadd.f32 %v468, %v718
    %v801 = vadd.f32 %v473, %v723
    %v802 = vadd.f32 %v478, %v728
    %v803 = vadd.f32 %v483, %v733
    %v804 = vadd.f32 %v488, %v738
    %v805 = vadd.f32 %v493, %v743
    %v806 = vadd.f32 %v498, %v748
    %v807 = vadd.f32 %v503, %v753
    %v808 = vadd.f32 %v508, %v758
    %v809 = vadd.f32 %v513, %v763
    %v810 = vadd.f32 %v518, %v768
    %v811 = vadd.f32 %v523, %v773
    %v812 = vadd.f32 %v528, %v778
    %v813 = vadd.f32 %v533, %v783
    %v814 = vadd.f32 %v538, %v788
    %v815 = vadd.f32 %v543, %v793
    %v816 = vld [vmem:[%s0 + $0x3] sm:$0xff]
    %v817 = vld [vmem:[%s0 + $0xb] sm:$0xff]
    %v818 = vld [vmem:[%s0 + $0x13] sm:$0xff]
    %v819 = vld [vmem:[%s0 + $0x1b] sm:$0xff]
    %v820 = vld [vmem:[%s0 + $0x23] sm:$0xff]
    %v821 = vld [vmem:[%s0 + $0x2b] sm:$0xff]
    %v822 = vld [vmem:[%s0 + $0x33] sm:$0xff]
    %v823 = vld [vmem:[%s0 + $0x3b] sm:$0xff]
    %v824 = vld [vmem:[%s0 + $0x43] sm:$0xff]
    %v825 = vld [vmem:[%s0 + $0x4b] sm:$0xff]
    %v826 = vld [vmem:[%s0 + $0x53] sm:$0xff]
    %v827 = vld [vmem:[%s0 + $0x5b] sm:$0xff]
    %v828 = vld [vmem:[%s0 + $0x63] sm:$0xff]
    %v829 = vld [vmem:[%s0 + $0x6b] sm:$0xff]
    %v830 = vld [vmem:[%s0 + $0x73] sm:$0xff]
    %v831 = vld [vmem:[%s0 + $0x7b] sm:$0xff]
    %v832 = vld [vmem:[%s0 + $0x83] sm:$0xff]
    %v833 = vld [vmem:[%s0 + $0x8b] sm:$0xff]
    %v834 = vld [vmem:[%s0 + $0x93] sm:$0xff]
    %v835 = vld [vmem:[%s0 + $0x9b] sm:$0xff]
    %s836 = scalar_lea.vmem %s2, 6
    %v837 = vld [vmem:[%s836] sm:$0x3]
    %v839 = vsel %vm88, %v816, 0
    %v842 = vsel %vm88, %v817, 0
    %v845 = vsel %vm88, %v818, 0
    %v848 = vsel %vm88, %v819, 0
    %v851 = vsel %vm88, %v820, 0
    %v854 = vsel %vm88, %v821, 0
    %v857 = vsel %vm88, %v822, 0
    %v860 = vsel %vm88, %v823, 0
    %v863 = vsel %vm88, %v824, 0
    %v866 = vsel %vm88, %v825, 0
    %v869 = vsel %vm88, %v826, 0
    %v872 = vsel %vm88, %v827, 0
    %v875 = vsel %vm88, %v828, 0
    %v878 = vsel %vm88, %v829, 0
    %v881 = vsel %vm88, %v830, 0
    %v884 = vsel %vm88, %v831, 0
    %v887 = vsel %vm88, %v832, 0
    %v890 = vsel %vm88, %v833, 0
    %v893 = vsel %vm88, %v834, 0
    %v896 = vsel %vm88, %v835, 0
    %v899 = vsel %vm149, %v837, 0
    %901 = vmatprep.subr.mxu0 0.0
    %902 = vmatpush1.msra.mxu0 %v899
    %903 = vmatprep.subr.mxu0 0.0
    %904 = vmatpush1.msra.mxu0 0.0
    %905 = vmatprep.subr.mxu0 0.0
    %906 = vmatpush1.msra.mxu0 0.0
    %907 = vmatprep.subr.mxu0 0.0
    %908 = vmatpush1.msra.mxu0 0.0
    %909 = vmatprep.subr.mxu0 0.0
    %910 = vmatpush1.msra.mxu0 0.0
    %911 = vmatprep.subr.mxu0 0.0
    %912 = vmatpush1.msra.mxu0 0.0
    %913 = vmatprep.subr.mxu0 0.0
    %914 = vmatpush1.msra.mxu0 0.0
    %915 = vmatprep.subr.mxu0 0.0
    %916 = vmatpush1.msra.mxu0 0.0
    %917 = vmatprep.subr.mxu0 0.0
    %918 = vmatpush1.msra.mxu0 0.0
    %919 = vmatprep.subr.mxu0 0.0
    %920 = vmatpush1.msra.mxu0 0.0
    %921 = vmatprep.subr.mxu0 0.0
    %922 = vmatpush1.msra.mxu0 0.0
    %923 = vmatprep.subr.mxu0 0.0
    %924 = vmatpush1.msra.mxu0 0.0
    %925 = vmatprep.subr.mxu0 0.0
    %926 = vmatpush1.msra.mxu0 0.0
    %927 = vmatprep.subr.mxu0 0.0
    %928 = vmatpush1.msra.mxu0 0.0
    %929 = vmatprep.subr.mxu0 0.0
    %930 = vmatpush1.msra.mxu0 0.0
    %931 = vmatprep.subr.mxu0 0.0
    %932 = vmatpush1.msra.mxu0 0.0
    %933 = vmatprep.subr.mxu0 0.0
    %934 = vmatpush1.msra.mxu0 0.0
    %935 = vmatprep.subr.mxu0 0.0
    %936 = vmatpush1.msra.mxu0 0.0
    %937 = vmatprep.subr.mxu0 0.0
    %938 = vmatpush1.msra.mxu0 0.0
    %939 = vmatprep.subr.mxu0 0.0
    %940 = vmatpush1.msra.mxu0 0.0
    %941 = vmatprep.subr.mxu0 0.0
    %942 = vmatpush1.msra.mxu0 0.0
    %943 = vmatprep.subr.mxu0 0.0
    %944 = vmatpush1.msra.mxu0 0.0
    %945 = vmatprep.subr.mxu0 0.0
    %946 = vmatpush1.msra.mxu0 0.0
    %947 = vmatprep.subr.mxu0 0.0
    %948 = vmatpush1.msra.mxu0 0.0
    %949 = vmatprep.subr.mxu0 0.0
    %950 = vmatpush1.msra.mxu0 0.0
    %951 = vmatprep.subr.mxu0 0.0
    %952 = vmatpush1.msra.mxu0 0.0
    %953 = vmatprep.subr.mxu0 0.0
    %954 = vmatpush1.msra.mxu0 0.0
    %955 = vmatprep.subr.mxu0 0.0
    %956 = vmatpush1.msra.mxu0 0.0
    %957 = vmatprep.subr.mxu0 0.0
    %958 = vmatpush1.msra.mxu0 0.0
    %959 = vmatprep.subr.mxu0 0.0
    %960 = vmatpush1.msra.mxu0 0.0
    %961 = vmatprep.subr.mxu0 0.0
    %962 = vmatpush1.msra.mxu0 0.0
    %963 = vmatprep.subr.mxu0 0.0
    %964 = vmatpush1.msra.mxu0 0.0
    %965 = vmatprep.mubr.f32.mxu0 0.0
    %966 = vmatmul.mubr.f32.gmra.mrb[0].mxu0 %v839
    %v967 = vpop.f32.mrb[0].mxu0
    %v968 = vadd.f32 0.0, %v967
    %v969 = vpop.f32.mrb[0].mxu0
    %970 = vmatprep.mubr.f32.mxu0 0.0
    %971 = vmatmul.mubr.f32.gmra.mrb[0].mxu0 %v842
    %v972 = vpop.f32.mrb[0].mxu0
    %v973 = vadd.f32 0.0, %v972
    %v974 = vpop.f32.mrb[0].mxu0
    %975 = vmatprep.mubr.f32.mxu0 0.0
    %976 = vmatmul.mubr.f32.gmra.mrb[0].mxu0 %v845
    %v977 = vpop.f32.mrb[0].mxu0
    %v978 = vadd.f32 0.0, %v977
    %v979 = vpop.f32.mrb[0].mxu0
    %980 = vmatprep.mubr.f32.mxu0 0.0
    %981 = vmatmul.mubr.f32.gmra.mrb[0].mxu0 %v848
    %v982 = vpop.f32.mrb[0].mxu0
    %v983 = vadd.f32 0.0, %v982
    %v984 = vpop.f32.mrb[0].mxu0
    %985 = vmatprep.mubr.f32.mxu0 0.0
    %986 = vmatmul.mubr.f32.gmra.mrb[0].mxu0 %v851
    %v987 = vpop.f32.mrb[0].mxu0
    %v988 = vadd.f32 0.0, %v987
    %v989 = vpop.f32.mrb[0].mxu0
    %990 = vmatprep.mubr.f32.mxu0 0.0
    %991 = vmatmul.mubr.f32.gmra.mrb[0].mxu0 %v854
    %v992 = vpop.f32.mrb[0].mxu0
    %v993 = vadd.f32 0.0, %v992
    %v994 = vpop.f32.mrb[0].mxu0
    %995 = vmatprep.mubr.f32.mxu0 0.0
    %996 = vmatmul.mubr.f32.gmra.mrb[0].mxu0 %v857
    %v997 = vpop.f32.mrb[0].mxu0
    %v998 = vadd.f32 0.0, %v997
    %v999 = vpop.f32.mrb[0].mxu0
    %1000 = vmatprep.mubr.f32.mxu0 0.0
    %1001 = vmatmul.mubr.f32.gmra.mrb[0].mxu0 %v860
    %v1002 = vpop.f32.mrb[0].mxu0
    %v1003 = vadd.f32 0.0, %v1002
    %v1004 = vpop.f32.mrb[0].mxu0
    %1005 = vmatprep.mubr.f32.mxu0 0.0
    %1006 = vmatmul.mubr.f32.gmra.mrb[0].mxu0 %v863
    %v1007 = vpop.f32.mrb[0].mxu0
    %v1008 = vadd.f32 0.0, %v1007
    %v1009 = vpop.f32.mrb[0].mxu0
    %1010 = vmatprep.mubr.f32.mxu0 0.0
    %1011 = vmatmul.mubr.f32.gmra.mrb[0].mxu0 %v866
    %v1012 = vpop.f32.mrb[0].mxu0
    %v1013 = vadd.f32 0.0, %v1012
    %v1014 = vpop.f32.mrb[0].mxu0
    %1015 = vmatprep.mubr.f32.mxu0 0.0
    %1016 = vmatmul.mubr.f32.gmra.mrb[0].mxu0 %v869
    %v1017 = vpop.f32.mrb[0].mxu0
    %v1018 = vadd.f32 0.0, %v1017
    %v1019 = vpop.f32.mrb[0].mxu0
    %1020 = vmatprep.mubr.f32.mxu0 0.0
    %1021 = vmatmul.mubr.f32.gmra.mrb[0].mxu0 %v872
    %v1022 = vpop.f32.mrb[0].mxu0
    %v1023 = vadd.f32 0.0, %v1022
    %v1024 = vpop.f32.mrb[0].mxu0
    %1025 = vmatprep.mubr.f32.mxu0 0.0
    %1026 = vmatmul.mubr.f32.gmra.mrb[0].mxu0 %v875
    %v1027 = vpop.f32.mrb[0].mxu0
    %v1028 = vadd.f32 0.0, %v1027
    %v1029 = vpop.f32.mrb[0].mxu0
    %1030 = vmatprep.mubr.f32.mxu0 0.0
    %1031 = vmatmul.mubr.f32.gmra.mrb[0].mxu0 %v878
    %v1032 = vpop.f32.mrb[0].mxu0
    %v1033 = vadd.f32 0.0, %v1032
    %v1034 = vpop.f32.mrb[0].mxu0
    %1035 = vmatprep.mubr.f32.mxu0 0.0
    %1036 = vmatmul.mubr.f32.gmra.mrb[0].mxu0 %v881
    %v1037 = vpop.f32.mrb[0].mxu0
    %v1038 = vadd.f32 0.0, %v1037
    %v1039 = vpop.f32.mrb[0].mxu0
    %1040 = vmatprep.mubr.f32.mxu0 0.0
    %1041 = vmatmul.mubr.f32.gmra.mrb[0].mxu0 %v884
    %v1042 = vpop.f32.mrb[0].mxu0
    %v1043 = vadd.f32 0.0, %v1042
    %v1044 = vpop.f32.mrb[0].mxu0
    %1045 = vmatprep.mubr.f32.mxu0 0.0
    %1046 = vmatmul.mubr.f32.gmra.mrb[0].mxu0 %v887
    %v1047 = vpop.f32.mrb[0].mxu0
    %v1048 = vadd.f32 0.0, %v1047
    %v1049 = vpop.f32.mrb[0].mxu0
    %1050 = vmatprep.mubr.f32.mxu0 0.0
    %1051 = vmatmul.mubr.f32.gmra.mrb[0].mxu0 %v890
    %v1052 = vpop.f32.mrb[0].mxu0
    %v1053 = vadd.f32 0.0, %v1052
    %v1054 = vpop.f32.mrb[0].mxu0
    %1055 = vmatprep.mubr.f32.mxu0 0.0
    %1056 = vmatmul.mubr.f32.gmra.mrb[0].mxu0 %v893
    %v1057 = vpop.f32.mrb[0].mxu0
    %v1058 = vadd.f32 0.0, %v1057
    %v1059 = vpop.f32.mrb[0].mxu0
    %1060 = vmatprep.mubr.f32.mxu0 0.0
    %1061 = vmatmul.mubr.f32.gmra.mrb[0].mxu0 %v896
    %v1062 = vpop.f32.mrb[0].mxu0
    %v1063 = vadd.f32 0.0, %v1062
    %v1064 = vpop.f32.mrb[0].mxu0
    %1065 = vdwg.mxu0
    %v1066 = vadd.f32 %v796, %v968
    %v1067 = vadd.f32 %v797, %v973
    %v1068 = vadd.f32 %v798, %v978
    %v1069 = vadd.f32 %v799, %v983
    %v1070 = vadd.f32 %v800, %v988
    %v1071 = vadd.f32 %v801, %v993
    %v1072 = vadd.f32 %v802, %v998
    %v1073 = vadd.f32 %v803, %v1003
    %v1074 = vadd.f32 %v804, %v1008
    %v1075 = vadd.f32 %v805, %v1013
    %v1076 = vadd.f32 %v806, %v1018
    %v1077 = vadd.f32 %v807, %v1023
    %v1078 = vadd.f32 %v808, %v1028
    %v1079 = vadd.f32 %v809, %v1033
    %v1080 = vadd.f32 %v810, %v1038
    %v1081 = vadd.f32 %v811, %v1043
    %v1082 = vadd.f32 %v812, %v1048
    %v1083 = vadd.f32 %v813, %v1053
    %v1084 = vadd.f32 %v814, %v1058
    %v1085 = vadd.f32 %v815, %v1063
    %v1086 = vld [vmem:[%s0 + $0xa] sm:$0xff]
    %v1087 = vld [vmem:[%s0 + $0x12] sm:$0xff]
    %v1088 = vld [vmem:[%s0 + $0x1a] sm:$0xff]
    %v1089 = vld [vmem:[%s0 + $0x22] sm:$0xff]
    %v1090 = vld [vmem:[%s0 + $0x2a] sm:$0xff]
    %v1091 = vld [vmem:[%s0 + $0x32] sm:$0xff]
    %v1092 = vld [vmem:[%s0 + $0x3a] sm:$0xff]
    %v1093 = vld [vmem:[%s0 + $0x42] sm:$0xff]
    %v1094 = vld [vmem:[%s0 + $0x4a] sm:$0xff]
    %v1095 = vld [vmem:[%s0 + $0x52] sm:$0xff]
    %v1096 = vld [vmem:[%s0 + $0x5a] sm:$0xff]
    %v1097 = vld [vmem:[%s0 + $0x62] sm:$0xff]
    %v1098 = vld [vmem:[%s0 + $0x6a] sm:$0xff]
    %v1099 = vld [vmem:[%s0 + $0x72] sm:$0xff]
    %v1100 = vld [vmem:[%s0 + $0x7a] sm:$0xff]
    %v1101 = vld [vmem:[%s0 + $0x82] sm:$0xff]
    %v1102 = vld [vmem:[%s0 + $0x8a] sm:$0xff]
    %v1103 = vld [vmem:[%s0 + $0x92] sm:$0xff]
    %v1104 = vld [vmem:[%s0 + $0x9a] sm:$0xff]
    %v1105 = vld [vmem:[%s0 + $0xa2] sm:$0xff]
    %s1106 = scalar_lea.vmem %s2, 8
    %v1107 = vld [vmem:[%s1106] sm:$0x3]
    %v1109 = vsel %vm88, %v1086, 0
    %v1112 = vsel %vm88, %v1087, 0
    %v1115 = vsel %vm88, %v1088, 0
    %v1118 = vsel %vm88, %v1089, 0
    %v1121 = vsel %vm88, %v1090, 0
    %v1124 = vsel %vm88, %v1091, 0
    %v1127 = vsel %vm88, %v1092, 0
    %v1130 = vsel %vm88, %v1093, 0
    %v1133 = vsel %vm88, %v1094, 0
    %v1136 = vsel %vm88, %v1095, 0
    %v1139 = vsel %vm88, %v1096, 0
    %v1142 = vsel %vm88, %v1097, 0
    %v1145 = vsel %vm88, %v1098, 0
    %v1148 = vsel %vm88, %v1099, 0
    %v1151 = vsel %vm88, %v1100, 0
    %v1154 = vsel %vm88, %v1101, 0
    %v1157 = vsel %vm88, %v1102, 0
    %v1160 = vsel %vm88, %v1103, 0
    %v1163 = vsel %vm88, %v1104, 0
    %v1166 = vsel %vm88, %v1105, 0
    %v1169 = vsel %vm149, %v1107, 0
    %1171 = vmatprep.subr.mxu0 0.0
    %1172 = vmatpush1.msra.mxu0 %v1169
    %1173 = vmatprep.subr.mxu0 0.0
    %1174 = vmatpush1.msra.mxu0 0.0
    %1175 = vmatprep.subr.mxu0 0.0
    %1176 = vmatpush1.msra.mxu0 0.0
    %1177 = vmatprep.subr.mxu0 0.0
    %1178 = vmatpush1.msra.mxu0 0.0
    %1179 = vmatprep.subr.mxu0 0.0
    %1180 = vmatpush1.msra.mxu0 0.0
    %1181 = vmatprep.subr.mxu0 0.0
    %1182 = vmatpush1.msra.mxu0 0.0
    %1183 = vmatprep.subr.mxu0 0.0
    %1184 = vmatpush1.msra.mxu0 0.0
    %1185 = vmatprep.subr.mxu0 0.0
    %1186 = vmatpush1.msra.mxu0 0.0
    %1187 = vmatprep.subr.mxu0 0.0
    %1188 = vmatpush1.msra.mxu0 0.0
    %1189 = vmatprep.subr.mxu0 0.0
    %1190 = vmatpush1.msra.mxu0 0.0
    %1191 = vmatprep.subr.mxu0 0.0
    %1192 = vmatpush1.msra.mxu0 0.0
    %1193 = vmatprep.subr.mxu0 0.0
    %1194 = vmatpush1.msra.mxu0 0.0
    %1195 = vmatprep.subr.mxu0 0.0
    %1196 = vmatpush1.msra.mxu0 0.0
    %1197 = vmatprep.subr.mxu0 0.0
    %1198 = vmatpush1.msra.mxu0 0.0
    %1199 = vmatprep.subr.mxu0 0.0
    %1200 = vmatpush1.msra.mxu0 0.0
    %1201 = vmatprep.subr.mxu0 0.0
    %1202 = vmatpush1.msra.mxu0 0.0
    %1203 = vmatprep.subr.mxu0 0.0
    %1204 = vmatpush1.msra.mxu0 0.0
    %1205 = vmatprep.subr.mxu0 0.0
    %1206 = vmatpush1.msra.mxu0 0.0
    %1207 = vmatprep.subr.mxu0 0.0
    %1208 = vmatpush1.msra.mxu0 0.0
    %1209 = vmatprep.subr.mxu0 0.0
    %1210 = vmatpush1.msra.mxu0 0.0
    %1211 = vmatprep.subr.mxu0 0.0
    %1212 = vmatpush1.msra.mxu0 0.0
    %1213 = vmatprep.subr.mxu0 0.0
    %1214 = vmatpush1.msra.mxu0 0.0
    %1215 = vmatprep.subr.mxu0 0.0
    %1216 = vmatpush1.msra.mxu0 0.0
    %1217 = vmatprep.subr.mxu0 0.0
    %1218 = vmatpush1.msra.mxu0 0.0
    %1219 = vmatprep.subr.mxu0 0.0
    %1220 = vmatpush1.msra.mxu0 0.0
    %1221 = vmatprep.subr.mxu0 0.0
    %1222 = vmatpush1.msra.mxu0 0.0
    %1223 = vmatprep.subr.mxu0 0.0
    %1224 = vmatpush1.msra.mxu0 0.0
    %1225 = vmatprep.subr.mxu0 0.0
    %1226 = vmatpush1.msra.mxu0 0.0
    %1227 = vmatprep.subr.mxu0 0.0
    %1228 = vmatpush1.msra.mxu0 0.0
    %1229 = vmatprep.subr.mxu0 0.0
    %1230 = vmatpush1.msra.mxu0 0.0
    %1231 = vmatprep.subr.mxu0 0.0
    %1232 = vmatpush1.msra.mxu0 0.0
    %1233 = vmatprep.subr.mxu0 0.0
    %1234 = vmatpush1.msra.mxu0 0.0
    %1235 = vmatprep.mubr.f32.mxu0 0.0
    %1236 = vmatmul.mubr.f32.gmra.mrb[0].mxu0 %v1109
    %v1237 = vpop.f32.mrb[0].mxu0
    %v1238 = vadd.f32 0.0, %v1237
    %v1239 = vpop.f32.mrb[0].mxu0
    %1240 = vmatprep.mubr.f32.mxu0 0.0
    %1241 = vmatmul.mubr.f32.gmra.mrb[0].mxu0 %v1112
    %v1242 = vpop.f32.mrb[0].mxu0
    %v1243 = vadd.f32 0.0, %v1242
    %v1244 = vpop.f32.mrb[0].mxu0
    %1245 = vmatprep.mubr.f32.mxu0 0.0
    %1246 = vmatmul.mubr.f32.gmra.mrb[0].mxu0 %v1115
    %v1247 = vpop.f32.mrb[0].mxu0
    %v1248 = vadd.f32 0.0, %v1247
    %v1249 = vpop.f32.mrb[0].mxu0
    %1250 = vmatprep.mubr.f32.mxu0 0.0
    %1251 = vmatmul.mubr.f32.gmra.mrb[0].mxu0 %v1118
    %v1252 = vpop.f32.mrb[0].mxu0
    %v1253 = vadd.f32 0.0, %v1252
    %v1254 = vpop.f32.mrb[0].mxu0
    %1255 = vmatprep.mubr.f32.mxu0 0.0
    %1256 = vmatmul.mubr.f32.gmra.mrb[0].mxu0 %v1121
    %v1257 = vpop.f32.mrb[0].mxu0
    %v1258 = vadd.f32 0.0, %v1257
    %v1259 = vpop.f32.mrb[0].mxu0
    %1260 = vmatprep.mubr.f32.mxu0 0.0
    %1261 = vmatmul.mubr.f32.gmra.mrb[0].mxu0 %v1124
    %v1262 = vpop.f32.mrb[0].mxu0
    %v1263 = vadd.f32 0.0, %v1262
    %v1264 = vpop.f32.mrb[0].mxu0
    %1265 = vmatprep.mubr.f32.mxu0 0.0
    %1266 = vmatmul.mubr.f32.gmra.mrb[0].mxu0 %v1127
    %v1267 = vpop.f32.mrb[0].mxu0
    %v1268 = vadd.f32 0.0, %v1267
    %v1269 = vpop.f32.mrb[0].mxu0
    %1270 = vmatprep.mubr.f32.mxu0 0.0
    %1271 = vmatmul.mubr.f32.gmra.mrb[0].mxu0 %v1130
    %v1272 = vpop.f32.mrb[0].mxu0
    %v1273 = vadd.f32 0.0, %v1272
    %v1274 = vpop.f32.mrb[0].mxu0
    %1275 = vmatprep.mubr.f32.mxu0 0.0
    %1276 = vmatmul.mubr.f32.gmra.mrb[0].mxu0 %v1133
    %v1277 = vpop.f32.mrb[0].mxu0
    %v1278 = vadd.f32 0.0, %v1277
    %v1279 = vpop.f32.mrb[0].mxu0
    %1280 = vmatprep.mubr.f32.mxu0 0.0
    %1281 = vmatmul.mubr.f32.gmra.mrb[0].mxu0 %v1136
    %v1282 = vpop.f32.mrb[0].mxu0
    %v1283 = vadd.f32 0.0, %v1282
    %v1284 = vpop.f32.mrb[0].mxu0
    %1285 = vmatprep.mubr.f32.mxu0 0.0
    %1286 = vmatmul.mubr.f32.gmra.mrb[0].mxu0 %v1139
    %v1287 = vpop.f32.mrb[0].mxu0
    %v1288 = vadd.f32 0.0, %v1287
    %v1289 = vpop.f32.mrb[0].mxu0
    %1290 = vmatprep.mubr.f32.mxu0 0.0
    %1291 = vmatmul.mubr.f32.gmra.mrb[0].mxu0 %v1142
    %v1292 = vpop.f32.mrb[0].mxu0
    %v1293 = vadd.f32 0.0, %v1292
    %v1294 = vpop.f32.mrb[0].mxu0
    %1295 = vmatprep.mubr.f32.mxu0 0.0
    %1296 = vmatmul.mubr.f32.gmra.mrb[0].mxu0 %v1145
    %v1297 = vpop.f32.mrb[0].mxu0
    %v1298 = vadd.f32 0.0, %v1297
    %v1299 = vpop.f32.mrb[0].mxu0
    %1300 = vmatprep.mubr.f32.mxu0 0.0
    %1301 = vmatmul.mubr.f32.gmra.mrb[0].mxu0 %v1148
    %v1302 = vpop.f32.mrb[0].mxu0
    %v1303 = vadd.f32 0.0, %v1302
    %v1304 = vpop.f32.mrb[0].mxu0
    %1305 = vmatprep.mubr.f32.mxu0 0.0
    %1306 = vmatmul.mubr.f32.gmra.mrb[0].mxu0 %v1151
    %v1307 = vpop.f32.mrb[0].mxu0
    %v1308 = vadd.f32 0.0, %v1307
    %v1309 = vpop.f32.mrb[0].mxu0
    %1310 = vmatprep.mubr.f32.mxu0 0.0
    %1311 = vmatmul.mubr.f32.gmra.mrb[0].mxu0 %v1154
    %v1312 = vpop.f32.mrb[0].mxu0
    %v1313 = vadd.f32 0.0, %v1312
    %v1314 = vpop.f32.mrb[0].mxu0
    %1315 = vmatprep.mubr.f32.mxu0 0.0
    %1316 = vmatmul.mubr.f32.gmra.mrb[0].mxu0 %v1157
    %v1317 = vpop.f32.mrb[0].mxu0
    %v1318 = vadd.f32 0.0, %v1317
    %v1319 = vpop.f32.mrb[0].mxu0
    %1320 = vmatprep.mubr.f32.mxu0 0.0
    %1321 = vmatmul.mubr.f32.gmra.mrb[0].mxu0 %v1160
    %v1322 = vpop.f32.mrb[0].mxu0
    %v1323 = vadd.f32 0.0, %v1322
    %v1324 = vpop.f32.mrb[0].mxu0
    %1325 = vmatprep.mubr.f32.mxu0 0.0
    %1326 = vmatmul.mubr.f32.gmra.mrb[0].mxu0 %v1163
    %v1327 = vpop.f32.mrb[0].mxu0
    %v1328 = vadd.f32 0.0, %v1327
    %v1329 = vpop.f32.mrb[0].mxu0
    %1330 = vmatprep.mubr.f32.mxu0 0.0
    %1331 = vmatmul.mubr.f32.gmra.mrb[0].mxu0 %v1166
    %v1332 = vpop.f32.mrb[0].mxu0
    %v1333 = vadd.f32 0.0, %v1332
    %v1334 = vpop.f32.mrb[0].mxu0
    %1335 = vdwg.mxu0
    %v1336 = vadd.f32 %v1066, %v1238
    %v1337 = vadd.f32 %v1067, %v1243
    %v1338 = vadd.f32 %v1068, %v1248
    %v1339 = vadd.f32 %v1069, %v1253
    %v1340 = vadd.f32 %v1070, %v1258
    %v1341 = vadd.f32 %v1071, %v1263
    %v1342 = vadd.f32 %v1072, %v1268
    %v1343 = vadd.f32 %v1073, %v1273
    %v1344 = vadd.f32 %v1074, %v1278
    %v1345 = vadd.f32 %v1075, %v1283
    %v1346 = vadd.f32 %v1076, %v1288
    %v1347 = vadd.f32 %v1077, %v1293
    %v1348 = vadd.f32 %v1078, %v1298
    %v1349 = vadd.f32 %v1079, %v1303
    %v1350 = vadd.f32 %v1080, %v1308
    %v1351 = vadd.f32 %v1081, %v1313
    %v1352 = vadd.f32 %v1082, %v1318
    %v1353 = vadd.f32 %v1083, %v1323
    %v1354 = vadd.f32 %v1084, %v1328
    %v1355 = vadd.f32 %v1085, %v1333
    %v1356 = vld [vmem:[%s0 + $0xb] sm:$0xff]
    %v1357 = vld [vmem:[%s0 + $0x13] sm:$0xff]
    %v1358 = vld [vmem:[%s0 + $0x1b] sm:$0xff]
    %v1359 = vld [vmem:[%s0 + $0x23] sm:$0xff]
    %v1360 = vld [vmem:[%s0 + $0x2b] sm:$0xff]
    %v1361 = vld [vmem:[%s0 + $0x33] sm:$0xff]
    %v1362 = vld [vmem:[%s0 + $0x3b] sm:$0xff]
    %v1363 = vld [vmem:[%s0 + $0x43] sm:$0xff]
    %v1364 = vld [vmem:[%s0 + $0x4b] sm:$0xff]
    %v1365 = vld [vmem:[%s0 + $0x53] sm:$0xff]
    %v1366 = vld [vmem:[%s0 + $0x5b] sm:$0xff]
    %v1367 = vld [vmem:[%s0 + $0x63] sm:$0xff]
    %v1368 = vld [vmem:[%s0 + $0x6b] sm:$0xff]
    %v1369 = vld [vmem:[%s0 + $0x73] sm:$0xff]
    %v1370 = vld [vmem:[%s0 + $0x7b] sm:$0xff]
    %v1371 = vld [vmem:[%s0 + $0x83] sm:$0xff]
    %v1372 = vld [vmem:[%s0 + $0x8b] sm:$0xff]
    %v1373 = vld [vmem:[%s0 + $0x93] sm:$0xff]
    %v1374 = vld [vmem:[%s0 + $0x9b] sm:$0xff]
    %v1375 = vld [vmem:[%s0 + $0xa3] sm:$0xff]
    %s1376 = scalar_lea.vmem %s2, 10
    %v1377 = vld [vmem:[%s1376] sm:$0x3]
    %v1379 = vsel %vm88, %v1356, 0
    %v1382 = vsel %vm88, %v1357, 0
    %v1385 = vsel %vm88, %v1358, 0
    %v1388 = vsel %vm88, %v1359, 0
    %v1391 = vsel %vm88, %v1360, 0
    %v1394 = vsel %vm88, %v1361, 0
    %v1397 = vsel %vm88, %v1362, 0
    %v1400 = vsel %vm88, %v1363, 0
    %v1403 = vsel %vm88, %v1364, 0
    %v1406 = vsel %vm88, %v1365, 0
    %v1409 = vsel %vm88, %v1366, 0
    %v1412 = vsel %vm88, %v1367, 0
    %v1415 = vsel %vm88, %v1368, 0
    %v1418 = vsel %vm88, %v1369, 0
    %v1421 = vsel %vm88, %v1370, 0
    %v1424 = vsel %vm88, %v1371, 0
    %v1427 = vsel %vm88, %v1372, 0
    %v1430 = vsel %vm88, %v1373, 0
    %v1433 = vsel %vm88, %v1374, 0
    %v1436 = vsel %vm88, %v1375, 0
    %v1439 = vsel %vm149, %v1377, 0
    %1441 = vmatprep.subr.mxu0 0.0
    %1442 = vmatpush1.msra.mxu0 %v1439
    %1443 = vmatprep.subr.mxu0 0.0
    %1444 = vmatpush1.msra.mxu0 0.0
    %1445 = vmatprep.subr.mxu0 0.0
    %1446 = vmatpush1.msra.mxu0 0.0
    %1447 = vmatprep.subr.mxu0 0.0
    %1448 = vmatpush1.msra.mxu0 0.0
    %1449 = vmatprep.subr.mxu0 0.0
    %1450 = vmatpush1.msra.mxu0 0.0
    %1451 = vmatprep.subr.mxu0 0.0
    %1452 = vmatpush1.msra.mxu0 0.0
    %1453 = vmatprep.subr.mxu0 0.0
    %1454 = vmatpush1.msra.mxu0 0.0
    %1455 = vmatprep.subr.mxu0 0.0
    %1456 = vmatpush1.msra.mxu0 0.0
    %1457 = vmatprep.subr.mxu0 0.0
    %1458 = vmatpush1.msra.mxu0 0.0
    %1459 = vmatprep.subr.mxu0 0.0
    %1460 = vmatpush1.msra.mxu0 0.0
    %1461 = vmatprep.subr.mxu0 0.0
    %1462 = vmatpush1.msra.mxu0 0.0
    %1463 = vmatprep.subr.mxu0 0.0
    %1464 = vmatpush1.msra.mxu0 0.0
    %1465 = vmatprep.subr.mxu0 0.0
    %1466 = vmatpush1.msra.mxu0 0.0
    %1467 = vmatprep.subr.mxu0 0.0
    %1468 = vmatpush1.msra.mxu0 0.0
    %1469 = vmatprep.subr.mxu0 0.0
    %1470 = vmatpush1.msra.mxu0 0.0
    %1471 = vmatprep.subr.mxu0 0.0
    %1472 = vmatpush1.msra.mxu0 0.0
    %1473 = vmatprep.subr.mxu0 0.0
    %1474 = vmatpush1.msra.mxu0 0.0
    %1475 = vmatprep.subr.mxu0 0.0
    %1476 = vmatpush1.msra.mxu0 0.0
    %1477 = vmatprep.subr.mxu0 0.0
    %1478 = vmatpush1.msra.mxu0 0.0
    %1479 = vmatprep.subr.mxu0 0.0
    %1480 = vmatpush1.msra.mxu0 0.0
    %1481 = vmatprep.subr.mxu0 0.0
    %1482 = vmatpush1.msra.mxu0 0.0
    %1483 = vmatprep.subr.mxu0 0.0
    %1484 = vmatpush1.msra.mxu0 0.0
    %1485 = vmatprep.subr.mxu0 0.0
    %1486 = vmatpush1.msra.mxu0 0.0
    %1487 = vmatprep.subr.mxu0 0.0
    %1488 = vmatpush1.msra.mxu0 0.0
    %1489 = vmatprep.subr.mxu0 0.0
    %1490 = vmatpush1.msra.mxu0 0.0
    %1491 = vmatprep.subr.mxu0 0.0
    %1492 = vmatpush1.msra.mxu0 0.0
    %1493 = vmatprep.subr.mxu0 0.0
    %1494 = vmatpush1.msra.mxu0 0.0
    %1495 = vmatprep.subr.mxu0 0.0
    %1496 = vmatpush1.msra.mxu0 0.0
    %1497 = vmatprep.subr.mxu0 0.0
    %1498 = vmatpush1.msra.mxu0 0.0
    %1499 = vmatprep.subr.mxu0 0.0
    %1500 = vmatpush1.msra.mxu0 0.0
    %1501 = vmatprep.subr.mxu0 0.0
    %1502 = vmatpush1.msra.mxu0 0.0
    %1503 = vmatprep.subr.mxu0 0.0
    %1504 = vmatpush1.msra.mxu0 0.0
    %1505 = vmatprep.mubr.f32.mxu0 0.0
    %1506 = vmatmul.mubr.f32.gmra.mrb[0].mxu0 %v1379
    %v1507 = vpop.f32.mrb[0].mxu0
    %v1508 = vadd.f32 0.0, %v1507
    %v1509 = vpop.f32.mrb[0].mxu0
    %1510 = vmatprep.mubr.f32.mxu0 0.0
    %1511 = vmatmul.mubr.f32.gmra.mrb[0].mxu0 %v1382
    %v1512 = vpop.f32.mrb[0].mxu0
    %v1513 = vadd.f32 0.0, %v1512
    %v1514 = vpop.f32.mrb[0].mxu0
    %1515 = vmatprep.mubr.f32.mxu0 0.0
    %1516 = vmatmul.mubr.f32.gmra.mrb[0].mxu0 %v1385
    %v1517 = vpop.f32.mrb[0].mxu0
    %v1518 = vadd.f32 0.0, %v1517
    %v1519 = vpop.f32.mrb[0].mxu0
    %1520 = vmatprep.mubr.f32.mxu0 0.0
    %1521 = vmatmul.mubr.f32.gmra.mrb[0].mxu0 %v1388
    %v1522 = vpop.f32.mrb[0].mxu0
    %v1523 = vadd.f32 0.0, %v1522
    %v1524 = vpop.f32.mrb[0].mxu0
    %1525 = vmatprep.mubr.f32.mxu0 0.0
    %1526 = vmatmul.mubr.f32.gmra.mrb[0].mxu0 %v1391
    %v1527 = vpop.f32.mrb[0].mxu0
    %v1528 = vadd.f32 0.0, %v1527
    %v1529 = vpop.f32.mrb[0].mxu0
    %1530 = vmatprep.mubr.f32.mxu0 0.0
    %1531 = vmatmul.mubr.f32.gmra.mrb[0].mxu0 %v1394
    %v1532 = vpop.f32.mrb[0].mxu0
    %v1533 = vadd.f32 0.0, %v1532
    %v1534 = vpop.f32.mrb[0].mxu0
    %1535 = vmatprep.mubr.f32.mxu0 0.0
    %1536 = vmatmul.mubr.f32.gmra.mrb[0].mxu0 %v1397
    %v1537 = vpop.f32.mrb[0].mxu0
    %v1538 = vadd.f32 0.0, %v1537
    %v1539 = vpop.f32.mrb[0].mxu0
    %1540 = vmatprep.mubr.f32.mxu0 0.0
    %1541 = vmatmul.mubr.f32.gmra.mrb[0].mxu0 %v1400
    %v1542 = vpop.f32.mrb[0].mxu0
    %v1543 = vadd.f32 0.0, %v1542
    %v1544 = vpop.f32.mrb[0].mxu0
    %1545 = vmatprep.mubr.f32.mxu0 0.0
    %1546 = vmatmul.mubr.f32.gmra.mrb[0].mxu0 %v1403
    %v1547 = vpop.f32.mrb[0].mxu0
    %v1548 = vadd.f32 0.0, %v1547
    %v1549 = vpop.f32.mrb[0].mxu0
    %1550 = vmatprep.mubr.f32.mxu0 0.0
    %1551 = vmatmul.mubr.f32.gmra.mrb[0].mxu0 %v1406
    %v1552 = vpop.f32.mrb[0].mxu0
    %v1553 = vadd.f32 0.0, %v1552
    %v1554 = vpop.f32.mrb[0].mxu0
    %1555 = vmatprep.mubr.f32.mxu0 0.0
    %1556 = vmatmul.mubr.f32.gmra.mrb[0].mxu0 %v1409
    %v1557 = vpop.f32.mrb[0].mxu0
    %v1558 = vadd.f32 0.0, %v1557
    %v1559 = vpop.f32.mrb[0].mxu0
    %1560 = vmatprep.mubr.f32.mxu0 0.0
    %1561 = vmatmul.mubr.f32.gmra.mrb[0].mxu0 %v1412
    %v1562 = vpop.f32.mrb[0].mxu0
    %v1563 = vadd.f32 0.0, %v1562
    %v1564 = vpop.f32.mrb[0].mxu0
    %1565 = vmatprep.mubr.f32.mxu0 0.0
    %1566 = vmatmul.mubr.f32.gmra.mrb[0].mxu0 %v1415
    %v1567 = vpop.f32.mrb[0].mxu0
    %v1568 = vadd.f32 0.0, %v1567
    %v1569 = vpop.f32.mrb[0].mxu0
    %1570 = vmatprep.mubr.f32.mxu0 0.0
    %1571 = vmatmul.mubr.f32.gmra.mrb[0].mxu0 %v1418
    %v1572 = vpop.f32.mrb[0].mxu0
    %v1573 = vadd.f32 0.0, %v1572
    %v1574 = vpop.f32.mrb[0].mxu0
    %1575 = vmatprep.mubr.f32.mxu0 0.0
    %1576 = vmatmul.mubr.f32.gmra.mrb[0].mxu0 %v1421
    %v1577 = vpop.f32.mrb[0].mxu0
    %v1578 = vadd.f32 0.0, %v1577
    %v1579 = vpop.f32.mrb[0].mxu0
    %1580 = vmatprep.mubr.f32.mxu0 0.0
    %1581 = vmatmul.mubr.f32.gmra.mrb[0].mxu0 %v1424
    %v1582 = vpop.f32.mrb[0].mxu0
    %v1583 = vadd.f32 0.0, %v1582
    %v1584 = vpop.f32.mrb[0].mxu0
    %1585 = vmatprep.mubr.f32.mxu0 0.0
    %1586 = vmatmul.mubr.f32.gmra.mrb[0].mxu0 %v1427
    %v1587 = vpop.f32.mrb[0].mxu0
    %v1588 = vadd.f32 0.0, %v1587
    %v1589 = vpop.f32.mrb[0].mxu0
    %1590 = vmatprep.mubr.f32.mxu0 0.0
    %1591 = vmatmul.mubr.f32.gmra.mrb[0].mxu0 %v1430
    %v1592 = vpop.f32.mrb[0].mxu0
    %v1593 = vadd.f32 0.0, %v1592
    %v1594 = vpop.f32.mrb[0].mxu0
    %1595 = vmatprep.mubr.f32.mxu0 0.0
    %1596 = vmatmul.mubr.f32.gmra.mrb[0].mxu0 %v1433
    %v1597 = vpop.f32.mrb[0].mxu0
    %v1598 = vadd.f32 0.0, %v1597
    %v1599 = vpop.f32.mrb[0].mxu0
    %1600 = vmatprep.mubr.f32.mxu0 0.0
    %1601 = vmatmul.mubr.f32.gmra.mrb[0].mxu0 %v1436
    %v1602 = vpop.f32.mrb[0].mxu0
    %v1603 = vadd.f32 0.0, %v1602
    %v1604 = vpop.f32.mrb[0].mxu0
    %1605 = vdwg.mxu0
    %v1606 = vadd.f32 %v1336, %v1508
    %v1607 = vadd.f32 %v1337, %v1513
    %v1608 = vadd.f32 %v1338, %v1518
    %v1609 = vadd.f32 %v1339, %v1523
    %v1610 = vadd.f32 %v1340, %v1528
    %v1611 = vadd.f32 %v1341, %v1533
    %v1612 = vadd.f32 %v1342, %v1538
    %v1613 = vadd.f32 %v1343, %v1543
    %v1614 = vadd.f32 %v1344, %v1548
    %v1615 = vadd.f32 %v1345, %v1553
    %v1616 = vadd.f32 %v1346, %v1558
    %v1617 = vadd.f32 %v1347, %v1563
    %v1618 = vadd.f32 %v1348, %v1568
    %v1619 = vadd.f32 %v1349, %v1573
    %v1620 = vadd.f32 %v1350, %v1578
    %v1621 = vadd.f32 %v1351, %v1583
    %v1622 = vadd.f32 %v1352, %v1588
    %v1623 = vadd.f32 %v1353, %v1593
    %v1624 = vadd.f32 %v1354, %v1598
    %v1625 = vadd.f32 %v1355, %v1603
    %v1626 = vld [vmem:[%s0 + $0xc] sm:$0xff]
    %v1627 = vld [vmem:[%s0 + $0x14] sm:$0xff]
    %v1628 = vld [vmem:[%s0 + $0x1c] sm:$0xff]
    %v1629 = vld [vmem:[%s0 + $0x24] sm:$0xff]
    %v1630 = vld [vmem:[%s0 + $0x2c] sm:$0xff]
    %v1631 = vld [vmem:[%s0 + $0x34] sm:$0xff]
    %v1632 = vld [vmem:[%s0 + $0x3c] sm:$0xff]
    %v1633 = vld [vmem:[%s0 + $0x44] sm:$0xff]
    %v1634 = vld [vmem:[%s0 + $0x4c] sm:$0xff]
    %v1635 = vld [vmem:[%s0 + $0x54] sm:$0xff]
    %v1636 = vld [vmem:[%s0 + $0x5c] sm:$0xff]
    %v1637 = vld [vmem:[%s0 + $0x64] sm:$0xff]
    %v1638 = vld [vmem:[%s0 + $0x6c] sm:$0xff]
    %v1639 = vld [vmem:[%s0 + $0x74] sm:$0xff]
    %v1640 = vld [vmem:[%s0 + $0x7c] sm:$0xff]
    %v1641 = vld [vmem:[%s0 + $0x84] sm:$0xff]
    %v1642 = vld [vmem:[%s0 + $0x8c] sm:$0xff]
    %v1643 = vld [vmem:[%s0 + $0x94] sm:$0xff]
    %v1644 = vld [vmem:[%s0 + $0x9c] sm:$0xff]
    %v1645 = vld [vmem:[%s0 + $0xa4] sm:$0xff]
    %s1646 = scalar_lea.vmem %s2, 12
    %v1647 = vld [vmem:[%s1646] sm:$0x3]
    %v1649 = vsel %vm88, %v1626, 0
    %v1652 = vsel %vm88, %v1627, 0
    %v1655 = vsel %vm88, %v1628, 0
    %v1658 = vsel %vm88, %v1629, 0
    %v1661 = vsel %vm88, %v1630, 0
    %v1664 = vsel %vm88, %v1631, 0
    %v1667 = vsel %vm88, %v1632, 0
    %v1670 = vsel %vm88, %v1633, 0
    %v1673 = vsel %vm88, %v1634, 0
    %v1676 = vsel %vm88, %v1635, 0
    %v1679 = vsel %vm88, %v1636, 0
    %v1682 = vsel %vm88, %v1637, 0
    %v1685 = vsel %vm88, %v1638, 0
    %v1688 = vsel %vm88, %v1639, 0
    %v1691 = vsel %vm88, %v1640, 0
    %v1694 = vsel %vm88, %v1641, 0
    %v1697 = vsel %vm88, %v1642, 0
    %v1700 = vsel %vm88, %v1643, 0
    %v1703 = vsel %vm88, %v1644, 0
    %v1706 = vsel %vm88, %v1645, 0
    %v1709 = vsel %vm149, %v1647, 0
    %1711 = vmatprep.subr.mxu0 0.0
    %1712 = vmatpush1.msra.mxu0 %v1709
    %1713 = vmatprep.subr.mxu0 0.0
    %1714 = vmatpush1.msra.mxu0 0.0
    %1715 = vmatprep.subr.mxu0 0.0
    %1716 = vmatpush1.msra.mxu0 0.0
    %1717 = vmatprep.subr.mxu0 0.0
    %1718 = vmatpush1.msra.mxu0 0.0
    %1719 = vmatprep.subr.mxu0 0.0
    %1720 = vmatpush1.msra.mxu0 0.0
    %1721 = vmatprep.subr.mxu0 0.0
    %1722 = vmatpush1.msra.mxu0 0.0
    %1723 = vmatprep.subr.mxu0 0.0
    %1724 = vmatpush1.msra.mxu0 0.0
    %1725 = vmatprep.subr.mxu0 0.0
    %1726 = vmatpush1.msra.mxu0 0.0
    %1727 = vmatprep.subr.mxu0 0.0
    %1728 = vmatpush1.msra.mxu0 0.0
    %1729 = vmatprep.subr.mxu0 0.0
    %1730 = vmatpush1.msra.mxu0 0.0
    %1731 = vmatprep.subr.mxu0 0.0
    %1732 = vmatpush1.msra.mxu0 0.0
    %1733 = vmatprep.subr.mxu0 0.0
    %1734 = vmatpush1.msra.mxu0 0.0
    %1735 = vmatprep.subr.mxu0 0.0
    %1736 = vmatpush1.msra.mxu0 0.0
    %1737 = vmatprep.subr.mxu0 0.0
    %1738 = vmatpush1.msra.mxu0 0.0
    %1739 = vmatprep.subr.mxu0 0.0
    %1740 = vmatpush1.msra.mxu0 0.0
    %1741 = vmatprep.subr.mxu0 0.0
    %1742 = vmatpush1.msra.mxu0 0.0
    %1743 = vmatprep.subr.mxu0 0.0
    %1744 = vmatpush1.msra.mxu0 0.0
    %1745 = vmatprep.subr.mxu0 0.0
    %1746 = vmatpush1.msra.mxu0 0.0
    %1747 = vmatprep.subr.mxu0 0.0
    %1748 = vmatpush1.msra.mxu0 0.0
    %1749 = vmatprep.subr.mxu0 0.0
    %1750 = vmatpush1.msra.mxu0 0.0
    %1751 = vmatprep.subr.mxu0 0.0
    %1752 = vmatpush1.msra.mxu0 0.0
    %1753 = vmatprep.subr.mxu0 0.0
    %1754 = vmatpush1.msra.mxu0 0.0
    %1755 = vmatprep.subr.mxu0 0.0
    %1756 = vmatpush1.msra.mxu0 0.0
    %1757 = vmatprep.subr.mxu0 0.0
    %1758 = vmatpush1.msra.mxu0 0.0
    %1759 = vmatprep.subr.mxu0 0.0
    %1760 = vmatpush1.msra.mxu0 0.0
    %1761 = vmatprep.subr.mxu0 0.0
    %1762 = vmatpush1.msra.mxu0 0.0
    %1763 = vmatprep.subr.mxu0 0.0
    %1764 = vmatpush1.msra.mxu0 0.0
    %1765 = vmatprep.subr.mxu0 0.0
    %1766 = vmatpush1.msra.mxu0 0.0
    %1767 = vmatprep.subr.mxu0 0.0
    %1768 = vmatpush1.msra.mxu0 0.0
    %1769 = vmatprep.subr.mxu0 0.0
    %1770 = vmatpush1.msra.mxu0 0.0
    %1771 = vmatprep.subr.mxu0 0.0
    %1772 = vmatpush1.msra.mxu0 0.0
    %1773 = vmatprep.subr.mxu0 0.0
    %1774 = vmatpush1.msra.mxu0 0.0
    %1775 = vmatprep.mubr.f32.mxu0 0.0
    %1776 = vmatmul.mubr.f32.gmra.mrb[0].mxu0 %v1649
    %v1777 = vpop.f32.mrb[0].mxu0
    %v1778 = vadd.f32 0.0, %v1777
    %v1779 = vpop.f32.mrb[0].mxu0
    %1780 = vmatprep.mubr.f32.mxu0 0.0
    %1781 = vmatmul.mubr.f32.gmra.mrb[0].mxu0 %v1652
    %v1782 = vpop.f32.mrb[0].mxu0
    %v1783 = vadd.f32 0.0, %v1782
    %v1784 = vpop.f32.mrb[0].mxu0
    %1785 = vmatprep.mubr.f32.mxu0 0.0
    %1786 = vmatmul.mubr.f32.gmra.mrb[0].mxu0 %v1655
    %v1787 = vpop.f32.mrb[0].mxu0
    %v1788 = vadd.f32 0.0, %v1787
    %v1789 = vpop.f32.mrb[0].mxu0
    %1790 = vmatprep.mubr.f32.mxu0 0.0
    %1791 = vmatmul.mubr.f32.gmra.mrb[0].mxu0 %v1658
    %v1792 = vpop.f32.mrb[0].mxu0
    %v1793 = vadd.f32 0.0, %v1792
    %v1794 = vpop.f32.mrb[0].mxu0
    %1795 = vmatprep.mubr.f32.mxu0 0.0
    %1796 = vmatmul.mubr.f32.gmra.mrb[0].mxu0 %v1661
    %v1797 = vpop.f32.mrb[0].mxu0
    %v1798 = vadd.f32 0.0, %v1797
    %v1799 = vpop.f32.mrb[0].mxu0
    %1800 = vmatprep.mubr.f32.mxu0 0.0
    %1801 = vmatmul.mubr.f32.gmra.mrb[0].mxu0 %v1664
    %v1802 = vpop.f32.mrb[0].mxu0
    %v1803 = vadd.f32 0.0, %v1802
    %v1804 = vpop.f32.mrb[0].mxu0
    %1805 = vmatprep.mubr.f32.mxu0 0.0
    %1806 = vmatmul.mubr.f32.gmra.mrb[0].mxu0 %v1667
    %v1807 = vpop.f32.mrb[0].mxu0
    %v1808 = vadd.f32 0.0, %v1807
    %v1809 = vpop.f32.mrb[0].mxu0
    %1810 = vmatprep.mubr.f32.mxu0 0.0
    %1811 = vmatmul.mubr.f32.gmra.mrb[0].mxu0 %v1670
    %v1812 = vpop.f32.mrb[0].mxu0
    %v1813 = vadd.f32 0.0, %v1812
    %v1814 = vpop.f32.mrb[0].mxu0
    %1815 = vmatprep.mubr.f32.mxu0 0.0
    %1816 = vmatmul.mubr.f32.gmra.mrb[0].mxu0 %v1673
    %v1817 = vpop.f32.mrb[0].mxu0
    %v1818 = vadd.f32 0.0, %v1817
    %v1819 = vpop.f32.mrb[0].mxu0
    %1820 = vmatprep.mubr.f32.mxu0 0.0
    %1821 = vmatmul.mubr.f32.gmra.mrb[0].mxu0 %v1676
    %v1822 = vpop.f32.mrb[0].mxu0
    %v1823 = vadd.f32 0.0, %v1822
    %v1824 = vpop.f32.mrb[0].mxu0
    %1825 = vmatprep.mubr.f32.mxu0 0.0
    %1826 = vmatmul.mubr.f32.gmra.mrb[0].mxu0 %v1679
    %v1827 = vpop.f32.mrb[0].mxu0
    %v1828 = vadd.f32 0.0, %v1827
    %v1829 = vpop.f32.mrb[0].mxu0
    %1830 = vmatprep.mubr.f32.mxu0 0.0
    %1831 = vmatmul.mubr.f32.gmra.mrb[0].mxu0 %v1682
    %v1832 = vpop.f32.mrb[0].mxu0
    %v1833 = vadd.f32 0.0, %v1832
    %v1834 = vpop.f32.mrb[0].mxu0
    %1835 = vmatprep.mubr.f32.mxu0 0.0
    %1836 = vmatmul.mubr.f32.gmra.mrb[0].mxu0 %v1685
    %v1837 = vpop.f32.mrb[0].mxu0
    %v1838 = vadd.f32 0.0, %v1837
    %v1839 = vpop.f32.mrb[0].mxu0
    %1840 = vmatprep.mubr.f32.mxu0 0.0
    %1841 = vmatmul.mubr.f32.gmra.mrb[0].mxu0 %v1688
    %v1842 = vpop.f32.mrb[0].mxu0
    %v1843 = vadd.f32 0.0, %v1842
    %v1844 = vpop.f32.mrb[0].mxu0
    %1845 = vmatprep.mubr.f32.mxu0 0.0
    %1846 = vmatmul.mubr.f32.gmra.mrb[0].mxu0 %v1691
    %v1847 = vpop.f32.mrb[0].mxu0
    %v1848 = vadd.f32 0.0, %v1847
    %v1849 = vpop.f32.mrb[0].mxu0
    %1850 = vmatprep.mubr.f32.mxu0 0.0
    %1851 = vmatmul.mubr.f32.gmra.mrb[0].mxu0 %v1694
    %v1852 = vpop.f32.mrb[0].mxu0
    %v1853 = vadd.f32 0.0, %v1852
    %v1854 = vpop.f32.mrb[0].mxu0
    %1855 = vmatprep.mubr.f32.mxu0 0.0
    %1856 = vmatmul.mubr.f32.gmra.mrb[0].mxu0 %v1697
    %v1857 = vpop.f32.mrb[0].mxu0
    %v1858 = vadd.f32 0.0, %v1857
    %v1859 = vpop.f32.mrb[0].mxu0
    %1860 = vmatprep.mubr.f32.mxu0 0.0
    %1861 = vmatmul.mubr.f32.gmra.mrb[0].mxu0 %v1700
    %v1862 = vpop.f32.mrb[0].mxu0
    %v1863 = vadd.f32 0.0, %v1862
    %v1864 = vpop.f32.mrb[0].mxu0
    %1865 = vmatprep.mubr.f32.mxu0 0.0
    %1866 = vmatmul.mubr.f32.gmra.mrb[0].mxu0 %v1703
    %v1867 = vpop.f32.mrb[0].mxu0
    %v1868 = vadd.f32 0.0, %v1867
    %v1869 = vpop.f32.mrb[0].mxu0
    %1870 = vmatprep.mubr.f32.mxu0 0.0
    %1871 = vmatmul.mubr.f32.gmra.mrb[0].mxu0 %v1706
    %v1872 = vpop.f32.mrb[0].mxu0
    %v1873 = vadd.f32 0.0, %v1872
    %v1874 = vpop.f32.mrb[0].mxu0
    %1875 = vdwg.mxu0
    %v1876 = vadd.f32 %v1606, %v1778
    %v1877 = vadd.f32 %v1607, %v1783
    %v1878 = vadd.f32 %v1608, %v1788
    %v1879 = vadd.f32 %v1609, %v1793
    %v1880 = vadd.f32 %v1610, %v1798
    %v1881 = vadd.f32 %v1611, %v1803
    %v1882 = vadd.f32 %v1612, %v1808
    %v1883 = vadd.f32 %v1613, %v1813
    %v1884 = vadd.f32 %v1614, %v1818
    %v1885 = vadd.f32 %v1615, %v1823
    %v1886 = vadd.f32 %v1616, %v1828
    %v1887 = vadd.f32 %v1617, %v1833
    %v1888 = vadd.f32 %v1618, %v1838
    %v1889 = vadd.f32 %v1619, %v1843
    %v1890 = vadd.f32 %v1620, %v1848
    %v1891 = vadd.f32 %v1621, %v1853
    %v1892 = vadd.f32 %v1622, %v1858
    %v1893 = vadd.f32 %v1623, %v1863
    %v1894 = vadd.f32 %v1624, %v1868
    %v1895 = vadd.f32 %v1625, %v1873
    %v1896 = vld [vmem:[%s0 + $0xd] sm:$0xff]
    %v1897 = vld [vmem:[%s0 + $0x15] sm:$0xff]
    %v1898 = vld [vmem:[%s0 + $0x1d] sm:$0xff]
    %v1899 = vld [vmem:[%s0 + $0x25] sm:$0xff]
    %v1900 = vld [vmem:[%s0 + $0x2d] sm:$0xff]
    %v1901 = vld [vmem:[%s0 + $0x35] sm:$0xff]
    %v1902 = vld [vmem:[%s0 + $0x3d] sm:$0xff]
    %v1903 = vld [vmem:[%s0 + $0x45] sm:$0xff]
    %v1904 = vld [vmem:[%s0 + $0x4d] sm:$0xff]
    %v1905 = vld [vmem:[%s0 + $0x55] sm:$0xff]
    %v1906 = vld [vmem:[%s0 + $0x5d] sm:$0xff]
    %v1907 = vld [vmem:[%s0 + $0x65] sm:$0xff]
    %v1908 = vld [vmem:[%s0 + $0x6d] sm:$0xff]
    %v1909 = vld [vmem:[%s0 + $0x75] sm:$0xff]
    %v1910 = vld [vmem:[%s0 + $0x7d] sm:$0xff]
    %v1911 = vld [vmem:[%s0 + $0x85] sm:$0xff]
    %v1912 = vld [vmem:[%s0 + $0x8d] sm:$0xff]
    %v1913 = vld [vmem:[%s0 + $0x95] sm:$0xff]
    %v1914 = vld [vmem:[%s0 + $0x9d] sm:$0xff]
    %v1915 = vld [vmem:[%s0 + $0xa5] sm:$0xff]
    %s1916 = scalar_lea.vmem %s2, 14
    %v1917 = vld [vmem:[%s1916] sm:$0x3]
    %v1919 = vsel %vm88, %v1896, 0
    %v1922 = vsel %vm88, %v1897, 0
    %v1925 = vsel %vm88, %v1898, 0
    %v1928 = vsel %vm88, %v1899, 0
    %v1931 = vsel %vm88, %v1900, 0
    %v1934 = vsel %vm88, %v1901, 0
    %v1937 = vsel %vm88, %v1902, 0
    %v1940 = vsel %vm88, %v1903, 0
    %v1943 = vsel %vm88, %v1904, 0
    %v1946 = vsel %vm88, %v1905, 0
    %v1949 = vsel %vm88, %v1906, 0
    %v1952 = vsel %vm88, %v1907, 0
    %v1955 = vsel %vm88, %v1908, 0
    %v1958 = vsel %vm88, %v1909, 0
    %v1961 = vsel %vm88, %v1910, 0
    %v1964 = vsel %vm88, %v1911, 0
    %v1967 = vsel %vm88, %v1912, 0
    %v1970 = vsel %vm88, %v1913, 0
    %v1973 = vsel %vm88, %v1914, 0
    %v1976 = vsel %vm88, %v1915, 0
    %v1979 = vsel %vm149, %v1917, 0
    %1981 = vmatprep.subr.mxu0 0.0
    %1982 = vmatpush1.msra.mxu0 %v1979
    %1983 = vmatprep.subr.mxu0 0.0
    %1984 = vmatpush1.msra.mxu0 0.0
    %1985 = vmatprep.subr.mxu0 0.0
    %1986 = vmatpush1.msra.mxu0 0.0
    %1987 = vmatprep.subr.mxu0 0.0
    %1988 = vmatpush1.msra.mxu0 0.0
    %1989 = vmatprep.subr.mxu0 0.0
    %1990 = vmatpush1.msra.mxu0 0.0
    %1991 = vmatprep.subr.mxu0 0.0
    %1992 = vmatpush1.msra.mxu0 0.0
    %1993 = vmatprep.subr.mxu0 0.0
    %1994 = vmatpush1.msra.mxu0 0.0
    %1995 = vmatprep.subr.mxu0 0.0
    %1996 = vmatpush1.msra.mxu0 0.0
    %1997 = vmatprep.subr.mxu0 0.0
    %1998 = vmatpush1.msra.mxu0 0.0
    %1999 = vmatprep.subr.mxu0 0.0
    %2000 = vmatpush1.msra.mxu0 0.0
    %2001 = vmatprep.subr.mxu0 0.0
    %2002 = vmatpush1.msra.mxu0 0.0
    %2003 = vmatprep.subr.mxu0 0.0
    %2004 = vmatpush1.msra.mxu0 0.0
    %2005 = vmatprep.subr.mxu0 0.0
    %2006 = vmatpush1.msra.mxu0 0.0
    %2007 = vmatprep.subr.mxu0 0.0
    %2008 = vmatpush1.msra.mxu0 0.0
    %2009 = vmatprep.subr.mxu0 0.0
    %2010 = vmatpush1.msra.mxu0 0.0
    %2011 = vmatprep.subr.mxu0 0.0
    %2012 = vmatpush1.msra.mxu0 0.0
    %2013 = vmatprep.subr.mxu0 0.0
    %2014 = vmatpush1.msra.mxu0 0.0
    %2015 = vmatprep.subr.mxu0 0.0
    %2016 = vmatpush1.msra.mxu0 0.0
    %2017 = vmatprep.subr.mxu0 0.0
    %2018 = vmatpush1.msra.mxu0 0.0
    %2019 = vmatprep.subr.mxu0 0.0
    %2020 = vmatpush1.msra.mxu0 0.0
    %2021 = vmatprep.subr.mxu0 0.0
    %2022 = vmatpush1.msra.mxu0 0.0
    %2023 = vmatprep.subr.mxu0 0.0
    %2024 = vmatpush1.msra.mxu0 0.0
    %2025 = vmatprep.subr.mxu0 0.0
    %2026 = vmatpush1.msra.mxu0 0.0
    %2027 = vmatprep.subr.mxu0 0.0
    %2028 = vmatpush1.msra.mxu0 0.0
    %2029 = vmatprep.subr.mxu0 0.0
    %2030 = vmatpush1.msra.mxu0 0.0
    %2031 = vmatprep.subr.mxu0 0.0
    %2032 = vmatpush1.msra.mxu0 0.0
    %2033 = vmatprep.subr.mxu0 0.0
    %2034 = vmatpush1.msra.mxu0 0.0
    %2035 = vmatprep.subr.mxu0 0.0
    %2036 = vmatpush1.msra.mxu0 0.0
    %2037 = vmatprep.subr.mxu0 0.0
    %2038 = vmatpush1.msra.mxu0 0.0
    %2039 = vmatprep.subr.mxu0 0.0
    %2040 = vmatpush1.msra.mxu0 0.0
    %2041 = vmatprep.subr.mxu0 0.0
    %2042 = vmatpush1.msra.mxu0 0.0
    %2043 = vmatprep.subr.mxu0 0.0
    %2044 = vmatpush1.msra.mxu0 0.0
    %2045 = vmatprep.mubr.f32.mxu0 0.0
    %2046 = vmatmul.mubr.f32.gmra.mrb[0].mxu0 %v1919
    %v2047 = vpop.f32.mrb[0].mxu0
    %v2048 = vadd.f32 0.0, %v2047
    %v2049 = vpop.f32.mrb[0].mxu0
    %2050 = vmatprep.mubr.f32.mxu0 0.0
    %2051 = vmatmul.mubr.f32.gmra.mrb[0].mxu0 %v1922
    %v2052 = vpop.f32.mrb[0].mxu0
    %v2053 = vadd.f32 0.0, %v2052
    %v2054 = vpop.f32.mrb[0].mxu0
    %2055 = vmatprep.mubr.f32.mxu0 0.0
    %2056 = vmatmul.mubr.f32.gmra.mrb[0].mxu0 %v1925
    %v2057 = vpop.f32.mrb[0].mxu0
    %v2058 = vadd.f32 0.0, %v2057
    %v2059 = vpop.f32.mrb[0].mxu0
    %2060 = vmatprep.mubr.f32.mxu0 0.0
    %2061 = vmatmul.mubr.f32.gmra.mrb[0].mxu0 %v1928
    %v2062 = vpop.f32.mrb[0].mxu0
    %v2063 = vadd.f32 0.0, %v2062
    %v2064 = vpop.f32.mrb[0].mxu0
    %2065 = vmatprep.mubr.f32.mxu0 0.0
    %2066 = vmatmul.mubr.f32.gmra.mrb[0].mxu0 %v1931
    %v2067 = vpop.f32.mrb[0].mxu0
    %v2068 = vadd.f32 0.0, %v2067
    %v2069 = vpop.f32.mrb[0].mxu0
    %2070 = vmatprep.mubr.f32.mxu0 0.0
    %2071 = vmatmul.mubr.f32.gmra.mrb[0].mxu0 %v1934
    %v2072 = vpop.f32.mrb[0].mxu0
    %v2073 = vadd.f32 0.0, %v2072
    %v2074 = vpop.f32.mrb[0].mxu0
    %2075 = vmatprep.mubr.f32.mxu0 0.0
    %2076 = vmatmul.mubr.f32.gmra.mrb[0].mxu0 %v1937
    %v2077 = vpop.f32.mrb[0].mxu0
    %v2078 = vadd.f32 0.0, %v2077
    %v2079 = vpop.f32.mrb[0].mxu0
    %2080 = vmatprep.mubr.f32.mxu0 0.0
    %2081 = vmatmul.mubr.f32.gmra.mrb[0].mxu0 %v1940
    %v2082 = vpop.f32.mrb[0].mxu0
    %v2083 = vadd.f32 0.0, %v2082
    %v2084 = vpop.f32.mrb[0].mxu0
    %2085 = vmatprep.mubr.f32.mxu0 0.0
    %2086 = vmatmul.mubr.f32.gmra.mrb[0].mxu0 %v1943
    %v2087 = vpop.f32.mrb[0].mxu0
    %v2088 = vadd.f32 0.0, %v2087
    %v2089 = vpop.f32.mrb[0].mxu0
    %2090 = vmatprep.mubr.f32.mxu0 0.0
    %2091 = vmatmul.mubr.f32.gmra.mrb[0].mxu0 %v1946
    %v2092 = vpop.f32.mrb[0].mxu0
    %v2093 = vadd.f32 0.0, %v2092
    %v2094 = vpop.f32.mrb[0].mxu0
    %2095 = vmatprep.mubr.f32.mxu0 0.0
    %2096 = vmatmul.mubr.f32.gmra.mrb[0].mxu0 %v1949
    %v2097 = vpop.f32.mrb[0].mxu0
    %v2098 = vadd.f32 0.0, %v2097
    %v2099 = vpop.f32.mrb[0].mxu0
    %2100 = vmatprep.mubr.f32.mxu0 0.0
    %2101 = vmatmul.mubr.f32.gmra.mrb[0].mxu0 %v1952
    %v2102 = vpop.f32.mrb[0].mxu0
    %v2103 = vadd.f32 0.0, %v2102
    %v2104 = vpop.f32.mrb[0].mxu0
    %2105 = vmatprep.mubr.f32.mxu0 0.0
    %2106 = vmatmul.mubr.f32.gmra.mrb[0].mxu0 %v1955
    %v2107 = vpop.f32.mrb[0].mxu0
    %v2108 = vadd.f32 0.0, %v2107
    %v2109 = vpop.f32.mrb[0].mxu0
    %2110 = vmatprep.mubr.f32.mxu0 0.0
    %2111 = vmatmul.mubr.f32.gmra.mrb[0].mxu0 %v1958
    %v2112 = vpop.f32.mrb[0].mxu0
    %v2113 = vadd.f32 0.0, %v2112
    %v2114 = vpop.f32.mrb[0].mxu0
    %2115 = vmatprep.mubr.f32.mxu0 0.0
    %2116 = vmatmul.mubr.f32.gmra.mrb[0].mxu0 %v1961
    %v2117 = vpop.f32.mrb[0].mxu0
    %v2118 = vadd.f32 0.0, %v2117
    %v2119 = vpop.f32.mrb[0].mxu0
    %2120 = vmatprep.mubr.f32.mxu0 0.0
    %2121 = vmatmul.mubr.f32.gmra.mrb[0].mxu0 %v1964
    %v2122 = vpop.f32.mrb[0].mxu0
    %v2123 = vadd.f32 0.0, %v2122
    %v2124 = vpop.f32.mrb[0].mxu0
    %2125 = vmatprep.mubr.f32.mxu0 0.0
    %2126 = vmatmul.mubr.f32.gmra.mrb[0].mxu0 %v1967
    %v2127 = vpop.f32.mrb[0].mxu0
    %v2128 = vadd.f32 0.0, %v2127
    %v2129 = vpop.f32.mrb[0].mxu0
    %2130 = vmatprep.mubr.f32.mxu0 0.0
    %2131 = vmatmul.mubr.f32.gmra.mrb[0].mxu0 %v1970
    %v2132 = vpop.f32.mrb[0].mxu0
    %v2133 = vadd.f32 0.0, %v2132
    %v2134 = vpop.f32.mrb[0].mxu0
    %2135 = vmatprep.mubr.f32.mxu0 0.0
    %2136 = vmatmul.mubr.f32.gmra.mrb[0].mxu0 %v1973
    %v2137 = vpop.f32.mrb[0].mxu0
    %v2138 = vadd.f32 0.0, %v2137
    %v2139 = vpop.f32.mrb[0].mxu0
    %2140 = vmatprep.mubr.f32.mxu0 0.0
    %2141 = vmatmul.mubr.f32.gmra.mrb[0].mxu0 %v1976
    %v2142 = vpop.f32.mrb[0].mxu0
    %v2143 = vadd.f32 0.0, %v2142
    %v2144 = vpop.f32.mrb[0].mxu0
    %2145 = vdwg.mxu0
    %v2146 = vadd.f32 %v1876, %v2048
    %v2147 = vadd.f32 %v1877, %v2053
    %v2148 = vadd.f32 %v1878, %v2058
    %v2149 = vadd.f32 %v1879, %v2063
    %v2150 = vadd.f32 %v1880, %v2068
    %v2151 = vadd.f32 %v1881, %v2073
    %v2152 = vadd.f32 %v1882, %v2078
    %v2153 = vadd.f32 %v1883, %v2083
    %v2154 = vadd.f32 %v1884, %v2088
    %v2155 = vadd.f32 %v1885, %v2093
    %v2156 = vadd.f32 %v1886, %v2098
    %v2157 = vadd.f32 %v1887, %v2103
    %v2158 = vadd.f32 %v1888, %v2108
    %v2159 = vadd.f32 %v1889, %v2113
    %v2160 = vadd.f32 %v1890, %v2118
    %v2161 = vadd.f32 %v1891, %v2123
    %v2162 = vadd.f32 %v1892, %v2128
    %v2163 = vadd.f32 %v1893, %v2133
    %v2164 = vadd.f32 %v1894, %v2138
    %v2165 = vadd.f32 %v1895, %v2143
    %v2166 = vld [vmem:[%s0 + $0x14] sm:$0xff]
    %v2167 = vld [vmem:[%s0 + $0x1c] sm:$0xff]
    %v2168 = vld [vmem:[%s0 + $0x24] sm:$0xff]
    %v2169 = vld [vmem:[%s0 + $0x2c] sm:$0xff]
    %v2170 = vld [vmem:[%s0 + $0x34] sm:$0xff]
    %v2171 = vld [vmem:[%s0 + $0x3c] sm:$0xff]
    %v2172 = vld [vmem:[%s0 + $0x44] sm:$0xff]
    %v2173 = vld [vmem:[%s0 + $0x4c] sm:$0xff]
    %v2174 = vld [vmem:[%s0 + $0x54] sm:$0xff]
    %v2175 = vld [vmem:[%s0 + $0x5c] sm:$0xff]
    %v2176 = vld [vmem:[%s0 + $0x64] sm:$0xff]
    %v2177 = vld [vmem:[%s0 + $0x6c] sm:$0xff]
    %v2178 = vld [vmem:[%s0 + $0x74] sm:$0xff]
    %v2179 = vld [vmem:[%s0 + $0x7c] sm:$0xff]
    %v2180 = vld [vmem:[%s0 + $0x84] sm:$0xff]
    %v2181 = vld [vmem:[%s0 + $0x8c] sm:$0xff]
    %v2182 = vld [vmem:[%s0 + $0x94] sm:$0xff]
    %v2183 = vld [vmem:[%s0 + $0x9c] sm:$0xff]
    %v2184 = vld [vmem:[%s0 + $0xa4] sm:$0xff]
    %v2185 = vld [vmem:[%s0 + $0xac] sm:$0xff]
    %s2186 = scalar_lea.vmem %s2, 16
    %v2187 = vld [vmem:[%s2186] sm:$0x3]
    %v2189 = vsel %vm88, %v2166, 0
    %v2192 = vsel %vm88, %v2167, 0
    %v2195 = vsel %vm88, %v2168, 0
    %v2198 = vsel %vm88, %v2169, 0
    %v2201 = vsel %vm88, %v2170, 0
    %v2204 = vsel %vm88, %v2171, 0
    %v2207 = vsel %vm88, %v2172, 0
    %v2210 = vsel %vm88, %v2173, 0
    %v2213 = vsel %vm88, %v2174, 0
    %v2216 = vsel %vm88, %v2175, 0
    %v2219 = vsel %vm88, %v2176, 0
    %v2222 = vsel %vm88, %v2177, 0
    %v2225 = vsel %vm88, %v2178, 0
    %v2228 = vsel %vm88, %v2179, 0
    %v2231 = vsel %vm88, %v2180, 0
    %v2234 = vsel %vm88, %v2181, 0
    %v2237 = vsel %vm88, %v2182, 0
    %v2240 = vsel %vm88, %v2183, 0
    %v2243 = vsel %vm88, %v2184, 0
    %v2246 = vsel %vm88, %v2185, 0
    %v2249 = vsel %vm149, %v2187, 0
    %2251 = vmatprep.subr.mxu0 0.0
    %2252 = vmatpush1.msra.mxu0 %v2249
    %2253 = vmatprep.subr.mxu0 0.0
    %2254 = vmatpush1.msra.mxu0 0.0
    %2255 = vmatprep.subr.mxu0 0.0
    %2256 = vmatpush1.msra.mxu0 0.0
    %2257 = vmatprep.subr.mxu0 0.0
    %2258 = vmatpush1.msra.mxu0 0.0
    %2259 = vmatprep.subr.mxu0 0.0
    %2260 = vmatpush1.msra.mxu0 0.0
    %2261 = vmatprep.subr.mxu0 0.0
    %2262 = vmatpush1.msra.mxu0 0.0
    %2263 = vmatprep.subr.mxu0 0.0
    %2264 = vmatpush1.msra.mxu0 0.0
    %2265 = vmatprep.subr.mxu0 0.0
    %2266 = vmatpush1.msra.mxu0 0.0
    %2267 = vmatprep.subr.mxu0 0.0
    %2268 = vmatpush1.msra.mxu0 0.0
    %2269 = vmatprep.subr.mxu0 0.0
    %2270 = vmatpush1.msra.mxu0 0.0
    %2271 = vmatprep.subr.mxu0 0.0
    %2272 = vmatpush1.msra.mxu0 0.0
    %2273 = vmatprep.subr.mxu0 0.0
    %2274 = vmatpush1.msra.mxu0 0.0
    %2275 = vmatprep.subr.mxu0 0.0
    %2276 = vmatpush1.msra.mxu0 0.0
    %2277 = vmatprep.subr.mxu0 0.0
    %2278 = vmatpush1.msra.mxu0 0.0
    %2279 = vmatprep.subr.mxu0 0.0
    %2280 = vmatpush1.msra.mxu0 0.0
    %2281 = vmatprep.subr.mxu0 0.0
    %2282 = vmatpush1.msra.mxu0 0.0
    %2283 = vmatprep.subr.mxu0 0.0
    %2284 = vmatpush1.msra.mxu0 0.0
    %2285 = vmatprep.subr.mxu0 0.0
    %2286 = vmatpush1.msra.mxu0 0.0
    %2287 = vmatprep.subr.mxu0 0.0
    %2288 = vmatpush1.msra.mxu0 0.0
    %2289 = vmatprep.subr.mxu0 0.0
    %2290 = vmatpush1.msra.mxu0 0.0
    %2291 = vmatprep.subr.mxu0 0.0
    %2292 = vmatpush1.msra.mxu0 0.0
    %2293 = vmatprep.subr.mxu0 0.0
    %2294 = vmatpush1.msra.mxu0 0.0
    %2295 = vmatprep.subr.mxu0 0.0
    %2296 = vmatpush1.msra.mxu0 0.0
    %2297 = vmatprep.subr.mxu0 0.0
    %2298 = vmatpush1.msra.mxu0 0.0
    %2299 = vmatprep.subr.mxu0 0.0
    %2300 = vmatpush1.msra.mxu0 0.0
    %2301 = vmatprep.subr.mxu0 0.0
    %2302 = vmatpush1.msra.mxu0 0.0
    %2303 = vmatprep.subr.mxu0 0.0
    %2304 = vmatpush1.msra.mxu0 0.0
    %2305 = vmatprep.subr.mxu0 0.0
    %2306 = vmatpush1.msra.mxu0 0.0
    %2307 = vmatprep.subr.mxu0 0.0
    %2308 = vmatpush1.msra.mxu0 0.0
    %2309 = vmatprep.subr.mxu0 0.0
    %2310 = vmatpush1.msra.mxu0 0.0
    %2311 = vmatprep.subr.mxu0 0.0
    %2312 = vmatpush1.msra.mxu0 0.0
    %2313 = vmatprep.subr.mxu0 0.0
    %2314 = vmatpush1.msra.mxu0 0.0
    %2315 = vmatprep.mubr.f32.mxu0 0.0
    %2316 = vmatmul.mubr.f32.gmra.mrb[0].mxu0 %v2189
    %v2317 = vpop.f32.mrb[0].mxu0
    %v2318 = vadd.f32 0.0, %v2317
    %v2319 = vpop.f32.mrb[0].mxu0
    %2320 = vmatprep.mubr.f32.mxu0 0.0
    %2321 = vmatmul.mubr.f32.gmra.mrb[0].mxu0 %v2192
    %v2322 = vpop.f32.mrb[0].mxu0
    %v2323 = vadd.f32 0.0, %v2322
    %v2324 = vpop.f32.mrb[0].mxu0
    %2325 = vmatprep.mubr.f32.mxu0 0.0
    %2326 = vmatmul.mubr.f32.gmra.mrb[0].mxu0 %v2195
    %v2327 = vpop.f32.mrb[0].mxu0
    %v2328 = vadd.f32 0.0, %v2327
    %v2329 = vpop.f32.mrb[0].mxu0
    %2330 = vmatprep.mubr.f32.mxu0 0.0
    %2331 = vmatmul.mubr.f32.gmra.mrb[0].mxu0 %v2198
    %v2332 = vpop.f32.mrb[0].mxu0
    %v2333 = vadd.f32 0.0, %v2332
    %v2334 = vpop.f32.mrb[0].mxu0
    %2335 = vmatprep.mubr.f32.mxu0 0.0
    %2336 = vmatmul.mubr.f32.gmra.mrb[0].mxu0 %v2201
    %v2337 = vpop.f32.mrb[0].mxu0
    %v2338 = vadd.f32 0.0, %v2337
    %v2339 = vpop.f32.mrb[0].mxu0
    %2340 = vmatprep.mubr.f32.mxu0 0.0
    %2341 = vmatmul.mubr.f32.gmra.mrb[0].mxu0 %v2204
    %v2342 = vpop.f32.mrb[0].mxu0
    %v2343 = vadd.f32 0.0, %v2342
    %v2344 = vpop.f32.mrb[0].mxu0
    %2345 = vmatprep.mubr.f32.mxu0 0.0
    %2346 = vmatmul.mubr.f32.gmra.mrb[0].mxu0 %v2207
    %v2347 = vpop.f32.mrb[0].mxu0
    %v2348 = vadd.f32 0.0, %v2347
    %v2349 = vpop.f32.mrb[0].mxu0
    %2350 = vmatprep.mubr.f32.mxu0 0.0
    %2351 = vmatmul.mubr.f32.gmra.mrb[0].mxu0 %v2210
    %v2352 = vpop.f32.mrb[0].mxu0
    %v2353 = vadd.f32 0.0, %v2352
    %v2354 = vpop.f32.mrb[0].mxu0
    %2355 = vmatprep.mubr.f32.mxu0 0.0
    %2356 = vmatmul.mubr.f32.gmra.mrb[0].mxu0 %v2213
    %v2357 = vpop.f32.mrb[0].mxu0
    %v2358 = vadd.f32 0.0, %v2357
    %v2359 = vpop.f32.mrb[0].mxu0
    %2360 = vmatprep.mubr.f32.mxu0 0.0
    %2361 = vmatmul.mubr.f32.gmra.mrb[0].mxu0 %v2216
    %v2362 = vpop.f32.mrb[0].mxu0
    %v2363 = vadd.f32 0.0, %v2362
    %v2364 = vpop.f32.mrb[0].mxu0
    %2365 = vmatprep.mubr.f32.mxu0 0.0
    %2366 = vmatmul.mubr.f32.gmra.mrb[0].mxu0 %v2219
    %v2367 = vpop.f32.mrb[0].mxu0
    %v2368 = vadd.f32 0.0, %v2367
    %v2369 = vpop.f32.mrb[0].mxu0
    %2370 = vmatprep.mubr.f32.mxu0 0.0
    %2371 = vmatmul.mubr.f32.gmra.mrb[0].mxu0 %v2222
    %v2372 = vpop.f32.mrb[0].mxu0
    %v2373 = vadd.f32 0.0, %v2372
    %v2374 = vpop.f32.mrb[0].mxu0
    %2375 = vmatprep.mubr.f32.mxu0 0.0
    %2376 = vmatmul.mubr.f32.gmra.mrb[0].mxu0 %v2225
    %v2377 = vpop.f32.mrb[0].mxu0
    %v2378 = vadd.f32 0.0, %v2377
    %v2379 = vpop.f32.mrb[0].mxu0
    %2380 = vmatprep.mubr.f32.mxu0 0.0
    %2381 = vmatmul.mubr.f32.gmra.mrb[0].mxu0 %v2228
    %v2382 = vpop.f32.mrb[0].mxu0
    %v2383 = vadd.f32 0.0, %v2382
    %v2384 = vpop.f32.mrb[0].mxu0
    %2385 = vmatprep.mubr.f32.mxu0 0.0
    %2386 = vmatmul.mubr.f32.gmra.mrb[0].mxu0 %v2231
    %v2387 = vpop.f32.mrb[0].mxu0
    %v2388 = vadd.f32 0.0, %v2387
    %v2389 = vpop.f32.mrb[0].mxu0
    %2390 = vmatprep.mubr.f32.mxu0 0.0
    %2391 = vmatmul.mubr.f32.gmra.mrb[0].mxu0 %v2234
    %v2392 = vpop.f32.mrb[0].mxu0
    %v2393 = vadd.f32 0.0, %v2392
    %v2394 = vpop.f32.mrb[0].mxu0
    %2395 = vmatprep.mubr.f32.mxu0 0.0
    %2396 = vmatmul.mubr.f32.gmra.mrb[0].mxu0 %v2237
    %v2397 = vpop.f32.mrb[0].mxu0
    %v2398 = vadd.f32 0.0, %v2397
    %v2399 = vpop.f32.mrb[0].mxu0
    %2400 = vmatprep.mubr.f32.mxu0 0.0
    %2401 = vmatmul.mubr.f32.gmra.mrb[0].mxu0 %v2240
    %v2402 = vpop.f32.mrb[0].mxu0
    %v2403 = vadd.f32 0.0, %v2402
    %v2404 = vpop.f32.mrb[0].mxu0
    %2405 = vmatprep.mubr.f32.mxu0 0.0
    %2406 = vmatmul.mubr.f32.gmra.mrb[0].mxu0 %v2243
    %v2407 = vpop.f32.mrb[0].mxu0
    %v2408 = vadd.f32 0.0, %v2407
    %v2409 = vpop.f32.mrb[0].mxu0
    %2410 = vmatprep.mubr.f32.mxu0 0.0
    %2411 = vmatmul.mubr.f32.gmra.mrb[0].mxu0 %v2246
    %v2412 = vpop.f32.mrb[0].mxu0
    %v2413 = vadd.f32 0.0, %v2412
    %v2414 = vpop.f32.mrb[0].mxu0
    %2415 = vdwg.mxu0
    %v2416 = vadd.f32 %v2146, %v2318
    %v2417 = vadd.f32 %v2147, %v2323
    %v2418 = vadd.f32 %v2148, %v2328
    %v2419 = vadd.f32 %v2149, %v2333
    %v2420 = vadd.f32 %v2150, %v2338
    %v2421 = vadd.f32 %v2151, %v2343
    %v2422 = vadd.f32 %v2152, %v2348
    %v2423 = vadd.f32 %v2153, %v2353
    %v2424 = vadd.f32 %v2154, %v2358
    %v2425 = vadd.f32 %v2155, %v2363
    %v2426 = vadd.f32 %v2156, %v2368
    %v2427 = vadd.f32 %v2157, %v2373
    %v2428 = vadd.f32 %v2158, %v2378
    %v2429 = vadd.f32 %v2159, %v2383
    %v2430 = vadd.f32 %v2160, %v2388
    %v2431 = vadd.f32 %v2161, %v2393
    %v2432 = vadd.f32 %v2162, %v2398
    %v2433 = vadd.f32 %v2163, %v2403
    %v2434 = vadd.f32 %v2164, %v2408
    %v2435 = vadd.f32 %v2165, %v2413
    %v2436 = vld [vmem:[%s0 + $0x15] sm:$0xff]
    %v2437 = vld [vmem:[%s0 + $0x1d] sm:$0xff]
    %v2438 = vld [vmem:[%s0 + $0x25] sm:$0xff]
    %v2439 = vld [vmem:[%s0 + $0x2d] sm:$0xff]
    %v2440 = vld [vmem:[%s0 + $0x35] sm:$0xff]
    %v2441 = vld [vmem:[%s0 + $0x3d] sm:$0xff]
    %v2442 = vld [vmem:[%s0 + $0x45] sm:$0xff]
    %v2443 = vld [vmem:[%s0 + $0x4d] sm:$0xff]
    %v2444 = vld [vmem:[%s0 + $0x55] sm:$0xff]
    %v2445 = vld [vmem:[%s0 + $0x5d] sm:$0xff]
    %v2446 = vld [vmem:[%s0 + $0x65] sm:$0xff]
    %v2447 = vld [vmem:[%s0 + $0x6d] sm:$0xff]
    %v2448 = vld [vmem:[%s0 + $0x75] sm:$0xff]
    %v2449 = vld [vmem:[%s0 + $0x7d] sm:$0xff]
    %v2450 = vld [vmem:[%s0 + $0x85] sm:$0xff]
    %v2451 = vld [vmem:[%s0 + $0x8d] sm:$0xff]
    %v2452 = vld [vmem:[%s0 + $0x95] sm:$0xff]
    %v2453 = vld [vmem:[%s0 + $0x9d] sm:$0xff]
    %v2454 = vld [vmem:[%s0 + $0xa5] sm:$0xff]
    %v2455 = vld [vmem:[%s0 + $0xad] sm:$0xff]
    %s2456 = scalar_lea.vmem %s2, 18
    %v2457 = vld [vmem:[%s2456] sm:$0x3]
    %v2459 = vsel %vm88, %v2436, 0
    %v2462 = vsel %vm88, %v2437, 0
    %v2465 = vsel %vm88, %v2438, 0
    %v2468 = vsel %vm88, %v2439, 0
    %v2471 = vsel %vm88, %v2440, 0
    %v2474 = vsel %vm88, %v2441, 0
    %v2477 = vsel %vm88, %v2442, 0
    %v2480 = vsel %vm88, %v2443, 0
    %v2483 = vsel %vm88, %v2444, 0
    %v2486 = vsel %vm88, %v2445, 0
    %v2489 = vsel %vm88, %v2446, 0
    %v2492 = vsel %vm88, %v2447, 0
    %v2495 = vsel %vm88, %v2448, 0
    %v2498 = vsel %vm88, %v2449, 0
    %v2501 = vsel %vm88, %v2450, 0
    %v2504 = vsel %vm88, %v2451, 0
    %v2507 = vsel %vm88, %v2452, 0
    %v2510 = vsel %vm88, %v2453, 0
    %v2513 = vsel %vm88, %v2454, 0
    %v2516 = vsel %vm88, %v2455, 0
    %v2519 = vsel %vm149, %v2457, 0
    %2521 = vmatprep.subr.mxu0 0.0
    %2522 = vmatpush1.msra.mxu0 %v2519
    %2523 = vmatprep.subr.mxu0 0.0
    %2524 = vmatpush1.msra.mxu0 0.0
    %2525 = vmatprep.subr.mxu0 0.0
    %2526 = vmatpush1.msra.mxu0 0.0
    %2527 = vmatprep.subr.mxu0 0.0
    %2528 = vmatpush1.msra.mxu0 0.0
    %2529 = vmatprep.subr.mxu0 0.0
    %2530 = vmatpush1.msra.mxu0 0.0
    %2531 = vmatprep.subr.mxu0 0.0
    %2532 = vmatpush1.msra.mxu0 0.0
    %2533 = vmatprep.subr.mxu0 0.0
    %2534 = vmatpush1.msra.mxu0 0.0
    %2535 = vmatprep.subr.mxu0 0.0
    %2536 = vmatpush1.msra.mxu0 0.0
    %2537 = vmatprep.subr.mxu0 0.0
    %2538 = vmatpush1.msra.mxu0 0.0
    %2539 = vmatprep.subr.mxu0 0.0
    %2540 = vmatpush1.msra.mxu0 0.0
    %2541 = vmatprep.subr.mxu0 0.0
    %2542 = vmatpush1.msra.mxu0 0.0
    %2543 = vmatprep.subr.mxu0 0.0
    %2544 = vmatpush1.msra.mxu0 0.0
    %2545 = vmatprep.subr.mxu0 0.0
    %2546 = vmatpush1.msra.mxu0 0.0
    %2547 = vmatprep.subr.mxu0 0.0
    %2548 = vmatpush1.msra.mxu0 0.0
    %2549 = vmatprep.subr.mxu0 0.0
    %2550 = vmatpush1.msra.mxu0 0.0
    %2551 = vmatprep.subr.mxu0 0.0
    %2552 = vmatpush1.msra.mxu0 0.0
    %2553 = vmatprep.subr.mxu0 0.0
    %2554 = vmatpush1.msra.mxu0 0.0
    %2555 = vmatprep.subr.mxu0 0.0
    %2556 = vmatpush1.msra.mxu0 0.0
    %2557 = vmatprep.subr.mxu0 0.0
    %2558 = vmatpush1.msra.mxu0 0.0
    %2559 = vmatprep.subr.mxu0 0.0
    %2560 = vmatpush1.msra.mxu0 0.0
    %2561 = vmatprep.subr.mxu0 0.0
    %2562 = vmatpush1.msra.mxu0 0.0
    %2563 = vmatprep.subr.mxu0 0.0
    %2564 = vmatpush1.msra.mxu0 0.0
    %2565 = vmatprep.subr.mxu0 0.0
    %2566 = vmatpush1.msra.mxu0 0.0
    %2567 = vmatprep.subr.mxu0 0.0
    %2568 = vmatpush1.msra.mxu0 0.0
    %2569 = vmatprep.subr.mxu0 0.0
    %2570 = vmatpush1.msra.mxu0 0.0
    %2571 = vmatprep.subr.mxu0 0.0
    %2572 = vmatpush1.msra.mxu0 0.0
    %2573 = vmatprep.subr.mxu0 0.0
    %2574 = vmatpush1.msra.mxu0 0.0
    %2575 = vmatprep.subr.mxu0 0.0
    %2576 = vmatpush1.msra.mxu0 0.0
    %2577 = vmatprep.subr.mxu0 0.0
    %2578 = vmatpush1.msra.mxu0 0.0
    %2579 = vmatprep.subr.mxu0 0.0
    %2580 = vmatpush1.msra.mxu0 0.0
    %2581 = vmatprep.subr.mxu0 0.0
    %2582 = vmatpush1.msra.mxu0 0.0
    %2583 = vmatprep.subr.mxu0 0.0
    %2584 = vmatpush1.msra.mxu0 0.0
    %2585 = vmatprep.mubr.f32.mxu0 0.0
    %2586 = vmatmul.mubr.f32.gmra.mrb[0].mxu0 %v2459
    %v2587 = vpop.f32.mrb[0].mxu0
    %v2588 = vadd.f32 0.0, %v2587
    %v2589 = vpop.f32.mrb[0].mxu0
    %2590 = vmatprep.mubr.f32.mxu0 0.0
    %2591 = vmatmul.mubr.f32.gmra.mrb[0].mxu0 %v2462
    %v2592 = vpop.f32.mrb[0].mxu0
    %v2593 = vadd.f32 0.0, %v2592
    %v2594 = vpop.f32.mrb[0].mxu0
    %2595 = vmatprep.mubr.f32.mxu0 0.0
    %2596 = vmatmul.mubr.f32.gmra.mrb[0].mxu0 %v2465
    %v2597 = vpop.f32.mrb[0].mxu0
    %v2598 = vadd.f32 0.0, %v2597
    %v2599 = vpop.f32.mrb[0].mxu0
    %2600 = vmatprep.mubr.f32.mxu0 0.0
    %2601 = vmatmul.mubr.f32.gmra.mrb[0].mxu0 %v2468
    %v2602 = vpop.f32.mrb[0].mxu0
    %v2603 = vadd.f32 0.0, %v2602
    %v2604 = vpop.f32.mrb[0].mxu0
    %2605 = vmatprep.mubr.f32.mxu0 0.0
    %2606 = vmatmul.mubr.f32.gmra.mrb[0].mxu0 %v2471
    %v2607 = vpop.f32.mrb[0].mxu0
    %v2608 = vadd.f32 0.0, %v2607
    %v2609 = vpop.f32.mrb[0].mxu0
    %2610 = vmatprep.mubr.f32.mxu0 0.0
    %2611 = vmatmul.mubr.f32.gmra.mrb[0].mxu0 %v2474
    %v2612 = vpop.f32.mrb[0].mxu0
    %v2613 = vadd.f32 0.0, %v2612
    %v2614 = vpop.f32.mrb[0].mxu0
    %2615 = vmatprep.mubr.f32.mxu0 0.0
    %2616 = vmatmul.mubr.f32.gmra.mrb[0].mxu0 %v2477
    %v2617 = vpop.f32.mrb[0].mxu0
    %v2618 = vadd.f32 0.0, %v2617
    %v2619 = vpop.f32.mrb[0].mxu0
    %2620 = vmatprep.mubr.f32.mxu0 0.0
    %2621 = vmatmul.mubr.f32.gmra.mrb[0].mxu0 %v2480
    %v2622 = vpop.f32.mrb[0].mxu0
    %v2623 = vadd.f32 0.0, %v2622
    %v2624 = vpop.f32.mrb[0].mxu0
    %2625 = vmatprep.mubr.f32.mxu0 0.0
    %2626 = vmatmul.mubr.f32.gmra.mrb[0].mxu0 %v2483
    %v2627 = vpop.f32.mrb[0].mxu0
    %v2628 = vadd.f32 0.0, %v2627
    %v2629 = vpop.f32.mrb[0].mxu0
    %2630 = vmatprep.mubr.f32.mxu0 0.0
    %2631 = vmatmul.mubr.f32.gmra.mrb[0].mxu0 %v2486
    %v2632 = vpop.f32.mrb[0].mxu0
    %v2633 = vadd.f32 0.0, %v2632
    %v2634 = vpop.f32.mrb[0].mxu0
    %2635 = vmatprep.mubr.f32.mxu0 0.0
    %2636 = vmatmul.mubr.f32.gmra.mrb[0].mxu0 %v2489
    %v2637 = vpop.f32.mrb[0].mxu0
    %v2638 = vadd.f32 0.0, %v2637
    %v2639 = vpop.f32.mrb[0].mxu0
    %2640 = vmatprep.mubr.f32.mxu0 0.0
    %2641 = vmatmul.mubr.f32.gmra.mrb[0].mxu0 %v2492
    %v2642 = vpop.f32.mrb[0].mxu0
    %v2643 = vadd.f32 0.0, %v2642
    %v2644 = vpop.f32.mrb[0].mxu0
    %2645 = vmatprep.mubr.f32.mxu0 0.0
    %2646 = vmatmul.mubr.f32.gmra.mrb[0].mxu0 %v2495
    %v2647 = vpop.f32.mrb[0].mxu0
    %v2648 = vadd.f32 0.0, %v2647
    %v2649 = vpop.f32.mrb[0].mxu0
    %2650 = vmatprep.mubr.f32.mxu0 0.0
    %2651 = vmatmul.mubr.f32.gmra.mrb[0].mxu0 %v2498
    %v2652 = vpop.f32.mrb[0].mxu0
    %v2653 = vadd.f32 0.0, %v2652
    %v2654 = vpop.f32.mrb[0].mxu0
    %2655 = vmatprep.mubr.f32.mxu0 0.0
    %2656 = vmatmul.mubr.f32.gmra.mrb[0].mxu0 %v2501
    %v2657 = vpop.f32.mrb[0].mxu0
    %v2658 = vadd.f32 0.0, %v2657
    %v2659 = vpop.f32.mrb[0].mxu0
    %2660 = vmatprep.mubr.f32.mxu0 0.0
    %2661 = vmatmul.mubr.f32.gmra.mrb[0].mxu0 %v2504
    %v2662 = vpop.f32.mrb[0].mxu0
    %v2663 = vadd.f32 0.0, %v2662
    %v2664 = vpop.f32.mrb[0].mxu0
    %2665 = vmatprep.mubr.f32.mxu0 0.0
    %2666 = vmatmul.mubr.f32.gmra.mrb[0].mxu0 %v2507
    %v2667 = vpop.f32.mrb[0].mxu0
    %v2668 = vadd.f32 0.0, %v2667
    %v2669 = vpop.f32.mrb[0].mxu0
    %2670 = vmatprep.mubr.f32.mxu0 0.0
    %2671 = vmatmul.mubr.f32.gmra.mrb[0].mxu0 %v2510
    %v2672 = vpop.f32.mrb[0].mxu0
    %v2673 = vadd.f32 0.0, %v2672
    %v2674 = vpop.f32.mrb[0].mxu0
    %2675 = vmatprep.mubr.f32.mxu0 0.0
    %2676 = vmatmul.mubr.f32.gmra.mrb[0].mxu0 %v2513
    %v2677 = vpop.f32.mrb[0].mxu0
    %v2678 = vadd.f32 0.0, %v2677
    %v2679 = vpop.f32.mrb[0].mxu0
    %2680 = vmatprep.mubr.f32.mxu0 0.0
    %2681 = vmatmul.mubr.f32.gmra.mrb[0].mxu0 %v2516
    %v2682 = vpop.f32.mrb[0].mxu0
    %v2683 = vadd.f32 0.0, %v2682
    %v2684 = vpop.f32.mrb[0].mxu0
    %2685 = vdwg.mxu0
    %v2686 = vadd.f32 %v2416, %v2588
    %v2687 = vadd.f32 %v2417, %v2593
    %v2688 = vadd.f32 %v2418, %v2598
    %v2689 = vadd.f32 %v2419, %v2603
    %v2690 = vadd.f32 %v2420, %v2608
    %v2691 = vadd.f32 %v2421, %v2613
    %v2692 = vadd.f32 %v2422, %v2618
    %v2693 = vadd.f32 %v2423, %v2623
    %v2694 = vadd.f32 %v2424, %v2628
    %v2695 = vadd.f32 %v2425, %v2633
    %v2696 = vadd.f32 %v2426, %v2638
    %v2697 = vadd.f32 %v2427, %v2643
    %v2698 = vadd.f32 %v2428, %v2648
    %v2699 = vadd.f32 %v2429, %v2653
    %v2700 = vadd.f32 %v2430, %v2658
    %v2701 = vadd.f32 %v2431, %v2663
    %v2702 = vadd.f32 %v2432, %v2668
    %v2703 = vadd.f32 %v2433, %v2673
    %v2704 = vadd.f32 %v2434, %v2678
    %v2705 = vadd.f32 %v2435, %v2683
    %v2706 = vld [vmem:[%s0 + $0x16] sm:$0xff]
    %v2707 = vld [vmem:[%s0 + $0x1e] sm:$0xff]
    %v2708 = vld [vmem:[%s0 + $0x26] sm:$0xff]
    %v2709 = vld [vmem:[%s0 + $0x2e] sm:$0xff]
    %v2710 = vld [vmem:[%s0 + $0x36] sm:$0xff]
    %v2711 = vld [vmem:[%s0 + $0x3e] sm:$0xff]
    %v2712 = vld [vmem:[%s0 + $0x46] sm:$0xff]
    %v2713 = vld [vmem:[%s0 + $0x4e] sm:$0xff]
    %v2714 = vld [vmem:[%s0 + $0x56] sm:$0xff]
    %v2715 = vld [vmem:[%s0 + $0x5e] sm:$0xff]
    %v2716 = vld [vmem:[%s0 + $0x66] sm:$0xff]
    %v2717 = vld [vmem:[%s0 + $0x6e] sm:$0xff]
    %v2718 = vld [vmem:[%s0 + $0x76] sm:$0xff]
    %v2719 = vld [vmem:[%s0 + $0x7e] sm:$0xff]
    %v2720 = vld [vmem:[%s0 + $0x86] sm:$0xff]
    %v2721 = vld [vmem:[%s0 + $0x8e] sm:$0xff]
    %v2722 = vld [vmem:[%s0 + $0x96] sm:$0xff]
    %v2723 = vld [vmem:[%s0 + $0x9e] sm:$0xff]
    %v2724 = vld [vmem:[%s0 + $0xa6] sm:$0xff]
    %v2725 = vld [vmem:[%s0 + $0xae] sm:$0xff]
    %s2726 = scalar_lea.vmem %s2, 20
    %v2727 = vld [vmem:[%s2726] sm:$0x3]
    %v2729 = vsel %vm88, %v2706, 0
    %v2732 = vsel %vm88, %v2707, 0
    %v2735 = vsel %vm88, %v2708, 0
    %v2738 = vsel %vm88, %v2709, 0
    %v2741 = vsel %vm88, %v2710, 0
    %v2744 = vsel %vm88, %v2711, 0
    %v2747 = vsel %vm88, %v2712, 0
    %v2750 = vsel %vm88, %v2713, 0
    %v2753 = vsel %vm88, %v2714, 0
    %v2756 = vsel %vm88, %v2715, 0
    %v2759 = vsel %vm88, %v2716, 0
    %v2762 = vsel %vm88, %v2717, 0
    %v2765 = vsel %vm88, %v2718, 0
    %v2768 = vsel %vm88, %v2719, 0
    %v2771 = vsel %vm88, %v2720, 0
    %v2774 = vsel %vm88, %v2721, 0
    %v2777 = vsel %vm88, %v2722, 0
    %v2780 = vsel %vm88, %v2723, 0
    %v2783 = vsel %vm88, %v2724, 0
    %v2786 = vsel %vm88, %v2725, 0
    %v2789 = vsel %vm149, %v2727, 0
    %2791 = vmatprep.subr.mxu0 0.0
    %2792 = vmatpush1.msra.mxu0 %v2789
    %2793 = vmatprep.subr.mxu0 0.0
    %2794 = vmatpush1.msra.mxu0 0.0
    %2795 = vmatprep.subr.mxu0 0.0
    %2796 = vmatpush1.msra.mxu0 0.0
    %2797 = vmatprep.subr.mxu0 0.0
    %2798 = vmatpush1.msra.mxu0 0.0
    %2799 = vmatprep.subr.mxu0 0.0
    %2800 = vmatpush1.msra.mxu0 0.0
    %2801 = vmatprep.subr.mxu0 0.0
    %2802 = vmatpush1.msra.mxu0 0.0
    %2803 = vmatprep.subr.mxu0 0.0
    %2804 = vmatpush1.msra.mxu0 0.0
    %2805 = vmatprep.subr.mxu0 0.0
    %2806 = vmatpush1.msra.mxu0 0.0
    %2807 = vmatprep.subr.mxu0 0.0
    %2808 = vmatpush1.msra.mxu0 0.0
    %2809 = vmatprep.subr.mxu0 0.0
    %2810 = vmatpush1.msra.mxu0 0.0
    %2811 = vmatprep.subr.mxu0 0.0
    %2812 = vmatpush1.msra.mxu0 0.0
    %2813 = vmatprep.subr.mxu0 0.0
    %2814 = vmatpush1.msra.mxu0 0.0
    %2815 = vmatprep.subr.mxu0 0.0
    %2816 = vmatpush1.msra.mxu0 0.0
    %2817 = vmatprep.subr.mxu0 0.0
    %2818 = vmatpush1.msra.mxu0 0.0
    %2819 = vmatprep.subr.mxu0 0.0
    %2820 = vmatpush1.msra.mxu0 0.0
    %2821 = vmatprep.subr.mxu0 0.0
    %2822 = vmatpush1.msra.mxu0 0.0
    %2823 = vmatprep.subr.mxu0 0.0
    %2824 = vmatpush1.msra.mxu0 0.0
    %2825 = vmatprep.subr.mxu0 0.0
    %2826 = vmatpush1.msra.mxu0 0.0
    %2827 = vmatprep.subr.mxu0 0.0
    %2828 = vmatpush1.msra.mxu0 0.0
    %2829 = vmatprep.subr.mxu0 0.0
    %2830 = vmatpush1.msra.mxu0 0.0
    %2831 = vmatprep.subr.mxu0 0.0
    %2832 = vmatpush1.msra.mxu0 0.0
    %2833 = vmatprep.subr.mxu0 0.0
    %2834 = vmatpush1.msra.mxu0 0.0
    %2835 = vmatprep.subr.mxu0 0.0
    %2836 = vmatpush1.msra.mxu0 0.0
    %2837 = vmatprep.subr.mxu0 0.0
    %2838 = vmatpush1.msra.mxu0 0.0
    %2839 = vmatprep.subr.mxu0 0.0
    %2840 = vmatpush1.msra.mxu0 0.0
    %2841 = vmatprep.subr.mxu0 0.0
    %2842 = vmatpush1.msra.mxu0 0.0
    %2843 = vmatprep.subr.mxu0 0.0
    %2844 = vmatpush1.msra.mxu0 0.0
    %2845 = vmatprep.subr.mxu0 0.0
    %2846 = vmatpush1.msra.mxu0 0.0
    %2847 = vmatprep.subr.mxu0 0.0
    %2848 = vmatpush1.msra.mxu0 0.0
    %2849 = vmatprep.subr.mxu0 0.0
    %2850 = vmatpush1.msra.mxu0 0.0
    %2851 = vmatprep.subr.mxu0 0.0
    %2852 = vmatpush1.msra.mxu0 0.0
    %2853 = vmatprep.subr.mxu0 0.0
    %2854 = vmatpush1.msra.mxu0 0.0
    %2855 = vmatprep.mubr.f32.mxu0 0.0
    %2856 = vmatmul.mubr.f32.gmra.mrb[0].mxu0 %v2729
    %v2857 = vpop.f32.mrb[0].mxu0
    %v2858 = vadd.f32 0.0, %v2857
    %v2859 = vpop.f32.mrb[0].mxu0
    %2860 = vmatprep.mubr.f32.mxu0 0.0
    %2861 = vmatmul.mubr.f32.gmra.mrb[0].mxu0 %v2732
    %v2862 = vpop.f32.mrb[0].mxu0
    %v2863 = vadd.f32 0.0, %v2862
    %v2864 = vpop.f32.mrb[0].mxu0
    %2865 = vmatprep.mubr.f32.mxu0 0.0
    %2866 = vmatmul.mubr.f32.gmra.mrb[0].mxu0 %v2735
    %v2867 = vpop.f32.mrb[0].mxu0
    %v2868 = vadd.f32 0.0, %v2867
    %v2869 = vpop.f32.mrb[0].mxu0
    %2870 = vmatprep.mubr.f32.mxu0 0.0
    %2871 = vmatmul.mubr.f32.gmra.mrb[0].mxu0 %v2738
    %v2872 = vpop.f32.mrb[0].mxu0
    %v2873 = vadd.f32 0.0, %v2872
    %v2874 = vpop.f32.mrb[0].mxu0
    %2875 = vmatprep.mubr.f32.mxu0 0.0
    %2876 = vmatmul.mubr.f32.gmra.mrb[0].mxu0 %v2741
    %v2877 = vpop.f32.mrb[0].mxu0
    %v2878 = vadd.f32 0.0, %v2877
    %v2879 = vpop.f32.mrb[0].mxu0
    %2880 = vmatprep.mubr.f32.mxu0 0.0
    %2881 = vmatmul.mubr.f32.gmra.mrb[0].mxu0 %v2744
    %v2882 = vpop.f32.mrb[0].mxu0
    %v2883 = vadd.f32 0.0, %v2882
    %v2884 = vpop.f32.mrb[0].mxu0
    %2885 = vmatprep.mubr.f32.mxu0 0.0
    %2886 = vmatmul.mubr.f32.gmra.mrb[0].mxu0 %v2747
    %v2887 = vpop.f32.mrb[0].mxu0
    %v2888 = vadd.f32 0.0, %v2887
    %v2889 = vpop.f32.mrb[0].mxu0
    %2890 = vmatprep.mubr.f32.mxu0 0.0
    %2891 = vmatmul.mubr.f32.gmra.mrb[0].mxu0 %v2750
    %v2892 = vpop.f32.mrb[0].mxu0
    %v2893 = vadd.f32 0.0, %v2892
    %v2894 = vpop.f32.mrb[0].mxu0
    %2895 = vmatprep.mubr.f32.mxu0 0.0
    %2896 = vmatmul.mubr.f32.gmra.mrb[0].mxu0 %v2753
    %v2897 = vpop.f32.mrb[0].mxu0
    %v2898 = vadd.f32 0.0, %v2897
    %v2899 = vpop.f32.mrb[0].mxu0
    %2900 = vmatprep.mubr.f32.mxu0 0.0
    %2901 = vmatmul.mubr.f32.gmra.mrb[0].mxu0 %v2756
    %v2902 = vpop.f32.mrb[0].mxu0
    %v2903 = vadd.f32 0.0, %v2902
    %v2904 = vpop.f32.mrb[0].mxu0
    %2905 = vmatprep.mubr.f32.mxu0 0.0
    %2906 = vmatmul.mubr.f32.gmra.mrb[0].mxu0 %v2759
    %v2907 = vpop.f32.mrb[0].mxu0
    %v2908 = vadd.f32 0.0, %v2907
    %v2909 = vpop.f32.mrb[0].mxu0
    %2910 = vmatprep.mubr.f32.mxu0 0.0
    %2911 = vmatmul.mubr.f32.gmra.mrb[0].mxu0 %v2762
    %v2912 = vpop.f32.mrb[0].mxu0
    %v2913 = vadd.f32 0.0, %v2912
    %v2914 = vpop.f32.mrb[0].mxu0
    %2915 = vmatprep.mubr.f32.mxu0 0.0
    %2916 = vmatmul.mubr.f32.gmra.mrb[0].mxu0 %v2765
    %v2917 = vpop.f32.mrb[0].mxu0
    %v2918 = vadd.f32 0.0, %v2917
    %v2919 = vpop.f32.mrb[0].mxu0
    %2920 = vmatprep.mubr.f32.mxu0 0.0
    %2921 = vmatmul.mubr.f32.gmra.mrb[0].mxu0 %v2768
    %v2922 = vpop.f32.mrb[0].mxu0
    %v2923 = vadd.f32 0.0, %v2922
    %v2924 = vpop.f32.mrb[0].mxu0
    %2925 = vmatprep.mubr.f32.mxu0 0.0
    %2926 = vmatmul.mubr.f32.gmra.mrb[0].mxu0 %v2771
    %v2927 = vpop.f32.mrb[0].mxu0
    %v2928 = vadd.f32 0.0, %v2927
    %v2929 = vpop.f32.mrb[0].mxu0
    %2930 = vmatprep.mubr.f32.mxu0 0.0
    %2931 = vmatmul.mubr.f32.gmra.mrb[0].mxu0 %v2774
    %v2932 = vpop.f32.mrb[0].mxu0
    %v2933 = vadd.f32 0.0, %v2932
    %v2934 = vpop.f32.mrb[0].mxu0
    %2935 = vmatprep.mubr.f32.mxu0 0.0
    %2936 = vmatmul.mubr.f32.gmra.mrb[0].mxu0 %v2777
    %v2937 = vpop.f32.mrb[0].mxu0
    %v2938 = vadd.f32 0.0, %v2937
    %v2939 = vpop.f32.mrb[0].mxu0
    %2940 = vmatprep.mubr.f32.mxu0 0.0
    %2941 = vmatmul.mubr.f32.gmra.mrb[0].mxu0 %v2780
    %v2942 = vpop.f32.mrb[0].mxu0
    %v2943 = vadd.f32 0.0, %v2942
    %v2944 = vpop.f32.mrb[0].mxu0
    %2945 = vmatprep.mubr.f32.mxu0 0.0
    %2946 = vmatmul.mubr.f32.gmra.mrb[0].mxu0 %v2783
    %v2947 = vpop.f32.mrb[0].mxu0
    %v2948 = vadd.f32 0.0, %v2947
    %v2949 = vpop.f32.mrb[0].mxu0
    %2950 = vmatprep.mubr.f32.mxu0 0.0
    %2951 = vmatmul.mubr.f32.gmra.mrb[0].mxu0 %v2786
    %v2952 = vpop.f32.mrb[0].mxu0
    %v2953 = vadd.f32 0.0, %v2952
    %v2954 = vpop.f32.mrb[0].mxu0
    %2955 = vdwg.mxu0
    %v2956 = vadd.f32 %v2686, %v2858
    %v2957 = vadd.f32 %v2687, %v2863
    %v2958 = vadd.f32 %v2688, %v2868
    %v2959 = vadd.f32 %v2689, %v2873
    %v2960 = vadd.f32 %v2690, %v2878
    %v2961 = vadd.f32 %v2691, %v2883
    %v2962 = vadd.f32 %v2692, %v2888
    %v2963 = vadd.f32 %v2693, %v2893
    %v2964 = vadd.f32 %v2694, %v2898
    %v2965 = vadd.f32 %v2695, %v2903
    %v2966 = vadd.f32 %v2696, %v2908
    %v2967 = vadd.f32 %v2697, %v2913
    %v2968 = vadd.f32 %v2698, %v2918
    %v2969 = vadd.f32 %v2699, %v2923
    %v2970 = vadd.f32 %v2700, %v2928
    %v2971 = vadd.f32 %v2701, %v2933
    %v2972 = vadd.f32 %v2702, %v2938
    %v2973 = vadd.f32 %v2703, %v2943
    %v2974 = vadd.f32 %v2704, %v2948
    %v2975 = vadd.f32 %v2705, %v2953
    %v2976 = vld [vmem:[%s0 + $0x17] sm:$0xff]
    %v2977 = vld [vmem:[%s0 + $0x1f] sm:$0xff]
    %v2978 = vld [vmem:[%s0 + $0x27] sm:$0xff]
    %v2979 = vld [vmem:[%s0 + $0x2f] sm:$0xff]
    %v2980 = vld [vmem:[%s0 + $0x37] sm:$0xff]
    %v2981 = vld [vmem:[%s0 + $0x3f] sm:$0xff]
    %v2982 = vld [vmem:[%s0 + $0x47] sm:$0xff]
    %v2983 = vld [vmem:[%s0 + $0x4f] sm:$0xff]
    %v2984 = vld [vmem:[%s0 + $0x57] sm:$0xff]
    %v2985 = vld [vmem:[%s0 + $0x5f] sm:$0xff]
    %v2986 = vld [vmem:[%s0 + $0x67] sm:$0xff]
    %v2987 = vld [vmem:[%s0 + $0x6f] sm:$0xff]
    %v2988 = vld [vmem:[%s0 + $0x77] sm:$0xff]
    %v2989 = vld [vmem:[%s0 + $0x7f] sm:$0xff]
    %v2990 = vld [vmem:[%s0 + $0x87] sm:$0xff]
    %v2991 = vld [vmem:[%s0 + $0x8f] sm:$0xff]
    %v2992 = vld [vmem:[%s0 + $0x97] sm:$0xff]
    %v2993 = vld [vmem:[%s0 + $0x9f] sm:$0xff]
    %v2994 = vld [vmem:[%s0 + $0xa7] sm:$0xff]
    %v2995 = vld [vmem:[%s0 + $0xaf] sm:$0xff]
    %s2996 = scalar_lea.vmem %s2, 22
    %v2997 = vld [vmem:[%s2996] sm:$0x3]
    %v2999 = vsel %vm88, %v2976, 0
    %v3002 = vsel %vm88, %v2977, 0
    %v3005 = vsel %vm88, %v2978, 0
    %v3008 = vsel %vm88, %v2979, 0
    %v3011 = vsel %vm88, %v2980, 0
    %v3014 = vsel %vm88, %v2981, 0
    %v3017 = vsel %vm88, %v2982, 0
    %v3020 = vsel %vm88, %v2983, 0
    %v3023 = vsel %vm88, %v2984, 0
    %v3026 = vsel %vm88, %v2985, 0
    %v3029 = vsel %vm88, %v2986, 0
    %v3032 = vsel %vm88, %v2987, 0
    %v3035 = vsel %vm88, %v2988, 0
    %v3038 = vsel %vm88, %v2989, 0
    %v3041 = vsel %vm88, %v2990, 0
    %v3044 = vsel %vm88, %v2991, 0
    %v3047 = vsel %vm88, %v2992, 0
    %v3050 = vsel %vm88, %v2993, 0
    %v3053 = vsel %vm88, %v2994, 0
    %v3056 = vsel %vm88, %v2995, 0
    %v3059 = vsel %vm149, %v2997, 0
    %3061 = vmatprep.subr.mxu0 0.0
    %3062 = vmatpush1.msra.mxu0 %v3059
    %3063 = vmatprep.subr.mxu0 0.0
    %3064 = vmatpush1.msra.mxu0 0.0
    %3065 = vmatprep.subr.mxu0 0.0
    %3066 = vmatpush1.msra.mxu0 0.0
    %3067 = vmatprep.subr.mxu0 0.0
    %3068 = vmatpush1.msra.mxu0 0.0
    %3069 = vmatprep.subr.mxu0 0.0
    %3070 = vmatpush1.msra.mxu0 0.0
    %3071 = vmatprep.subr.mxu0 0.0
    %3072 = vmatpush1.msra.mxu0 0.0
    %3073 = vmatprep.subr.mxu0 0.0
    %3074 = vmatpush1.msra.mxu0 0.0
    %3075 = vmatprep.subr.mxu0 0.0
    %3076 = vmatpush1.msra.mxu0 0.0
    %3077 = vmatprep.subr.mxu0 0.0
    %3078 = vmatpush1.msra.mxu0 0.0
    %3079 = vmatprep.subr.mxu0 0.0
    %3080 = vmatpush1.msra.mxu0 0.0
    %3081 = vmatprep.subr.mxu0 0.0
    %3082 = vmatpush1.msra.mxu0 0.0
    %3083 = vmatprep.subr.mxu0 0.0
    %3084 = vmatpush1.msra.mxu0 0.0
    %3085 = vmatprep.subr.mxu0 0.0
    %3086 = vmatpush1.msra.mxu0 0.0
    %3087 = vmatprep.subr.mxu0 0.0
    %3088 = vmatpush1.msra.mxu0 0.0
    %3089 = vmatprep.subr.mxu0 0.0
    %3090 = vmatpush1.msra.mxu0 0.0
    %3091 = vmatprep.subr.mxu0 0.0
    %3092 = vmatpush1.msra.mxu0 0.0
    %3093 = vmatprep.subr.mxu0 0.0
    %3094 = vmatpush1.msra.mxu0 0.0
    %3095 = vmatprep.subr.mxu0 0.0
    %3096 = vmatpush1.msra.mxu0 0.0
    %3097 = vmatprep.subr.mxu0 0.0
    %3098 = vmatpush1.msra.mxu0 0.0
    %3099 = vmatprep.subr.mxu0 0.0
    %3100 = vmatpush1.msra.mxu0 0.0
    %3101 = vmatprep.subr.mxu0 0.0
    %3102 = vmatpush1.msra.mxu0 0.0
    %3103 = vmatprep.subr.mxu0 0.0
    %3104 = vmatpush1.msra.mxu0 0.0
    %3105 = vmatprep.subr.mxu0 0.0
    %3106 = vmatpush1.msra.mxu0 0.0
    %3107 = vmatprep.subr.mxu0 0.0
    %3108 = vmatpush1.msra.mxu0 0.0
    %3109 = vmatprep.subr.mxu0 0.0
    %3110 = vmatpush1.msra.mxu0 0.0
    %3111 = vmatprep.subr.mxu0 0.0
    %3112 = vmatpush1.msra.mxu0 0.0
    %3113 = vmatprep.subr.mxu0 0.0
    %3114 = vmatpush1.msra.mxu0 0.0
    %3115 = vmatprep.subr.mxu0 0.0
    %3116 = vmatpush1.msra.mxu0 0.0
    %3117 = vmatprep.subr.mxu0 0.0
    %3118 = vmatpush1.msra.mxu0 0.0
    %3119 = vmatprep.subr.mxu0 0.0
    %3120 = vmatpush1.msra.mxu0 0.0
    %3121 = vmatprep.subr.mxu0 0.0
    %3122 = vmatpush1.msra.mxu0 0.0
    %3123 = vmatprep.subr.mxu0 0.0
    %3124 = vmatpush1.msra.mxu0 0.0
    %3125 = vmatprep.mubr.f32.mxu0 0.0
    %3126 = vmatmul.mubr.f32.gmra.mrb[0].mxu0 %v2999
    %v3127 = vpop.f32.mrb[0].mxu0
    %v3128 = vadd.f32 0.0, %v3127
    %v3129 = vpop.f32.mrb[0].mxu0
    %3130 = vmatprep.mubr.f32.mxu0 0.0
    %3131 = vmatmul.mubr.f32.gmra.mrb[0].mxu0 %v3002
    %v3132 = vpop.f32.mrb[0].mxu0
    %v3133 = vadd.f32 0.0, %v3132
    %v3134 = vpop.f32.mrb[0].mxu0
    %3135 = vmatprep.mubr.f32.mxu0 0.0
    %3136 = vmatmul.mubr.f32.gmra.mrb[0].mxu0 %v3005
    %v3137 = vpop.f32.mrb[0].mxu0
    %v3138 = vadd.f32 0.0, %v3137
    %v3139 = vpop.f32.mrb[0].mxu0
    %3140 = vmatprep.mubr.f32.mxu0 0.0
    %3141 = vmatmul.mubr.f32.gmra.mrb[0].mxu0 %v3008
    %v3142 = vpop.f32.mrb[0].mxu0
    %v3143 = vadd.f32 0.0, %v3142
    %v3144 = vpop.f32.mrb[0].mxu0
    %3145 = vmatprep.mubr.f32.mxu0 0.0
    %3146 = vmatmul.mubr.f32.gmra.mrb[0].mxu0 %v3011
    %v3147 = vpop.f32.mrb[0].mxu0
    %v3148 = vadd.f32 0.0, %v3147
    %v3149 = vpop.f32.mrb[0].mxu0
    %3150 = vmatprep.mubr.f32.mxu0 0.0
    %3151 = vmatmul.mubr.f32.gmra.mrb[0].mxu0 %v3014
    %v3152 = vpop.f32.mrb[0].mxu0
    %v3153 = vadd.f32 0.0, %v3152
    %v3154 = vpop.f32.mrb[0].mxu0
    %3155 = vmatprep.mubr.f32.mxu0 0.0
    %3156 = vmatmul.mubr.f32.gmra.mrb[0].mxu0 %v3017
    %v3157 = vpop.f32.mrb[0].mxu0
    %v3158 = vadd.f32 0.0, %v3157
    %v3159 = vpop.f32.mrb[0].mxu0
    %3160 = vmatprep.mubr.f32.mxu0 0.0
    %3161 = vmatmul.mubr.f32.gmra.mrb[0].mxu0 %v3020
    %v3162 = vpop.f32.mrb[0].mxu0
    %v3163 = vadd.f32 0.0, %v3162
    %v3164 = vpop.f32.mrb[0].mxu0
    %3165 = vmatprep.mubr.f32.mxu0 0.0
    %3166 = vmatmul.mubr.f32.gmra.mrb[0].mxu0 %v3023
    %v3167 = vpop.f32.mrb[0].mxu0
    %v3168 = vadd.f32 0.0, %v3167
    %v3169 = vpop.f32.mrb[0].mxu0
    %3170 = vmatprep.mubr.f32.mxu0 0.0
    %3171 = vmatmul.mubr.f32.gmra.mrb[0].mxu0 %v3026
    %v3172 = vpop.f32.mrb[0].mxu0
    %v3173 = vadd.f32 0.0, %v3172
    %v3174 = vpop.f32.mrb[0].mxu0
    %3175 = vmatprep.mubr.f32.mxu0 0.0
    %3176 = vmatmul.mubr.f32.gmra.mrb[0].mxu0 %v3029
    %v3177 = vpop.f32.mrb[0].mxu0
    %v3178 = vadd.f32 0.0, %v3177
    %v3179 = vpop.f32.mrb[0].mxu0
    %3180 = vmatprep.mubr.f32.mxu0 0.0
    %3181 = vmatmul.mubr.f32.gmra.mrb[0].mxu0 %v3032
    %v3182 = vpop.f32.mrb[0].mxu0
    %v3183 = vadd.f32 0.0, %v3182
    %v3184 = vpop.f32.mrb[0].mxu0
    %3185 = vmatprep.mubr.f32.mxu0 0.0
    %3186 = vmatmul.mubr.f32.gmra.mrb[0].mxu0 %v3035
    %v3187 = vpop.f32.mrb[0].mxu0
    %v3188 = vadd.f32 0.0, %v3187
    %v3189 = vpop.f32.mrb[0].mxu0
    %3190 = vmatprep.mubr.f32.mxu0 0.0
    %3191 = vmatmul.mubr.f32.gmra.mrb[0].mxu0 %v3038
    %v3192 = vpop.f32.mrb[0].mxu0
    %v3193 = vadd.f32 0.0, %v3192
    %v3194 = vpop.f32.mrb[0].mxu0
    %3195 = vmatprep.mubr.f32.mxu0 0.0
    %3196 = vmatmul.mubr.f32.gmra.mrb[0].mxu0 %v3041
    %v3197 = vpop.f32.mrb[0].mxu0
    %v3198 = vadd.f32 0.0, %v3197
    %v3199 = vpop.f32.mrb[0].mxu0
    %3200 = vmatprep.mubr.f32.mxu0 0.0
    %3201 = vmatmul.mubr.f32.gmra.mrb[0].mxu0 %v3044
    %v3202 = vpop.f32.mrb[0].mxu0
    %v3203 = vadd.f32 0.0, %v3202
    %v3204 = vpop.f32.mrb[0].mxu0
    %3205 = vmatprep.mubr.f32.mxu0 0.0
    %3206 = vmatmul.mubr.f32.gmra.mrb[0].mxu0 %v3047
    %v3207 = vpop.f32.mrb[0].mxu0
    %v3208 = vadd.f32 0.0, %v3207
    %v3209 = vpop.f32.mrb[0].mxu0
    %3210 = vmatprep.mubr.f32.mxu0 0.0
    %3211 = vmatmul.mubr.f32.gmra.mrb[0].mxu0 %v3050
    %v3212 = vpop.f32.mrb[0].mxu0
    %v3213 = vadd.f32 0.0, %v3212
    %v3214 = vpop.f32.mrb[0].mxu0
    %3215 = vmatprep.mubr.f32.mxu0 0.0
    %3216 = vmatmul.mubr.f32.gmra.mrb[0].mxu0 %v3053
    %v3217 = vpop.f32.mrb[0].mxu0
    %v3218 = vadd.f32 0.0, %v3217
    %v3219 = vpop.f32.mrb[0].mxu0
    %3220 = vmatprep.mubr.f32.mxu0 0.0
    %3221 = vmatmul.mubr.f32.gmra.mrb[0].mxu0 %v3056
    %v3222 = vpop.f32.mrb[0].mxu0
    %v3223 = vadd.f32 0.0, %v3222
    %v3224 = vpop.f32.mrb[0].mxu0
    %3225 = vdwg.mxu0
    %v3226 = vadd.f32 %v2956, %v3128
    %v3227 = vadd.f32 %v2957, %v3133
    %v3228 = vadd.f32 %v2958, %v3138
    %v3229 = vadd.f32 %v2959, %v3143
    %v3230 = vadd.f32 %v2960, %v3148
    %v3231 = vadd.f32 %v2961, %v3153
    %v3232 = vadd.f32 %v2962, %v3158
    %v3233 = vadd.f32 %v2963, %v3163
    %v3234 = vadd.f32 %v2964, %v3168
    %v3235 = vadd.f32 %v2965, %v3173
    %v3236 = vadd.f32 %v2966, %v3178
    %v3237 = vadd.f32 %v2967, %v3183
    %v3238 = vadd.f32 %v2968, %v3188
    %v3239 = vadd.f32 %v2969, %v3193
    %v3240 = vadd.f32 %v2970, %v3198
    %v3241 = vadd.f32 %v2971, %v3203
    %v3242 = vadd.f32 %v2972, %v3208
    %v3243 = vadd.f32 %v2973, %v3213
    %v3244 = vadd.f32 %v2974, %v3218
    %v3245 = vadd.f32 %v2975, %v3223
    %v3246 = vld [vmem:[%s0 + $0x1e] sm:$0xff]
    %v3247 = vld [vmem:[%s0 + $0x26] sm:$0xff]
    %v3248 = vld [vmem:[%s0 + $0x2e] sm:$0xff]
    %v3249 = vld [vmem:[%s0 + $0x36] sm:$0xff]
    %v3250 = vld [vmem:[%s0 + $0x3e] sm:$0xff]
    %v3251 = vld [vmem:[%s0 + $0x46] sm:$0xff]
    %v3252 = vld [vmem:[%s0 + $0x4e] sm:$0xff]
    %v3253 = vld [vmem:[%s0 + $0x56] sm:$0xff]
    %v3254 = vld [vmem:[%s0 + $0x5e] sm:$0xff]
    %v3255 = vld [vmem:[%s0 + $0x66] sm:$0xff]
    %v3256 = vld [vmem:[%s0 + $0x6e] sm:$0xff]
    %v3257 = vld [vmem:[%s0 + $0x76] sm:$0xff]
    %v3258 = vld [vmem:[%s0 + $0x7e] sm:$0xff]
    %v3259 = vld [vmem:[%s0 + $0x86] sm:$0xff]
    %v3260 = vld [vmem:[%s0 + $0x8e] sm:$0xff]
    %v3261 = vld [vmem:[%s0 + $0x96] sm:$0xff]
    %v3262 = vld [vmem:[%s0 + $0x9e] sm:$0xff]
    %v3263 = vld [vmem:[%s0 + $0xa6] sm:$0xff]
    %v3264 = vld [vmem:[%s0 + $0xae] sm:$0xff]
    %v3265 = vld [vmem:[%s0 + $0xb6] sm:$0xff]
    %s3266 = scalar_lea.vmem %s2, 24
    %v3267 = vld [vmem:[%s3266] sm:$0x3]
    %v3269 = vsel %vm88, %v3246, 0
    %v3272 = vsel %vm88, %v3247, 0
    %v3275 = vsel %vm88, %v3248, 0
    %v3278 = vsel %vm88, %v3249, 0
    %v3281 = vsel %vm88, %v3250, 0
    %v3284 = vsel %vm88, %v3251, 0
    %v3287 = vsel %vm88, %v3252, 0
    %v3290 = vsel %vm88, %v3253, 0
    %v3293 = vsel %vm88, %v3254, 0
    %v3296 = vsel %vm88, %v3255, 0
    %v3299 = vsel %vm88, %v3256, 0
    %v3302 = vsel %vm88, %v3257, 0
    %v3305 = vsel %vm88, %v3258, 0
    %v3308 = vsel %vm88, %v3259, 0
    %v3311 = vsel %vm88, %v3260, 0
    %v3314 = vsel %vm88, %v3261, 0
    %v3317 = vsel %vm88, %v3262, 0
    %v3320 = vsel %vm88, %v3263, 0
    %v3323 = vsel %vm88, %v3264, 0
    %v3326 = vsel %vm88, %v3265, 0
    %v3329 = vsel %vm149, %v3267, 0
    %3331 = vmatprep.subr.mxu0 0.0
    %3332 = vmatpush1.msra.mxu0 %v3329
    %3333 = vmatprep.subr.mxu0 0.0
    %3334 = vmatpush1.msra.mxu0 0.0
    %3335 = vmatprep.subr.mxu0 0.0
    %3336 = vmatpush1.msra.mxu0 0.0
    %3337 = vmatprep.subr.mxu0 0.0
    %3338 = vmatpush1.msra.mxu0 0.0
    %3339 = vmatprep.subr.mxu0 0.0
    %3340 = vmatpush1.msra.mxu0 0.0
    %3341 = vmatprep.subr.mxu0 0.0
    %3342 = vmatpush1.msra.mxu0 0.0
    %3343 = vmatprep.subr.mxu0 0.0
    %3344 = vmatpush1.msra.mxu0 0.0
    %3345 = vmatprep.subr.mxu0 0.0
    %3346 = vmatpush1.msra.mxu0 0.0
    %3347 = vmatprep.subr.mxu0 0.0
    %3348 = vmatpush1.msra.mxu0 0.0
    %3349 = vmatprep.subr.mxu0 0.0
    %3350 = vmatpush1.msra.mxu0 0.0
    %3351 = vmatprep.subr.mxu0 0.0
    %3352 = vmatpush1.msra.mxu0 0.0
    %3353 = vmatprep.subr.mxu0 0.0
    %3354 = vmatpush1.msra.mxu0 0.0
    %3355 = vmatprep.subr.mxu0 0.0
    %3356 = vmatpush1.msra.mxu0 0.0
    %3357 = vmatprep.subr.mxu0 0.0
    %3358 = vmatpush1.msra.mxu0 0.0
    %3359 = vmatprep.subr.mxu0 0.0
    %3360 = vmatpush1.msra.mxu0 0.0
    %3361 = vmatprep.subr.mxu0 0.0
    %3362 = vmatpush1.msra.mxu0 0.0
    %3363 = vmatprep.subr.mxu0 0.0
    %3364 = vmatpush1.msra.mxu0 0.0
    %3365 = vmatprep.subr.mxu0 0.0
    %3366 = vmatpush1.msra.mxu0 0.0
    %3367 = vmatprep.subr.mxu0 0.0
    %3368 = vmatpush1.msra.mxu0 0.0
    %3369 = vmatprep.subr.mxu0 0.0
    %3370 = vmatpush1.msra.mxu0 0.0
    %3371 = vmatprep.subr.mxu0 0.0
    %3372 = vmatpush1.msra.mxu0 0.0
    %3373 = vmatprep.subr.mxu0 0.0
    %3374 = vmatpush1.msra.mxu0 0.0
    %3375 = vmatprep.subr.mxu0 0.0
    %3376 = vmatpush1.msra.mxu0 0.0
    %3377 = vmatprep.subr.mxu0 0.0
    %3378 = vmatpush1.msra.mxu0 0.0
    %3379 = vmatprep.subr.mxu0 0.0
    %3380 = vmatpush1.msra.mxu0 0.0
    %3381 = vmatprep.subr.mxu0 0.0
    %3382 = vmatpush1.msra.mxu0 0.0
    %3383 = vmatprep.subr.mxu0 0.0
    %3384 = vmatpush1.msra.mxu0 0.0
    %3385 = vmatprep.subr.mxu0 0.0
    %3386 = vmatpush1.msra.mxu0 0.0
    %3387 = vmatprep.subr.mxu0 0.0
    %3388 = vmatpush1.msra.mxu0 0.0
    %3389 = vmatprep.subr.mxu0 0.0
    %3390 = vmatpush1.msra.mxu0 0.0
    %3391 = vmatprep.subr.mxu0 0.0
    %3392 = vmatpush1.msra.mxu0 0.0
    %3393 = vmatprep.subr.mxu0 0.0
    %3394 = vmatpush1.msra.mxu0 0.0
    %3395 = vmatprep.mubr.f32.mxu0 0.0
    %3396 = vmatmul.mubr.f32.gmra.mrb[0].mxu0 %v3269
    %v3397 = vpop.f32.mrb[0].mxu0
    %v3398 = vadd.f32 0.0, %v3397
    %v3399 = vpop.f32.mrb[0].mxu0
    %3400 = vmatprep.mubr.f32.mxu0 0.0
    %3401 = vmatmul.mubr.f32.gmra.mrb[0].mxu0 %v3272
    %v3402 = vpop.f32.mrb[0].mxu0
    %v3403 = vadd.f32 0.0, %v3402
    %v3404 = vpop.f32.mrb[0].mxu0
    %3405 = vmatprep.mubr.f32.mxu0 0.0
    %3406 = vmatmul.mubr.f32.gmra.mrb[0].mxu0 %v3275
    %v3407 = vpop.f32.mrb[0].mxu0
    %v3408 = vadd.f32 0.0, %v3407
    %v3409 = vpop.f32.mrb[0].mxu0
    %3410 = vmatprep.mubr.f32.mxu0 0.0
    %3411 = vmatmul.mubr.f32.gmra.mrb[0].mxu0 %v3278
    %v3412 = vpop.f32.mrb[0].mxu0
    %v3413 = vadd.f32 0.0, %v3412
    %v3414 = vpop.f32.mrb[0].mxu0
    %3415 = vmatprep.mubr.f32.mxu0 0.0
    %3416 = vmatmul.mubr.f32.gmra.mrb[0].mxu0 %v3281
    %v3417 = vpop.f32.mrb[0].mxu0
    %v3418 = vadd.f32 0.0, %v3417
    %v3419 = vpop.f32.mrb[0].mxu0
    %3420 = vmatprep.mubr.f32.mxu0 0.0
    %3421 = vmatmul.mubr.f32.gmra.mrb[0].mxu0 %v3284
    %v3422 = vpop.f32.mrb[0].mxu0
    %v3423 = vadd.f32 0.0, %v3422
    %v3424 = vpop.f32.mrb[0].mxu0
    %3425 = vmatprep.mubr.f32.mxu0 0.0
    %3426 = vmatmul.mubr.f32.gmra.mrb[0].mxu0 %v3287
    %v3427 = vpop.f32.mrb[0].mxu0
    %v3428 = vadd.f32 0.0, %v3427
    %v3429 = vpop.f32.mrb[0].mxu0
    %3430 = vmatprep.mubr.f32.mxu0 0.0
    %3431 = vmatmul.mubr.f32.gmra.mrb[0].mxu0 %v3290
    %v3432 = vpop.f32.mrb[0].mxu0
    %v3433 = vadd.f32 0.0, %v3432
    %v3434 = vpop.f32.mrb[0].mxu0
    %3435 = vmatprep.mubr.f32.mxu0 0.0
    %3436 = vmatmul.mubr.f32.gmra.mrb[0].mxu0 %v3293
    %v3437 = vpop.f32.mrb[0].mxu0
    %v3438 = vadd.f32 0.0, %v3437
    %v3439 = vpop.f32.mrb[0].mxu0
    %3440 = vmatprep.mubr.f32.mxu0 0.0
    %3441 = vmatmul.mubr.f32.gmra.mrb[0].mxu0 %v3296
    %v3442 = vpop.f32.mrb[0].mxu0
    %v3443 = vadd.f32 0.0, %v3442
    %v3444 = vpop.f32.mrb[0].mxu0
    %3445 = vmatprep.mubr.f32.mxu0 0.0
    %3446 = vmatmul.mubr.f32.gmra.mrb[0].mxu0 %v3299
    %v3447 = vpop.f32.mrb[0].mxu0
    %v3448 = vadd.f32 0.0, %v3447
    %v3449 = vpop.f32.mrb[0].mxu0
    %3450 = vmatprep.mubr.f32.mxu0 0.0
    %3451 = vmatmul.mubr.f32.gmra.mrb[0].mxu0 %v3302
    %v3452 = vpop.f32.mrb[0].mxu0
    %v3453 = vadd.f32 0.0, %v3452
    %v3454 = vpop.f32.mrb[0].mxu0
    %3455 = vmatprep.mubr.f32.mxu0 0.0
    %3456 = vmatmul.mubr.f32.gmra.mrb[0].mxu0 %v3305
    %v3457 = vpop.f32.mrb[0].mxu0
    %v3458 = vadd.f32 0.0, %v3457
    %v3459 = vpop.f32.mrb[0].mxu0
    %3460 = vmatprep.mubr.f32.mxu0 0.0
    %3461 = vmatmul.mubr.f32.gmra.mrb[0].mxu0 %v3308
    %v3462 = vpop.f32.mrb[0].mxu0
    %v3463 = vadd.f32 0.0, %v3462
    %v3464 = vpop.f32.mrb[0].mxu0
    %3465 = vmatprep.mubr.f32.mxu0 0.0
    %3466 = vmatmul.mubr.f32.gmra.mrb[0].mxu0 %v3311
    %v3467 = vpop.f32.mrb[0].mxu0
    %v3468 = vadd.f32 0.0, %v3467
    %v3469 = vpop.f32.mrb[0].mxu0
    %3470 = vmatprep.mubr.f32.mxu0 0.0
    %3471 = vmatmul.mubr.f32.gmra.mrb[0].mxu0 %v3314
    %v3472 = vpop.f32.mrb[0].mxu0
    %v3473 = vadd.f32 0.0, %v3472
    %v3474 = vpop.f32.mrb[0].mxu0
    %3475 = vmatprep.mubr.f32.mxu0 0.0
    %3476 = vmatmul.mubr.f32.gmra.mrb[0].mxu0 %v3317
    %v3477 = vpop.f32.mrb[0].mxu0
    %v3478 = vadd.f32 0.0, %v3477
    %v3479 = vpop.f32.mrb[0].mxu0
    %3480 = vmatprep.mubr.f32.mxu0 0.0
    %3481 = vmatmul.mubr.f32.gmra.mrb[0].mxu0 %v3320
    %v3482 = vpop.f32.mrb[0].mxu0
    %v3483 = vadd.f32 0.0, %v3482
    %v3484 = vpop.f32.mrb[0].mxu0
    %3485 = vmatprep.mubr.f32.mxu0 0.0
    %3486 = vmatmul.mubr.f32.gmra.mrb[0].mxu0 %v3323
    %v3487 = vpop.f32.mrb[0].mxu0
    %v3488 = vadd.f32 0.0, %v3487
    %v3489 = vpop.f32.mrb[0].mxu0
    %3490 = vmatprep.mubr.f32.mxu0 0.0
    %3491 = vmatmul.mubr.f32.gmra.mrb[0].mxu0 %v3326
    %v3492 = vpop.f32.mrb[0].mxu0
    %v3493 = vadd.f32 0.0, %v3492
    %v3494 = vpop.f32.mrb[0].mxu0
    %3495 = vdwg.mxu0
    %v3496 = vadd.f32 %v3226, %v3398
    %v3497 = vadd.f32 %v3227, %v3403
    %v3498 = vadd.f32 %v3228, %v3408
    %v3499 = vadd.f32 %v3229, %v3413
    %v3500 = vadd.f32 %v3230, %v3418
    %v3501 = vadd.f32 %v3231, %v3423
    %v3502 = vadd.f32 %v3232, %v3428
    %v3503 = vadd.f32 %v3233, %v3433
    %v3504 = vadd.f32 %v3234, %v3438
    %v3505 = vadd.f32 %v3235, %v3443
    %v3506 = vadd.f32 %v3236, %v3448
    %v3507 = vadd.f32 %v3237, %v3453
    %v3508 = vadd.f32 %v3238, %v3458
    %v3509 = vadd.f32 %v3239, %v3463
    %v3510 = vadd.f32 %v3240, %v3468
    %v3511 = vadd.f32 %v3241, %v3473
    %v3512 = vadd.f32 %v3242, %v3478
    %v3513 = vadd.f32 %v3243, %v3483
    %v3514 = vadd.f32 %v3244, %v3488
    %v3515 = vadd.f32 %v3245, %v3493
    %v3516 = vld [vmem:[%s0 + $0x1f] sm:$0xff]
    %v3517 = vld [vmem:[%s0 + $0x27] sm:$0xff]
    %v3518 = vld [vmem:[%s0 + $0x2f] sm:$0xff]
    %v3519 = vld [vmem:[%s0 + $0x37] sm:$0xff]
    %v3520 = vld [vmem:[%s0 + $0x3f] sm:$0xff]
    %v3521 = vld [vmem:[%s0 + $0x47] sm:$0xff]
    %v3522 = vld [vmem:[%s0 + $0x4f] sm:$0xff]
    %v3523 = vld [vmem:[%s0 + $0x57] sm:$0xff]
    %v3524 = vld [vmem:[%s0 + $0x5f] sm:$0xff]
    %v3525 = vld [vmem:[%s0 + $0x67] sm:$0xff]
    %v3526 = vld [vmem:[%s0 + $0x6f] sm:$0xff]
    %v3527 = vld [vmem:[%s0 + $0x77] sm:$0xff]
    %v3528 = vld [vmem:[%s0 + $0x7f] sm:$0xff]
    %v3529 = vld [vmem:[%s0 + $0x87] sm:$0xff]
    %v3530 = vld [vmem:[%s0 + $0x8f] sm:$0xff]
    %v3531 = vld [vmem:[%s0 + $0x97] sm:$0xff]
    %v3532 = vld [vmem:[%s0 + $0x9f] sm:$0xff]
    %v3533 = vld [vmem:[%s0 + $0xa7] sm:$0xff]
    %v3534 = vld [vmem:[%s0 + $0xaf] sm:$0xff]
    %v3535 = vld [vmem:[%s0 + $0xb7] sm:$0xff]
    %s3536 = scalar_lea.vmem %s2, 26
    %v3537 = vld [vmem:[%s3536] sm:$0x3]
    %v3539 = vsel %vm88, %v3516, 0
    %v3542 = vsel %vm88, %v3517, 0
    %v3545 = vsel %vm88, %v3518, 0
    %v3548 = vsel %vm88, %v3519, 0
    %v3551 = vsel %vm88, %v3520, 0
    %v3554 = vsel %vm88, %v3521, 0
    %v3557 = vsel %vm88, %v3522, 0
    %v3560 = vsel %vm88, %v3523, 0
    %v3563 = vsel %vm88, %v3524, 0
    %v3566 = vsel %vm88, %v3525, 0
    %v3569 = vsel %vm88, %v3526, 0
    %v3572 = vsel %vm88, %v3527, 0
    %v3575 = vsel %vm88, %v3528, 0
    %v3578 = vsel %vm88, %v3529, 0
    %v3581 = vsel %vm88, %v3530, 0
    %v3584 = vsel %vm88, %v3531, 0
    %v3587 = vsel %vm88, %v3532, 0
    %v3590 = vsel %vm88, %v3533, 0
    %v3593 = vsel %vm88, %v3534, 0
    %v3596 = vsel %vm88, %v3535, 0
    %v3599 = vsel %vm149, %v3537, 0
    %3601 = vmatprep.subr.mxu0 0.0
    %3602 = vmatpush1.msra.mxu0 %v3599
    %3603 = vmatprep.subr.mxu0 0.0
    %3604 = vmatpush1.msra.mxu0 0.0
    %3605 = vmatprep.subr.mxu0 0.0
    %3606 = vmatpush1.msra.mxu0 0.0
    %3607 = vmatprep.subr.mxu0 0.0
    %3608 = vmatpush1.msra.mxu0 0.0
    %3609 = vmatprep.subr.mxu0 0.0
    %3610 = vmatpush1.msra.mxu0 0.0
    %3611 = vmatprep.subr.mxu0 0.0
    %3612 = vmatpush1.msra.mxu0 0.0
    %3613 = vmatprep.subr.mxu0 0.0
    %3614 = vmatpush1.msra.mxu0 0.0
    %3615 = vmatprep.subr.mxu0 0.0
    %3616 = vmatpush1.msra.mxu0 0.0
    %3617 = vmatprep.subr.mxu0 0.0
    %3618 = vmatpush1.msra.mxu0 0.0
    %3619 = vmatprep.subr.mxu0 0.0
    %3620 = vmatpush1.msra.mxu0 0.0
    %3621 = vmatprep.subr.mxu0 0.0
    %3622 = vmatpush1.msra.mxu0 0.0
    %3623 = vmatprep.subr.mxu0 0.0
    %3624 = vmatpush1.msra.mxu0 0.0
    %3625 = vmatprep.subr.mxu0 0.0
    %3626 = vmatpush1.msra.mxu0 0.0
    %3627 = vmatprep.subr.mxu0 0.0
    %3628 = vmatpush1.msra.mxu0 0.0
    %3629 = vmatprep.subr.mxu0 0.0
    %3630 = vmatpush1.msra.mxu0 0.0
    %3631 = vmatprep.subr.mxu0 0.0
    %3632 = vmatpush1.msra.mxu0 0.0
    %3633 = vmatprep.subr.mxu0 0.0
    %3634 = vmatpush1.msra.mxu0 0.0
    %3635 = vmatprep.subr.mxu0 0.0
    %3636 = vmatpush1.msra.mxu0 0.0
    %3637 = vmatprep.subr.mxu0 0.0
    %3638 = vmatpush1.msra.mxu0 0.0
    %3639 = vmatprep.subr.mxu0 0.0
    %3640 = vmatpush1.msra.mxu0 0.0
    %3641 = vmatprep.subr.mxu0 0.0
    %3642 = vmatpush1.msra.mxu0 0.0
    %3643 = vmatprep.subr.mxu0 0.0
    %3644 = vmatpush1.msra.mxu0 0.0
    %3645 = vmatprep.subr.mxu0 0.0
    %3646 = vmatpush1.msra.mxu0 0.0
    %3647 = vmatprep.subr.mxu0 0.0
    %3648 = vmatpush1.msra.mxu0 0.0
    %3649 = vmatprep.subr.mxu0 0.0
    %3650 = vmatpush1.msra.mxu0 0.0
    %3651 = vmatprep.subr.mxu0 0.0
    %3652 = vmatpush1.msra.mxu0 0.0
    %3653 = vmatprep.subr.mxu0 0.0
    %3654 = vmatpush1.msra.mxu0 0.0
    %3655 = vmatprep.subr.mxu0 0.0
    %3656 = vmatpush1.msra.mxu0 0.0
    %3657 = vmatprep.subr.mxu0 0.0
    %3658 = vmatpush1.msra.mxu0 0.0
    %3659 = vmatprep.subr.mxu0 0.0
    %3660 = vmatpush1.msra.mxu0 0.0
    %3661 = vmatprep.subr.mxu0 0.0
    %3662 = vmatpush1.msra.mxu0 0.0
    %3663 = vmatprep.subr.mxu0 0.0
    %3664 = vmatpush1.msra.mxu0 0.0
    %3665 = vmatprep.mubr.f32.mxu0 0.0
    %3666 = vmatmul.mubr.f32.gmra.mrb[0].mxu0 %v3539
    %v3667 = vpop.f32.mrb[0].mxu0
    %v3668 = vadd.f32 0.0, %v3667
    %v3669 = vpop.f32.mrb[0].mxu0
    %3670 = vmatprep.mubr.f32.mxu0 0.0
    %3671 = vmatmul.mubr.f32.gmra.mrb[0].mxu0 %v3542
    %v3672 = vpop.f32.mrb[0].mxu0
    %v3673 = vadd.f32 0.0, %v3672
    %v3674 = vpop.f32.mrb[0].mxu0
    %3675 = vmatprep.mubr.f32.mxu0 0.0
    %3676 = vmatmul.mubr.f32.gmra.mrb[0].mxu0 %v3545
    %v3677 = vpop.f32.mrb[0].mxu0
    %v3678 = vadd.f32 0.0, %v3677
    %v3679 = vpop.f32.mrb[0].mxu0
    %3680 = vmatprep.mubr.f32.mxu0 0.0
    %3681 = vmatmul.mubr.f32.gmra.mrb[0].mxu0 %v3548
    %v3682 = vpop.f32.mrb[0].mxu0
    %v3683 = vadd.f32 0.0, %v3682
    %v3684 = vpop.f32.mrb[0].mxu0
    %3685 = vmatprep.mubr.f32.mxu0 0.0
    %3686 = vmatmul.mubr.f32.gmra.mrb[0].mxu0 %v3551
    %v3687 = vpop.f32.mrb[0].mxu0
    %v3688 = vadd.f32 0.0, %v3687
    %v3689 = vpop.f32.mrb[0].mxu0
    %3690 = vmatprep.mubr.f32.mxu0 0.0
    %3691 = vmatmul.mubr.f32.gmra.mrb[0].mxu0 %v3554
    %v3692 = vpop.f32.mrb[0].mxu0
    %v3693 = vadd.f32 0.0, %v3692
    %v3694 = vpop.f32.mrb[0].mxu0
    %3695 = vmatprep.mubr.f32.mxu0 0.0
    %3696 = vmatmul.mubr.f32.gmra.mrb[0].mxu0 %v3557
    %v3697 = vpop.f32.mrb[0].mxu0
    %v3698 = vadd.f32 0.0, %v3697
    %v3699 = vpop.f32.mrb[0].mxu0
    %3700 = vmatprep.mubr.f32.mxu0 0.0
    %3701 = vmatmul.mubr.f32.gmra.mrb[0].mxu0 %v3560
    %v3702 = vpop.f32.mrb[0].mxu0
    %v3703 = vadd.f32 0.0, %v3702
    %v3704 = vpop.f32.mrb[0].mxu0
    %3705 = vmatprep.mubr.f32.mxu0 0.0
    %3706 = vmatmul.mubr.f32.gmra.mrb[0].mxu0 %v3563
    %v3707 = vpop.f32.mrb[0].mxu0
    %v3708 = vadd.f32 0.0, %v3707
    %v3709 = vpop.f32.mrb[0].mxu0
    %3710 = vmatprep.mubr.f32.mxu0 0.0
    %3711 = vmatmul.mubr.f32.gmra.mrb[0].mxu0 %v3566
    %v3712 = vpop.f32.mrb[0].mxu0
    %v3713 = vadd.f32 0.0, %v3712
    %v3714 = vpop.f32.mrb[0].mxu0
    %3715 = vmatprep.mubr.f32.mxu0 0.0
    %3716 = vmatmul.mubr.f32.gmra.mrb[0].mxu0 %v3569
    %v3717 = vpop.f32.mrb[0].mxu0
    %v3718 = vadd.f32 0.0, %v3717
    %v3719 = vpop.f32.mrb[0].mxu0
    %3720 = vmatprep.mubr.f32.mxu0 0.0
    %3721 = vmatmul.mubr.f32.gmra.mrb[0].mxu0 %v3572
    %v3722 = vpop.f32.mrb[0].mxu0
    %v3723 = vadd.f32 0.0, %v3722
    %v3724 = vpop.f32.mrb[0].mxu0
    %3725 = vmatprep.mubr.f32.mxu0 0.0
    %3726 = vmatmul.mubr.f32.gmra.mrb[0].mxu0 %v3575
    %v3727 = vpop.f32.mrb[0].mxu0
    %v3728 = vadd.f32 0.0, %v3727
    %v3729 = vpop.f32.mrb[0].mxu0
    %3730 = vmatprep.mubr.f32.mxu0 0.0
    %3731 = vmatmul.mubr.f32.gmra.mrb[0].mxu0 %v3578
    %v3732 = vpop.f32.mrb[0].mxu0
    %v3733 = vadd.f32 0.0, %v3732
    %v3734 = vpop.f32.mrb[0].mxu0
    %3735 = vmatprep.mubr.f32.mxu0 0.0
    %3736 = vmatmul.mubr.f32.gmra.mrb[0].mxu0 %v3581
    %v3737 = vpop.f32.mrb[0].mxu0
    %v3738 = vadd.f32 0.0, %v3737
    %v3739 = vpop.f32.mrb[0].mxu0
    %3740 = vmatprep.mubr.f32.mxu0 0.0
    %3741 = vmatmul.mubr.f32.gmra.mrb[0].mxu0 %v3584
    %v3742 = vpop.f32.mrb[0].mxu0
    %v3743 = vadd.f32 0.0, %v3742
    %v3744 = vpop.f32.mrb[0].mxu0
    %3745 = vmatprep.mubr.f32.mxu0 0.0
    %3746 = vmatmul.mubr.f32.gmra.mrb[0].mxu0 %v3587
    %v3747 = vpop.f32.mrb[0].mxu0
    %v3748 = vadd.f32 0.0, %v3747
    %v3749 = vpop.f32.mrb[0].mxu0
    %3750 = vmatprep.mubr.f32.mxu0 0.0
    %3751 = vmatmul.mubr.f32.gmra.mrb[0].mxu0 %v3590
    %v3752 = vpop.f32.mrb[0].mxu0
    %v3753 = vadd.f32 0.0, %v3752
    %v3754 = vpop.f32.mrb[0].mxu0
    %3755 = vmatprep.mubr.f32.mxu0 0.0
    %3756 = vmatmul.mubr.f32.gmra.mrb[0].mxu0 %v3593
    %v3757 = vpop.f32.mrb[0].mxu0
    %v3758 = vadd.f32 0.0, %v3757
    %v3759 = vpop.f32.mrb[0].mxu0
    %3760 = vmatprep.mubr.f32.mxu0 0.0
    %3761 = vmatmul.mubr.f32.gmra.mrb[0].mxu0 %v3596
    %v3762 = vpop.f32.mrb[0].mxu0
    %v3763 = vadd.f32 0.0, %v3762
    %v3764 = vpop.f32.mrb[0].mxu0
    %3765 = vdwg.mxu0
    %v3766 = vadd.f32 %v3496, %v3668
    %v3767 = vadd.f32 %v3497, %v3673
    %v3768 = vadd.f32 %v3498, %v3678
    %v3769 = vadd.f32 %v3499, %v3683
    %v3770 = vadd.f32 %v3500, %v3688
    %v3771 = vadd.f32 %v3501, %v3693
    %v3772 = vadd.f32 %v3502, %v3698
    %v3773 = vadd.f32 %v3503, %v3703
    %v3774 = vadd.f32 %v3504, %v3708
    %v3775 = vadd.f32 %v3505, %v3713
    %v3776 = vadd.f32 %v3506, %v3718
    %v3777 = vadd.f32 %v3507, %v3723
    %v3778 = vadd.f32 %v3508, %v3728
    %v3779 = vadd.f32 %v3509, %v3733
    %v3780 = vadd.f32 %v3510, %v3738
    %v3781 = vadd.f32 %v3511, %v3743
    %v3782 = vadd.f32 %v3512, %v3748
    %v3783 = vadd.f32 %v3513, %v3753
    %v3784 = vadd.f32 %v3514, %v3758
    %v3785 = vadd.f32 %v3515, %v3763
    %v3786 = vld [vmem:[%s0 + $0x20] sm:$0xff]
    %v3787 = vld [vmem:[%s0 + $0x28] sm:$0xff]
    %v3788 = vld [vmem:[%s0 + $0x30] sm:$0xff]
    %v3789 = vld [vmem:[%s0 + $0x38] sm:$0xff]
    %v3790 = vld [vmem:[%s0 + $0x40] sm:$0xff]
    %v3791 = vld [vmem:[%s0 + $0x48] sm:$0xff]
    %v3792 = vld [vmem:[%s0 + $0x50] sm:$0xff]
    %v3793 = vld [vmem:[%s0 + $0x58] sm:$0xff]
    %v3794 = vld [vmem:[%s0 + $0x60] sm:$0xff]
    %v3795 = vld [vmem:[%s0 + $0x68] sm:$0xff]
    %v3796 = vld [vmem:[%s0 + $0x70] sm:$0xff]
    %v3797 = vld [vmem:[%s0 + $0x78] sm:$0xff]
    %v3798 = vld [vmem:[%s0 + $0x80] sm:$0xff]
    %v3799 = vld [vmem:[%s0 + $0x88] sm:$0xff]
    %v3800 = vld [vmem:[%s0 + $0x90] sm:$0xff]
    %v3801 = vld [vmem:[%s0 + $0x98] sm:$0xff]
    %v3802 = vld [vmem:[%s0 + $0xa0] sm:$0xff]
    %v3803 = vld [vmem:[%s0 + $0xa8] sm:$0xff]
    %v3804 = vld [vmem:[%s0 + $0xb0] sm:$0xff]
    %v3805 = vld [vmem:[%s0 + $0xb8] sm:$0xff]
    %s3806 = scalar_lea.vmem %s2, 28
    %v3807 = vld [vmem:[%s3806] sm:$0x3]
    %v3809 = vsel %vm88, %v3786, 0
    %v3812 = vsel %vm88, %v3787, 0
    %v3815 = vsel %vm88, %v3788, 0
    %v3818 = vsel %vm88, %v3789, 0
    %v3821 = vsel %vm88, %v3790, 0
    %v3824 = vsel %vm88, %v3791, 0
    %v3827 = vsel %vm88, %v3792, 0
    %v3830 = vsel %vm88, %v3793, 0
    %v3833 = vsel %vm88, %v3794, 0
    %v3836 = vsel %vm88, %v3795, 0
    %v3839 = vsel %vm88, %v3796, 0
    %v3842 = vsel %vm88, %v3797, 0
    %v3845 = vsel %vm88, %v3798, 0
    %v3848 = vsel %vm88, %v3799, 0
    %v3851 = vsel %vm88, %v3800, 0
    %v3854 = vsel %vm88, %v3801, 0
    %v3857 = vsel %vm88, %v3802, 0
    %v3860 = vsel %vm88, %v3803, 0
    %v3863 = vsel %vm88, %v3804, 0
    %v3866 = vsel %vm88, %v3805, 0
    %v3869 = vsel %vm149, %v3807, 0
    %3871 = vmatprep.subr.mxu0 0.0
    %3872 = vmatpush1.msra.mxu0 %v3869
    %3873 = vmatprep.subr.mxu0 0.0
    %3874 = vmatpush1.msra.mxu0 0.0
    %3875 = vmatprep.subr.mxu0 0.0
    %3876 = vmatpush1.msra.mxu0 0.0
    %3877 = vmatprep.subr.mxu0 0.0
    %3878 = vmatpush1.msra.mxu0 0.0
    %3879 = vmatprep.subr.mxu0 0.0
    %3880 = vmatpush1.msra.mxu0 0.0
    %3881 = vmatprep.subr.mxu0 0.0
    %3882 = vmatpush1.msra.mxu0 0.0
    %3883 = vmatprep.subr.mxu0 0.0
    %3884 = vmatpush1.msra.mxu0 0.0
    %3885 = vmatprep.subr.mxu0 0.0
    %3886 = vmatpush1.msra.mxu0 0.0
    %3887 = vmatprep.subr.mxu0 0.0
    %3888 = vmatpush1.msra.mxu0 0.0
    %3889 = vmatprep.subr.mxu0 0.0
    %3890 = vmatpush1.msra.mxu0 0.0
    %3891 = vmatprep.subr.mxu0 0.0
    %3892 = vmatpush1.msra.mxu0 0.0
    %3893 = vmatprep.subr.mxu0 0.0
    %3894 = vmatpush1.msra.mxu0 0.0
    %3895 = vmatprep.subr.mxu0 0.0
    %3896 = vmatpush1.msra.mxu0 0.0
    %3897 = vmatprep.subr.mxu0 0.0
    %3898 = vmatpush1.msra.mxu0 0.0
    %3899 = vmatprep.subr.mxu0 0.0
    %3900 = vmatpush1.msra.mxu0 0.0
    %3901 = vmatprep.subr.mxu0 0.0
    %3902 = vmatpush1.msra.mxu0 0.0
    %3903 = vmatprep.subr.mxu0 0.0
    %3904 = vmatpush1.msra.mxu0 0.0
    %3905 = vmatprep.subr.mxu0 0.0
    %3906 = vmatpush1.msra.mxu0 0.0
    %3907 = vmatprep.subr.mxu0 0.0
    %3908 = vmatpush1.msra.mxu0 0.0
    %3909 = vmatprep.subr.mxu0 0.0
    %3910 = vmatpush1.msra.mxu0 0.0
    %3911 = vmatprep.subr.mxu0 0.0
    %3912 = vmatpush1.msra.mxu0 0.0
    %3913 = vmatprep.subr.mxu0 0.0
    %3914 = vmatpush1.msra.mxu0 0.0
    %3915 = vmatprep.subr.mxu0 0.0
    %3916 = vmatpush1.msra.mxu0 0.0
    %3917 = vmatprep.subr.mxu0 0.0
    %3918 = vmatpush1.msra.mxu0 0.0
    %3919 = vmatprep.subr.mxu0 0.0
    %3920 = vmatpush1.msra.mxu0 0.0
    %3921 = vmatprep.subr.mxu0 0.0
    %3922 = vmatpush1.msra.mxu0 0.0
    %3923 = vmatprep.subr.mxu0 0.0
    %3924 = vmatpush1.msra.mxu0 0.0
    %3925 = vmatprep.subr.mxu0 0.0
    %3926 = vmatpush1.msra.mxu0 0.0
    %3927 = vmatprep.subr.mxu0 0.0
    %3928 = vmatpush1.msra.mxu0 0.0
    %3929 = vmatprep.subr.mxu0 0.0
    %3930 = vmatpush1.msra.mxu0 0.0
    %3931 = vmatprep.subr.mxu0 0.0
    %3932 = vmatpush1.msra.mxu0 0.0
    %3933 = vmatprep.subr.mxu0 0.0
    %3934 = vmatpush1.msra.mxu0 0.0
    %3935 = vmatprep.mubr.f32.mxu0 0.0
    %3936 = vmatmul.mubr.f32.gmra.mrb[0].mxu0 %v3809
    %v3937 = vpop.f32.mrb[0].mxu0
    %v3938 = vadd.f32 0.0, %v3937
    %v3939 = vpop.f32.mrb[0].mxu0
    %3940 = vmatprep.mubr.f32.mxu0 0.0
    %3941 = vmatmul.mubr.f32.gmra.mrb[0].mxu0 %v3812
    %v3942 = vpop.f32.mrb[0].mxu0
    %v3943 = vadd.f32 0.0, %v3942
    %v3944 = vpop.f32.mrb[0].mxu0
    %3945 = vmatprep.mubr.f32.mxu0 0.0
    %3946 = vmatmul.mubr.f32.gmra.mrb[0].mxu0 %v3815
    %v3947 = vpop.f32.mrb[0].mxu0
    %v3948 = vadd.f32 0.0, %v3947
    %v3949 = vpop.f32.mrb[0].mxu0
    %3950 = vmatprep.mubr.f32.mxu0 0.0
    %3951 = vmatmul.mubr.f32.gmra.mrb[0].mxu0 %v3818
    %v3952 = vpop.f32.mrb[0].mxu0
    %v3953 = vadd.f32 0.0, %v3952
    %v3954 = vpop.f32.mrb[0].mxu0
    %3955 = vmatprep.mubr.f32.mxu0 0.0
    %3956 = vmatmul.mubr.f32.gmra.mrb[0].mxu0 %v3821
    %v3957 = vpop.f32.mrb[0].mxu0
    %v3958 = vadd.f32 0.0, %v3957
    %v3959 = vpop.f32.mrb[0].mxu0
    %3960 = vmatprep.mubr.f32.mxu0 0.0
    %3961 = vmatmul.mubr.f32.gmra.mrb[0].mxu0 %v3824
    %v3962 = vpop.f32.mrb[0].mxu0
    %v3963 = vadd.f32 0.0, %v3962
    %v3964 = vpop.f32.mrb[0].mxu0
    %3965 = vmatprep.mubr.f32.mxu0 0.0
    %3966 = vmatmul.mubr.f32.gmra.mrb[0].mxu0 %v3827
    %v3967 = vpop.f32.mrb[0].mxu0
    %v3968 = vadd.f32 0.0, %v3967
    %v3969 = vpop.f32.mrb[0].mxu0
    %3970 = vmatprep.mubr.f32.mxu0 0.0
    %3971 = vmatmul.mubr.f32.gmra.mrb[0].mxu0 %v3830
    %v3972 = vpop.f32.mrb[0].mxu0
    %v3973 = vadd.f32 0.0, %v3972
    %v3974 = vpop.f32.mrb[0].mxu0
    %3975 = vmatprep.mubr.f32.mxu0 0.0
    %3976 = vmatmul.mubr.f32.gmra.mrb[0].mxu0 %v3833
    %v3977 = vpop.f32.mrb[0].mxu0
    %v3978 = vadd.f32 0.0, %v3977
    %v3979 = vpop.f32.mrb[0].mxu0
    %3980 = vmatprep.mubr.f32.mxu0 0.0
    %3981 = vmatmul.mubr.f32.gmra.mrb[0].mxu0 %v3836
    %v3982 = vpop.f32.mrb[0].mxu0
    %v3983 = vadd.f32 0.0, %v3982
    %v3984 = vpop.f32.mrb[0].mxu0
    %3985 = vmatprep.mubr.f32.mxu0 0.0
    %3986 = vmatmul.mubr.f32.gmra.mrb[0].mxu0 %v3839
    %v3987 = vpop.f32.mrb[0].mxu0
    %v3988 = vadd.f32 0.0, %v3987
    %v3989 = vpop.f32.mrb[0].mxu0
    %3990 = vmatprep.mubr.f32.mxu0 0.0
    %3991 = vmatmul.mubr.f32.gmra.mrb[0].mxu0 %v3842
    %v3992 = vpop.f32.mrb[0].mxu0
    %v3993 = vadd.f32 0.0, %v3992
    %v3994 = vpop.f32.mrb[0].mxu0
    %3995 = vmatprep.mubr.f32.mxu0 0.0
    %3996 = vmatmul.mubr.f32.gmra.mrb[0].mxu0 %v3845
    %v3997 = vpop.f32.mrb[0].mxu0
    %v3998 = vadd.f32 0.0, %v3997
    %v3999 = vpop.f32.mrb[0].mxu0
    %4000 = vmatprep.mubr.f32.mxu0 0.0
    %4001 = vmatmul.mubr.f32.gmra.mrb[0].mxu0 %v3848
    %v4002 = vpop.f32.mrb[0].mxu0
    %v4003 = vadd.f32 0.0, %v4002
    %v4004 = vpop.f32.mrb[0].mxu0
    %4005 = vmatprep.mubr.f32.mxu0 0.0
    %4006 = vmatmul.mubr.f32.gmra.mrb[0].mxu0 %v3851
    %v4007 = vpop.f32.mrb[0].mxu0
    %v4008 = vadd.f32 0.0, %v4007
    %v4009 = vpop.f32.mrb[0].mxu0
    %4010 = vmatprep.mubr.f32.mxu0 0.0
    %4011 = vmatmul.mubr.f32.gmra.mrb[0].mxu0 %v3854
    %v4012 = vpop.f32.mrb[0].mxu0
    %v4013 = vadd.f32 0.0, %v4012
    %v4014 = vpop.f32.mrb[0].mxu0
    %4015 = vmatprep.mubr.f32.mxu0 0.0
    %4016 = vmatmul.mubr.f32.gmra.mrb[0].mxu0 %v3857
    %v4017 = vpop.f32.mrb[0].mxu0
    %v4018 = vadd.f32 0.0, %v4017
    %v4019 = vpop.f32.mrb[0].mxu0
    %4020 = vmatprep.mubr.f32.mxu0 0.0
    %4021 = vmatmul.mubr.f32.gmra.mrb[0].mxu0 %v3860
    %v4022 = vpop.f32.mrb[0].mxu0
    %v4023 = vadd.f32 0.0, %v4022
    %v4024 = vpop.f32.mrb[0].mxu0
    %4025 = vmatprep.mubr.f32.mxu0 0.0
    %4026 = vmatmul.mubr.f32.gmra.mrb[0].mxu0 %v3863
    %v4027 = vpop.f32.mrb[0].mxu0
    %v4028 = vadd.f32 0.0, %v4027
    %v4029 = vpop.f32.mrb[0].mxu0
    %4030 = vmatprep.mubr.f32.mxu0 0.0
    %4031 = vmatmul.mubr.f32.gmra.mrb[0].mxu0 %v3866
    %v4032 = vpop.f32.mrb[0].mxu0
    %v4033 = vadd.f32 0.0, %v4032
    %v4034 = vpop.f32.mrb[0].mxu0
    %4035 = vdwg.mxu0
    %v4036 = vadd.f32 %v3766, %v3938
    %v4037 = vadd.f32 %v3767, %v3943
    %v4038 = vadd.f32 %v3768, %v3948
    %v4039 = vadd.f32 %v3769, %v3953
    %v4040 = vadd.f32 %v3770, %v3958
    %v4041 = vadd.f32 %v3771, %v3963
    %v4042 = vadd.f32 %v3772, %v3968
    %v4043 = vadd.f32 %v3773, %v3973
    %v4044 = vadd.f32 %v3774, %v3978
    %v4045 = vadd.f32 %v3775, %v3983
    %v4046 = vadd.f32 %v3776, %v3988
    %v4047 = vadd.f32 %v3777, %v3993
    %v4048 = vadd.f32 %v3778, %v3998
    %v4049 = vadd.f32 %v3779, %v4003
    %v4050 = vadd.f32 %v3780, %v4008
    %v4051 = vadd.f32 %v3781, %v4013
    %v4052 = vadd.f32 %v3782, %v4018
    %v4053 = vadd.f32 %v3783, %v4023
    %v4054 = vadd.f32 %v3784, %v4028
    %v4055 = vadd.f32 %v3785, %v4033
    %v4056 = vld [vmem:[%s0 + $0x21] sm:$0xff]
    %v4057 = vld [vmem:[%s0 + $0x29] sm:$0xff]
    %v4058 = vld [vmem:[%s0 + $0x31] sm:$0xff]
    %v4059 = vld [vmem:[%s0 + $0x39] sm:$0xff]
    %v4060 = vld [vmem:[%s0 + $0x41] sm:$0xff]
    %v4061 = vld [vmem:[%s0 + $0x49] sm:$0xff]
    %v4062 = vld [vmem:[%s0 + $0x51] sm:$0xff]
    %v4063 = vld [vmem:[%s0 + $0x59] sm:$0xff]
    %v4064 = vld [vmem:[%s0 + $0x61] sm:$0xff]
    %v4065 = vld [vmem:[%s0 + $0x69] sm:$0xff]
    %v4066 = vld [vmem:[%s0 + $0x71] sm:$0xff]
    %v4067 = vld [vmem:[%s0 + $0x79] sm:$0xff]
    %v4068 = vld [vmem:[%s0 + $0x81] sm:$0xff]
    %v4069 = vld [vmem:[%s0 + $0x89] sm:$0xff]
    %v4070 = vld [vmem:[%s0 + $0x91] sm:$0xff]
    %v4071 = vld [vmem:[%s0 + $0x99] sm:$0xff]
    %v4072 = vld [vmem:[%s0 + $0xa1] sm:$0xff]
    %v4073 = vld [vmem:[%s0 + $0xa9] sm:$0xff]
    %v4074 = vld [vmem:[%s0 + $0xb1] sm:$0xff]
    %v4075 = vld [vmem:[%s0 + $0xb9] sm:$0xff]
    %s4076 = scalar_lea.vmem %s2, 30
    %v4077 = vld [vmem:[%s4076] sm:$0x3]
    %v4079 = vsel %vm88, %v4056, 0
    %v4082 = vsel %vm88, %v4057, 0
    %v4085 = vsel %vm88, %v4058, 0
    %v4088 = vsel %vm88, %v4059, 0
    %v4091 = vsel %vm88, %v4060, 0
    %v4094 = vsel %vm88, %v4061, 0
    %v4097 = vsel %vm88, %v4062, 0
    %v4100 = vsel %vm88, %v4063, 0
    %v4103 = vsel %vm88, %v4064, 0
    %v4106 = vsel %vm88, %v4065, 0
    %v4109 = vsel %vm88, %v4066, 0
    %v4112 = vsel %vm88, %v4067, 0
    %v4115 = vsel %vm88, %v4068, 0
    %v4118 = vsel %vm88, %v4069, 0
    %v4121 = vsel %vm88, %v4070, 0
    %v4124 = vsel %vm88, %v4071, 0
    %v4127 = vsel %vm88, %v4072, 0
    %v4130 = vsel %vm88, %v4073, 0
    %v4133 = vsel %vm88, %v4074, 0
    %v4136 = vsel %vm88, %v4075, 0
    %v4139 = vsel %vm149, %v4077, 0
    %4141 = vmatprep.subr.mxu0 0.0
    %4142 = vmatpush1.msra.mxu0 %v4139
    %4143 = vmatprep.subr.mxu0 0.0
    %4144 = vmatpush1.msra.mxu0 0.0
    %4145 = vmatprep.subr.mxu0 0.0
    %4146 = vmatpush1.msra.mxu0 0.0
    %4147 = vmatprep.subr.mxu0 0.0
    %4148 = vmatpush1.msra.mxu0 0.0
    %4149 = vmatprep.subr.mxu0 0.0
    %4150 = vmatpush1.msra.mxu0 0.0
    %4151 = vmatprep.subr.mxu0 0.0
    %4152 = vmatpush1.msra.mxu0 0.0
    %4153 = vmatprep.subr.mxu0 0.0
    %4154 = vmatpush1.msra.mxu0 0.0
    %4155 = vmatprep.subr.mxu0 0.0
    %4156 = vmatpush1.msra.mxu0 0.0
    %4157 = vmatprep.subr.mxu0 0.0
    %4158 = vmatpush1.msra.mxu0 0.0
    %4159 = vmatprep.subr.mxu0 0.0
    %4160 = vmatpush1.msra.mxu0 0.0
    %4161 = vmatprep.subr.mxu0 0.0
    %4162 = vmatpush1.msra.mxu0 0.0
    %4163 = vmatprep.subr.mxu0 0.0
    %4164 = vmatpush1.msra.mxu0 0.0
    %4165 = vmatprep.subr.mxu0 0.0
    %4166 = vmatpush1.msra.mxu0 0.0
    %4167 = vmatprep.subr.mxu0 0.0
    %4168 = vmatpush1.msra.mxu0 0.0
    %4169 = vmatprep.subr.mxu0 0.0
    %4170 = vmatpush1.msra.mxu0 0.0
    %4171 = vmatprep.subr.mxu0 0.0
    %4172 = vmatpush1.msra.mxu0 0.0
    %4173 = vmatprep.subr.mxu0 0.0
    %4174 = vmatpush1.msra.mxu0 0.0
    %4175 = vmatprep.subr.mxu0 0.0
    %4176 = vmatpush1.msra.mxu0 0.0
    %4177 = vmatprep.subr.mxu0 0.0
    %4178 = vmatpush1.msra.mxu0 0.0
    %4179 = vmatprep.subr.mxu0 0.0
    %4180 = vmatpush1.msra.mxu0 0.0
    %4181 = vmatprep.subr.mxu0 0.0
    %4182 = vmatpush1.msra.mxu0 0.0
    %4183 = vmatprep.subr.mxu0 0.0
    %4184 = vmatpush1.msra.mxu0 0.0
    %4185 = vmatprep.subr.mxu0 0.0
    %4186 = vmatpush1.msra.mxu0 0.0
    %4187 = vmatprep.subr.mxu0 0.0
    %4188 = vmatpush1.msra.mxu0 0.0
    %4189 = vmatprep.subr.mxu0 0.0
    %4190 = vmatpush1.msra.mxu0 0.0
    %4191 = vmatprep.subr.mxu0 0.0
    %4192 = vmatpush1.msra.mxu0 0.0
    %4193 = vmatprep.subr.mxu0 0.0
    %4194 = vmatpush1.msra.mxu0 0.0
    %4195 = vmatprep.subr.mxu0 0.0
    %4196 = vmatpush1.msra.mxu0 0.0
    %4197 = vmatprep.subr.mxu0 0.0
    %4198 = vmatpush1.msra.mxu0 0.0
    %4199 = vmatprep.subr.mxu0 0.0
    %4200 = vmatpush1.msra.mxu0 0.0
    %4201 = vmatprep.subr.mxu0 0.0
    %4202 = vmatpush1.msra.mxu0 0.0
    %4203 = vmatprep.subr.mxu0 0.0
    %4204 = vmatpush1.msra.mxu0 0.0
    %4205 = vmatprep.mubr.f32.mxu0 0.0
    %4206 = vmatmul.mubr.f32.gmra.mrb[0].mxu0 %v4079
    %v4207 = vpop.f32.mrb[0].mxu0
    %v4208 = vadd.f32 0.0, %v4207
    %v4209 = vpop.f32.mrb[0].mxu0
    %4210 = vmatprep.mubr.f32.mxu0 0.0
    %4211 = vmatmul.mubr.f32.gmra.mrb[0].mxu0 %v4082
    %v4212 = vpop.f32.mrb[0].mxu0
    %v4213 = vadd.f32 0.0, %v4212
    %v4214 = vpop.f32.mrb[0].mxu0
    %4215 = vmatprep.mubr.f32.mxu0 0.0
    %4216 = vmatmul.mubr.f32.gmra.mrb[0].mxu0 %v4085
    %v4217 = vpop.f32.mrb[0].mxu0
    %v4218 = vadd.f32 0.0, %v4217
    %v4219 = vpop.f32.mrb[0].mxu0
    %4220 = vmatprep.mubr.f32.mxu0 0.0
    %4221 = vmatmul.mubr.f32.gmra.mrb[0].mxu0 %v4088
    %v4222 = vpop.f32.mrb[0].mxu0
    %v4223 = vadd.f32 0.0, %v4222
    %v4224 = vpop.f32.mrb[0].mxu0
    %4225 = vmatprep.mubr.f32.mxu0 0.0
    %4226 = vmatmul.mubr.f32.gmra.mrb[0].mxu0 %v4091
    %v4227 = vpop.f32.mrb[0].mxu0
    %v4228 = vadd.f32 0.0, %v4227
    %v4229 = vpop.f32.mrb[0].mxu0
    %4230 = vmatprep.mubr.f32.mxu0 0.0
    %4231 = vmatmul.mubr.f32.gmra.mrb[0].mxu0 %v4094
    %v4232 = vpop.f32.mrb[0].mxu0
    %v4233 = vadd.f32 0.0, %v4232
    %v4234 = vpop.f32.mrb[0].mxu0
    %4235 = vmatprep.mubr.f32.mxu0 0.0
    %4236 = vmatmul.mubr.f32.gmra.mrb[0].mxu0 %v4097
    %v4237 = vpop.f32.mrb[0].mxu0
    %v4238 = vadd.f32 0.0, %v4237
    %v4239 = vpop.f32.mrb[0].mxu0
    %4240 = vmatprep.mubr.f32.mxu0 0.0
    %4241 = vmatmul.mubr.f32.gmra.mrb[0].mxu0 %v4100
    %v4242 = vpop.f32.mrb[0].mxu0
    %v4243 = vadd.f32 0.0, %v4242
    %v4244 = vpop.f32.mrb[0].mxu0
    %4245 = vmatprep.mubr.f32.mxu0 0.0
    %4246 = vmatmul.mubr.f32.gmra.mrb[0].mxu0 %v4103
    %v4247 = vpop.f32.mrb[0].mxu0
    %v4248 = vadd.f32 0.0, %v4247
    %v4249 = vpop.f32.mrb[0].mxu0
    %4250 = vmatprep.mubr.f32.mxu0 0.0
    %4251 = vmatmul.mubr.f32.gmra.mrb[0].mxu0 %v4106
    %v4252 = vpop.f32.mrb[0].mxu0
    %v4253 = vadd.f32 0.0, %v4252
    %v4254 = vpop.f32.mrb[0].mxu0
    %4255 = vmatprep.mubr.f32.mxu0 0.0
    %4256 = vmatmul.mubr.f32.gmra.mrb[0].mxu0 %v4109
    %v4257 = vpop.f32.mrb[0].mxu0
    %v4258 = vadd.f32 0.0, %v4257
    %v4259 = vpop.f32.mrb[0].mxu0
    %4260 = vmatprep.mubr.f32.mxu0 0.0
    %4261 = vmatmul.mubr.f32.gmra.mrb[0].mxu0 %v4112
    %v4262 = vpop.f32.mrb[0].mxu0
    %v4263 = vadd.f32 0.0, %v4262
    %v4264 = vpop.f32.mrb[0].mxu0
    %4265 = vmatprep.mubr.f32.mxu0 0.0
    %4266 = vmatmul.mubr.f32.gmra.mrb[0].mxu0 %v4115
    %v4267 = vpop.f32.mrb[0].mxu0
    %v4268 = vadd.f32 0.0, %v4267
    %v4269 = vpop.f32.mrb[0].mxu0
    %4270 = vmatprep.mubr.f32.mxu0 0.0
    %4271 = vmatmul.mubr.f32.gmra.mrb[0].mxu0 %v4118
    %v4272 = vpop.f32.mrb[0].mxu0
    %v4273 = vadd.f32 0.0, %v4272
    %v4274 = vpop.f32.mrb[0].mxu0
    %4275 = vmatprep.mubr.f32.mxu0 0.0
    %4276 = vmatmul.mubr.f32.gmra.mrb[0].mxu0 %v4121
    %v4277 = vpop.f32.mrb[0].mxu0
    %v4278 = vadd.f32 0.0, %v4277
    %v4279 = vpop.f32.mrb[0].mxu0
    %4280 = vmatprep.mubr.f32.mxu0 0.0
    %4281 = vmatmul.mubr.f32.gmra.mrb[0].mxu0 %v4124
    %v4282 = vpop.f32.mrb[0].mxu0
    %v4283 = vadd.f32 0.0, %v4282
    %v4284 = vpop.f32.mrb[0].mxu0
    %4285 = vmatprep.mubr.f32.mxu0 0.0
    %4286 = vmatmul.mubr.f32.gmra.mrb[0].mxu0 %v4127
    %v4287 = vpop.f32.mrb[0].mxu0
    %v4288 = vadd.f32 0.0, %v4287
    %v4289 = vpop.f32.mrb[0].mxu0
    %4290 = vmatprep.mubr.f32.mxu0 0.0
    %4291 = vmatmul.mubr.f32.gmra.mrb[0].mxu0 %v4130
    %v4292 = vpop.f32.mrb[0].mxu0
    %v4293 = vadd.f32 0.0, %v4292
    %v4294 = vpop.f32.mrb[0].mxu0
    %4295 = vmatprep.mubr.f32.mxu0 0.0
    %4296 = vmatmul.mubr.f32.gmra.mrb[0].mxu0 %v4133
    %v4297 = vpop.f32.mrb[0].mxu0
    %v4298 = vadd.f32 0.0, %v4297
    %v4299 = vpop.f32.mrb[0].mxu0
    %4300 = vmatprep.mubr.f32.mxu0 0.0
    %4301 = vmatmul.mubr.f32.gmra.mrb[0].mxu0 %v4136
    %v4302 = vpop.f32.mrb[0].mxu0
    %v4303 = vadd.f32 0.0, %v4302
    %v4304 = vpop.f32.mrb[0].mxu0
    %4305 = vdwg.mxu0
    %v4306 = vadd.f32 %v4036, %v4208
    %v4307 = vadd.f32 %v4037, %v4213
    %v4308 = vadd.f32 %v4038, %v4218
    %v4309 = vadd.f32 %v4039, %v4223
    %v4310 = vadd.f32 %v4040, %v4228
    %v4311 = vadd.f32 %v4041, %v4233
    %v4312 = vadd.f32 %v4042, %v4238
    %v4313 = vadd.f32 %v4043, %v4243
    %v4314 = vadd.f32 %v4044, %v4248
    %v4315 = vadd.f32 %v4045, %v4253
    %v4316 = vadd.f32 %v4046, %v4258
    %v4317 = vadd.f32 %v4047, %v4263
    %v4318 = vadd.f32 %v4048, %v4268
    %v4319 = vadd.f32 %v4049, %v4273
    %v4320 = vadd.f32 %v4050, %v4278
    %v4321 = vadd.f32 %v4051, %v4283
    %v4322 = vadd.f32 %v4052, %v4288
    %v4323 = vadd.f32 %v4053, %v4293
    %v4324 = vadd.f32 %v4054, %v4298
    %v4325 = vadd.f32 %v4055, %v4303
    %v4326 = vld [vmem:[%s3] sm:$0x1]
    %v4328 = vlaneseq
    %v4329 = vshrl.u32 %v4328, 7
    %v4330 = vsub.s32 0, %v4329
    %v4331 = vrot.slane %v4326, %v4330
    %v4333 = vadd.f32 %v4306, %v4331
    %v4334 = vadd.f32 %v4307, %v4331
    %v4335 = vadd.f32 %v4308, %v4331
    %v4336 = vadd.f32 %v4309, %v4331
    %v4337 = vadd.f32 %v4310, %v4331
    %v4338 = vadd.f32 %v4311, %v4331
    %v4339 = vadd.f32 %v4312, %v4331
    %v4340 = vadd.f32 %v4313, %v4331
    %v4341 = vadd.f32 %v4314, %v4331
    %v4342 = vadd.f32 %v4315, %v4331
    %v4343 = vadd.f32 %v4316, %v4331
    %v4344 = vadd.f32 %v4317, %v4331
    %v4345 = vadd.f32 %v4318, %v4331
    %v4346 = vadd.f32 %v4319, %v4331
    %v4347 = vadd.f32 %v4320, %v4331
    %v4348 = vadd.f32 %v4321, %v4331
    %v4349 = vadd.f32 %v4322, %v4331
    %v4350 = vadd.f32 %v4323, %v4331
    %v4351 = vadd.f32 %v4324, %v4331
    %v4352 = vadd.f32 %v4325, %v4331
    %vm4353 = vcmask 31744
    %4354 = vst.msk [vmem:[#allocation2] sm:$0xff] %vm4353, %v4333
    %4355 = vst.msk [vmem:[#allocation2 + $0x8] sm:$0xff] %vm4353, %v4334
    %4356 = vst.msk [vmem:[#allocation2 + $0x10] sm:$0xff] %vm4353, %v4335
    %4357 = vst.msk [vmem:[#allocation2 + $0x18] sm:$0xff] %vm4353, %v4336
    %4358 = vst.msk [vmem:[#allocation2 + $0x20] sm:$0xff] %vm4353, %v4337
    %4359 = vst.msk [vmem:[#allocation2 + $0x28] sm:$0xff] %vm4353, %v4338
    %4360 = vst.msk [vmem:[#allocation2 + $0x30] sm:$0xff] %vm4353, %v4339
    %4361 = vst.msk [vmem:[#allocation2 + $0x38] sm:$0xff] %vm4353, %v4340
    %4362 = vst.msk [vmem:[#allocation2 + $0x40] sm:$0xff] %vm4353, %v4341
    %4363 = vst.msk [vmem:[#allocation2 + $0x48] sm:$0xff] %vm4353, %v4342
    %4364 = vst.msk [vmem:[#allocation2 + $0x50] sm:$0xff] %vm4353, %v4343
    %4365 = vst.msk [vmem:[#allocation2 + $0x58] sm:$0xff] %vm4353, %v4344
    %4366 = vst.msk [vmem:[#allocation2 + $0x60] sm:$0xff] %vm4353, %v4345
    %4367 = vst.msk [vmem:[#allocation2 + $0x68] sm:$0xff] %vm4353, %v4346
    %4368 = vst.msk [vmem:[#allocation2 + $0x70] sm:$0xff] %vm4353, %v4347
    %4369 = vst.msk [vmem:[#allocation2 + $0x78] sm:$0xff] %vm4353, %v4348
    %4370 = vst.msk [vmem:[#allocation2 + $0x80] sm:$0xff] %vm4353, %v4349
    %4371 = vst.msk [vmem:[#allocation2 + $0x88] sm:$0xff] %vm4353, %v4350
    %4372 = vst.msk [vmem:[#allocation2 + $0x90] sm:$0xff] %vm4353, %v4351
    %4373 = vst.msk [vmem:[#allocation2 + $0x98] sm:$0xff] %vm4353, %v4352
    %4374 = vst.msk [vmem:[#allocation2 + $0xa0] sm:$0xff] %vm4353, 0.0
    %4375 = vst.msk [vmem:[#allocation2 + $0xa8] sm:$0xff] %vm4353, 0.0
    %v4376 = vld [vmem:[#allocation2] sm:$0xff]
    %v4377 = vld [vmem:[#allocation2 + $0x8] sm:$0xff]
    %v4378 = vld [vmem:[#allocation2 + $0x10] sm:$0xff]
    %v4379 = vld [vmem:[#allocation2 + $0x18] sm:$0xff]
    %v4380 = vld [vmem:[#allocation2 + $0x20] sm:$0xff]
    %v4381 = vld [vmem:[#allocation2 + $0x28] sm:$0xff]
    %v4382 = vld [vmem:[#allocation2 + $0x30] sm:$0xff]
    %v4383 = vld [vmem:[#allocation2 + $0x38] sm:$0xff]
    %v4384 = vld [vmem:[#allocation2 + $0x40] sm:$0xff]
    %v4385 = vld [vmem:[#allocation2 + $0x48] sm:$0xff]
    %v4386 = vld [vmem:[#allocation2 + $0x50] sm:$0xff]
    %v4387 = vld [vmem:[#allocation2 + $0x58] sm:$0xff]
    %v4388 = vld [vmem:[#allocation2 + $0x60] sm:$0xff]
    %v4389 = vld [vmem:[#allocation2 + $0x68] sm:$0xff]
    %v4390 = vld [vmem:[#allocation2 + $0x70] sm:$0xff]
    %v4391 = vld [vmem:[#allocation2 + $0x78] sm:$0xff]
    %v4392 = vld [vmem:[#allocation2 + $0x80] sm:$0xff]
    %v4393 = vld [vmem:[#allocation2 + $0x88] sm:$0xff]
    %v4394 = vld [vmem:[#allocation2 + $0x90] sm:$0xff]
    %v4395 = vld [vmem:[#allocation2 + $0x98] sm:$0xff]
    %v4396 = vld [vmem:[#allocation2 + $0x1] sm:$0xff]
    %v4397 = vld [vmem:[#allocation2 + $0x9] sm:$0xff]
    %v4398 = vld [vmem:[#allocation2 + $0x11] sm:$0xff]
    %v4399 = vld [vmem:[#allocation2 + $0x19] sm:$0xff]
    %v4400 = vld [vmem:[#allocation2 + $0x21] sm:$0xff]
    %v4401 = vld [vmem:[#allocation2 + $0x29] sm:$0xff]
    %v4402 = vld [vmem:[#allocation2 + $0x31] sm:$0xff]
    %v4403 = vld [vmem:[#allocation2 + $0x39] sm:$0xff]
    %v4404 = vld [vmem:[#allocation2 + $0x41] sm:$0xff]
    %v4405 = vld [vmem:[#allocation2 + $0x49] sm:$0xff]
    %v4406 = vld [vmem:[#allocation2 + $0x51] sm:$0xff]
    %v4407 = vld [vmem:[#allocation2 + $0x59] sm:$0xff]
    %v4408 = vld [vmem:[#allocation2 + $0x61] sm:$0xff]
    %v4409 = vld [vmem:[#allocation2 + $0x69] sm:$0xff]
    %v4410 = vld [vmem:[#allocation2 + $0x71] sm:$0xff]
    %v4411 = vld [vmem:[#allocation2 + $0x79] sm:$0xff]
    %v4412 = vld [vmem:[#allocation2 + $0x81] sm:$0xff]
    %v4413 = vld [vmem:[#allocation2 + $0x89] sm:$0xff]
    %v4414 = vld [vmem:[#allocation2 + $0x91] sm:$0xff]
    %v4415 = vld [vmem:[#allocation2 + $0x99] sm:$0xff]
    %v4416 = vmax.f32 %v4376, %v4396
    %v4417 = vmax.f32 %v4377, %v4397
    %v4418 = vmax.f32 %v4378, %v4398
    %v4419 = vmax.f32 %v4379, %v4399
    %v4420 = vmax.f32 %v4380, %v4400
    %v4421 = vmax.f32 %v4381, %v4401
    %v4422 = vmax.f32 %v4382, %v4402
    %v4423 = vmax.f32 %v4383, %v4403
    %v4424 = vmax.f32 %v4384, %v4404
    %v4425 = vmax.f32 %v4385, %v4405
    %v4426 = vmax.f32 %v4386, %v4406
    %v4427 = vmax.f32 %v4387, %v4407
    %v4428 = vmax.f32 %v4388, %v4408
    %v4429 = vmax.f32 %v4389, %v4409
    %v4430 = vmax.f32 %v4390, %v4410
    %v4431 = vmax.f32 %v4391, %v4411
    %v4432 = vmax.f32 %v4392, %v4412
    %v4433 = vmax.f32 %v4393, %v4413
    %v4434 = vmax.f32 %v4394, %v4414
    %v4435 = vmax.f32 %v4395, %v4415
    %v4436 = vld [vmem:[#allocation2 + $0xa] sm:$0xff]
    %v4437 = vld [vmem:[#allocation2 + $0x12] sm:$0xff]
    %v4438 = vld [vmem:[#allocation2 + $0x1a] sm:$0xff]
    %v4439 = vld [vmem:[#allocation2 + $0x22] sm:$0xff]
    %v4440 = vld [vmem:[#allocation2 + $0x2a] sm:$0xff]
    %v4441 = vld [vmem:[#allocation2 + $0x32] sm:$0xff]
    %v4442 = vld [vmem:[#allocation2 + $0x3a] sm:$0xff]
    %v4443 = vld [vmem:[#allocation2 + $0x42] sm:$0xff]
    %v4444 = vld [vmem:[#allocation2 + $0x4a] sm:$0xff]
    %v4445 = vld [vmem:[#allocation2 + $0x52] sm:$0xff]
    %v4446 = vld [vmem:[#allocation2 + $0x5a] sm:$0xff]
    %v4447 = vld [vmem:[#allocation2 + $0x62] sm:$0xff]
    %v4448 = vld [vmem:[#allocation2 + $0x6a] sm:$0xff]
    %v4449 = vld [vmem:[#allocation2 + $0x72] sm:$0xff]
    %v4450 = vld [vmem:[#allocation2 + $0x7a] sm:$0xff]
    %v4451 = vld [vmem:[#allocation2 + $0x82] sm:$0xff]
    %v4452 = vld [vmem:[#allocation2 + $0x8a] sm:$0xff]
    %v4453 = vld [vmem:[#allocation2 + $0x92] sm:$0xff]
    %v4454 = vld [vmem:[#allocation2 + $0x9a] sm:$0xff]
    %v4455 = vld [vmem:[#allocation2 + $0xa2] sm:$0xff]
    %v4456 = vmax.f32 %v4416, %v4436
    %v4457 = vmax.f32 %v4417, %v4437
    %v4458 = vmax.f32 %v4418, %v4438
    %v4459 = vmax.f32 %v4419, %v4439
    %v4460 = vmax.f32 %v4420, %v4440
    %v4461 = vmax.f32 %v4421, %v4441
    %v4462 = vmax.f32 %v4422, %v4442
    %v4463 = vmax.f32 %v4423, %v4443
    %v4464 = vmax.f32 %v4424, %v4444
    %v4465 = vmax.f32 %v4425, %v4445
    %v4466 = vmax.f32 %v4426, %v4446
    %v4467 = vmax.f32 %v4427, %v4447
    %v4468 = vmax.f32 %v4428, %v4448
    %v4469 = vmax.f32 %v4429, %v4449
    %v4470 = vmax.f32 %v4430, %v4450
    %v4471 = vmax.f32 %v4431, %v4451
    %v4472 = vmax.f32 %v4432, %v4452
    %v4473 = vmax.f32 %v4433, %v4453
    %v4474 = vmax.f32 %v4434, %v4454
    %v4475 = vmax.f32 %v4435, %v4455
    %v4476 = vld [vmem:[#allocation2 + $0xb] sm:$0xff]
    %v4477 = vld [vmem:[#allocation2 + $0x13] sm:$0xff]
    %v4478 = vld [vmem:[#allocation2 + $0x1b] sm:$0xff]
    %v4479 = vld [vmem:[#allocation2 + $0x23] sm:$0xff]
    %v4480 = vld [vmem:[#allocation2 + $0x2b] sm:$0xff]
    %v4481 = vld [vmem:[#allocation2 + $0x33] sm:$0xff]
    %v4482 = vld [vmem:[#allocation2 + $0x3b] sm:$0xff]
    %v4483 = vld [vmem:[#allocation2 + $0x43] sm:$0xff]
    %v4484 = vld [vmem:[#allocation2 + $0x4b] sm:$0xff]
    %v4485 = vld [vmem:[#allocation2 + $0x53] sm:$0xff]
    %v4486 = vld [vmem:[#allocation2 + $0x5b] sm:$0xff]
    %v4487 = vld [vmem:[#allocation2 + $0x63] sm:$0xff]
    %v4488 = vld [vmem:[#allocation2 + $0x6b] sm:$0xff]
    %v4489 = vld [vmem:[#allocation2 + $0x73] sm:$0xff]
    %v4490 = vld [vmem:[#allocation2 + $0x7b] sm:$0xff]
    %v4491 = vld [vmem:[#allocation2 + $0x83] sm:$0xff]
    %v4492 = vld [vmem:[#allocation2 + $0x8b] sm:$0xff]
    %v4493 = vld [vmem:[#allocation2 + $0x93] sm:$0xff]
    %v4494 = vld [vmem:[#allocation2 + $0x9b] sm:$0xff]
    %v4495 = vld [vmem:[#allocation2 + $0xa3] sm:$0xff]
    %v4496 = vmax.f32 %v4456, %v4476
    %v4497 = vmax.f32 %v4457, %v4477
    %v4498 = vmax.f32 %v4458, %v4478
    %v4499 = vmax.f32 %v4459, %v4479
    %v4500 = vmax.f32 %v4460, %v4480
    %v4501 = vmax.f32 %v4461, %v4481
    %v4502 = vmax.f32 %v4462, %v4482
    %v4503 = vmax.f32 %v4463, %v4483
    %v4504 = vmax.f32 %v4464, %v4484
    %v4505 = vmax.f32 %v4465, %v4485
    %v4506 = vmax.f32 %v4466, %v4486
    %v4507 = vmax.f32 %v4467, %v4487
    %v4508 = vmax.f32 %v4468, %v4488
    %v4509 = vmax.f32 %v4469, %v4489
    %v4510 = vmax.f32 %v4470, %v4490
    %v4511 = vmax.f32 %v4471, %v4491
    %v4512 = vmax.f32 %v4472, %v4492
    %v4513 = vmax.f32 %v4473, %v4493
    %v4514 = vmax.f32 %v4474, %v4494
    %v4515 = vmax.f32 %v4475, %v4495
    %v4516 = vmax.f32 %v4496, 0.0
    %v4517 = vmax.f32 %v4497, 0.0
    %v4518 = vmax.f32 %v4498, 0.0
    %v4519 = vmax.f32 %v4499, 0.0
    %v4520 = vmax.f32 %v4500, 0.0
    %v4521 = vmax.f32 %v4501, 0.0
    %v4522 = vmax.f32 %v4502, 0.0
    %v4523 = vmax.f32 %v4503, 0.0
    %v4524 = vmax.f32 %v4504, 0.0
    %v4525 = vmax.f32 %v4505, 0.0
    %v4526 = vmax.f32 %v4506, 0.0
    %v4527 = vmax.f32 %v4507, 0.0
    %v4528 = vmax.f32 %v4508, 0.0
    %v4529 = vmax.f32 %v4509, 0.0
    %v4530 = vmax.f32 %v4510, 0.0
    %v4531 = vmax.f32 %v4511, 0.0
    %v4532 = vmax.f32 %v4512, 0.0
    %v4533 = vmax.f32 %v4513, 0.0
    %v4534 = vmax.f32 %v4514, 0.0
    %v4535 = vmax.f32 %v4515, 0.0
    %4536 = vst.msk [vmem:[#allocation3] sm:$0xff] %vm4353, %v4516
    %4537 = vst.msk [vmem:[#allocation3 + $0x8] sm:$0xff] %vm4353, %v4517
    %4538 = vst.msk [vmem:[#allocation3 + $0x10] sm:$0xff] %vm4353, %v4518
    %4539 = vst.msk [vmem:[#allocation3 + $0x18] sm:$0xff] %vm4353, %v4519
    %4540 = vst.msk [vmem:[#allocation3 + $0x20] sm:$0xff] %vm4353, %v4520
    %4541 = vst.msk [vmem:[#allocation3 + $0x28] sm:$0xff] %vm4353, %v4521
    %4542 = vst.msk [vmem:[#allocation3 + $0x30] sm:$0xff] %vm4353, %v4522
    %4543 = vst.msk [vmem:[#allocation3 + $0x38] sm:$0xff] %vm4353, %v4523
    %4544 = vst.msk [vmem:[#allocation3 + $0x40] sm:$0xff] %vm4353, %v4524
    %4545 = vst.msk [vmem:[#allocation3 + $0x48] sm:$0xff] %vm4353, %v4525
    %4546 = vst.msk [vmem:[#allocation3 + $0x50] sm:$0xff] %vm4353, %v4526
    %4547 = vst.msk [vmem:[#allocation3 + $0x58] sm:$0xff] %vm4353, %v4527
    %4548 = vst.msk [vmem:[#allocation3 + $0x60] sm:$0xff] %vm4353, %v4528
    %4549 = vst.msk [vmem:[#allocation3 + $0x68] sm:$0xff] %vm4353, %v4529
    %4550 = vst.msk [vmem:[#allocation3 + $0x70] sm:$0xff] %vm4353, %v4530
    %4551 = vst.msk [vmem:[#allocation3 + $0x78] sm:$0xff] %vm4353, %v4531
    %4552 = vst.msk [vmem:[#allocation3 + $0x80] sm:$0xff] %vm4353, %v4532
    %4553 = vst.msk [vmem:[#allocation3 + $0x88] sm:$0xff] %vm4353, %v4533
    %4554 = vst.msk [vmem:[#allocation3 + $0x90] sm:$0xff] %vm4353, %v4534
    %4555 = vst.msk [vmem:[#allocation3 + $0x98] sm:$0xff] %vm4353, %v4535
    %v4556 = vld [vmem:[%s5] sm:$0x1]
    %v4557 = vld [vmem:[%s7] sm:$0x1]
    %v4558 = vld [vmem:[#allocation3] sm:$0x1]
    %v4559 = vld [vmem:[%s4] sm:$0xf]
    %v4561 = vsel %vm4353, %v4558, 0
    %vm4563 = vcmask 1043456
    %v4565 = vsel %vm4563, %v4559, 0
    %4567 = vmatprep.subr.mxu0 0.0
    %4568 = vmatpush1.msra.mxu0 %v4565
    %4569 = vmatprep.subr.mxu0 0.0
    %4570 = vmatpush1.msra.mxu0 0.0
    %4571 = vmatprep.subr.mxu0 0.0
    %4572 = vmatpush1.msra.mxu0 0.0
    %4573 = vmatprep.subr.mxu0 0.0
    %4574 = vmatpush1.msra.mxu0 0.0
    %4575 = vmatprep.subr.mxu0 0.0
    %4576 = vmatpush1.msra.mxu0 0.0
    %4577 = vmatprep.subr.mxu0 0.0
    %4578 = vmatpush1.msra.mxu0 0.0
    %4579 = vmatprep.subr.mxu0 0.0
    %4580 = vmatpush1.msra.mxu0 0.0
    %4581 = vmatprep.subr.mxu0 0.0
    %4582 = vmatpush1.msra.mxu0 0.0
    %4583 = vmatprep.subr.mxu0 0.0
    %4584 = vmatpush1.msra.mxu0 0.0
    %4585 = vmatprep.subr.mxu0 0.0
    %4586 = vmatpush1.msra.mxu0 0.0
    %4587 = vmatprep.subr.mxu0 0.0
    %4588 = vmatpush1.msra.mxu0 0.0
    %4589 = vmatprep.subr.mxu0 0.0
    %4590 = vmatpush1.msra.mxu0 0.0
    %4591 = vmatprep.subr.mxu0 0.0
    %4592 = vmatpush1.msra.mxu0 0.0
    %4593 = vmatprep.subr.mxu0 0.0
    %4594 = vmatpush1.msra.mxu0 0.0
    %4595 = vmatprep.subr.mxu0 0.0
    %4596 = vmatpush1.msra.mxu0 0.0
    %4597 = vmatprep.subr.mxu0 0.0
    %4598 = vmatpush1.msra.mxu0 0.0
    %4599 = vmatprep.subr.mxu0 0.0
    %4600 = vmatpush1.msra.mxu0 0.0
    %4601 = vmatprep.subr.mxu0 0.0
    %4602 = vmatpush1.msra.mxu0 0.0
    %4603 = vmatprep.subr.mxu0 0.0
    %4604 = vmatpush1.msra.mxu0 0.0
    %4605 = vmatprep.subr.mxu0 0.0
    %4606 = vmatpush1.msra.mxu0 0.0
    %4607 = vmatprep.subr.mxu0 0.0
    %4608 = vmatpush1.msra.mxu0 0.0
    %4609 = vmatprep.subr.mxu0 0.0
    %4610 = vmatpush1.msra.mxu0 0.0
    %4611 = vmatprep.subr.mxu0 0.0
    %4612 = vmatpush1.msra.mxu0 0.0
    %4613 = vmatprep.subr.mxu0 0.0
    %4614 = vmatpush1.msra.mxu0 0.0
    %4615 = vmatprep.subr.mxu0 0.0
    %4616 = vmatpush1.msra.mxu0 0.0
    %4617 = vmatprep.subr.mxu0 0.0
    %4618 = vmatpush1.msra.mxu0 0.0
    %4619 = vmatprep.subr.mxu0 0.0
    %4620 = vmatpush1.msra.mxu0 0.0
    %4621 = vmatprep.subr.mxu0 0.0
    %4622 = vmatpush1.msra.mxu0 0.0
    %4623 = vmatprep.subr.mxu0 0.0
    %4624 = vmatpush1.msra.mxu0 0.0
    %4625 = vmatprep.subr.mxu0 0.0
    %4626 = vmatpush1.msra.mxu0 0.0
    %4627 = vmatprep.subr.mxu0 0.0
    %4628 = vmatpush1.msra.mxu0 0.0
    %4629 = vmatprep.subr.mxu0 0.0
    %4630 = vmatpush1.msra.mxu0 0.0
    %4631 = vmatprep.mubr.f32.mxu0 0.0
    %4632 = vmatmul.mubr.f32.gmra.mrb[0].mxu0 %v4561
    %v4633 = vpop.f32.mrb[0].mxu0
    %v4634 = vadd.f32 0.0, %v4633
    %v4635 = vpop.f32.mrb[0].mxu0
    %4636 = vdwg.mxu0
    %v4637 = vadd.f32 %v4556, %v4634
    %v4638 = vld [vmem:[#allocation3 + $0x2] sm:$0x1]
    %s4639 = scalar_lea.vmem %s4, 4
    %v4640 = vld [vmem:[%s4639] sm:$0xf]
    %v4642 = vsel %vm4353, %v4638, 0
    %v4645 = vsel %vm4563, %v4640, 0
    %4647 = vmatprep.subr.mxu0 0.0
    %4648 = vmatpush1.msra.mxu0 %v4645
    %4649 = vmatprep.subr.mxu0 0.0
    %4650 = vmatpush1.msra.mxu0 0.0
    %4651 = vmatprep.subr.mxu0 0.0
    %4652 = vmatpush1.msra.mxu0 0.0
    %4653 = vmatprep.subr.mxu0 0.0
    %4654 = vmatpush1.msra.mxu0 0.0
    %4655 = vmatprep.subr.mxu0 0.0
    %4656 = vmatpush1.msra.mxu0 0.0
    %4657 = vmatprep.subr.mxu0 0.0
    %4658 = vmatpush1.msra.mxu0 0.0
    %4659 = vmatprep.subr.mxu0 0.0
    %4660 = vmatpush1.msra.mxu0 0.0
    %4661 = vmatprep.subr.mxu0 0.0
    %4662 = vmatpush1.msra.mxu0 0.0
    %4663 = vmatprep.subr.mxu0 0.0
    %4664 = vmatpush1.msra.mxu0 0.0
    %4665 = vmatprep.subr.mxu0 0.0
    %4666 = vmatpush1.msra.mxu0 0.0
    %4667 = vmatprep.subr.mxu0 0.0
    %4668 = vmatpush1.msra.mxu0 0.0
    %4669 = vmatprep.subr.mxu0 0.0
    %4670 = vmatpush1.msra.mxu0 0.0
    %4671 = vmatprep.subr.mxu0 0.0
    %4672 = vmatpush1.msra.mxu0 0.0
    %4673 = vmatprep.subr.mxu0 0.0
    %4674 = vmatpush1.msra.mxu0 0.0
    %4675 = vmatprep.subr.mxu0 0.0
    %4676 = vmatpush1.msra.mxu0 0.0
    %4677 = vmatprep.subr.mxu0 0.0
    %4678 = vmatpush1.msra.mxu0 0.0
    %4679 = vmatprep.subr.mxu0 0.0
    %4680 = vmatpush1.msra.mxu0 0.0
    %4681 = vmatprep.subr.mxu0 0.0
    %4682 = vmatpush1.msra.mxu0 0.0
    %4683 = vmatprep.subr.mxu0 0.0
    %4684 = vmatpush1.msra.mxu0 0.0
    %4685 = vmatprep.subr.mxu0 0.0
    %4686 = vmatpush1.msra.mxu0 0.0
    %4687 = vmatprep.subr.mxu0 0.0
    %4688 = vmatpush1.msra.mxu0 0.0
    %4689 = vmatprep.subr.mxu0 0.0
    %4690 = vmatpush1.msra.mxu0 0.0
    %4691 = vmatprep.subr.mxu0 0.0
    %4692 = vmatpush1.msra.mxu0 0.0
    %4693 = vmatprep.subr.mxu0 0.0
    %4694 = vmatpush1.msra.mxu0 0.0
    %4695 = vmatprep.subr.mxu0 0.0
    %4696 = vmatpush1.msra.mxu0 0.0
    %4697 = vmatprep.subr.mxu0 0.0
    %4698 = vmatpush1.msra.mxu0 0.0
    %4699 = vmatprep.subr.mxu0 0.0
    %4700 = vmatpush1.msra.mxu0 0.0
    %4701 = vmatprep.subr.mxu0 0.0
    %4702 = vmatpush1.msra.mxu0 0.0
    %4703 = vmatprep.subr.mxu0 0.0
    %4704 = vmatpush1.msra.mxu0 0.0
    %4705 = vmatprep.subr.mxu0 0.0
    %4706 = vmatpush1.msra.mxu0 0.0
    %4707 = vmatprep.subr.mxu0 0.0
    %4708 = vmatpush1.msra.mxu0 0.0
    %4709 = vmatprep.subr.mxu0 0.0
    %4710 = vmatpush1.msra.mxu0 0.0
    %4711 = vmatprep.mubr.f32.mxu0 0.0
    %4712 = vmatmul.mubr.f32.gmra.mrb[0].mxu0 %v4642
    %v4713 = vpop.f32.mrb[0].mxu0
    %v4714 = vadd.f32 0.0, %v4713
    %v4715 = vpop.f32.mrb[0].mxu0
    %4716 = vdwg.mxu0
    %v4717 = vadd.f32 %v4637, %v4714
    %v4718 = vld [vmem:[#allocation3 + $0x4] sm:$0x1]
    %s4719 = scalar_lea.vmem %s4, 8
    %v4720 = vld [vmem:[%s4719] sm:$0xf]
    %v4722 = vsel %vm4353, %v4718, 0
    %v4725 = vsel %vm4563, %v4720, 0
    %4727 = vmatprep.subr.mxu0 0.0
    %4728 = vmatpush1.msra.mxu0 %v4725
    %4729 = vmatprep.subr.mxu0 0.0
    %4730 = vmatpush1.msra.mxu0 0.0
    %4731 = vmatprep.subr.mxu0 0.0
    %4732 = vmatpush1.msra.mxu0 0.0
    %4733 = vmatprep.subr.mxu0 0.0
    %4734 = vmatpush1.msra.mxu0 0.0
    %4735 = vmatprep.subr.mxu0 0.0
    %4736 = vmatpush1.msra.mxu0 0.0
    %4737 = vmatprep.subr.mxu0 0.0
    %4738 = vmatpush1.msra.mxu0 0.0
    %4739 = vmatprep.subr.mxu0 0.0
    %4740 = vmatpush1.msra.mxu0 0.0
    %4741 = vmatprep.subr.mxu0 0.0
    %4742 = vmatpush1.msra.mxu0 0.0
    %4743 = vmatprep.subr.mxu0 0.0
    %4744 = vmatpush1.msra.mxu0 0.0
    %4745 = vmatprep.subr.mxu0 0.0
    %4746 = vmatpush1.msra.mxu0 0.0
    %4747 = vmatprep.subr.mxu0 0.0
    %4748 = vmatpush1.msra.mxu0 0.0
    %4749 = vmatprep.subr.mxu0 0.0
    %4750 = vmatpush1.msra.mxu0 0.0
    %4751 = vmatprep.subr.mxu0 0.0
    %4752 = vmatpush1.msra.mxu0 0.0
    %4753 = vmatprep.subr.mxu0 0.0
    %4754 = vmatpush1.msra.mxu0 0.0
    %4755 = vmatprep.subr.mxu0 0.0
    %4756 = vmatpush1.msra.mxu0 0.0
    %4757 = vmatprep.subr.mxu0 0.0
    %4758 = vmatpush1.msra.mxu0 0.0
    %4759 = vmatprep.subr.mxu0 0.0
    %4760 = vmatpush1.msra.mxu0 0.0
    %4761 = vmatprep.subr.mxu0 0.0
    %4762 = vmatpush1.msra.mxu0 0.0
    %4763 = vmatprep.subr.mxu0 0.0
    %4764 = vmatpush1.msra.mxu0 0.0
    %4765 = vmatprep.subr.mxu0 0.0
    %4766 = vmatpush1.msra.mxu0 0.0
    %4767 = vmatprep.subr.mxu0 0.0
    %4768 = vmatpush1.msra.mxu0 0.0
    %4769 = vmatprep.subr.mxu0 0.0
    %4770 = vmatpush1.msra.mxu0 0.0
    %4771 = vmatprep.subr.mxu0 0.0
    %4772 = vmatpush1.msra.mxu0 0.0
    %4773 = vmatprep.subr.mxu0 0.0
    %4774 = vmatpush1.msra.mxu0 0.0
    %4775 = vmatprep.subr.mxu0 0.0
    %4776 = vmatpush1.msra.mxu0 0.0
    %4777 = vmatprep.subr.mxu0 0.0
    %4778 = vmatpush1.msra.mxu0 0.0
    %4779 = vmatprep.subr.mxu0 0.0
    %4780 = vmatpush1.msra.mxu0 0.0
    %4781 = vmatprep.subr.mxu0 0.0
    %4782 = vmatpush1.msra.mxu0 0.0
    %4783 = vmatprep.subr.mxu0 0.0
    %4784 = vmatpush1.msra.mxu0 0.0
    %4785 = vmatprep.subr.mxu0 0.0
    %4786 = vmatpush1.msra.mxu0 0.0
    %4787 = vmatprep.subr.mxu0 0.0
    %4788 = vmatpush1.msra.mxu0 0.0
    %4789 = vmatprep.subr.mxu0 0.0
    %4790 = vmatpush1.msra.mxu0 0.0
    %4791 = vmatprep.mubr.f32.mxu0 0.0
    %4792 = vmatmul.mubr.f32.gmra.mrb[0].mxu0 %v4722
    %v4793 = vpop.f32.mrb[0].mxu0
    %v4794 = vadd.f32 0.0, %v4793
    %v4795 = vpop.f32.mrb[0].mxu0
    %4796 = vdwg.mxu0
    %v4797 = vadd.f32 %v4717, %v4794
    %v4798 = vld [vmem:[#allocation3 + $0x14] sm:$0x1]
    %s4799 = scalar_lea.vmem %s4, 12
    %v4800 = vld [vmem:[%s4799] sm:$0xf]
    %v4802 = vsel %vm4353, %v4798, 0
    %v4805 = vsel %vm4563, %v4800, 0
    %4807 = vmatprep.subr.mxu0 0.0
    %4808 = vmatpush1.msra.mxu0 %v4805
    %4809 = vmatprep.subr.mxu0 0.0
    %4810 = vmatpush1.msra.mxu0 0.0
    %4811 = vmatprep.subr.mxu0 0.0
    %4812 = vmatpush1.msra.mxu0 0.0
    %4813 = vmatprep.subr.mxu0 0.0
    %4814 = vmatpush1.msra.mxu0 0.0
    %4815 = vmatprep.subr.mxu0 0.0
    %4816 = vmatpush1.msra.mxu0 0.0
    %4817 = vmatprep.subr.mxu0 0.0
    %4818 = vmatpush1.msra.mxu0 0.0
    %4819 = vmatprep.subr.mxu0 0.0
    %4820 = vmatpush1.msra.mxu0 0.0
    %4821 = vmatprep.subr.mxu0 0.0
    %4822 = vmatpush1.msra.mxu0 0.0
    %4823 = vmatprep.subr.mxu0 0.0
    %4824 = vmatpush1.msra.mxu0 0.0
    %4825 = vmatprep.subr.mxu0 0.0
    %4826 = vmatpush1.msra.mxu0 0.0
    %4827 = vmatprep.subr.mxu0 0.0
    %4828 = vmatpush1.msra.mxu0 0.0
    %4829 = vmatprep.subr.mxu0 0.0
    %4830 = vmatpush1.msra.mxu0 0.0
    %4831 = vmatprep.subr.mxu0 0.0
    %4832 = vmatpush1.msra.mxu0 0.0
    %4833 = vmatprep.subr.mxu0 0.0
    %4834 = vmatpush1.msra.mxu0 0.0
    %4835 = vmatprep.subr.mxu0 0.0
    %4836 = vmatpush1.msra.mxu0 0.0
    %4837 = vmatprep.subr.mxu0 0.0
    %4838 = vmatpush1.msra.mxu0 0.0
    %4839 = vmatprep.subr.mxu0 0.0
    %4840 = vmatpush1.msra.mxu0 0.0
    %4841 = vmatprep.subr.mxu0 0.0
    %4842 = vmatpush1.msra.mxu0 0.0
    %4843 = vmatprep.subr.mxu0 0.0
    %4844 = vmatpush1.msra.mxu0 0.0
    %4845 = vmatprep.subr.mxu0 0.0
    %4846 = vmatpush1.msra.mxu0 0.0
    %4847 = vmatprep.subr.mxu0 0.0
    %4848 = vmatpush1.msra.mxu0 0.0
    %4849 = vmatprep.subr.mxu0 0.0
    %4850 = vmatpush1.msra.mxu0 0.0
    %4851 = vmatprep.subr.mxu0 0.0
    %4852 = vmatpush1.msra.mxu0 0.0
    %4853 = vmatprep.subr.mxu0 0.0
    %4854 = vmatpush1.msra.mxu0 0.0
    %4855 = vmatprep.subr.mxu0 0.0
    %4856 = vmatpush1.msra.mxu0 0.0
    %4857 = vmatprep.subr.mxu0 0.0
    %4858 = vmatpush1.msra.mxu0 0.0
    %4859 = vmatprep.subr.mxu0 0.0
    %4860 = vmatpush1.msra.mxu0 0.0
    %4861 = vmatprep.subr.mxu0 0.0
    %4862 = vmatpush1.msra.mxu0 0.0
    %4863 = vmatprep.subr.mxu0 0.0
    %4864 = vmatpush1.msra.mxu0 0.0
    %4865 = vmatprep.subr.mxu0 0.0
    %4866 = vmatpush1.msra.mxu0 0.0
    %4867 = vmatprep.subr.mxu0 0.0
    %4868 = vmatpush1.msra.mxu0 0.0
    %4869 = vmatprep.subr.mxu0 0.0
    %4870 = vmatpush1.msra.mxu0 0.0
    %4871 = vmatprep.mubr.f32.mxu0 0.0
    %4872 = vmatmul.mubr.f32.gmra.mrb[0].mxu0 %v4802
    %v4873 = vpop.f32.mrb[0].mxu0
    %v4874 = vadd.f32 0.0, %v4873
    %v4875 = vpop.f32.mrb[0].mxu0
    %4876 = vdwg.mxu0
    %v4877 = vadd.f32 %v4797, %v4874
    %v4878 = vld [vmem:[#allocation3 + $0x16] sm:$0x1]
    %s4879 = scalar_lea.vmem %s4, 16
    %v4880 = vld [vmem:[%s4879] sm:$0xf]
    %v4882 = vsel %vm4353, %v4878, 0
    %v4885 = vsel %vm4563, %v4880, 0
    %4887 = vmatprep.subr.mxu0 0.0
    %4888 = vmatpush1.msra.mxu0 %v4885
    %4889 = vmatprep.subr.mxu0 0.0
    %4890 = vmatpush1.msra.mxu0 0.0
    %4891 = vmatprep.subr.mxu0 0.0
    %4892 = vmatpush1.msra.mxu0 0.0
    %4893 = vmatprep.subr.mxu0 0.0
    %4894 = vmatpush1.msra.mxu0 0.0
    %4895 = vmatprep.subr.mxu0 0.0
    %4896 = vmatpush1.msra.mxu0 0.0
    %4897 = vmatprep.subr.mxu0 0.0
    %4898 = vmatpush1.msra.mxu0 0.0
    %4899 = vmatprep.subr.mxu0 0.0
    %4900 = vmatpush1.msra.mxu0 0.0
    %4901 = vmatprep.subr.mxu0 0.0
    %4902 = vmatpush1.msra.mxu0 0.0
    %4903 = vmatprep.subr.mxu0 0.0
    %4904 = vmatpush1.msra.mxu0 0.0
    %4905 = vmatprep.subr.mxu0 0.0
    %4906 = vmatpush1.msra.mxu0 0.0
    %4907 = vmatprep.subr.mxu0 0.0
    %4908 = vmatpush1.msra.mxu0 0.0
    %4909 = vmatprep.subr.mxu0 0.0
    %4910 = vmatpush1.msra.mxu0 0.0
    %4911 = vmatprep.subr.mxu0 0.0
    %4912 = vmatpush1.msra.mxu0 0.0
    %4913 = vmatprep.subr.mxu0 0.0
    %4914 = vmatpush1.msra.mxu0 0.0
    %4915 = vmatprep.subr.mxu0 0.0
    %4916 = vmatpush1.msra.mxu0 0.0
    %4917 = vmatprep.subr.mxu0 0.0
    %4918 = vmatpush1.msra.mxu0 0.0
    %4919 = vmatprep.subr.mxu0 0.0
    %4920 = vmatpush1.msra.mxu0 0.0
    %4921 = vmatprep.subr.mxu0 0.0
    %4922 = vmatpush1.msra.mxu0 0.0
    %4923 = vmatprep.subr.mxu0 0.0
    %4924 = vmatpush1.msra.mxu0 0.0
    %4925 = vmatprep.subr.mxu0 0.0
    %4926 = vmatpush1.msra.mxu0 0.0
    %4927 = vmatprep.subr.mxu0 0.0
    %4928 = vmatpush1.msra.mxu0 0.0
    %4929 = vmatprep.subr.mxu0 0.0
    %4930 = vmatpush1.msra.mxu0 0.0
    %4931 = vmatprep.subr.mxu0 0.0
    %4932 = vmatpush1.msra.mxu0 0.0
    %4933 = vmatprep.subr.mxu0 0.0
    %4934 = vmatpush1.msra.mxu0 0.0
    %4935 = vmatprep.subr.mxu0 0.0
    %4936 = vmatpush1.msra.mxu0 0.0
    %4937 = vmatprep.subr.mxu0 0.0
    %4938 = vmatpush1.msra.mxu0 0.0
    %4939 = vmatprep.subr.mxu0 0.0
    %4940 = vmatpush1.msra.mxu0 0.0
    %4941 = vmatprep.subr.mxu0 0.0
    %4942 = vmatpush1.msra.mxu0 0.0
    %4943 = vmatprep.subr.mxu0 0.0
    %4944 = vmatpush1.msra.mxu0 0.0
    %4945 = vmatprep.subr.mxu0 0.0
    %4946 = vmatpush1.msra.mxu0 0.0
    %4947 = vmatprep.subr.mxu0 0.0
    %4948 = vmatpush1.msra.mxu0 0.0
    %4949 = vmatprep.subr.mxu0 0.0
    %4950 = vmatpush1.msra.mxu0 0.0
    %4951 = vmatprep.mubr.f32.mxu0 0.0
    %4952 = vmatmul.mubr.f32.gmra.mrb[0].mxu0 %v4882
    %v4953 = vpop.f32.mrb[0].mxu0
    %v4954 = vadd.f32 0.0, %v4953
    %v4955 = vpop.f32.mrb[0].mxu0
    %4956 = vdwg.mxu0
    %v4957 = vadd.f32 %v4877, %v4954
    %v4958 = vld [vmem:[#allocation3 + $0x18] sm:$0x1]
    %s4959 = scalar_lea.vmem %s4, 20
    %v4960 = vld [vmem:[%s4959] sm:$0xf]
    %v4962 = vsel %vm4353, %v4958, 0
    %v4965 = vsel %vm4563, %v4960, 0
    %4967 = vmatprep.subr.mxu0 0.0
    %4968 = vmatpush1.msra.mxu0 %v4965
    %4969 = vmatprep.subr.mxu0 0.0
    %4970 = vmatpush1.msra.mxu0 0.0
    %4971 = vmatprep.subr.mxu0 0.0
    %4972 = vmatpush1.msra.mxu0 0.0
    %4973 = vmatprep.subr.mxu0 0.0
    %4974 = vmatpush1.msra.mxu0 0.0
    %4975 = vmatprep.subr.mxu0 0.0
    %4976 = vmatpush1.msra.mxu0 0.0
    %4977 = vmatprep.subr.mxu0 0.0
    %4978 = vmatpush1.msra.mxu0 0.0
    %4979 = vmatprep.subr.mxu0 0.0
    %4980 = vmatpush1.msra.mxu0 0.0
    %4981 = vmatprep.subr.mxu0 0.0
    %4982 = vmatpush1.msra.mxu0 0.0
    %4983 = vmatprep.subr.mxu0 0.0
    %4984 = vmatpush1.msra.mxu0 0.0
    %4985 = vmatprep.subr.mxu0 0.0
    %4986 = vmatpush1.msra.mxu0 0.0
    %4987 = vmatprep.subr.mxu0 0.0
    %4988 = vmatpush1.msra.mxu0 0.0
    %4989 = vmatprep.subr.mxu0 0.0
    %4990 = vmatpush1.msra.mxu0 0.0
    %4991 = vmatprep.subr.mxu0 0.0
    %4992 = vmatpush1.msra.mxu0 0.0
    %4993 = vmatprep.subr.mxu0 0.0
    %4994 = vmatpush1.msra.mxu0 0.0
    %4995 = vmatprep.subr.mxu0 0.0
    %4996 = vmatpush1.msra.mxu0 0.0
    %4997 = vmatprep.subr.mxu0 0.0
    %4998 = vmatpush1.msra.mxu0 0.0
    %4999 = vmatprep.subr.mxu0 0.0
    %5000 = vmatpush1.msra.mxu0 0.0
    %5001 = vmatprep.subr.mxu0 0.0
    %5002 = vmatpush1.msra.mxu0 0.0
    %5003 = vmatprep.subr.mxu0 0.0
    %5004 = vmatpush1.msra.mxu0 0.0
    %5005 = vmatprep.subr.mxu0 0.0
    %5006 = vmatpush1.msra.mxu0 0.0
    %5007 = vmatprep.subr.mxu0 0.0
    %5008 = vmatpush1.msra.mxu0 0.0
    %5009 = vmatprep.subr.mxu0 0.0
    %5010 = vmatpush1.msra.mxu0 0.0
    %5011 = vmatprep.subr.mxu0 0.0
    %5012 = vmatpush1.msra.mxu0 0.0
    %5013 = vmatprep.subr.mxu0 0.0
    %5014 = vmatpush1.msra.mxu0 0.0
    %5015 = vmatprep.subr.mxu0 0.0
    %5016 = vmatpush1.msra.mxu0 0.0
    %5017 = vmatprep.subr.mxu0 0.0
    %5018 = vmatpush1.msra.mxu0 0.0
    %5019 = vmatprep.subr.mxu0 0.0
    %5020 = vmatpush1.msra.mxu0 0.0
    %5021 = vmatprep.subr.mxu0 0.0
    %5022 = vmatpush1.msra.mxu0 0.0
    %5023 = vmatprep.subr.mxu0 0.0
    %5024 = vmatpush1.msra.mxu0 0.0
    %5025 = vmatprep.subr.mxu0 0.0
    %5026 = vmatpush1.msra.mxu0 0.0
    %5027 = vmatprep.subr.mxu0 0.0
    %5028 = vmatpush1.msra.mxu0 0.0
    %5029 = vmatprep.subr.mxu0 0.0
    %5030 = vmatpush1.msra.mxu0 0.0
    %5031 = vmatprep.mubr.f32.mxu0 0.0
    %5032 = vmatmul.mubr.f32.gmra.mrb[0].mxu0 %v4962
    %v5033 = vpop.f32.mrb[0].mxu0
    %v5034 = vadd.f32 0.0, %v5033
    %v5035 = vpop.f32.mrb[0].mxu0
    %5036 = vdwg.mxu0
    %v5037 = vadd.f32 %v4957, %v5034
    %v5038 = vld [vmem:[#allocation3 + $0x28] sm:$0x1]
    %s5039 = scalar_lea.vmem %s4, 24
    %v5040 = vld [vmem:[%s5039] sm:$0xf]
    %v5042 = vsel %vm4353, %v5038, 0
    %v5045 = vsel %vm4563, %v5040, 0
    %5047 = vmatprep.subr.mxu0 0.0
    %5048 = vmatpush1.msra.mxu0 %v5045
    %5049 = vmatprep.subr.mxu0 0.0
    %5050 = vmatpush1.msra.mxu0 0.0
    %5051 = vmatprep.subr.mxu0 0.0
    %5052 = vmatpush1.msra.mxu0 0.0
    %5053 = vmatprep.subr.mxu0 0.0
    %5054 = vmatpush1.msra.mxu0 0.0
    %5055 = vmatprep.subr.mxu0 0.0
    %5056 = vmatpush1.msra.mxu0 0.0
    %5057 = vmatprep.subr.mxu0 0.0
    %5058 = vmatpush1.msra.mxu0 0.0
    %5059 = vmatprep.subr.mxu0 0.0
    %5060 = vmatpush1.msra.mxu0 0.0
    %5061 = vmatprep.subr.mxu0 0.0
    %5062 = vmatpush1.msra.mxu0 0.0
    %5063 = vmatprep.subr.mxu0 0.0
    %5064 = vmatpush1.msra.mxu0 0.0
    %5065 = vmatprep.subr.mxu0 0.0
    %5066 = vmatpush1.msra.mxu0 0.0
    %5067 = vmatprep.subr.mxu0 0.0
    %5068 = vmatpush1.msra.mxu0 0.0
    %5069 = vmatprep.subr.mxu0 0.0
    %5070 = vmatpush1.msra.mxu0 0.0
    %5071 = vmatprep.subr.mxu0 0.0
    %5072 = vmatpush1.msra.mxu0 0.0
    %5073 = vmatprep.subr.mxu0 0.0
    %5074 = vmatpush1.msra.mxu0 0.0
    %5075 = vmatprep.subr.mxu0 0.0
    %5076 = vmatpush1.msra.mxu0 0.0
    %5077 = vmatprep.subr.mxu0 0.0
    %5078 = vmatpush1.msra.mxu0 0.0
    %5079 = vmatprep.subr.mxu0 0.0
    %5080 = vmatpush1.msra.mxu0 0.0
    %5081 = vmatprep.subr.mxu0 0.0
    %5082 = vmatpush1.msra.mxu0 0.0
    %5083 = vmatprep.subr.mxu0 0.0
    %5084 = vmatpush1.msra.mxu0 0.0
    %5085 = vmatprep.subr.mxu0 0.0
    %5086 = vmatpush1.msra.mxu0 0.0
    %5087 = vmatprep.subr.mxu0 0.0
    %5088 = vmatpush1.msra.mxu0 0.0
    %5089 = vmatprep.subr.mxu0 0.0
    %5090 = vmatpush1.msra.mxu0 0.0
    %5091 = vmatprep.subr.mxu0 0.0
    %5092 = vmatpush1.msra.mxu0 0.0
    %5093 = vmatprep.subr.mxu0 0.0
    %5094 = vmatpush1.msra.mxu0 0.0
    %5095 = vmatprep.subr.mxu0 0.0
    %5096 = vmatpush1.msra.mxu0 0.0
    %5097 = vmatprep.subr.mxu0 0.0
    %5098 = vmatpush1.msra.mxu0 0.0
    %5099 = vmatprep.subr.mxu0 0.0
    %5100 = vmatpush1.msra.mxu0 0.0
    %5101 = vmatprep.subr.mxu0 0.0
    %5102 = vmatpush1.msra.mxu0 0.0
    %5103 = vmatprep.subr.mxu0 0.0
    %5104 = vmatpush1.msra.mxu0 0.0
    %5105 = vmatprep.subr.mxu0 0.0
    %5106 = vmatpush1.msra.mxu0 0.0
    %5107 = vmatprep.subr.mxu0 0.0
    %5108 = vmatpush1.msra.mxu0 0.0
    %5109 = vmatprep.subr.mxu0 0.0
    %5110 = vmatpush1.msra.mxu0 0.0
    %5111 = vmatprep.mubr.f32.mxu0 0.0
    %5112 = vmatmul.mubr.f32.gmra.mrb[0].mxu0 %v5042
    %v5113 = vpop.f32.mrb[0].mxu0
    %v5114 = vadd.f32 0.0, %v5113
    %v5115 = vpop.f32.mrb[0].mxu0
    %5116 = vdwg.mxu0
    %v5117 = vadd.f32 %v5037, %v5114
    %v5118 = vld [vmem:[#allocation3 + $0x2a] sm:$0x1]
    %s5119 = scalar_lea.vmem %s4, 28
    %v5120 = vld [vmem:[%s5119] sm:$0xf]
    %v5122 = vsel %vm4353, %v5118, 0
    %v5125 = vsel %vm4563, %v5120, 0
    %5127 = vmatprep.subr.mxu0 0.0
    %5128 = vmatpush1.msra.mxu0 %v5125
    %5129 = vmatprep.subr.mxu0 0.0
    %5130 = vmatpush1.msra.mxu0 0.0
    %5131 = vmatprep.subr.mxu0 0.0
    %5132 = vmatpush1.msra.mxu0 0.0
    %5133 = vmatprep.subr.mxu0 0.0
    %5134 = vmatpush1.msra.mxu0 0.0
    %5135 = vmatprep.subr.mxu0 0.0
    %5136 = vmatpush1.msra.mxu0 0.0
    %5137 = vmatprep.subr.mxu0 0.0
    %5138 = vmatpush1.msra.mxu0 0.0
    %5139 = vmatprep.subr.mxu0 0.0
    %5140 = vmatpush1.msra.mxu0 0.0
    %5141 = vmatprep.subr.mxu0 0.0
    %5142 = vmatpush1.msra.mxu0 0.0
    %5143 = vmatprep.subr.mxu0 0.0
    %5144 = vmatpush1.msra.mxu0 0.0
    %5145 = vmatprep.subr.mxu0 0.0
    %5146 = vmatpush1.msra.mxu0 0.0
    %5147 = vmatprep.subr.mxu0 0.0
    %5148 = vmatpush1.msra.mxu0 0.0
    %5149 = vmatprep.subr.mxu0 0.0
    %5150 = vmatpush1.msra.mxu0 0.0
    %5151 = vmatprep.subr.mxu0 0.0
    %5152 = vmatpush1.msra.mxu0 0.0
    %5153 = vmatprep.subr.mxu0 0.0
    %5154 = vmatpush1.msra.mxu0 0.0
    %5155 = vmatprep.subr.mxu0 0.0
    %5156 = vmatpush1.msra.mxu0 0.0
    %5157 = vmatprep.subr.mxu0 0.0
    %5158 = vmatpush1.msra.mxu0 0.0
    %5159 = vmatprep.subr.mxu0 0.0
    %5160 = vmatpush1.msra.mxu0 0.0
    %5161 = vmatprep.subr.mxu0 0.0
    %5162 = vmatpush1.msra.mxu0 0.0
    %5163 = vmatprep.subr.mxu0 0.0
    %5164 = vmatpush1.msra.mxu0 0.0
    %5165 = vmatprep.subr.mxu0 0.0
    %5166 = vmatpush1.msra.mxu0 0.0
    %5167 = vmatprep.subr.mxu0 0.0
    %5168 = vmatpush1.msra.mxu0 0.0
    %5169 = vmatprep.subr.mxu0 0.0
    %5170 = vmatpush1.msra.mxu0 0.0
    %5171 = vmatprep.subr.mxu0 0.0
    %5172 = vmatpush1.msra.mxu0 0.0
    %5173 = vmatprep.subr.mxu0 0.0
    %5174 = vmatpush1.msra.mxu0 0.0
    %5175 = vmatprep.subr.mxu0 0.0
    %5176 = vmatpush1.msra.mxu0 0.0
    %5177 = vmatprep.subr.mxu0 0.0
    %5178 = vmatpush1.msra.mxu0 0.0
    %5179 = vmatprep.subr.mxu0 0.0
    %5180 = vmatpush1.msra.mxu0 0.0
    %5181 = vmatprep.subr.mxu0 0.0
    %5182 = vmatpush1.msra.mxu0 0.0
    %5183 = vmatprep.subr.mxu0 0.0
    %5184 = vmatpush1.msra.mxu0 0.0
    %5185 = vmatprep.subr.mxu0 0.0
    %5186 = vmatpush1.msra.mxu0 0.0
    %5187 = vmatprep.subr.mxu0 0.0
    %5188 = vmatpush1.msra.mxu0 0.0
    %5189 = vmatprep.subr.mxu0 0.0
    %5190 = vmatpush1.msra.mxu0 0.0
    %5191 = vmatprep.mubr.f32.mxu0 0.0
    %5192 = vmatmul.mubr.f32.gmra.mrb[0].mxu0 %v5122
    %v5193 = vpop.f32.mrb[0].mxu0
    %v5194 = vadd.f32 0.0, %v5193
    %v5195 = vpop.f32.mrb[0].mxu0
    %5196 = vdwg.mxu0
    %v5197 = vadd.f32 %v5117, %v5194
    %v5198 = vld [vmem:[#allocation3 + $0x2c] sm:$0x1]
    %s5199 = scalar_lea.vmem %s4, 32
    %v5200 = vld [vmem:[%s5199] sm:$0xf]
    %v5202 = vsel %vm4353, %v5198, 0
    %v5205 = vsel %vm4563, %v5200, 0
    %5207 = vmatprep.subr.mxu0 0.0
    %5208 = vmatpush1.msra.mxu0 %v5205
    %5209 = vmatprep.subr.mxu0 0.0
    %5210 = vmatpush1.msra.mxu0 0.0
    %5211 = vmatprep.subr.mxu0 0.0
    %5212 = vmatpush1.msra.mxu0 0.0
    %5213 = vmatprep.subr.mxu0 0.0
    %5214 = vmatpush1.msra.mxu0 0.0
    %5215 = vmatprep.subr.mxu0 0.0
    %5216 = vmatpush1.msra.mxu0 0.0
    %5217 = vmatprep.subr.mxu0 0.0
    %5218 = vmatpush1.msra.mxu0 0.0
    %5219 = vmatprep.subr.mxu0 0.0
    %5220 = vmatpush1.msra.mxu0 0.0
    %5221 = vmatprep.subr.mxu0 0.0
    %5222 = vmatpush1.msra.mxu0 0.0
    %5223 = vmatprep.subr.mxu0 0.0
    %5224 = vmatpush1.msra.mxu0 0.0
    %5225 = vmatprep.subr.mxu0 0.0
    %5226 = vmatpush1.msra.mxu0 0.0
    %5227 = vmatprep.subr.mxu0 0.0
    %5228 = vmatpush1.msra.mxu0 0.0
    %5229 = vmatprep.subr.mxu0 0.0
    %5230 = vmatpush1.msra.mxu0 0.0
    %5231 = vmatprep.subr.mxu0 0.0
    %5232 = vmatpush1.msra.mxu0 0.0
    %5233 = vmatprep.subr.mxu0 0.0
    %5234 = vmatpush1.msra.mxu0 0.0
    %5235 = vmatprep.subr.mxu0 0.0
    %5236 = vmatpush1.msra.mxu0 0.0
    %5237 = vmatprep.subr.mxu0 0.0
    %5238 = vmatpush1.msra.mxu0 0.0
    %5239 = vmatprep.subr.mxu0 0.0
    %5240 = vmatpush1.msra.mxu0 0.0
    %5241 = vmatprep.subr.mxu0 0.0
    %5242 = vmatpush1.msra.mxu0 0.0
    %5243 = vmatprep.subr.mxu0 0.0
    %5244 = vmatpush1.msra.mxu0 0.0
    %5245 = vmatprep.subr.mxu0 0.0
    %5246 = vmatpush1.msra.mxu0 0.0
    %5247 = vmatprep.subr.mxu0 0.0
    %5248 = vmatpush1.msra.mxu0 0.0
    %5249 = vmatprep.subr.mxu0 0.0
    %5250 = vmatpush1.msra.mxu0 0.0
    %5251 = vmatprep.subr.mxu0 0.0
    %5252 = vmatpush1.msra.mxu0 0.0
    %5253 = vmatprep.subr.mxu0 0.0
    %5254 = vmatpush1.msra.mxu0 0.0
    %5255 = vmatprep.subr.mxu0 0.0
    %5256 = vmatpush1.msra.mxu0 0.0
    %5257 = vmatprep.subr.mxu0 0.0
    %5258 = vmatpush1.msra.mxu0 0.0
    %5259 = vmatprep.subr.mxu0 0.0
    %5260 = vmatpush1.msra.mxu0 0.0
    %5261 = vmatprep.subr.mxu0 0.0
    %5262 = vmatpush1.msra.mxu0 0.0
    %5263 = vmatprep.subr.mxu0 0.0
    %5264 = vmatpush1.msra.mxu0 0.0
    %5265 = vmatprep.subr.mxu0 0.0
    %5266 = vmatpush1.msra.mxu0 0.0
    %5267 = vmatprep.subr.mxu0 0.0
    %5268 = vmatpush1.msra.mxu0 0.0
    %5269 = vmatprep.subr.mxu0 0.0
    %5270 = vmatpush1.msra.mxu0 0.0
    %5271 = vmatprep.mubr.f32.mxu0 0.0
    %5272 = vmatmul.mubr.f32.gmra.mrb[0].mxu0 %v5202
    %v5273 = vpop.f32.mrb[0].mxu0
    %v5274 = vadd.f32 0.0, %v5273
    %v5275 = vpop.f32.mrb[0].mxu0
    %5276 = vdwg.mxu0
    %v5277 = vadd.f32 %v5197, %v5274
    %v5278 = vmax.f32 %v5277, 0.0
    %v5279 = vld [vmem:[%s6] sm:$0xff]
    %vm5280 = vcmask 64512
    %v5282 = vsel %vm5280, %v5278, 0
    %5284 = vmatprep.subr.mxu0 0.0
    %5285 = vmatpush1.msra.mxu0 %v5279
    %5286 = vmatprep.subr.mxu0 0.0
    %5287 = vmatpush1.msra.mxu0 0.0
    %5288 = vmatprep.subr.mxu0 0.0
    %5289 = vmatpush1.msra.mxu0 0.0
    %5290 = vmatprep.subr.mxu0 0.0
    %5291 = vmatpush1.msra.mxu0 0.0
    %5292 = vmatprep.subr.mxu0 0.0
    %5293 = vmatpush1.msra.mxu0 0.0
    %5294 = vmatprep.subr.mxu0 0.0
    %5295 = vmatpush1.msra.mxu0 0.0
    %5296 = vmatprep.subr.mxu0 0.0
    %5297 = vmatpush1.msra.mxu0 0.0
    %5298 = vmatprep.subr.mxu0 0.0
    %5299 = vmatpush1.msra.mxu0 0.0
    %5300 = vmatprep.subr.mxu0 0.0
    %5301 = vmatpush1.msra.mxu0 0.0
    %5302 = vmatprep.subr.mxu0 0.0
    %5303 = vmatpush1.msra.mxu0 0.0
    %5304 = vmatprep.subr.mxu0 0.0
    %5305 = vmatpush1.msra.mxu0 0.0
    %5306 = vmatprep.subr.mxu0 0.0
    %5307 = vmatpush1.msra.mxu0 0.0
    %5308 = vmatprep.subr.mxu0 0.0
    %5309 = vmatpush1.msra.mxu0 0.0
    %5310 = vmatprep.subr.mxu0 0.0
    %5311 = vmatpush1.msra.mxu0 0.0
    %5312 = vmatprep.subr.mxu0 0.0
    %5313 = vmatpush1.msra.mxu0 0.0
    %5314 = vmatprep.subr.mxu0 0.0
    %5315 = vmatpush1.msra.mxu0 0.0
    %5316 = vmatprep.subr.mxu0 0.0
    %5317 = vmatpush1.msra.mxu0 0.0
    %5318 = vmatprep.subr.mxu0 0.0
    %5319 = vmatpush1.msra.mxu0 0.0
    %5320 = vmatprep.subr.mxu0 0.0
    %5321 = vmatpush1.msra.mxu0 0.0
    %5322 = vmatprep.subr.mxu0 0.0
    %5323 = vmatpush1.msra.mxu0 0.0
    %5324 = vmatprep.subr.mxu0 0.0
    %5325 = vmatpush1.msra.mxu0 0.0
    %5326 = vmatprep.subr.mxu0 0.0
    %5327 = vmatpush1.msra.mxu0 0.0
    %5328 = vmatprep.subr.mxu0 0.0
    %5329 = vmatpush1.msra.mxu0 0.0
    %5330 = vmatprep.subr.mxu0 0.0
    %5331 = vmatpush1.msra.mxu0 0.0
    %5332 = vmatprep.subr.mxu0 0.0
    %5333 = vmatpush1.msra.mxu0 0.0
    %5334 = vmatprep.subr.mxu0 0.0
    %5335 = vmatpush1.msra.mxu0 0.0
    %5336 = vmatprep.subr.mxu0 0.0
    %5337 = vmatpush1.msra.mxu0 0.0
    %5338 = vmatprep.subr.mxu0 0.0
    %5339 = vmatpush1.msra.mxu0 0.0
    %5340 = vmatprep.subr.mxu0 0.0
    %5341 = vmatpush1.msra.mxu0 0.0
    %5342 = vmatprep.subr.mxu0 0.0
    %5343 = vmatpush1.msra.mxu0 0.0
    %5344 = vmatprep.subr.mxu0 0.0
    %5345 = vmatpush1.msra.mxu0 0.0
    %5346 = vmatprep.subr.mxu0 0.0
    %5347 = vmatpush1.msra.mxu0 0.0
    %5348 = vmatprep.mubr.f32.mxu0 0.0
    %5349 = vmatmul.mubr.f32.gmra.mrb[0].mxu0 %v5282
    %v5350 = vpop.f32.mrb[0].mxu0
    %v5351 = vadd.f32 %v4557, %v5350
    %v5352 = vpop.f32.mrb[0].mxu0
    %5353 = vdwg.mxu0
    %vm5354 = vcmask 253952
    %5355 = vst.msk [vmem:[#allocation4] sm:$0x1] %vm5354, %v5351
    %v5356 = vld [vmem:[#allocation3 + $0x64] sm:$0x1]
    %v5357 = vld [vmem:[%s4] sm:$0xf]
    %v5359 = vsel %vm4353, %v5356, 0
    %v5362 = vsel %vm4563, %v5357, 0
    %5364 = vmatprep.subr.mxu0 0.0
    %5365 = vmatpush1.msra.mxu0 %v5362
    %5366 = vmatprep.subr.mxu0 0.0
    %5367 = vmatpush1.msra.mxu0 0.0
    %5368 = vmatprep.subr.mxu0 0.0
    %5369 = vmatpush1.msra.mxu0 0.0
    %5370 = vmatprep.subr.mxu0 0.0
    %5371 = vmatpush1.msra.mxu0 0.0
    %5372 = vmatprep.subr.mxu0 0.0
    %5373 = vmatpush1.msra.mxu0 0.0
    %5374 = vmatprep.subr.mxu0 0.0
    %5375 = vmatpush1.msra.mxu0 0.0
    %5376 = vmatprep.subr.mxu0 0.0
    %5377 = vmatpush1.msra.mxu0 0.0
    %5378 = vmatprep.subr.mxu0 0.0
    %5379 = vmatpush1.msra.mxu0 0.0
    %5380 = vmatprep.subr.mxu0 0.0
    %5381 = vmatpush1.msra.mxu0 0.0
    %5382 = vmatprep.subr.mxu0 0.0
    %5383 = vmatpush1.msra.mxu0 0.0
    %5384 = vmatprep.subr.mxu0 0.0
    %5385 = vmatpush1.msra.mxu0 0.0
    %5386 = vmatprep.subr.mxu0 0.0
    %5387 = vmatpush1.msra.mxu0 0.0
    %5388 = vmatprep.subr.mxu0 0.0
    %5389 = vmatpush1.msra.mxu0 0.0
    %5390 = vmatprep.subr.mxu0 0.0
    %5391 = vmatpush1.msra.mxu0 0.0
    %5392 = vmatprep.subr.mxu0 0.0
    %5393 = vmatpush1.msra.mxu0 0.0
    %5394 = vmatprep.subr.mxu0 0.0
    %5395 = vmatpush1.msra.mxu0 0.0
    %5396 = vmatprep.subr.mxu0 0.0
    %5397 = vmatpush1.msra.mxu0 0.0
    %5398 = vmatprep.subr.mxu0 0.0
    %5399 = vmatpush1.msra.mxu0 0.0
    %5400 = vmatprep.subr.mxu0 0.0
    %5401 = vmatpush1.msra.mxu0 0.0
    %5402 = vmatprep.subr.mxu0 0.0
    %5403 = vmatpush1.msra.mxu0 0.0
    %5404 = vmatprep.subr.mxu0 0.0
    %5405 = vmatpush1.msra.mxu0 0.0
    %5406 = vmatprep.subr.mxu0 0.0
    %5407 = vmatpush1.msra.mxu0 0.0
    %5408 = vmatprep.subr.mxu0 0.0
    %5409 = vmatpush1.msra.mxu0 0.0
    %5410 = vmatprep.subr.mxu0 0.0
    %5411 = vmatpush1.msra.mxu0 0.0
    %5412 = vmatprep.subr.mxu0 0.0
    %5413 = vmatpush1.msra.mxu0 0.0
    %5414 = vmatprep.subr.mxu0 0.0
    %5415 = vmatpush1.msra.mxu0 0.0
    %5416 = vmatprep.subr.mxu0 0.0
    %5417 = vmatpush1.msra.mxu0 0.0
    %5418 = vmatprep.subr.mxu0 0.0
    %5419 = vmatpush1.msra.mxu0 0.0
    %5420 = vmatprep.subr.mxu0 0.0
    %5421 = vmatpush1.msra.mxu0 0.0
    %5422 = vmatprep.subr.mxu0 0.0
    %5423 = vmatpush1.msra.mxu0 0.0
    %5424 = vmatprep.subr.mxu0 0.0
    %5425 = vmatpush1.msra.mxu0 0.0
    %5426 = vmatprep.subr.mxu0 0.0
    %5427 = vmatpush1.msra.mxu0 0.0
    %5428 = vmatprep.mubr.f32.mxu0 0.0
    %5429 = vmatmul.mubr.f32.gmra.mrb[0].mxu0 %v5359
    %v5430 = vpop.f32.mrb[0].mxu0
    %v5431 = vadd.f32 0.0, %v5430
    %v5432 = vpop.f32.mrb[0].mxu0
    %5433 = vdwg.mxu0
    %v5434 = vadd.f32 %v4556, %v5431
    %v5435 = vld [vmem:[#allocation3 + $0x66] sm:$0x1]
    %v5436 = vld [vmem:[%s4639] sm:$0xf]
    %v5438 = vsel %vm4353, %v5435, 0
    %v5441 = vsel %vm4563, %v5436, 0
    %5443 = vmatprep.subr.mxu0 0.0
    %5444 = vmatpush1.msra.mxu0 %v5441
    %5445 = vmatprep.subr.mxu0 0.0
    %5446 = vmatpush1.msra.mxu0 0.0
    %5447 = vmatprep.subr.mxu0 0.0
    %5448 = vmatpush1.msra.mxu0 0.0
    %5449 = vmatprep.subr.mxu0 0.0
    %5450 = vmatpush1.msra.mxu0 0.0
    %5451 = vmatprep.subr.mxu0 0.0
    %5452 = vmatpush1.msra.mxu0 0.0
    %5453 = vmatprep.subr.mxu0 0.0
    %5454 = vmatpush1.msra.mxu0 0.0
    %5455 = vmatprep.subr.mxu0 0.0
    %5456 = vmatpush1.msra.mxu0 0.0
    %5457 = vmatprep.subr.mxu0 0.0
    %5458 = vmatpush1.msra.mxu0 0.0
    %5459 = vmatprep.subr.mxu0 0.0
    %5460 = vmatpush1.msra.mxu0 0.0
    %5461 = vmatprep.subr.mxu0 0.0
    %5462 = vmatpush1.msra.mxu0 0.0
    %5463 = vmatprep.subr.mxu0 0.0
    %5464 = vmatpush1.msra.mxu0 0.0
    %5465 = vmatprep.subr.mxu0 0.0
    %5466 = vmatpush1.msra.mxu0 0.0
    %5467 = vmatprep.subr.mxu0 0.0
    %5468 = vmatpush1.msra.mxu0 0.0
    %5469 = vmatprep.subr.mxu0 0.0
    %5470 = vmatpush1.msra.mxu0 0.0
    %5471 = vmatprep.subr.mxu0 0.0
    %5472 = vmatpush1.msra.mxu0 0.0
    %5473 = vmatprep.subr.mxu0 0.0
    %5474 = vmatpush1.msra.mxu0 0.0
    %5475 = vmatprep.subr.mxu0 0.0
    %5476 = vmatpush1.msra.mxu0 0.0
    %5477 = vmatprep.subr.mxu0 0.0
    %5478 = vmatpush1.msra.mxu0 0.0
    %5479 = vmatprep.subr.mxu0 0.0
    %5480 = vmatpush1.msra.mxu0 0.0
    %5481 = vmatprep.subr.mxu0 0.0
    %5482 = vmatpush1.msra.mxu0 0.0
    %5483 = vmatprep.subr.mxu0 0.0
    %5484 = vmatpush1.msra.mxu0 0.0
    %5485 = vmatprep.subr.mxu0 0.0
    %5486 = vmatpush1.msra.mxu0 0.0
    %5487 = vmatprep.subr.mxu0 0.0
    %5488 = vmatpush1.msra.mxu0 0.0
    %5489 = vmatprep.subr.mxu0 0.0
    %5490 = vmatpush1.msra.mxu0 0.0
    %5491 = vmatprep.subr.mxu0 0.0
    %5492 = vmatpush1.msra.mxu0 0.0
    %5493 = vmatprep.subr.mxu0 0.0
    %5494 = vmatpush1.msra.mxu0 0.0
    %5495 = vmatprep.subr.mxu0 0.0
    %5496 = vmatpush1.msra.mxu0 0.0
    %5497 = vmatprep.subr.mxu0 0.0
    %5498 = vmatpush1.msra.mxu0 0.0
    %5499 = vmatprep.subr.mxu0 0.0
    %5500 = vmatpush1.msra.mxu0 0.0
    %5501 = vmatprep.subr.mxu0 0.0
    %5502 = vmatpush1.msra.mxu0 0.0
    %5503 = vmatprep.subr.mxu0 0.0
    %5504 = vmatpush1.msra.mxu0 0.0
    %5505 = vmatprep.subr.mxu0 0.0
    %5506 = vmatpush1.msra.mxu0 0.0
    %5507 = vmatprep.mubr.f32.mxu0 0.0
    %5508 = vmatmul.mubr.f32.gmra.mrb[0].mxu0 %v5438
    %v5509 = vpop.f32.mrb[0].mxu0
    %v5510 = vadd.f32 0.0, %v5509
    %v5511 = vpop.f32.mrb[0].mxu0
    %5512 = vdwg.mxu0
    %v5513 = vadd.f32 %v5434, %v5510
    %v5514 = vld [vmem:[#allocation3 + $0x68] sm:$0x1]
    %v5515 = vld [vmem:[%s4719] sm:$0xf]
    %v5517 = vsel %vm4353, %v5514, 0
    %v5520 = vsel %vm4563, %v5515, 0
    %5522 = vmatprep.subr.mxu0 0.0
    %5523 = vmatpush1.msra.mxu0 %v5520
    %5524 = vmatprep.subr.mxu0 0.0
    %5525 = vmatpush1.msra.mxu0 0.0
    %5526 = vmatprep.subr.mxu0 0.0
    %5527 = vmatpush1.msra.mxu0 0.0
    %5528 = vmatprep.subr.mxu0 0.0
    %5529 = vmatpush1.msra.mxu0 0.0
    %5530 = vmatprep.subr.mxu0 0.0
    %5531 = vmatpush1.msra.mxu0 0.0
    %5532 = vmatprep.subr.mxu0 0.0
    %5533 = vmatpush1.msra.mxu0 0.0
    %5534 = vmatprep.subr.mxu0 0.0
    %5535 = vmatpush1.msra.mxu0 0.0
    %5536 = vmatprep.subr.mxu0 0.0
    %5537 = vmatpush1.msra.mxu0 0.0
    %5538 = vmatprep.subr.mxu0 0.0
    %5539 = vmatpush1.msra.mxu0 0.0
    %5540 = vmatprep.subr.mxu0 0.0
    %5541 = vmatpush1.msra.mxu0 0.0
    %5542 = vmatprep.subr.mxu0 0.0
    %5543 = vmatpush1.msra.mxu0 0.0
    %5544 = vmatprep.subr.mxu0 0.0
    %5545 = vmatpush1.msra.mxu0 0.0
    %5546 = vmatprep.subr.mxu0 0.0
    %5547 = vmatpush1.msra.mxu0 0.0
    %5548 = vmatprep.subr.mxu0 0.0
    %5549 = vmatpush1.msra.mxu0 0.0
    %5550 = vmatprep.subr.mxu0 0.0
    %5551 = vmatpush1.msra.mxu0 0.0
    %5552 = vmatprep.subr.mxu0 0.0
    %5553 = vmatpush1.msra.mxu0 0.0
    %5554 = vmatprep.subr.mxu0 0.0
    %5555 = vmatpush1.msra.mxu0 0.0
    %5556 = vmatprep.subr.mxu0 0.0
    %5557 = vmatpush1.msra.mxu0 0.0
    %5558 = vmatprep.subr.mxu0 0.0
    %5559 = vmatpush1.msra.mxu0 0.0
    %5560 = vmatprep.subr.mxu0 0.0
    %5561 = vmatpush1.msra.mxu0 0.0
    %5562 = vmatprep.subr.mxu0 0.0
    %5563 = vmatpush1.msra.mxu0 0.0
    %5564 = vmatprep.subr.mxu0 0.0
    %5565 = vmatpush1.msra.mxu0 0.0
    %5566 = vmatprep.subr.mxu0 0.0
    %5567 = vmatpush1.msra.mxu0 0.0
    %5568 = vmatprep.subr.mxu0 0.0
    %5569 = vmatpush1.msra.mxu0 0.0
    %5570 = vmatprep.subr.mxu0 0.0
    %5571 = vmatpush1.msra.mxu0 0.0
    %5572 = vmatprep.subr.mxu0 0.0
    %5573 = vmatpush1.msra.mxu0 0.0
    %5574 = vmatprep.subr.mxu0 0.0
    %5575 = vmatpush1.msra.mxu0 0.0
    %5576 = vmatprep.subr.mxu0 0.0
    %5577 = vmatpush1.msra.mxu0 0.0
    %5578 = vmatprep.subr.mxu0 0.0
    %5579 = vmatpush1.msra.mxu0 0.0
    %5580 = vmatprep.subr.mxu0 0.0
    %5581 = vmatpush1.msra.mxu0 0.0
    %5582 = vmatprep.subr.mxu0 0.0
    %5583 = vmatpush1.msra.mxu0 0.0
    %5584 = vmatprep.subr.mxu0 0.0
    %5585 = vmatpush1.msra.mxu0 0.0
    %5586 = vmatprep.mubr.f32.mxu0 0.0
    %5587 = vmatmul.mubr.f32.gmra.mrb[0].mxu0 %v5517
    %v5588 = vpop.f32.mrb[0].mxu0
    %v5589 = vadd.f32 0.0, %v5588
    %v5590 = vpop.f32.mrb[0].mxu0
    %5591 = vdwg.mxu0
    %v5592 = vadd.f32 %v5513, %v5589
    %v5593 = vld [vmem:[#allocation3 + $0x78] sm:$0x1]
    %v5594 = vld [vmem:[%s4799] sm:$0xf]
    %v5596 = vsel %vm4353, %v5593, 0
    %v5599 = vsel %vm4563, %v5594, 0
    %5601 = vmatprep.subr.mxu0 0.0
    %5602 = vmatpush1.msra.mxu0 %v5599
    %5603 = vmatprep.subr.mxu0 0.0
    %5604 = vmatpush1.msra.mxu0 0.0
    %5605 = vmatprep.subr.mxu0 0.0
    %5606 = vmatpush1.msra.mxu0 0.0
    %5607 = vmatprep.subr.mxu0 0.0
    %5608 = vmatpush1.msra.mxu0 0.0
    %5609 = vmatprep.subr.mxu0 0.0
    %5610 = vmatpush1.msra.mxu0 0.0
    %5611 = vmatprep.subr.mxu0 0.0
    %5612 = vmatpush1.msra.mxu0 0.0
    %5613 = vmatprep.subr.mxu0 0.0
    %5614 = vmatpush1.msra.mxu0 0.0
    %5615 = vmatprep.subr.mxu0 0.0
    %5616 = vmatpush1.msra.mxu0 0.0
    %5617 = vmatprep.subr.mxu0 0.0
    %5618 = vmatpush1.msra.mxu0 0.0
    %5619 = vmatprep.subr.mxu0 0.0
    %5620 = vmatpush1.msra.mxu0 0.0
    %5621 = vmatprep.subr.mxu0 0.0
    %5622 = vmatpush1.msra.mxu0 0.0
    %5623 = vmatprep.subr.mxu0 0.0
    %5624 = vmatpush1.msra.mxu0 0.0
    %5625 = vmatprep.subr.mxu0 0.0
    %5626 = vmatpush1.msra.mxu0 0.0
    %5627 = vmatprep.subr.mxu0 0.0
    %5628 = vmatpush1.msra.mxu0 0.0
    %5629 = vmatprep.subr.mxu0 0.0
    %5630 = vmatpush1.msra.mxu0 0.0
    %5631 = vmatprep.subr.mxu0 0.0
    %5632 = vmatpush1.msra.mxu0 0.0
    %5633 = vmatprep.subr.mxu0 0.0
    %5634 = vmatpush1.msra.mxu0 0.0
    %5635 = vmatprep.subr.mxu0 0.0
    %5636 = vmatpush1.msra.mxu0 0.0
    %5637 = vmatprep.subr.mxu0 0.0
    %5638 = vmatpush1.msra.mxu0 0.0
    %5639 = vmatprep.subr.mxu0 0.0
    %5640 = vmatpush1.msra.mxu0 0.0
    %5641 = vmatprep.subr.mxu0 0.0
    %5642 = vmatpush1.msra.mxu0 0.0
    %5643 = vmatprep.subr.mxu0 0.0
    %5644 = vmatpush1.msra.mxu0 0.0
    %5645 = vmatprep.subr.mxu0 0.0
    %5646 = vmatpush1.msra.mxu0 0.0
    %5647 = vmatprep.subr.mxu0 0.0
    %5648 = vmatpush1.msra.mxu0 0.0
    %5649 = vmatprep.subr.mxu0 0.0
    %5650 = vmatpush1.msra.mxu0 0.0
    %5651 = vmatprep.subr.mxu0 0.0
    %5652 = vmatpush1.msra.mxu0 0.0
    %5653 = vmatprep.subr.mxu0 0.0
    %5654 = vmatpush1.msra.mxu0 0.0
    %5655 = vmatprep.subr.mxu0 0.0
    %5656 = vmatpush1.msra.mxu0 0.0
    %5657 = vmatprep.subr.mxu0 0.0
    %5658 = vmatpush1.msra.mxu0 0.0
    %5659 = vmatprep.subr.mxu0 0.0
    %5660 = vmatpush1.msra.mxu0 0.0
    %5661 = vmatprep.subr.mxu0 0.0
    %5662 = vmatpush1.msra.mxu0 0.0
    %5663 = vmatprep.subr.mxu0 0.0
    %5664 = vmatpush1.msra.mxu0 0.0
    %5665 = vmatprep.mubr.f32.mxu0 0.0
    %5666 = vmatmul.mubr.f32.gmra.mrb[0].mxu0 %v5596
    %v5667 = vpop.f32.mrb[0].mxu0
    %v5668 = vadd.f32 0.0, %v5667
    %v5669 = vpop.f32.mrb[0].mxu0
    %5670 = vdwg.mxu0
    %v5671 = vadd.f32 %v5592, %v5668
    %v5672 = vld [vmem:[#allocation3 + $0x7a] sm:$0x1]
    %v5673 = vld [vmem:[%s4879] sm:$0xf]
    %v5675 = vsel %vm4353, %v5672, 0
    %v5678 = vsel %vm4563, %v5673, 0
    %5680 = vmatprep.subr.mxu0 0.0
    %5681 = vmatpush1.msra.mxu0 %v5678
    %5682 = vmatprep.subr.mxu0 0.0
    %5683 = vmatpush1.msra.mxu0 0.0
    %5684 = vmatprep.subr.mxu0 0.0
    %5685 = vmatpush1.msra.mxu0 0.0
    %5686 = vmatprep.subr.mxu0 0.0
    %5687 = vmatpush1.msra.mxu0 0.0
    %5688 = vmatprep.subr.mxu0 0.0
    %5689 = vmatpush1.msra.mxu0 0.0
    %5690 = vmatprep.subr.mxu0 0.0
    %5691 = vmatpush1.msra.mxu0 0.0
    %5692 = vmatprep.subr.mxu0 0.0
    %5693 = vmatpush1.msra.mxu0 0.0
    %5694 = vmatprep.subr.mxu0 0.0
    %5695 = vmatpush1.msra.mxu0 0.0
    %5696 = vmatprep.subr.mxu0 0.0
    %5697 = vmatpush1.msra.mxu0 0.0
    %5698 = vmatprep.subr.mxu0 0.0
    %5699 = vmatpush1.msra.mxu0 0.0
    %5700 = vmatprep.subr.mxu0 0.0
    %5701 = vmatpush1.msra.mxu0 0.0
    %5702 = vmatprep.subr.mxu0 0.0
    %5703 = vmatpush1.msra.mxu0 0.0
    %5704 = vmatprep.subr.mxu0 0.0
    %5705 = vmatpush1.msra.mxu0 0.0
    %5706 = vmatprep.subr.mxu0 0.0
    %5707 = vmatpush1.msra.mxu0 0.0
    %5708 = vmatprep.subr.mxu0 0.0
    %5709 = vmatpush1.msra.mxu0 0.0
    %5710 = vmatprep.subr.mxu0 0.0
    %5711 = vmatpush1.msra.mxu0 0.0
    %5712 = vmatprep.subr.mxu0 0.0
    %5713 = vmatpush1.msra.mxu0 0.0
    %5714 = vmatprep.subr.mxu0 0.0
    %5715 = vmatpush1.msra.mxu0 0.0
    %5716 = vmatprep.subr.mxu0 0.0
    %5717 = vmatpush1.msra.mxu0 0.0
    %5718 = vmatprep.subr.mxu0 0.0
    %5719 = vmatpush1.msra.mxu0 0.0
    %5720 = vmatprep.subr.mxu0 0.0
    %5721 = vmatpush1.msra.mxu0 0.0
    %5722 = vmatprep.subr.mxu0 0.0
    %5723 = vmatpush1.msra.mxu0 0.0
    %5724 = vmatprep.subr.mxu0 0.0
    %5725 = vmatpush1.msra.mxu0 0.0
    %5726 = vmatprep.subr.mxu0 0.0
    %5727 = vmatpush1.msra.mxu0 0.0
    %5728 = vmatprep.subr.mxu0 0.0
    %5729 = vmatpush1.msra.mxu0 0.0
    %5730 = vmatprep.subr.mxu0 0.0
    %5731 = vmatpush1.msra.mxu0 0.0
    %5732 = vmatprep.subr.mxu0 0.0
    %5733 = vmatpush1.msra.mxu0 0.0
    %5734 = vmatprep.subr.mxu0 0.0
    %5735 = vmatpush1.msra.mxu0 0.0
    %5736 = vmatprep.subr.mxu0 0.0
    %5737 = vmatpush1.msra.mxu0 0.0
    %5738 = vmatprep.subr.mxu0 0.0
    %5739 = vmatpush1.msra.mxu0 0.0
    %5740 = vmatprep.subr.mxu0 0.0
    %5741 = vmatpush1.msra.mxu0 0.0
    %5742 = vmatprep.subr.mxu0 0.0
    %5743 = vmatpush1.msra.mxu0 0.0
    %5744 = vmatprep.mubr.f32.mxu0 0.0
    %5745 = vmatmul.mubr.f32.gmra.mrb[0].mxu0 %v5675
    %v5746 = vpop.f32.mrb[0].mxu0
    %v5747 = vadd.f32 0.0, %v5746
    %v5748 = vpop.f32.mrb[0].mxu0
    %5749 = vdwg.mxu0
    %v5750 = vadd.f32 %v5671, %v5747
    %v5751 = vld [vmem:[#allocation3 + $0x7c] sm:$0x1]
    %v5752 = vld [vmem:[%s4959] sm:$0xf]
    %v5754 = vsel %vm4353, %v5751, 0
    %v5757 = vsel %vm4563, %v5752, 0
    %5759 = vmatprep.subr.mxu0 0.0
    %5760 = vmatpush1.msra.mxu0 %v5757
    %5761 = vmatprep.subr.mxu0 0.0
    %5762 = vmatpush1.msra.mxu0 0.0
    %5763 = vmatprep.subr.mxu0 0.0
    %5764 = vmatpush1.msra.mxu0 0.0
    %5765 = vmatprep.subr.mxu0 0.0
    %5766 = vmatpush1.msra.mxu0 0.0
    %5767 = vmatprep.subr.mxu0 0.0
    %5768 = vmatpush1.msra.mxu0 0.0
    %5769 = vmatprep.subr.mxu0 0.0
    %5770 = vmatpush1.msra.mxu0 0.0
    %5771 = vmatprep.subr.mxu0 0.0
    %5772 = vmatpush1.msra.mxu0 0.0
    %5773 = vmatprep.subr.mxu0 0.0
    %5774 = vmatpush1.msra.mxu0 0.0
    %5775 = vmatprep.subr.mxu0 0.0
    %5776 = vmatpush1.msra.mxu0 0.0
    %5777 = vmatprep.subr.mxu0 0.0
    %5778 = vmatpush1.msra.mxu0 0.0
    %5779 = vmatprep.subr.mxu0 0.0
    %5780 = vmatpush1.msra.mxu0 0.0
    %5781 = vmatprep.subr.mxu0 0.0
    %5782 = vmatpush1.msra.mxu0 0.0
    %5783 = vmatprep.subr.mxu0 0.0
    %5784 = vmatpush1.msra.mxu0 0.0
    %5785 = vmatprep.subr.mxu0 0.0
    %5786 = vmatpush1.msra.mxu0 0.0
    %5787 = vmatprep.subr.mxu0 0.0
    %5788 = vmatpush1.msra.mxu0 0.0
    %5789 = vmatprep.subr.mxu0 0.0
    %5790 = vmatpush1.msra.mxu0 0.0
    %5791 = vmatprep.subr.mxu0 0.0
    %5792 = vmatpush1.msra.mxu0 0.0
    %5793 = vmatprep.subr.mxu0 0.0
    %5794 = vmatpush1.msra.mxu0 0.0
    %5795 = vmatprep.subr.mxu0 0.0
    %5796 = vmatpush1.msra.mxu0 0.0
    %5797 = vmatprep.subr.mxu0 0.0
    %5798 = vmatpush1.msra.mxu0 0.0
    %5799 = vmatprep.subr.mxu0 0.0
    %5800 = vmatpush1.msra.mxu0 0.0
    %5801 = vmatprep.subr.mxu0 0.0
    %5802 = vmatpush1.msra.mxu0 0.0
    %5803 = vmatprep.subr.mxu0 0.0
    %5804 = vmatpush1.msra.mxu0 0.0
    %5805 = vmatprep.subr.mxu0 0.0
    %5806 = vmatpush1.msra.mxu0 0.0
    %5807 = vmatprep.subr.mxu0 0.0
    %5808 = vmatpush1.msra.mxu0 0.0
    %5809 = vmatprep.subr.mxu0 0.0
    %5810 = vmatpush1.msra.mxu0 0.0
    %5811 = vmatprep.subr.mxu0 0.0
    %5812 = vmatpush1.msra.mxu0 0.0
    %5813 = vmatprep.subr.mxu0 0.0
    %5814 = vmatpush1.msra.mxu0 0.0
    %5815 = vmatprep.subr.mxu0 0.0
    %5816 = vmatpush1.msra.mxu0 0.0
    %5817 = vmatprep.subr.mxu0 0.0
    %5818 = vmatpush1.msra.mxu0 0.0
    %5819 = vmatprep.subr.mxu0 0.0
    %5820 = vmatpush1.msra.mxu0 0.0
    %5821 = vmatprep.subr.mxu0 0.0
    %5822 = vmatpush1.msra.mxu0 0.0
    %5823 = vmatprep.mubr.f32.mxu0 0.0
    %5824 = vmatmul.mubr.f32.gmra.mrb[0].mxu0 %v5754
    %v5825 = vpop.f32.mrb[0].mxu0
    %v5826 = vadd.f32 0.0, %v5825
    %v5827 = vpop.f32.mrb[0].mxu0
    %5828 = vdwg.mxu0
    %v5829 = vadd.f32 %v5750, %v5826
    %v5830 = vld [vmem:[#allocation3 + $0x8c] sm:$0x1]
    %v5831 = vld [vmem:[%s5039] sm:$0xf]
    %v5833 = vsel %vm4353, %v5830, 0
    %v5836 = vsel %vm4563, %v5831, 0
    %5838 = vmatprep.subr.mxu0 0.0
    %5839 = vmatpush1.msra.mxu0 %v5836
    %5840 = vmatprep.subr.mxu0 0.0
    %5841 = vmatpush1.msra.mxu0 0.0
    %5842 = vmatprep.subr.mxu0 0.0
    %5843 = vmatpush1.msra.mxu0 0.0
    %5844 = vmatprep.subr.mxu0 0.0
    %5845 = vmatpush1.msra.mxu0 0.0
    %5846 = vmatprep.subr.mxu0 0.0
    %5847 = vmatpush1.msra.mxu0 0.0
    %5848 = vmatprep.subr.mxu0 0.0
    %5849 = vmatpush1.msra.mxu0 0.0
    %5850 = vmatprep.subr.mxu0 0.0
    %5851 = vmatpush1.msra.mxu0 0.0
    %5852 = vmatprep.subr.mxu0 0.0
    %5853 = vmatpush1.msra.mxu0 0.0
    %5854 = vmatprep.subr.mxu0 0.0
    %5855 = vmatpush1.msra.mxu0 0.0
    %5856 = vmatprep.subr.mxu0 0.0
    %5857 = vmatpush1.msra.mxu0 0.0
    %5858 = vmatprep.subr.mxu0 0.0
    %5859 = vmatpush1.msra.mxu0 0.0
    %5860 = vmatprep.subr.mxu0 0.0
    %5861 = vmatpush1.msra.mxu0 0.0
    %5862 = vmatprep.subr.mxu0 0.0
    %5863 = vmatpush1.msra.mxu0 0.0
    %5864 = vmatprep.subr.mxu0 0.0
    %5865 = vmatpush1.msra.mxu0 0.0
    %5866 = vmatprep.subr.mxu0 0.0
    %5867 = vmatpush1.msra.mxu0 0.0
    %5868 = vmatprep.subr.mxu0 0.0
    %5869 = vmatpush1.msra.mxu0 0.0
    %5870 = vmatprep.subr.mxu0 0.0
    %5871 = vmatpush1.msra.mxu0 0.0
    %5872 = vmatprep.subr.mxu0 0.0
    %5873 = vmatpush1.msra.mxu0 0.0
    %5874 = vmatprep.subr.mxu0 0.0
    %5875 = vmatpush1.msra.mxu0 0.0
    %5876 = vmatprep.subr.mxu0 0.0
    %5877 = vmatpush1.msra.mxu0 0.0
    %5878 = vmatprep.subr.mxu0 0.0
    %5879 = vmatpush1.msra.mxu0 0.0
    %5880 = vmatprep.subr.mxu0 0.0
    %5881 = vmatpush1.msra.mxu0 0.0
    %5882 = vmatprep.subr.mxu0 0.0
    %5883 = vmatpush1.msra.mxu0 0.0
    %5884 = vmatprep.subr.mxu0 0.0
    %5885 = vmatpush1.msra.mxu0 0.0
    %5886 = vmatprep.subr.mxu0 0.0
    %5887 = vmatpush1.msra.mxu0 0.0
    %5888 = vmatprep.subr.mxu0 0.0
    %5889 = vmatpush1.msra.mxu0 0.0
    %5890 = vmatprep.subr.mxu0 0.0
    %5891 = vmatpush1.msra.mxu0 0.0
    %5892 = vmatprep.subr.mxu0 0.0
    %5893 = vmatpush1.msra.mxu0 0.0
    %5894 = vmatprep.subr.mxu0 0.0
    %5895 = vmatpush1.msra.mxu0 0.0
    %5896 = vmatprep.subr.mxu0 0.0
    %5897 = vmatpush1.msra.mxu0 0.0
    %5898 = vmatprep.subr.mxu0 0.0
    %5899 = vmatpush1.msra.mxu0 0.0
    %5900 = vmatprep.subr.mxu0 0.0
    %5901 = vmatpush1.msra.mxu0 0.0
    %5902 = vmatprep.mubr.f32.mxu0 0.0
    %5903 = vmatmul.mubr.f32.gmra.mrb[0].mxu0 %v5833
    %v5904 = vpop.f32.mrb[0].mxu0
    %v5905 = vadd.f32 0.0, %v5904
    %v5906 = vpop.f32.mrb[0].mxu0
    %5907 = vdwg.mxu0
    %v5908 = vadd.f32 %v5829, %v5905
    %v5909 = vld [vmem:[#allocation3 + $0x8e] sm:$0x1]
    %v5910 = vld [vmem:[%s5119] sm:$0xf]
    %v5912 = vsel %vm4353, %v5909, 0
    %v5915 = vsel %vm4563, %v5910, 0
    %5917 = vmatprep.subr.mxu0 0.0
    %5918 = vmatpush1.msra.mxu0 %v5915
    %5919 = vmatprep.subr.mxu0 0.0
    %5920 = vmatpush1.msra.mxu0 0.0
    %5921 = vmatprep.subr.mxu0 0.0
    %5922 = vmatpush1.msra.mxu0 0.0
    %5923 = vmatprep.subr.mxu0 0.0
    %5924 = vmatpush1.msra.mxu0 0.0
    %5925 = vmatprep.subr.mxu0 0.0
    %5926 = vmatpush1.msra.mxu0 0.0
    %5927 = vmatprep.subr.mxu0 0.0
    %5928 = vmatpush1.msra.mxu0 0.0
    %5929 = vmatprep.subr.mxu0 0.0
    %5930 = vmatpush1.msra.mxu0 0.0
    %5931 = vmatprep.subr.mxu0 0.0
    %5932 = vmatpush1.msra.mxu0 0.0
    %5933 = vmatprep.subr.mxu0 0.0
    %5934 = vmatpush1.msra.mxu0 0.0
    %5935 = vmatprep.subr.mxu0 0.0
    %5936 = vmatpush1.msra.mxu0 0.0
    %5937 = vmatprep.subr.mxu0 0.0
    %5938 = vmatpush1.msra.mxu0 0.0
    %5939 = vmatprep.subr.mxu0 0.0
    %5940 = vmatpush1.msra.mxu0 0.0
    %5941 = vmatprep.subr.mxu0 0.0
    %5942 = vmatpush1.msra.mxu0 0.0
    %5943 = vmatprep.subr.mxu0 0.0
    %5944 = vmatpush1.msra.mxu0 0.0
    %5945 = vmatprep.subr.mxu0 0.0
    %5946 = vmatpush1.msra.mxu0 0.0
    %5947 = vmatprep.subr.mxu0 0.0
    %5948 = vmatpush1.msra.mxu0 0.0
    %5949 = vmatprep.subr.mxu0 0.0
    %5950 = vmatpush1.msra.mxu0 0.0
    %5951 = vmatprep.subr.mxu0 0.0
    %5952 = vmatpush1.msra.mxu0 0.0
    %5953 = vmatprep.subr.mxu0 0.0
    %5954 = vmatpush1.msra.mxu0 0.0
    %5955 = vmatprep.subr.mxu0 0.0
    %5956 = vmatpush1.msra.mxu0 0.0
    %5957 = vmatprep.subr.mxu0 0.0
    %5958 = vmatpush1.msra.mxu0 0.0
    %5959 = vmatprep.subr.mxu0 0.0
    %5960 = vmatpush1.msra.mxu0 0.0
    %5961 = vmatprep.subr.mxu0 0.0
    %5962 = vmatpush1.msra.mxu0 0.0
    %5963 = vmatprep.subr.mxu0 0.0
    %5964 = vmatpush1.msra.mxu0 0.0
    %5965 = vmatprep.subr.mxu0 0.0
    %5966 = vmatpush1.msra.mxu0 0.0
    %5967 = vmatprep.subr.mxu0 0.0
    %5968 = vmatpush1.msra.mxu0 0.0
    %5969 = vmatprep.subr.mxu0 0.0
    %5970 = vmatpush1.msra.mxu0 0.0
    %5971 = vmatprep.subr.mxu0 0.0
    %5972 = vmatpush1.msra.mxu0 0.0
    %5973 = vmatprep.subr.mxu0 0.0
    %5974 = vmatpush1.msra.mxu0 0.0
    %5975 = vmatprep.subr.mxu0 0.0
    %5976 = vmatpush1.msra.mxu0 0.0
    %5977 = vmatprep.subr.mxu0 0.0
    %5978 = vmatpush1.msra.mxu0 0.0
    %5979 = vmatprep.subr.mxu0 0.0
    %5980 = vmatpush1.msra.mxu0 0.0
    %5981 = vmatprep.mubr.f32.mxu0 0.0
    %5982 = vmatmul.mubr.f32.gmra.mrb[0].mxu0 %v5912
    %v5983 = vpop.f32.mrb[0].mxu0
    %v5984 = vadd.f32 0.0, %v5983
    %v5985 = vpop.f32.mrb[0].mxu0
    %5986 = vdwg.mxu0
    %v5987 = vadd.f32 %v5908, %v5984
    %v5988 = vld [vmem:[#allocation3 + $0x90] sm:$0x1]
    %v5989 = vld [vmem:[%s5199] sm:$0xf]
    %v5991 = vsel %vm4353, %v5988, 0
    %v5994 = vsel %vm4563, %v5989, 0
    %5996 = vmatprep.subr.mxu0 0.0
    %5997 = vmatpush1.msra.mxu0 %v5994
    %5998 = vmatprep.subr.mxu0 0.0
    %5999 = vmatpush1.msra.mxu0 0.0
    %6000 = vmatprep.subr.mxu0 0.0
    %6001 = vmatpush1.msra.mxu0 0.0
    %6002 = vmatprep.subr.mxu0 0.0
    %6003 = vmatpush1.msra.mxu0 0.0
    %6004 = vmatprep.subr.mxu0 0.0
    %6005 = vmatpush1.msra.mxu0 0.0
    %6006 = vmatprep.subr.mxu0 0.0
    %6007 = vmatpush1.msra.mxu0 0.0
    %6008 = vmatprep.subr.mxu0 0.0
    %6009 = vmatpush1.msra.mxu0 0.0
    %6010 = vmatprep.subr.mxu0 0.0
    %6011 = vmatpush1.msra.mxu0 0.0
    %6012 = vmatprep.subr.mxu0 0.0
    %6013 = vmatpush1.msra.mxu0 0.0
    %6014 = vmatprep.subr.mxu0 0.0
    %6015 = vmatpush1.msra.mxu0 0.0
    %6016 = vmatprep.subr.mxu0 0.0
    %6017 = vmatpush1.msra.mxu0 0.0
    %6018 = vmatprep.subr.mxu0 0.0
    %6019 = vmatpush1.msra.mxu0 0.0
    %6020 = vmatprep.subr.mxu0 0.0
    %6021 = vmatpush1.msra.mxu0 0.0
    %6022 = vmatprep.subr.mxu0 0.0
    %6023 = vmatpush1.msra.mxu0 0.0
    %6024 = vmatprep.subr.mxu0 0.0
    %6025 = vmatpush1.msra.mxu0 0.0
    %6026 = vmatprep.subr.mxu0 0.0
    %6027 = vmatpush1.msra.mxu0 0.0
    %6028 = vmatprep.subr.mxu0 0.0
    %6029 = vmatpush1.msra.mxu0 0.0
    %6030 = vmatprep.subr.mxu0 0.0
    %6031 = vmatpush1.msra.mxu0 0.0
    %6032 = vmatprep.subr.mxu0 0.0
    %6033 = vmatpush1.msra.mxu0 0.0
    %6034 = vmatprep.subr.mxu0 0.0
    %6035 = vmatpush1.msra.mxu0 0.0
    %6036 = vmatprep.subr.mxu0 0.0
    %6037 = vmatpush1.msra.mxu0 0.0
    %6038 = vmatprep.subr.mxu0 0.0
    %6039 = vmatpush1.msra.mxu0 0.0
    %6040 = vmatprep.subr.mxu0 0.0
    %6041 = vmatpush1.msra.mxu0 0.0
    %6042 = vmatprep.subr.mxu0 0.0
    %6043 = vmatpush1.msra.mxu0 0.0
    %6044 = vmatprep.subr.mxu0 0.0
    %6045 = vmatpush1.msra.mxu0 0.0
    %6046 = vmatprep.subr.mxu0 0.0
    %6047 = vmatpush1.msra.mxu0 0.0
    %6048 = vmatprep.subr.mxu0 0.0
    %6049 = vmatpush1.msra.mxu0 0.0
    %6050 = vmatprep.subr.mxu0 0.0
    %6051 = vmatpush1.msra.mxu0 0.0
    %6052 = vmatprep.subr.mxu0 0.0
    %6053 = vmatpush1.msra.mxu0 0.0
    %6054 = vmatprep.subr.mxu0 0.0
    %6055 = vmatpush1.msra.mxu0 0.0
    %6056 = vmatprep.subr.mxu0 0.0
    %6057 = vmatpush1.msra.mxu0 0.0
    %6058 = vmatprep.subr.mxu0 0.0
    %6059 = vmatpush1.msra.mxu0 0.0
    %6060 = vmatprep.mubr.f32.mxu0 0.0
    %6061 = vmatmul.mubr.f32.gmra.mrb[0].mxu0 %v5991
    %v6062 = vpop.f32.mrb[0].mxu0
    %v6063 = vadd.f32 0.0, %v6062
    %v6064 = vpop.f32.mrb[0].mxu0
    %6065 = vdwg.mxu0
    %v6066 = vadd.f32 %v5987, %v6063
    %v6067 = vmax.f32 %v6066, 0.0
    %v6068 = vld [vmem:[%s6] sm:$0xff]
    %v6070 = vsel %vm5280, %v6067, 0
    %6072 = vmatprep.subr.mxu0 0.0
    %6073 = vmatpush1.msra.mxu0 %v6068
    %6074 = vmatprep.subr.mxu0 0.0
    %6075 = vmatpush1.msra.mxu0 0.0
    %6076 = vmatprep.subr.mxu0 0.0
    %6077 = vmatpush1.msra.mxu0 0.0
    %6078 = vmatprep.subr.mxu0 0.0
    %6079 = vmatpush1.msra.mxu0 0.0
    %6080 = vmatprep.subr.mxu0 0.0
    %6081 = vmatpush1.msra.mxu0 0.0
    %6082 = vmatprep.subr.mxu0 0.0
    %6083 = vmatpush1.msra.mxu0 0.0
    %6084 = vmatprep.subr.mxu0 0.0
    %6085 = vmatpush1.msra.mxu0 0.0
    %6086 = vmatprep.subr.mxu0 0.0
    %6087 = vmatpush1.msra.mxu0 0.0
    %6088 = vmatprep.subr.mxu0 0.0
    %6089 = vmatpush1.msra.mxu0 0.0
    %6090 = vmatprep.subr.mxu0 0.0
    %6091 = vmatpush1.msra.mxu0 0.0
    %6092 = vmatprep.subr.mxu0 0.0
    %6093 = vmatpush1.msra.mxu0 0.0
    %6094 = vmatprep.subr.mxu0 0.0
    %6095 = vmatpush1.msra.mxu0 0.0
    %6096 = vmatprep.subr.mxu0 0.0
    %6097 = vmatpush1.msra.mxu0 0.0
    %6098 = vmatprep.subr.mxu0 0.0
    %6099 = vmatpush1.msra.mxu0 0.0
    %6100 = vmatprep.subr.mxu0 0.0
    %6101 = vmatpush1.msra.mxu0 0.0
    %6102 = vmatprep.subr.mxu0 0.0
    %6103 = vmatpush1.msra.mxu0 0.0
    %6104 = vmatprep.subr.mxu0 0.0
    %6105 = vmatpush1.msra.mxu0 0.0
    %6106 = vmatprep.subr.mxu0 0.0
    %6107 = vmatpush1.msra.mxu0 0.0
    %6108 = vmatprep.subr.mxu0 0.0
    %6109 = vmatpush1.msra.mxu0 0.0
    %6110 = vmatprep.subr.mxu0 0.0
    %6111 = vmatpush1.msra.mxu0 0.0
    %6112 = vmatprep.subr.mxu0 0.0
    %6113 = vmatpush1.msra.mxu0 0.0
    %6114 = vmatprep.subr.mxu0 0.0
    %6115 = vmatpush1.msra.mxu0 0.0
    %6116 = vmatprep.subr.mxu0 0.0
    %6117 = vmatpush1.msra.mxu0 0.0
    %6118 = vmatprep.subr.mxu0 0.0
    %6119 = vmatpush1.msra.mxu0 0.0
    %6120 = vmatprep.subr.mxu0 0.0
    %6121 = vmatpush1.msra.mxu0 0.0
    %6122 = vmatprep.subr.mxu0 0.0
    %6123 = vmatpush1.msra.mxu0 0.0
    %6124 = vmatprep.subr.mxu0 0.0
    %6125 = vmatpush1.msra.mxu0 0.0
    %6126 = vmatprep.subr.mxu0 0.0
    %6127 = vmatpush1.msra.mxu0 0.0
    %6128 = vmatprep.subr.mxu0 0.0
    %6129 = vmatpush1.msra.mxu0 0.0
    %6130 = vmatprep.subr.mxu0 0.0
    %6131 = vmatpush1.msra.mxu0 0.0
    %6132 = vmatprep.subr.mxu0 0.0
    %6133 = vmatpush1.msra.mxu0 0.0
    %6134 = vmatprep.subr.mxu0 0.0
    %6135 = vmatpush1.msra.mxu0 0.0
    %6136 = vmatprep.mubr.f32.mxu0 0.0
    %6137 = vmatmul.mubr.f32.gmra.mrb[0].mxu0 %v6070
    %v6138 = vpop.f32.mrb[0].mxu0
    %v6139 = vadd.f32 %v4557, %v6138
    %v6140 = vpop.f32.mrb[0].mxu0
    %6141 = vdwg.mxu0
    %6142 = vst.msk [vmem:[#allocation4 + $0x1] sm:$0x1] %vm5354, %v6139
    %v6143 = vld [vmem:[%s1] sm:$0x3]
    %v6144 = vld [vmem:[%s8] sm:$0xff]
    %v6145 = vld [vmem:[%s8 + $0x8] sm:$0xff]
    %v6146 = vld [vmem:[%s9] sm:$0x1]
    %v6148 = vlaneseq
    %v6149 = vshrl.u32 %v6148, 7
    %v6150 = vsub.s32 0, %v6149
    %v6151 = vrot.slane %v6146, %v6150
    %vm6153 = vcmask 130048
    %v6155 = vsel %vm6153, %v6143, 0
    %6157 = vmatprep.subr.mxu0 0.0
    %6158 = vmatpush1.msra.mxu0 %v6144
    %6159 = vmatprep.subr.mxu0 0.0
    %6160 = vmatpush1.msra.mxu0 %v6145
    %6161 = vmatprep.subr.mxu0 0.0
    %6162 = vmatpush1.msra.mxu0 0.0
    %6163 = vmatprep.subr.mxu0 0.0
    %6164 = vmatpush1.msra.mxu0 0.0
    %6165 = vmatprep.subr.mxu0 0.0
    %6166 = vmatpush1.msra.mxu0 0.0
    %6167 = vmatprep.subr.mxu0 0.0
    %6168 = vmatpush1.msra.mxu0 0.0
    %6169 = vmatprep.subr.mxu0 0.0
    %6170 = vmatpush1.msra.mxu0 0.0
    %6171 = vmatprep.subr.mxu0 0.0
    %6172 = vmatpush1.msra.mxu0 0.0
    %6173 = vmatprep.subr.mxu0 0.0
    %6174 = vmatpush1.msra.mxu0 0.0
    %6175 = vmatprep.subr.mxu0 0.0
    %6176 = vmatpush1.msra.mxu0 0.0
    %6177 = vmatprep.subr.mxu0 0.0
    %6178 = vmatpush1.msra.mxu0 0.0
    %6179 = vmatprep.subr.mxu0 0.0
    %6180 = vmatpush1.msra.mxu0 0.0
    %6181 = vmatprep.subr.mxu0 0.0
    %6182 = vmatpush1.msra.mxu0 0.0
    %6183 = vmatprep.subr.mxu0 0.0
    %6184 = vmatpush1.msra.mxu0 0.0
    %6185 = vmatprep.subr.mxu0 0.0
    %6186 = vmatpush1.msra.mxu0 0.0
    %6187 = vmatprep.subr.mxu0 0.0
    %6188 = vmatpush1.msra.mxu0 0.0
    %6189 = vmatprep.subr.mxu0 0.0
    %6190 = vmatpush1.msra.mxu0 0.0
    %6191 = vmatprep.subr.mxu0 0.0
    %6192 = vmatpush1.msra.mxu0 0.0
    %6193 = vmatprep.subr.mxu0 0.0
    %6194 = vmatpush1.msra.mxu0 0.0
    %6195 = vmatprep.subr.mxu0 0.0
    %6196 = vmatpush1.msra.mxu0 0.0
    %6197 = vmatprep.subr.mxu0 0.0
    %6198 = vmatpush1.msra.mxu0 0.0
    %6199 = vmatprep.subr.mxu0 0.0
    %6200 = vmatpush1.msra.mxu0 0.0
    %6201 = vmatprep.subr.mxu0 0.0
    %6202 = vmatpush1.msra.mxu0 0.0
    %6203 = vmatprep.subr.mxu0 0.0
    %6204 = vmatpush1.msra.mxu0 0.0
    %6205 = vmatprep.subr.mxu0 0.0
    %6206 = vmatpush1.msra.mxu0 0.0
    %6207 = vmatprep.subr.mxu0 0.0
    %6208 = vmatpush1.msra.mxu0 0.0
    %6209 = vmatprep.subr.mxu0 0.0
    %6210 = vmatpush1.msra.mxu0 0.0
    %6211 = vmatprep.subr.mxu0 0.0
    %6212 = vmatpush1.msra.mxu0 0.0
    %6213 = vmatprep.subr.mxu0 0.0
    %6214 = vmatpush1.msra.mxu0 0.0
    %6215 = vmatprep.subr.mxu0 0.0
    %6216 = vmatpush1.msra.mxu0 0.0
    %6217 = vmatprep.subr.mxu0 0.0
    %6218 = vmatpush1.msra.mxu0 0.0
    %6219 = vmatprep.subr.mxu0 0.0
    %6220 = vmatpush1.msra.mxu0 0.0
    %6221 = vmatprep.mubr.f32.mxu0 0.0
    %6222 = vmatmul.mubr.f32.gmra.mrb[0].mxu0 %v6155
    %v6223 = vpop.f32.mrb[0].mxu0
    %v6224 = vadd.f32 %v6151, %v6223
    %v6225 = vpop.f32.mrb[0].mxu0
    %6226 = vdwg.mxu0
    %v6227 = vmax.f32 %v6224, 0.0
    %v6228 = vld [vmem:[#allocation4] sm:$0x3]
    %v6229 = vld [vmem:[%s10] sm:$0xff]
    %v6230 = vld [vmem:[%s10 + $0x8] sm:$0xff]
    %v6231 = vld [vmem:[%s10 + $0x10] sm:$0xff]
    %v6232 = vld [vmem:[%s10 + $0x18] sm:$0xff]
    %v6233 = vld [vmem:[%s11] sm:$0xff]
    %v6234 = vld [vmem:[%s11 + $0x8] sm:$0xff]
    %v6235 = vld [vmem:[%s11 + $0x10] sm:$0xff]
    %v6236 = vld [vmem:[%s11 + $0x18] sm:$0xff]
    %vm6237 = vcmask 261120
    %v6239 = vsel %vm6237, %v6228, 0
    %6241 = vmatprep.subr.mxu0 0.0
    %6242 = vmatpush1.msra.mxu0 %v6233
    %6243 = vmatprep.subr.mxu0 0.0
    %6244 = vmatpush1.msra.mxu0 %v6234
    %6245 = vmatprep.subr.mxu0 0.0
    %6246 = vmatpush1.msra.mxu0 %v6235
    %6247 = vmatprep.subr.mxu0 0.0
    %6248 = vmatpush1.msra.mxu0 %v6236
    %6249 = vmatprep.subr.mxu0 0.0
    %6250 = vmatpush1.msra.mxu0 0.0
    %6251 = vmatprep.subr.mxu0 0.0
    %6252 = vmatpush1.msra.mxu0 0.0
    %6253 = vmatprep.subr.mxu0 0.0
    %6254 = vmatpush1.msra.mxu0 0.0
    %6255 = vmatprep.subr.mxu0 0.0
    %6256 = vmatpush1.msra.mxu0 0.0
    %6257 = vmatprep.subr.mxu0 0.0
    %6258 = vmatpush1.msra.mxu0 0.0
    %6259 = vmatprep.subr.mxu0 0.0
    %6260 = vmatpush1.msra.mxu0 0.0
    %6261 = vmatprep.subr.mxu0 0.0
    %6262 = vmatpush1.msra.mxu0 0.0
    %6263 = vmatprep.subr.mxu0 0.0
    %6264 = vmatpush1.msra.mxu0 0.0
    %6265 = vmatprep.subr.mxu0 0.0
    %6266 = vmatpush1.msra.mxu0 0.0
    %6267 = vmatprep.subr.mxu0 0.0
    %6268 = vmatpush1.msra.mxu0 0.0
    %6269 = vmatprep.subr.mxu0 0.0
    %6270 = vmatpush1.msra.mxu0 0.0
    %6271 = vmatprep.subr.mxu0 0.0
    %6272 = vmatpush1.msra.mxu0 0.0
    %6273 = vmatprep.subr.mxu0 0.0
    %6274 = vmatpush1.msra.mxu0 0.0
    %6275 = vmatprep.subr.mxu0 0.0
    %6276 = vmatpush1.msra.mxu0 0.0
    %6277 = vmatprep.subr.mxu0 0.0
    %6278 = vmatpush1.msra.mxu0 0.0
    %6279 = vmatprep.subr.mxu0 0.0
    %6280 = vmatpush1.msra.mxu0 0.0
    %6281 = vmatprep.subr.mxu0 0.0
    %6282 = vmatpush1.msra.mxu0 0.0
    %6283 = vmatprep.subr.mxu0 0.0
    %6284 = vmatpush1.msra.mxu0 0.0
    %6285 = vmatprep.subr.mxu0 0.0
    %6286 = vmatpush1.msra.mxu0 0.0
    %6287 = vmatprep.subr.mxu0 0.0
    %6288 = vmatpush1.msra.mxu0 0.0
    %6289 = vmatprep.subr.mxu0 0.0
    %6290 = vmatpush1.msra.mxu0 0.0
    %6291 = vmatprep.subr.mxu0 0.0
    %6292 = vmatpush1.msra.mxu0 0.0
    %6293 = vmatprep.subr.mxu0 0.0
    %6294 = vmatpush1.msra.mxu0 0.0
    %6295 = vmatprep.subr.mxu0 0.0
    %6296 = vmatpush1.msra.mxu0 0.0
    %6297 = vmatprep.subr.mxu0 0.0
    %6298 = vmatpush1.msra.mxu0 0.0
    %6299 = vmatprep.subr.mxu0 0.0
    %6300 = vmatpush1.msra.mxu0 0.0
    %6301 = vmatprep.subr.mxu0 0.0
    %6302 = vmatpush1.msra.mxu0 0.0
    %6303 = vmatprep.subr.mxu0 0.0
    %6304 = vmatpush1.msra.mxu0 0.0
    %6305 = vmatprep.mubr.f32.mxu0 0.0
    %6306 = vmatmul.mubr.f32.gmra.mrb[0].mxu0 %v6239
    %v6307 = vpop.f32.mrb[0].mxu0
    %v6308 = vadd.f32 0.0, %v6307
    %v6309 = vpop.f32.mrb[0].mxu0
    %6310 = vdwg.mxu0
    %v6312 = vsel %vm6237, %v6227, 0
    %6314 = vmatprep.subr.mxu0 0.0
    %6315 = vmatpush1.msra.mxu0 %v6229
    %6316 = vmatprep.subr.mxu0 0.0
    %6317 = vmatpush1.msra.mxu0 %v6230
    %6318 = vmatprep.subr.mxu0 0.0
    %6319 = vmatpush1.msra.mxu0 %v6231
    %6320 = vmatprep.subr.mxu0 0.0
    %6321 = vmatpush1.msra.mxu0 %v6232
    %6322 = vmatprep.subr.mxu0 0.0
    %6323 = vmatpush1.msra.mxu0 0.0
    %6324 = vmatprep.subr.mxu0 0.0
    %6325 = vmatpush1.msra.mxu0 0.0
    %6326 = vmatprep.subr.mxu0 0.0
    %6327 = vmatpush1.msra.mxu0 0.0
    %6328 = vmatprep.subr.mxu0 0.0
    %6329 = vmatpush1.msra.mxu0 0.0
    %6330 = vmatprep.subr.mxu0 0.0
    %6331 = vmatpush1.msra.mxu0 0.0
    %6332 = vmatprep.subr.mxu0 0.0
    %6333 = vmatpush1.msra.mxu0 0.0
    %6334 = vmatprep.subr.mxu0 0.0
    %6335 = vmatpush1.msra.mxu0 0.0
    %6336 = vmatprep.subr.mxu0 0.0
    %6337 = vmatpush1.msra.mxu0 0.0
    %6338 = vmatprep.subr.mxu0 0.0
    %6339 = vmatpush1.msra.mxu0 0.0
    %6340 = vmatprep.subr.mxu0 0.0
    %6341 = vmatpush1.msra.mxu0 0.0
    %6342 = vmatprep.subr.mxu0 0.0
    %6343 = vmatpush1.msra.mxu0 0.0
    %6344 = vmatprep.subr.mxu0 0.0
    %6345 = vmatpush1.msra.mxu0 0.0
    %6346 = vmatprep.subr.mxu0 0.0
    %6347 = vmatpush1.msra.mxu0 0.0
    %6348 = vmatprep.subr.mxu0 0.0
    %6349 = vmatpush1.msra.mxu0 0.0
    %6350 = vmatprep.subr.mxu0 0.0
    %6351 = vmatpush1.msra.mxu0 0.0
    %6352 = vmatprep.subr.mxu0 0.0
    %6353 = vmatpush1.msra.mxu0 0.0
    %6354 = vmatprep.subr.mxu0 0.0
    %6355 = vmatpush1.msra.mxu0 0.0
    %6356 = vmatprep.subr.mxu0 0.0
    %6357 = vmatpush1.msra.mxu0 0.0
    %6358 = vmatprep.subr.mxu0 0.0
    %6359 = vmatpush1.msra.mxu0 0.0
    %6360 = vmatprep.subr.mxu0 0.0
    %6361 = vmatpush1.msra.mxu0 0.0
    %6362 = vmatprep.subr.mxu0 0.0
    %6363 = vmatpush1.msra.mxu0 0.0
    %6364 = vmatprep.subr.mxu0 0.0
    %6365 = vmatpush1.msra.mxu0 0.0
    %6366 = vmatprep.subr.mxu0 0.0
    %6367 = vmatpush1.msra.mxu0 0.0
    %6368 = vmatprep.subr.mxu0 0.0
    %6369 = vmatpush1.msra.mxu0 0.0
    %6370 = vmatprep.subr.mxu0 0.0
    %6371 = vmatpush1.msra.mxu0 0.0
    %6372 = vmatprep.subr.mxu0 0.0
    %6373 = vmatpush1.msra.mxu0 0.0
    %6374 = vmatprep.subr.mxu0 0.0
    %6375 = vmatpush1.msra.mxu0 0.0
    %6376 = vmatprep.subr.mxu0 0.0
    %6377 = vmatpush1.msra.mxu0 0.0
    %6378 = vmatprep.mubr.f32.mxu0 0.0
    %6379 = vmatmul.mubr.f32.gmra.mrb[0].mxu0 %v6312
    %v6380 = vpop.f32.mrb[0].mxu0
    %v6381 = vadd.f32 %v6308, %v6380
    %v6382 = vpop.f32.mrb[0].mxu0
    %6383 = vdwg.mxu0
    %v6384 = vld [vmem:[%s12] sm:$0x1]
    %v6386 = vlaneseq
    %v6387 = vshrl.u32 %v6386, 7
    %v6388 = vsub.s32 0, %v6387
    %v6389 = vrot.slane %v6384, %v6388
    %v6391 = vadd.f32 %v6381, %v6389
    %vm6392 = vcmask 25600
    %6393 = vst.msk [vmem:[#allocation5] sm:$0x3] %vm6392, %v6391
    // Predicated region
    $region54: #{conv_qnet_forward.1} parent=1 // pred_check
      _
    $region55: #{conv_qnet_forward.1} parent=1 // pred_check_branch
      %6395 = sbr.rel (0) target = $region57
    $region56: #{conv_qnet_forward.1} parent=1 // pred_region
      %s6397 = ssub.s32 32, 32
      %6398 = vsyncadd [#allocation6], %s6397
      %s6400 = sshll.u32 [#allocation5], 4
      %s6401 = int_to_ptr.vmem [resolvable:$true] %s6400
      %6403 = dma.vmem_to_hbm [thread:$0]  %s6401, 32, %s13, [#allocation6]
    $region57: #{conv_qnet_forward.1} parent=1 // pred_fallthru
      _
    // Predicated region
    $region58: #{conv_qnet_forward.1} parent=1 // pred_check
      _
    $region59: #{conv_qnet_forward.1} parent=1 // pred_check_branch
      %6405 = sbr.rel (0) target = $region61
    $region60: #{conv_qnet_forward.1} parent=1 // pred_region
      %6406 = dma.done [#allocation6], 32
    $region61: #{conv_qnet_forward.1} parent=1 // pred_fallthru
      _
    %6407 = vsyncpa [#allocation6], 1

</llo_original>
